<compile_context>
chip_gen: v7x
topology: tpu7x:2x2x1
jax: 0.10.0
libtpu: 0.0.40
codegen_flags: <defaults>
</compile_context>

<pallas_src>
import functools

import numpy as np
import jax
import jax.numpy as jnp
from jax.experimental import pallas as pl
from jax.experimental.pallas import tpu as pltpu


# ----------------------------------------------------------------------------
# Deterministic level-1 icosphere (42 unit vectors), equivalent to
# icosahedron2sphere(1): 12 icosahedron vertices + 30 normalized edge midpoints.
# ----------------------------------------------------------------------------
def icosahedron2sphere_level1():
    t = (1.0 + 5.0 ** 0.5) / 2.0
    verts = np.array(
        [[-1, t, 0], [1, t, 0], [-1, -t, 0], [1, -t, 0],
         [0, -1, t], [0, 1, t], [0, -1, -t], [0, 1, -t],
         [t, 0, -1], [t, 0, 1], [-t, 0, -1], [-t, 0, 1]],
        dtype=np.float64)
    verts /= np.linalg.norm(verts, axis=1, keepdims=True)
    faces = np.array(
        [[0, 11, 5], [0, 5, 1], [0, 1, 7], [0, 7, 10], [0, 10, 11],
         [1, 5, 9], [5, 11, 4], [11, 10, 2], [10, 7, 6], [7, 1, 8],
         [3, 9, 4], [3, 4, 2], [3, 2, 6], [3, 6, 8], [3, 8, 9],
         [4, 9, 5], [2, 4, 11], [6, 2, 10], [8, 6, 7], [9, 8, 1]])
    edges = set()
    for f in faces:
        for i in range(3):
            a, b = int(f[i]), int(f[(i + 1) % 3])
            edges.add((min(a, b), max(a, b)))
    mids = []
    for a, b in sorted(edges):
        m = verts[a] + verts[b]
        mids.append(m / np.linalg.norm(m))
    all_v = np.concatenate([verts, np.asarray(mids)], axis=0)  # (42, 3)
    return all_v.astype(np.float32)


# ----------------------------------------------------------------------------
# Pallas kernel: one (batch, point-tile) step computes ALL U upsample groups.
# All operands are (rows, TN) with TN points on the lane axis.
# ----------------------------------------------------------------------------
def _xyzs_upsample_kernel(x_ref, xyz_ref, w1_ref, b1_ref, w2_ref, b2_ref,
                          hyp_ref, out_ref, *, num_groups, num_hyp, group_out):
    x = x_ref[0]                                    # (C, TN)   all channels of this tile
    xyz = xyz_ref[0]                                # (3, TN)

    # fused layer 1 (weight_nn ++ scale_nn, all U groups stacked on M):
    # (U*2H, C) @ (C, TN); group/channel regrouping folded into w1.
    h = jnp.dot(w1_ref[...], x, preferred_element_type=jnp.float32) + b1_ref[...]
    h = jnp.maximum(h, 0.0)                         # (U*2H, TN)

    # fused block-diagonal layer 2: (U*48, U*2H) @ (U*2H, TN)
    # per group: rows [0:43) hypothesis logits, row 43 scale, rows 44..47 pad.
    z = jnp.dot(w2_ref[...], h, preferred_element_type=jnp.float32) + b2_ref[...]

    for u in range(num_groups):                     # static unroll, U is small
        base = u * group_out                        # multiple of 8 -> aligned slice
        logits = z[base:base + num_hyp, :]          # (43, TN)
        scale = z[base + num_hyp:base + num_hyp + 1, :]   # (1, TN)

        # softmax over the hypotheses (sublane axis)
        m = jnp.max(logits, axis=0, keepdims=True)
        e = jnp.exp(logits - m)
        probs = e * (1.0 / jnp.sum(e, axis=0, keepdims=True))

        # weighted hypothesis sum -> direction, L2 normalize (EUP rsqrt), scale, add
        d = jnp.dot(hyp_ref[...], probs, preferred_element_type=jnp.float32)   # (3, TN)
        sumsq = jnp.sum(d * d, axis=0, keepdims=True)
        inv_norm = jax.lax.rsqrt(jnp.maximum(sumsq, 1e-24))  # == 1 / max(||d||, 1e-12)
        out_ref[0, u, :, :] = xyz + d * (inv_norm * scale)   # (3, TN) lane-dense store


# ----------------------------------------------------------------------------
# One-time weight packing (hoisted out of the per-call path).
# ----------------------------------------------------------------------------
def pack_xyzs_upsample_params(params, upsample_rate):
    f32 = jnp.float32
    U = upsample_rate
    Cg, H = params["w1w"].shape
    KH = params["hyp"].shape[0]                     # 43
    C = Cg * U
    GOUT = ((KH + 1 + 7) // 8) * 8                  # 48: pad group rows to sublane multiple

    # layer 1: weight_nn & scale_nn concatenated, 'b (c g) n -> b c n g' folded
    # in via per-group channel selection, all U groups stacked on the M axis.
    w1cat = jnp.concatenate([params["w1w"].T, params["w1s"].T], axis=0).astype(f32)  # (2H, Cg)
    eye_u = jnp.eye(U, dtype=f32)
    w1 = jnp.einsum("hc,gu->uhcg", w1cat, eye_u).reshape(U * 2 * H, C)               # (U*2H, C)
    b1cat = jnp.concatenate([params["b1w"][0], params["b1s"][0]]).astype(f32)[:, None]
    b1 = jnp.tile(b1cat, (U, 1))                                                      # (U*2H, 1)

    # layer 2: block-diagonal; group u -> rows [u*48, u*48+43) logits, row u*48+43 scale.
    w2 = jnp.zeros((U * GOUT, U * 2 * H), f32)
    b2 = jnp.zeros((U * GOUT, 1), f32)
    for u in range(U):
        r0, c0 = u * GOUT, u * 2 * H
        w2 = w2.at[r0:r0 + KH, c0:c0 + H].set(params["w2w"].T.astype(f32))
        w2 = w2.at[r0 + KH, c0 + H:c0 + 2 * H].set(params["w2s"].T[0].astype(f32))
        b2 = b2.at[r0:r0 + KH, 0].set(params["b2w"][0].astype(f32))
        b2 = b2.at[r0 + KH, 0].set(params["b2s"][0, 0].astype(f32))

    hyp_t = params["hyp"].T.astype(f32)                                               # (3, 43)
    return dict(w1=w1, b1=b1, w2=w2, b2=b2, hyp_t=hyp_t,
                U=U, H=H, KH=KH, GOUT=GOUT, C=C)


def _choose_point_tile(n, batch):
    # lane-dense tiles (multiples of 128) that divide N; prefer the largest
    # while keeping enough grid steps for megacore sharding + pipelining.
    candidates = (4096, 2048, 1024, 512, 256, 128)
    for min_steps in (4, 2, 1):
        for tn in candidates:
            if n % tn == 0 and batch * (n // tn) >= min_steps:
                return tn
    return n  # small N: single full-extent tile


def xyzs_upsample_pallas(xyzs, feats, packed):
    """xyzs: (B, 3, N) f32, feats: (B, C, N) f32 -> (B, 3, N, U) f32."""
    B, C, N = feats.shape
    U, H, KH, GOUT = packed["U"], packed["H"], packed["KH"], packed["GOUT"]
    assert C == packed["C"]
    TN = _choose_point_tile(N, B)
    f32 = jnp.float32

    kernel = functools.partial(_xyzs_upsample_kernel,
                               num_groups=U, num_hyp=KH, group_out=GOUT)

    out4 = pl.pallas_call(
        kernel,
        out_shape=jax.ShapeDtypeStruct((B, U, 3, N), f32),
        grid=(B, N // TN),
        in_specs=[
            pl.BlockSpec((1, C, TN), lambda b, nt: (b, 0, nt)),          # feats (as-is)
            pl.BlockSpec((1, 3, TN), lambda b, nt: (b, 0, nt)),          # xyzs  (as-is)
            pl.BlockSpec((U * 2 * H, C), lambda b, nt: (0, 0)),          # stacked layer-1 W
            pl.BlockSpec((U * 2 * H, 1), lambda b, nt: (0, 0)),          # stacked layer-1 b
            pl.BlockSpec((U * GOUT, U * 2 * H), lambda b, nt: (0, 0)),   # block-diag layer-2 W
            pl.BlockSpec((U * GOUT, 1), lambda b, nt: (0, 0)),           # layer-2 b
            pl.BlockSpec((3, KH), lambda b, nt: (0, 0)),                 # hypothesis^T
        ],
        out_specs=pl.BlockSpec((1, U, 3, TN), lambda b, nt: (b, 0, 0, nt)),
        compiler_params=pltpu.CompilerParams(
            dimension_semantics=("parallel", "parallel"),
            vmem_limit_bytes=32 * 1024 * 1024),
    )(feats, xyzs, packed["w1"], packed["b1"], packed["w2"], packed["b2"],
      packed["hyp_t"])

    # (B, U, 3, N) -> (B, 3, N, U) to match the module's return contract.
    # TODO(synk): removable if the consumer accepts (B, U, 3, N); see header.
    return jnp.transpose(out4, (0, 2, 3, 1))


# ----------------------------------------------------------------------------
# Pure-JAX reference (mirrors the PyTorch forward semantics exactly)
# ----------------------------------------------------------------------------
def xyzs_upsample_reference(xyzs, feats, params, upsample_rate):
    B, C, N = feats.shape
    U = upsample_rate
    Cg = C // U
    # rearrange 'b (c g) n -> b c n g'
    fg = jnp.transpose(feats.reshape(B, Cg, U, N), (0, 1, 3, 2))  # (B, Cg, N, U)

    def mlp(x, w1, b1, w2, b2):
        h = jax.nn.relu(jnp.einsum('bcnu,ch->bhnu', x, w1) + b1[0][None, :, None, None])
        return jnp.einsum('bhnu,ho->bonu', h, w2) + b2[0][None, :, None, None]

    weights = mlp(fg, params["w1w"], params["b1w"], params["w2w"], params["b2w"])  # (B,43,N,U)
    weights = jax.nn.softmax(weights[:, :, None, :, :], axis=1)                    # (B,43,1,N,U)
    hyp = params["hyp"]                                                             # (43,3)
    directions = jnp.sum(weights * hyp[None, :, :, None, None], axis=1)             # (B,3,N,U)
    norm = jnp.sqrt(jnp.sum(directions ** 2, axis=1, keepdims=True))
    directions = directions / jnp.maximum(norm, 1e-12)
    scales = mlp(fg, params["w1s"], params["b1s"], params["w2s"], params["b2s"])    # (B,1,N,U)
    deltas = directions * scales
    return xyzs[:, :, :, None] + deltas


# ----------------------------------------------------------------------------
# main
# ----------------------------------------------------------------------------
if __name__ == "__main__":
    # keep both the reference einsums and the kernel dots at full f32 accuracy
    jax.config.update("jax_default_matmul_precision", "highest")

    # small config consistent with the module: args.dim=32, hidden_dim=32, U=4
    B, N = 2, 16
    DIM, HID, U = 32, 32, 4
    Cg = DIM // U

    key = jax.random.PRNGKey(0)
    ks = jax.random.split(key, 10)

    hyp42 = icosahedron2sphere_level1()                       # (42, 3)
    hyp = jnp.asarray(np.concatenate([np.zeros((1, 3), np.float32), hyp42], axis=0))  # (43, 3)

    # deterministic synthetic parameters (stored pre-transposed: in_dim x out_dim)
    params = {
        "w1w": jax.random.normal(ks[0], (Cg, HID), jnp.float32) * 0.2,
        "b1w": jax.random.normal(ks[1], (1, HID), jnp.float32) * 0.05,
        "w2w": jax.random.normal(ks[2], (HID, 43), jnp.float32) * 0.2,
        "b2w": jax.random.normal(ks[3], (1, 43), jnp.float32) * 0.05,
        "w1s": jax.random.normal(ks[4], (Cg, HID), jnp.float32) * 0.2,
        "b1s": jax.random.normal(ks[5], (1, HID), jnp.float32) * 0.05,
        "w2s": jax.random.normal(ks[6], (HID, 1), jnp.float32) * 0.2,
        "b2s": jax.random.normal(ks[7], (1, 1), jnp.float32) * 0.05,
        "hyp": hyp,
    }

    xyzs = jax.random.normal(ks[8], (B, 3, N), jnp.float32)
    feats = jax.random.normal(ks[9], (B, DIM, N), jnp.float32)

    # one-time weight packing (hoisted out of the forward path)
    packed = pack_xyzs_upsample_params(params, U)

    out = xyzs_upsample_pallas(xyzs, feats, packed)
    out = jax.block_until_ready(out)

    ref = xyzs_upsample_reference(xyzs, feats, params, U)
    np.testing.assert_allclose(np.asarray(out), np.asarray(ref), rtol=1e-5, atol=1e-5)
    assert out.shape == (B, 3, N, U)

    print("KERNEL_OK")
</pallas_src>

<mosaic_0001>
module attributes {stable_mosaic.version = 11 : i64} {
  func.func @_xyzs_upsample_kernel(%arg0: i32, %arg1: i32, %arg2: memref<1x32x16xf32, #tpu.memory_space<vmem>>, %arg3: memref<1x3x16xf32, #tpu.memory_space<vmem>>, %arg4: memref<256x32xf32, #tpu.memory_space<vmem>>, %arg5: memref<256x1xf32, #tpu.memory_space<vmem>>, %arg6: memref<192x256xf32, #tpu.memory_space<vmem>>, %arg7: memref<192x1xf32, #tpu.memory_space<vmem>>, %arg8: memref<3x43xf32, #tpu.memory_space<vmem>>, %arg9: memref<1x4x3x16xf32, #tpu.memory_space<vmem>>) attributes {dimension_semantics = [#tpu.dimension_semantics<parallel>, #tpu.dimension_semantics<parallel>], iteration_bounds = array<i64: 2, 1>, scalar_prefetch = 0 : i64, scratch_operands = 0 : i64, tpu.core_type = #tpu.core_type<tc>, window_params = [{transform_indices = @transform_0, window_bounds = array<i64: 1, 32, 16>}, {transform_indices = @transform_1, window_bounds = array<i64: 1, 3, 16>}, {pipeline_mode = #tpu.pipeline_mode<synchronous>, transform_indices = @transform_2, window_bounds = array<i64: 256, 32>}, {pipeline_mode = #tpu.pipeline_mode<synchronous>, transform_indices = @transform_3, window_bounds = array<i64: 256, 1>}, {pipeline_mode = #tpu.pipeline_mode<synchronous>, transform_indices = @transform_4, window_bounds = array<i64: 192, 256>}, {pipeline_mode = #tpu.pipeline_mode<synchronous>, transform_indices = @transform_5, window_bounds = array<i64: 192, 1>}, {pipeline_mode = #tpu.pipeline_mode<synchronous>, transform_indices = @transform_6, window_bounds = array<i64: 3, 43>}, {transform_indices = @transform_7, window_bounds = array<i64: 1, 4, 3, 16>}]} {
    %c0 = arith.constant 0 : index
    %c0_0 = arith.constant 0 : index
    %c0_1 = arith.constant 0 : index
    %0 = vector.load %arg2[%c0, %c0_0, %c0_1] : memref<1x32x16xf32, #tpu.memory_space<vmem>>, vector<1x32x16xf32>
    %1 = vector.shape_cast %0 : vector<1x32x16xf32> to vector<32x16xf32>
    %c0_2 = arith.constant 0 : index
    %c0_3 = arith.constant 0 : index
    %c0_4 = arith.constant 0 : index
    %2 = vector.load %arg3[%c0_2, %c0_3, %c0_4] : memref<1x3x16xf32, #tpu.memory_space<vmem>>, vector<1x3x16xf32>
    %3 = vector.shape_cast %2 : vector<1x3x16xf32> to vector<3x16xf32>
    %c0_5 = arith.constant 0 : index
    %c0_6 = arith.constant 0 : index
    %4 = vector.load %arg4[%c0_5, %c0_6] : memref<256x32xf32, #tpu.memory_space<vmem>>, vector<256x32xf32>
    %cst = arith.constant dense<0.000000e+00> : vector<256x16xf32>
    %5 = tpu.matmul %4, %1, %cst {dimension_numbers = #tpu.dot_dimension_numbers<[1], [0], [0], [1], [0, 0, 1, 1], [], []>, precision = #tpu.contract_precision<fp32>} : vector<256x32xf32>, vector<32x16xf32>, vector<256x16xf32> -> vector<256x16xf32>
    %c0_7 = arith.constant 0 : index
    %c0_8 = arith.constant 0 : index
    %6 = vector.load %arg5[%c0_7, %c0_8] : memref<256x1xf32, #tpu.memory_space<vmem>>, vector<256x1xf32>
    %7 = vector.broadcast %6 : vector<256x1xf32> to vector<256x16xf32>
    %8 = arith.addf %5, %7 : vector<256x16xf32>
    %cst_9 = arith.constant 0.000000e+00 : f32
    %9 = vector.broadcast %cst_9 : f32 to vector<256x16xf32>
    %10 = arith.maximumf %8, %9 : vector<256x16xf32>
    %c0_10 = arith.constant 0 : index
    %c0_11 = arith.constant 0 : index
    %11 = vector.load %arg6[%c0_10, %c0_11] : memref<192x256xf32, #tpu.memory_space<vmem>>, vector<192x256xf32>
    %cst_12 = arith.constant dense<0.000000e+00> : vector<192x16xf32>
    %12 = tpu.matmul %11, %10, %cst_12 {dimension_numbers = #tpu.dot_dimension_numbers<[1], [0], [0], [1], [0, 0, 1, 1], [], []>, precision = #tpu.contract_precision<fp32>} : vector<192x256xf32>, vector<256x16xf32>, vector<192x16xf32> -> vector<192x16xf32>
    %c0_13 = arith.constant 0 : index
    %c0_14 = arith.constant 0 : index
    %13 = vector.load %arg7[%c0_13, %c0_14] : memref<192x1xf32, #tpu.memory_space<vmem>>, vector<192x1xf32>
    %14 = vector.broadcast %13 : vector<192x1xf32> to vector<192x16xf32>
    %15 = arith.addf %12, %14 : vector<192x16xf32>
    %16 = vector.extract_strided_slice %15 {offsets = [0, 0], sizes = [43, 16], strides = [1, 1]} : vector<192x16xf32> to vector<43x16xf32>
    %17 = vector.extract_strided_slice %15 {offsets = [43, 0], sizes = [1, 16], strides = [1, 1]} : vector<192x16xf32> to vector<1x16xf32>
    %cst_15 = arith.constant dense<0xFF800000> : vector<16xf32>
    %18 = vector.multi_reduction <maximumf>, %16, %cst_15 [0] : vector<43x16xf32> to vector<16xf32>
    %19 = vector.shape_cast %18 : vector<16xf32> to vector<1x16xf32>
    %20 = vector.broadcast %19 : vector<1x16xf32> to vector<43x16xf32>
    %21 = arith.subf %16, %20 : vector<43x16xf32>
    %22 = math.exp %21 : vector<43x16xf32>
    %cst_16 = arith.constant dense<0.000000e+00> : vector<16xf32>
    %23 = vector.multi_reduction <add>, %22, %cst_16 [0] : vector<43x16xf32> to vector<16xf32>
    %24 = vector.shape_cast %23 : vector<16xf32> to vector<1x16xf32>
    %cst_17 = arith.constant 1.000000e+00 : f32
    %25 = vector.broadcast %cst_17 : f32 to vector<1x16xf32>
    %26 = arith.divf %25, %24 : vector<1x16xf32>
    %27 = vector.broadcast %26 : vector<1x16xf32> to vector<43x16xf32>
    %28 = arith.mulf %22, %27 : vector<43x16xf32>
    %c0_18 = arith.constant 0 : index
    %c0_19 = arith.constant 0 : index
    %29 = vector.load %arg8[%c0_18, %c0_19] : memref<3x43xf32, #tpu.memory_space<vmem>>, vector<3x43xf32>
    %cst_20 = arith.constant dense<0.000000e+00> : vector<3x16xf32>
    %30 = tpu.matmul %29, %28, %cst_20 {dimension_numbers = #tpu.dot_dimension_numbers<[1], [0], [0], [1], [0, 0, 1, 1], [], []>, precision = #tpu.contract_precision<fp32>} : vector<3x43xf32>, vector<43x16xf32>, vector<3x16xf32> -> vector<3x16xf32>
    %31 = arith.mulf %30, %30 : vector<3x16xf32>
    %cst_21 = arith.constant dense<0.000000e+00> : vector<16xf32>
    %32 = vector.multi_reduction <add>, %31, %cst_21 [0] : vector<3x16xf32> to vector<16xf32>
    %33 = vector.shape_cast %32 : vector<16xf32> to vector<1x16xf32>
    %cst_22 = arith.constant 1.000000e-24 : f32
    %34 = vector.broadcast %cst_22 : f32 to vector<1x16xf32>
    %35 = arith.maximumf %33, %34 : vector<1x16xf32>
    %36 = math.rsqrt %35 : vector<1x16xf32>
    %37 = arith.mulf %36, %17 : vector<1x16xf32>
    %38 = vector.broadcast %37 : vector<1x16xf32> to vector<3x16xf32>
    %39 = arith.mulf %30, %38 : vector<3x16xf32>
    %40 = arith.addf %3, %39 : vector<3x16xf32>
    %c0_23 = arith.constant 0 : index
    %c0_24 = arith.constant 0 : index
    %c0_25 = arith.constant 0 : index
    %c0_26 = arith.constant 0 : index
    %41 = vector.load %arg9[%c0_23, %c0_24, %c0_25, %c0_26] : memref<1x4x3x16xf32, #tpu.memory_space<vmem>>, vector<1x1x3x16xf32>
    %42 = vector.shape_cast %41 : vector<1x1x3x16xf32> to vector<3x16xf32>
    %43 = vector.shape_cast %40 : vector<3x16xf32> to vector<1x1x3x16xf32>
    tpu.vector_store %arg9[%c0_23, %c0_24, %c0_25, %c0_26], %43 {strides = array<i32>} : memref<1x4x3x16xf32, #tpu.memory_space<vmem>>, vector<1x1x3x16xf32>,
    %44 = vector.extract_strided_slice %15 {offsets = [48, 0], sizes = [43, 16], strides = [1, 1]} : vector<192x16xf32> to vector<43x16xf32>
    %45 = vector.extract_strided_slice %15 {offsets = [91, 0], sizes = [1, 16], strides = [1, 1]} : vector<192x16xf32> to vector<1x16xf32>
    %cst_27 = arith.constant dense<0xFF800000> : vector<16xf32>
    %46 = vector.multi_reduction <maximumf>, %44, %cst_27 [0] : vector<43x16xf32> to vector<16xf32>
    %47 = vector.shape_cast %46 : vector<16xf32> to vector<1x16xf32>
    %48 = vector.broadcast %47 : vector<1x16xf32> to vector<43x16xf32>
    %49 = arith.subf %44, %48 : vector<43x16xf32>
    %50 = math.exp %49 : vector<43x16xf32>
    %cst_28 = arith.constant dense<0.000000e+00> : vector<16xf32>
    %51 = vector.multi_reduction <add>, %50, %cst_28 [0] : vector<43x16xf32> to vector<16xf32>
    %52 = vector.shape_cast %51 : vector<16xf32> to vector<1x16xf32>
    %cst_29 = arith.constant 1.000000e+00 : f32
    %53 = vector.broadcast %cst_29 : f32 to vector<1x16xf32>
    %54 = arith.divf %53, %52 : vector<1x16xf32>
    %55 = vector.broadcast %54 : vector<1x16xf32> to vector<43x16xf32>
    %56 = arith.mulf %50, %55 : vector<43x16xf32>
    %c0_30 = arith.constant 0 : index
    %c0_31 = arith.constant 0 : index
    %57 = vector.load %arg8[%c0_30, %c0_31] : memref<3x43xf32, #tpu.memory_space<vmem>>, vector<3x43xf32>
    %cst_32 = arith.constant dense<0.000000e+00> : vector<3x16xf32>
    %58 = tpu.matmul %57, %56, %cst_32 {dimension_numbers = #tpu.dot_dimension_numbers<[1], [0], [0], [1], [0, 0, 1, 1], [], []>, precision = #tpu.contract_precision<fp32>} : vector<3x43xf32>, vector<43x16xf32>, vector<3x16xf32> -> vector<3x16xf32>
    %59 = arith.mulf %58, %58 : vector<3x16xf32>
    %cst_33 = arith.constant dense<0.000000e+00> : vector<16xf32>
    %60 = vector.multi_reduction <add>, %59, %cst_33 [0] : vector<3x16xf32> to vector<16xf32>
    %61 = vector.shape_cast %60 : vector<16xf32> to vector<1x16xf32>
    %cst_34 = arith.constant 1.000000e-24 : f32
    %62 = vector.broadcast %cst_34 : f32 to vector<1x16xf32>
    %63 = arith.maximumf %61, %62 : vector<1x16xf32>
    %64 = math.rsqrt %63 : vector<1x16xf32>
    %65 = arith.mulf %64, %45 : vector<1x16xf32>
    %66 = vector.broadcast %65 : vector<1x16xf32> to vector<3x16xf32>
    %67 = arith.mulf %58, %66 : vector<3x16xf32>
    %68 = arith.addf %3, %67 : vector<3x16xf32>
    %c0_35 = arith.constant 0 : index
    %c1 = arith.constant 1 : index
    %c0_36 = arith.constant 0 : index
    %c0_37 = arith.constant 0 : index
    %69 = vector.load %arg9[%c0_35, %c1, %c0_36, %c0_37] : memref<1x4x3x16xf32, #tpu.memory_space<vmem>>, vector<1x1x3x16xf32>
    %70 = vector.shape_cast %69 : vector<1x1x3x16xf32> to vector<3x16xf32>
    %71 = vector.shape_cast %68 : vector<3x16xf32> to vector<1x1x3x16xf32>
    tpu.vector_store %arg9[%c0_35, %c1, %c0_36, %c0_37], %71 {strides = array<i32>} : memref<1x4x3x16xf32, #tpu.memory_space<vmem>>, vector<1x1x3x16xf32>,
    %72 = vector.extract_strided_slice %15 {offsets = [96, 0], sizes = [43, 16], strides = [1, 1]} : vector<192x16xf32> to vector<43x16xf32>
    %73 = vector.extract_strided_slice %15 {offsets = [139, 0], sizes = [1, 16], strides = [1, 1]} : vector<192x16xf32> to vector<1x16xf32>
    %cst_38 = arith.constant dense<0xFF800000> : vector<16xf32>
    %74 = vector.multi_reduction <maximumf>, %72, %cst_38 [0] : vector<43x16xf32> to vector<16xf32>
    %75 = vector.shape_cast %74 : vector<16xf32> to vector<1x16xf32>
    %76 = vector.broadcast %75 : vector<1x16xf32> to vector<43x16xf32>
    %77 = arith.subf %72, %76 : vector<43x16xf32>
    %78 = math.exp %77 : vector<43x16xf32>
    %cst_39 = arith.constant dense<0.000000e+00> : vector<16xf32>
    %79 = vector.multi_reduction <add>, %78, %cst_39 [0] : vector<43x16xf32> to vector<16xf32>
    %80 = vector.shape_cast %79 : vector<16xf32> to vector<1x16xf32>
    %cst_40 = arith.constant 1.000000e+00 : f32
    %81 = vector.broadcast %cst_40 : f32 to vector<1x16xf32>
    %82 = arith.divf %81, %80 : vector<1x16xf32>
    %83 = vector.broadcast %82 : vector<1x16xf32> to vector<43x16xf32>
    %84 = arith.mulf %78, %83 : vector<43x16xf32>
    %c0_41 = arith.constant 0 : index
    %c0_42 = arith.constant 0 : index
    %85 = vector.load %arg8[%c0_41, %c0_42] : memref<3x43xf32, #tpu.memory_space<vmem>>, vector<3x43xf32>
    %cst_43 = arith.constant dense<0.000000e+00> : vector<3x16xf32>
    %86 = tpu.matmul %85, %84, %cst_43 {dimension_numbers = #tpu.dot_dimension_numbers<[1], [0], [0], [1], [0, 0, 1, 1], [], []>, precision = #tpu.contract_precision<fp32>} : vector<3x43xf32>, vector<43x16xf32>, vector<3x16xf32> -> vector<3x16xf32>
    %87 = arith.mulf %86, %86 : vector<3x16xf32>
    %cst_44 = arith.constant dense<0.000000e+00> : vector<16xf32>
    %88 = vector.multi_reduction <add>, %87, %cst_44 [0] : vector<3x16xf32> to vector<16xf32>
    %89 = vector.shape_cast %88 : vector<16xf32> to vector<1x16xf32>
    %cst_45 = arith.constant 1.000000e-24 : f32
    %90 = vector.broadcast %cst_45 : f32 to vector<1x16xf32>
    %91 = arith.maximumf %89, %90 : vector<1x16xf32>
    %92 = math.rsqrt %91 : vector<1x16xf32>
    %93 = arith.mulf %92, %73 : vector<1x16xf32>
    %94 = vector.broadcast %93 : vector<1x16xf32> to vector<3x16xf32>
    %95 = arith.mulf %86, %94 : vector<3x16xf32>
    %96 = arith.addf %3, %95 : vector<3x16xf32>
    %c0_46 = arith.constant 0 : index
    %c2 = arith.constant 2 : index
    %c0_47 = arith.constant 0 : index
    %c0_48 = arith.constant 0 : index
    %97 = vector.load %arg9[%c0_46, %c2, %c0_47, %c0_48] : memref<1x4x3x16xf32, #tpu.memory_space<vmem>>, vector<1x1x3x16xf32>
    %98 = vector.shape_cast %97 : vector<1x1x3x16xf32> to vector<3x16xf32>
    %99 = vector.shape_cast %96 : vector<3x16xf32> to vector<1x1x3x16xf32>
    tpu.vector_store %arg9[%c0_46, %c2, %c0_47, %c0_48], %99 {strides = array<i32>} : memref<1x4x3x16xf32, #tpu.memory_space<vmem>>, vector<1x1x3x16xf32>,
    %100 = vector.extract_strided_slice %15 {offsets = [144, 0], sizes = [43, 16], strides = [1, 1]} : vector<192x16xf32> to vector<43x16xf32>
    %101 = vector.extract_strided_slice %15 {offsets = [187, 0], sizes = [1, 16], strides = [1, 1]} : vector<192x16xf32> to vector<1x16xf32>
    %cst_49 = arith.constant dense<0xFF800000> : vector<16xf32>
    %102 = vector.multi_reduction <maximumf>, %100, %cst_49 [0] : vector<43x16xf32> to vector<16xf32>
    %103 = vector.shape_cast %102 : vector<16xf32> to vector<1x16xf32>
    %104 = vector.broadcast %103 : vector<1x16xf32> to vector<43x16xf32>
    %105 = arith.subf %100, %104 : vector<43x16xf32>
    %106 = math.exp %105 : vector<43x16xf32>
    %cst_50 = arith.constant dense<0.000000e+00> : vector<16xf32>
    %107 = vector.multi_reduction <add>, %106, %cst_50 [0] : vector<43x16xf32> to vector<16xf32>
    %108 = vector.shape_cast %107 : vector<16xf32> to vector<1x16xf32>
    %cst_51 = arith.constant 1.000000e+00 : f32
    %109 = vector.broadcast %cst_51 : f32 to vector<1x16xf32>
    %110 = arith.divf %109, %108 : vector<1x16xf32>
    %111 = vector.broadcast %110 : vector<1x16xf32> to vector<43x16xf32>
    %112 = arith.mulf %106, %111 : vector<43x16xf32>
    %c0_52 = arith.constant 0 : index
    %c0_53 = arith.constant 0 : index
    %113 = vector.load %arg8[%c0_52, %c0_53] : memref<3x43xf32, #tpu.memory_space<vmem>>, vector<3x43xf32>
    %cst_54 = arith.constant dense<0.000000e+00> : vector<3x16xf32>
    %114 = tpu.matmul %113, %112, %cst_54 {dimension_numbers = #tpu.dot_dimension_numbers<[1], [0], [0], [1], [0, 0, 1, 1], [], []>, precision = #tpu.contract_precision<fp32>} : vector<3x43xf32>, vector<43x16xf32>, vector<3x16xf32> -> vector<3x16xf32>
    %115 = arith.mulf %114, %114 : vector<3x16xf32>
    %cst_55 = arith.constant dense<0.000000e+00> : vector<16xf32>
    %116 = vector.multi_reduction <add>, %115, %cst_55 [0] : vector<3x16xf32> to vector<16xf32>
    %117 = vector.shape_cast %116 : vector<16xf32> to vector<1x16xf32>
    %cst_56 = arith.constant 1.000000e-24 : f32
    %118 = vector.broadcast %cst_56 : f32 to vector<1x16xf32>
    %119 = arith.maximumf %117, %118 : vector<1x16xf32>
    %120 = math.rsqrt %119 : vector<1x16xf32>
    %121 = arith.mulf %120, %101 : vector<1x16xf32>
    %122 = vector.broadcast %121 : vector<1x16xf32> to vector<3x16xf32>
    %123 = arith.mulf %114, %122 : vector<3x16xf32>
    %124 = arith.addf %3, %123 : vector<3x16xf32>
    %c0_57 = arith.constant 0 : index
    %c3 = arith.constant 3 : index
    %c0_58 = arith.constant 0 : index
    %c0_59 = arith.constant 0 : index
    %125 = vector.load %arg9[%c0_57, %c3, %c0_58, %c0_59] : memref<1x4x3x16xf32, #tpu.memory_space<vmem>>, vector<1x1x3x16xf32>
    %126 = vector.shape_cast %125 : vector<1x1x3x16xf32> to vector<3x16xf32>
    %127 = vector.shape_cast %124 : vector<3x16xf32> to vector<1x1x3x16xf32>
    tpu.vector_store %arg9[%c0_57, %c3, %c0_58, %c0_59], %127 {strides = array<i32>} : memref<1x4x3x16xf32, #tpu.memory_space<vmem>>, vector<1x1x3x16xf32>,
    return
  }
  func.func @transform_0(%arg0: i32, %arg1: i32) -> (i32, i32, i32) {
    %c0_i32 = arith.constant 0 : i32
    %c0_i32_0 = arith.constant 0 : i32
    return %arg0, %c0_i32, %arg1 : i32, i32, i32
  }
  func.func @transform_1(%arg0: i32, %arg1: i32) -> (i32, i32, i32) {
    %c0_i32 = arith.constant 0 : i32
    %c0_i32_0 = arith.constant 0 : i32
    return %arg0, %c0_i32, %arg1 : i32, i32, i32
  }
  func.func @transform_2(%arg0: i32, %arg1: i32) -> (i32, i32) {
    %c0_i32 = arith.constant 0 : i32
    %c0_i32_0 = arith.constant 0 : i32
    %c0_i32_1 = arith.constant 0 : i32
    return %c0_i32, %c0_i32_0 : i32, i32
  }
  func.func @transform_3(%arg0: i32, %arg1: i32) -> (i32, i32) {
    %c0_i32 = arith.constant 0 : i32
    %c0_i32_0 = arith.constant 0 : i32
    %c0_i32_1 = arith.constant 0 : i32
    return %c0_i32, %c0_i32_0 : i32, i32
  }
  func.func @transform_4(%arg0: i32, %arg1: i32) -> (i32, i32) {
    %c0_i32 = arith.constant 0 : i32
    %c0_i32_0 = arith.constant 0 : i32
    %c0_i32_1 = arith.constant 0 : i32
    return %c0_i32, %c0_i32_0 : i32, i32
  }
  func.func @transform_5(%arg0: i32, %arg1: i32) -> (i32, i32) {
    %c0_i32 = arith.constant 0 : i32
    %c0_i32_0 = arith.constant 0 : i32
    %c0_i32_1 = arith.constant 0 : i32
    return %c0_i32, %c0_i32_0 : i32, i32
  }
  func.func @transform_6(%arg0: i32, %arg1: i32) -> (i32, i32) {
    %c0_i32 = arith.constant 0 : i32
    %c0_i32_0 = arith.constant 0 : i32
    %c0_i32_1 = arith.constant 0 : i32
    return %c0_i32, %c0_i32_0 : i32, i32
  }
  func.func @transform_7(%arg0: i32, %arg1: i32) -> (i32, i32, i32, i32) {
    %c0_i32 = arith.constant 0 : i32
    %c0_i32_0 = arith.constant 0 : i32
    %c0_i32_1 = arith.constant 0 : i32
    return %arg0, %c0_i32, %c0_i32_0, %arg1 : i32, i32, i32, i32
  }
}

</mosaic_0001>

<llo_original>
// kernel: tpu_custom_call.1
$region0: #{tpu_custom_call.1}
  #allocation0 [shape = 'u32[]', space=smem, size = 0x4, offset = 0x4, fixed_abs, tag = 'smem constant byte address 0x4 - core index']
  #allocation1 [shape = 'u32[144,128]{1,0:T(1,128)}', space=vmem, size = 0x12000, scoped, tag = 'internal scratch']
  %s0 = inlined_call_operand.vmem [shape: f32[2,32,16], index: 0, kind: input, shape index: {}]
  %s1 = inlined_call_operand.vmem [shape: f32[2,3,16], index: 1, kind: input, shape index: {}]
  %s2 = inlined_call_operand.vmem [shape: f32[256,32], index: 2, kind: input, shape index: {}]
  %s3 = inlined_call_operand.vmem [shape: f32[256,1], index: 3, kind: input, shape index: {}]
  %s4 = inlined_call_operand.vmem [shape: f32[192,256], index: 4, kind: input, shape index: {}]
  %s5 = inlined_call_operand.vmem [shape: f32[192,1], index: 5, kind: input, shape index: {}]
  %s6 = inlined_call_operand.vmem [shape: f32[3,43], index: 6, kind: input, shape index: {}]
  %s7 = inlined_call_operand.vmem [shape: f32[2,4,3,16], index: 7, kind: output, shape index: {}]
  %s8 = sld [smem:[#allocation0]]
  $region61: #{tpu_custom_call.1} parent=0
    _
  %s10 = ssub.s32 1, %s8
  %s11 = scalar_select 0, %s10, %s8
  loop: start=0, step=1, limit=4
  $region2: #{tpu_custom_call.1} parent=0 // loop_pre_header
    _
  $region3: #{tpu_custom_call.1} parent=0 // loop_header
    %s13 = sphi 0, %s17
    %p14 = scmp.ge.s32.totalorder %s13, 4
    %s20 = sphi 0, %s32
    %s21 = sphi 0, %s28
    %s22 = sphi 0, %s20
    %s23 = sphi 0, %s21
    %s24 = sphi 0, %s22
    %s25 = sphi 0, %s23
    %s37 = sphi 0, %s39
    %s40 = sphi 0, %s37
    %s41 = sphi 0, %s40
    %s57 = sphi 0, %s41
    %s65 = sphi 0, %s67
    %s68 = sphi 0, %s65
    %s69 = sphi 0, %s68
    %s85 = sphi 0, %s69
    %s89 = sphi 0, %s89
    %s91 = sphi 0, %s89
    %s92 = sphi 0, %s91
    %s106 = sphi 0, %s92
    %s110 = sphi 0, %s110
    %s112 = sphi 0, %s110
    %s113 = sphi 0, %s112
    %s127 = sphi 0, %s113
    %s131 = sphi 0, %s131
    %s133 = sphi 0, %s131
    %s134 = sphi 0, %s133
    %s148 = sphi 0, %s134
    %s152 = sphi 0, %s152
    %s154 = sphi 0, %s152
    %s155 = sphi 0, %s154
    %s169 = sphi 0, %s155
    %s173 = sphi 0, %s173
    %s175 = sphi 0, %s173
    %s176 = sphi 0, %s175
    %s190 = sphi 0, %s176
    %s198 = sphi 0, %s200
    %s201 = sphi 0, %s198
    %s202 = sphi 0, %s201
    %s218 = sphi 0, %s202
  $region4: #{tpu_custom_call.1} parent=0 // loop_header_branch
    %16 = sbr.rel (%p14) target = $region8
  $region5: #{tpu_custom_call.1} parent=0 // loop_body
    %s18 = ssub.s32 %s13, 1
    %s19 = ssub.s32 %s13, 2
    %s26 = sadd.s32 1, %s21
    %p27 = scmp.ge.s32.totalorder %s26, 1
    %s28 = scalar_select %p27, 0, %s26
    %s29 = sadd.s32 1, %s20
    %s30 = scalar_select %p27, %s29, %s20
    %p31 = scmp.ge.s32.totalorder %s30, 2
    %s32 = scalar_select %p31, 0, %s30
    %s33 = ssub.s32 %s20, %s32
    %s34 = ssub.s32 %s21, %s28
    %s35 = sor.u32 %s33, %s34
    %p36 = scmp.eq.s32.totalorder %s35, 0
    %s38 = sadd.s32 %s37, 1
    %s39 = scalar_select %p36, %s37, %s38
    %p42 = pneg %p36
    %p43 = scmp.eq.s32.totalorder %s13, 1
    %p44 = por %p42, %p43
    %p45 = scmp.ne.s32.totalorder %s37, %s40
    %p46 = scmp.eq.s32.totalorder %s13, 0
    %p47 = por %p45, %p46
    %p48 = scmp.ne.s32.totalorder %s37, %s40
    %p49 = scmp.eq.s32.totalorder %s18, 1
    %p50 = por %p48, %p49
    %p51 = scmp.ne.s32.totalorder %s40, %s41
    %p52 = scmp.eq.s32.totalorder %s18, 0
    %p53 = por %p51, %p52
    %p54 = scmp.ne.s32.totalorder %s40, %s41
    %p55 = scmp.eq.s32.totalorder %s19, 1
    %p56 = por %p54, %p55
    %p58 = scmp.ne.s32.totalorder %s41, %s57
    %p59 = scmp.eq.s32.totalorder %s19, 0
    %p60 = por %p58, %p59
    %s61 = ssub.s32 %s20, %s32
    %s62 = ssub.s32 %s21, %s28
    %s63 = sor.u32 %s61, %s62
    %p64 = scmp.eq.s32.totalorder %s63, 0
    %s66 = sadd.s32 %s65, 1
    %s67 = scalar_select %p64, %s65, %s66
    %p70 = pneg %p64
    %p71 = scmp.eq.s32.totalorder %s13, 1
    %p72 = por %p70, %p71
    %p73 = scmp.ne.s32.totalorder %s65, %s68
    %p74 = scmp.eq.s32.totalorder %s13, 0
    %p75 = por %p73, %p74
    %p76 = scmp.ne.s32.totalorder %s65, %s68
    %p77 = scmp.eq.s32.totalorder %s18, 1
    %p78 = por %p76, %p77
    %p79 = scmp.ne.s32.totalorder %s68, %s69
    %p80 = scmp.eq.s32.totalorder %s18, 0
    %p81 = por %p79, %p80
    %p82 = scmp.ne.s32.totalorder %s68, %s69
    %p83 = scmp.eq.s32.totalorder %s19, 1
    %p84 = por %p82, %p83
    %p86 = scmp.ne.s32.totalorder %s69, %s85
    %p87 = scmp.eq.s32.totalorder %s19, 0
    %p88 = por %p86, %p87
    %s90 = sadd.s32 %s89, 1
    %p93 = scmp.eq.s32.totalorder %s13, 1
    %p94 = scmp.ne.s32.totalorder %s89, %s91
    %p95 = scmp.eq.s32.totalorder %s13, 0
    %p96 = por %p94, %p95
    %p97 = scmp.ne.s32.totalorder %s89, %s91
    %p98 = scmp.eq.s32.totalorder %s18, 1
    %p99 = por %p97, %p98
    %p100 = scmp.ne.s32.totalorder %s91, %s92
    %p101 = scmp.eq.s32.totalorder %s18, 0
    %p102 = por %p100, %p101
    %p103 = scmp.ne.s32.totalorder %s91, %s92
    %p104 = scmp.eq.s32.totalorder %s19, 1
    %p105 = por %p103, %p104
    %p107 = scmp.ne.s32.totalorder %s92, %s106
    %p108 = scmp.eq.s32.totalorder %s19, 0
    %p109 = por %p107, %p108
    %s111 = sadd.s32 %s110, 1
    %p114 = scmp.eq.s32.totalorder %s13, 1
    %p115 = scmp.ne.s32.totalorder %s110, %s112
    %p116 = scmp.eq.s32.totalorder %s13, 0
    %p117 = por %p115, %p116
    %p118 = scmp.ne.s32.totalorder %s110, %s112
    %p119 = scmp.eq.s32.totalorder %s18, 1
    %p120 = por %p118, %p119
    %p121 = scmp.ne.s32.totalorder %s112, %s113
    %p122 = scmp.eq.s32.totalorder %s18, 0
    %p123 = por %p121, %p122
    %p124 = scmp.ne.s32.totalorder %s112, %s113
    %p125 = scmp.eq.s32.totalorder %s19, 1
    %p126 = por %p124, %p125
    %p128 = scmp.ne.s32.totalorder %s113, %s127
    %p129 = scmp.eq.s32.totalorder %s19, 0
    %p130 = por %p128, %p129
    %s132 = sadd.s32 %s131, 1
    %p135 = scmp.eq.s32.totalorder %s13, 1
    %p136 = scmp.ne.s32.totalorder %s131, %s133
    %p137 = scmp.eq.s32.totalorder %s13, 0
    %p138 = por %p136, %p137
    %p139 = scmp.ne.s32.totalorder %s131, %s133
    %p140 = scmp.eq.s32.totalorder %s18, 1
    %p141 = por %p139, %p140
    %p142 = scmp.ne.s32.totalorder %s133, %s134
    %p143 = scmp.eq.s32.totalorder %s18, 0
    %p144 = por %p142, %p143
    %p145 = scmp.ne.s32.totalorder %s133, %s134
    %p146 = scmp.eq.s32.totalorder %s19, 1
    %p147 = por %p145, %p146
    %p149 = scmp.ne.s32.totalorder %s134, %s148
    %p150 = scmp.eq.s32.totalorder %s19, 0
    %p151 = por %p149, %p150
    %s153 = sadd.s32 %s152, 1
    %p156 = scmp.eq.s32.totalorder %s13, 1
    %p157 = scmp.ne.s32.totalorder %s152, %s154
    %p158 = scmp.eq.s32.totalorder %s13, 0
    %p159 = por %p157, %p158
    %p160 = scmp.ne.s32.totalorder %s152, %s154
    %p161 = scmp.eq.s32.totalorder %s18, 1
    %p162 = por %p160, %p161
    %p163 = scmp.ne.s32.totalorder %s154, %s155
    %p164 = scmp.eq.s32.totalorder %s18, 0
    %p165 = por %p163, %p164
    %p166 = scmp.ne.s32.totalorder %s154, %s155
    %p167 = scmp.eq.s32.totalorder %s19, 1
    %p168 = por %p166, %p167
    %p170 = scmp.ne.s32.totalorder %s155, %s169
    %p171 = scmp.eq.s32.totalorder %s19, 0
    %p172 = por %p170, %p171
    %s174 = sadd.s32 %s173, 1
    %p177 = scmp.eq.s32.totalorder %s13, 1
    %p178 = scmp.ne.s32.totalorder %s173, %s175
    %p179 = scmp.eq.s32.totalorder %s13, 0
    %p180 = por %p178, %p179
    %p181 = scmp.ne.s32.totalorder %s173, %s175
    %p182 = scmp.eq.s32.totalorder %s18, 1
    %p183 = por %p181, %p182
    %p184 = scmp.ne.s32.totalorder %s175, %s176
    %p185 = scmp.eq.s32.totalorder %s18, 0
    %p186 = por %p184, %p185
    %p187 = scmp.ne.s32.totalorder %s175, %s176
    %p188 = scmp.eq.s32.totalorder %s19, 1
    %p189 = por %p187, %p188
    %p191 = scmp.ne.s32.totalorder %s176, %s190
    %p192 = scmp.eq.s32.totalorder %s19, 0
    %p193 = por %p191, %p192
    %s194 = ssub.s32 %s20, %s32
    %s195 = ssub.s32 %s21, %s28
    %s196 = sor.u32 %s194, %s195
    %p197 = scmp.eq.s32.totalorder %s196, 0
    %s199 = sadd.s32 %s198, 1
    %s200 = scalar_select %p197, %s198, %s199
    %p203 = pneg %p197
    %p204 = scmp.eq.s32.totalorder %s13, 1
    %p205 = por %p203, %p204
    %p206 = scmp.ne.s32.totalorder %s198, %s201
    %p207 = scmp.eq.s32.totalorder %s13, 0
    %p208 = por %p206, %p207
    %p209 = scmp.ne.s32.totalorder %s198, %s201
    %p210 = scmp.eq.s32.totalorder %s18, 1
    %p211 = por %p209, %p210
    %p212 = scmp.ne.s32.totalorder %s201, %s202
    %p213 = scmp.eq.s32.totalorder %s18, 0
    %p214 = por %p212, %p213
    %p215 = scmp.ne.s32.totalorder %s201, %s202
    %p216 = scmp.eq.s32.totalorder %s19, 1
    %p217 = por %p215, %p216
    %p219 = scmp.ne.s32.totalorder %s202, %s218
    %p220 = scmp.eq.s32.totalorder %s19, 0
    %p221 = por %p219, %p220
    %p222 = scmp.le.s32.totalorder 1, %s13
    %p223 = scmp.lt.s32.totalorder %s13, 3
    %p224 = pnand %p222, %p223
    %p225 = pneg %p224
    // Predicated region
    $region9: #{tpu_custom_call.1} parent=5 // pred_check
      _
    $region10: #{tpu_custom_call.1} parent=5 // pred_check_branch
      %227 = sbr.rel (%p224) target = $region12
    $region11: #{tpu_custom_call.1} parent=5 // pred_region
      %s228 = ssub.s32 %s13, 1
      // Predicated region
      $region13: #{tpu_custom_call.1} parent=11 // pred_check
        %p229 = pneg %p102
      $region14: #{tpu_custom_call.1} parent=11 // pred_check_branch
        %231 = sbr.rel (%p229) target = $region16
      $region15: #{tpu_custom_call.1} parent=11 // pred_region
        _
      $region16: #{tpu_custom_call.1} parent=11 // pred_fallthru
        _
      // Predicated region
      $region17: #{tpu_custom_call.1} parent=11 // pred_check
        %p232 = pneg %p123
      $region18: #{tpu_custom_call.1} parent=11 // pred_check_branch
        %234 = sbr.rel (%p232) target = $region20
      $region19: #{tpu_custom_call.1} parent=11 // pred_region
        _
      $region20: #{tpu_custom_call.1} parent=11 // pred_fallthru
        _
      // Predicated region
      $region21: #{tpu_custom_call.1} parent=11 // pred_check
        %p235 = pneg %p144
      $region22: #{tpu_custom_call.1} parent=11 // pred_check_branch
        %237 = sbr.rel (%p235) target = $region24
      $region23: #{tpu_custom_call.1} parent=11 // pred_region
        _
      $region24: #{tpu_custom_call.1} parent=11 // pred_fallthru
        _
      // Predicated region
      $region25: #{tpu_custom_call.1} parent=11 // pred_check
        %p238 = pneg %p165
      $region26: #{tpu_custom_call.1} parent=11 // pred_check_branch
        %240 = sbr.rel (%p238) target = $region28
      $region27: #{tpu_custom_call.1} parent=11 // pred_region
        _
      $region28: #{tpu_custom_call.1} parent=11 // pred_fallthru
        _
      // Predicated region
      $region29: #{tpu_custom_call.1} parent=11 // pred_check
        %p241 = pneg %p186
      $region30: #{tpu_custom_call.1} parent=11 // pred_check_branch
        %243 = sbr.rel (%p241) target = $region32
      $region31: #{tpu_custom_call.1} parent=11 // pred_region
        _
      $region32: #{tpu_custom_call.1} parent=11 // pred_fallthru
        _
    $region12: #{tpu_custom_call.1} parent=5 // pred_fallthru
      _
    %p244 = scmp.lt.s32.totalorder %s13, 2
    // Predicated region
    $region33: #{tpu_custom_call.1} parent=5 // pred_check
      %p245 = pneg %p244
    $region34: #{tpu_custom_call.1} parent=5 // pred_check_branch
      %247 = sbr.rel (%p245) target = $region36
    $region35: #{tpu_custom_call.1} parent=5 // pred_region
      // Predicated region
      $region37: #{tpu_custom_call.1} parent=35 // pred_check
        %p248 = pneg %p47
      $region38: #{tpu_custom_call.1} parent=35 // pred_check_branch
        %250 = sbr.rel (%p248) target = $region40
      $region39: #{tpu_custom_call.1} parent=35 // pred_region
        %p251 = scmp.lt.s32.totalorder %s20, 1
        %s252 = scalar_select %p251, %s20, 1
        %p253 = scmp.lt.s32.totalorder %s21, 0
        %s254 = scalar_select %p253, %s21, 0
        %s255 = smul.addr %s252, 4
        %s256 = sadd.s32 %s254, %s255
        %s257 = smul.addr %s256, 8
        %s258 = scalar_lea.vmem %s0, %s257
      $region40: #{tpu_custom_call.1} parent=35 // pred_fallthru
        _
      // Predicated region
      $region41: #{tpu_custom_call.1} parent=35 // pred_check
        %p259 = pneg %p75
      $region42: #{tpu_custom_call.1} parent=35 // pred_check_branch
        %261 = sbr.rel (%p259) target = $region44
      $region43: #{tpu_custom_call.1} parent=35 // pred_region
        %p262 = scmp.lt.s32.totalorder %s20, 1
        %s263 = scalar_select %p262, %s20, 1
        %p264 = scmp.lt.s32.totalorder %s21, 0
        %s265 = scalar_select %p264, %s21, 0
        %s266 = sadd.s32 %s265, %s263
        %s267 = smul.addr %s266, 4
        %s268 = scalar_lea.vmem %s1, %s267
      $region44: #{tpu_custom_call.1} parent=35 // pred_fallthru
        _
    $region36: #{tpu_custom_call.1} parent=5 // pred_fallthru
      _
    %p269 = scmp.le.s32.totalorder 1, %s13
    %p270 = scmp.lt.s32.totalorder %s13, 3
    %p271 = pnand %p269, %p270
    %p272 = pneg %p271
    // Predicated region
    $region45: #{tpu_custom_call.1} parent=5 // pred_check
      _
    $region46: #{tpu_custom_call.1} parent=5 // pred_check_branch
      %274 = sbr.rel (%p271) target = $region48
    $region47: #{tpu_custom_call.1} parent=5 // pred_region
      %s275 = ssub.s32 %s13, 1
      %p276 = scmp.lt.s32.totalorder %s22, 1
      %s277 = scalar_select %p276, %s22, 1
      %p278 = scmp.lt.s32.totalorder %s23, 0
      %s279 = scalar_select %p278, %s23, 0
      %s280 = smul.addr %s277, 4
      %s281 = sadd.s32 %s279, %s280
      %s282 = smul.addr %s281, 8
      %s283 = scalar_lea.vmem %s0, %s282
      %p284 = pneg %p53
      %p285 = pneg %p50
      %p286 = scmp.lt.s32.totalorder %s22, 1
      %s287 = scalar_select %p286, %s22, 1
      %p288 = scmp.lt.s32.totalorder %s23, 0
      %s289 = scalar_select %p288, %s23, 0
      %s290 = sadd.s32 %s289, %s287
      %s291 = smul.addr %s290, 4
      %s292 = scalar_lea.vmem %s1, %s291
      %p293 = pneg %p81
      %p294 = pneg %p78
      %p295 = pneg %p102
      %p296 = pneg %p99
      %p297 = pneg %p123
      %p298 = pneg %p120
      %p299 = pneg %p144
      %p300 = pneg %p141
      %p301 = pneg %p165
      %p302 = pneg %p162
      %p303 = pneg %p186
      %p304 = pneg %p183
      %p305 = pneg %p214
      %p306 = pneg %p211
      %p307 = scmp.lt.s32.totalorder %s22, 1
      %s308 = scalar_select %p307, %s22, 1
      %p309 = scmp.lt.s32.totalorder %s23, 0
      %s310 = scalar_select %p309, %s23, 0
      %s311 = smul.addr %s308, 4
      %s312 = sadd.s32 %s310, %s311
      %s313 = smul.addr %s312, 4
      %s314 = scalar_lea.vmem %s7, %s313
      %p315 = scmp.lt.s32.totalorder %s22, 1
      %s316 = scalar_select %p315, %s22, 1
      %p317 = scmp.lt.s32.totalorder %s23, 0
      %s318 = scalar_select %p317, %s23, 0
      %s319 = smul.addr %s316, 4
      %s320 = sadd.s32 %s318, %s319
      %s321 = smul.addr %s320, 8
      %s322 = scalar_lea.vmem %s0, %s321
      %p323 = scmp.lt.s32.totalorder %s22, 1
      %s324 = scalar_select %p323, %s22, 1
      %p325 = scmp.lt.s32.totalorder %s23, 0
      %s326 = scalar_select %p325, %s23, 0
      %s327 = sadd.s32 %s326, %s324
      %s328 = smul.addr %s327, 4
      %s329 = scalar_lea.vmem %s1, %s328
      %p330 = scmp.lt.s32.totalorder %s22, 1
      %s331 = scalar_select %p330, %s22, 1
      %p332 = scmp.lt.s32.totalorder %s23, 0
      %s333 = scalar_select %p332, %s23, 0
      %s334 = smul.addr %s331, 4
      %s335 = sadd.s32 %s333, %s334
      %s336 = smul.addr %s335, 4
      %s337 = scalar_lea.vmem %s7, %s336
      %v338 = vld [vmem:[%s322] sm:$0xff]
      %v339 = vld [vmem:[%s322 + $0x8] sm:$0xff]
      %v340 = vld [vmem:[%s322 + $0x10] sm:$0xff]
      %v341 = vld [vmem:[%s322 + $0x18] sm:$0xff]
      %v342 = vld [vmem:[%s329] sm:$0x7]
      %v343 = vld [vmem:[%s2] sm:$0xff]
      %v344 = vld [vmem:[%s2 + $0x8] sm:$0xff]
      %v345 = vld [vmem:[%s2 + $0x10] sm:$0xff]
      %v346 = vld [vmem:[%s2 + $0x18] sm:$0xff]
      %v347 = vld [vmem:[%s2 + $0x20] sm:$0xff]
      %v348 = vld [vmem:[%s2 + $0x28] sm:$0xff]
      %v349 = vld [vmem:[%s2 + $0x30] sm:$0xff]
      %v350 = vld [vmem:[%s2 + $0x38] sm:$0xff]
      %v351 = vld [vmem:[%s2 + $0x40] sm:$0xff]
      %v352 = vld [vmem:[%s2 + $0x48] sm:$0xff]
      %v353 = vld [vmem:[%s2 + $0x50] sm:$0xff]
      %v354 = vld [vmem:[%s2 + $0x58] sm:$0xff]
      %v355 = vld [vmem:[%s2 + $0x60] sm:$0xff]
      %v356 = vld [vmem:[%s2 + $0x68] sm:$0xff]
      %v357 = vld [vmem:[%s2 + $0x70] sm:$0xff]
      %v358 = vld [vmem:[%s2 + $0x78] sm:$0xff]
      %v359 = vld [vmem:[%s2 + $0x80] sm:$0xff]
      %v360 = vld [vmem:[%s2 + $0x88] sm:$0xff]
      %v361 = vld [vmem:[%s2 + $0x90] sm:$0xff]
      %v362 = vld [vmem:[%s2 + $0x98] sm:$0xff]
      %v363 = vld [vmem:[%s2 + $0xa0] sm:$0xff]
      %v364 = vld [vmem:[%s2 + $0xa8] sm:$0xff]
      %v365 = vld [vmem:[%s2 + $0xb0] sm:$0xff]
      %v366 = vld [vmem:[%s2 + $0xb8] sm:$0xff]
      %v367 = vld [vmem:[%s2 + $0xc0] sm:$0xff]
      %v368 = vld [vmem:[%s2 + $0xc8] sm:$0xff]
      %v369 = vld [vmem:[%s2 + $0xd0] sm:$0xff]
      %v370 = vld [vmem:[%s2 + $0xd8] sm:$0xff]
      %v371 = vld [vmem:[%s2 + $0xe0] sm:$0xff]
      %v372 = vld [vmem:[%s2 + $0xe8] sm:$0xff]
      %v373 = vld [vmem:[%s2 + $0xf0] sm:$0xff]
      %v374 = vld [vmem:[%s2 + $0xf8] sm:$0xff]
      %v375 = vld [vmem:[%s3] sm:$0xff]
      %v376 = vld [vmem:[%s3 + $0x8] sm:$0xff]
      %v377 = vld [vmem:[%s3 + $0x10] sm:$0xff]
      %v378 = vld [vmem:[%s3 + $0x18] sm:$0xff]
      %v379 = vld [vmem:[%s3 + $0x20] sm:$0xff]
      %v380 = vld [vmem:[%s3 + $0x28] sm:$0xff]
      %v381 = vld [vmem:[%s3 + $0x30] sm:$0xff]
      %v382 = vld [vmem:[%s3 + $0x38] sm:$0xff]
      %v383 = vld [vmem:[%s3 + $0x40] sm:$0xff]
      %v384 = vld [vmem:[%s3 + $0x48] sm:$0xff]
      %v385 = vld [vmem:[%s3 + $0x50] sm:$0xff]
      %v386 = vld [vmem:[%s3 + $0x58] sm:$0xff]
      %v387 = vld [vmem:[%s3 + $0x60] sm:$0xff]
      %v388 = vld [vmem:[%s3 + $0x68] sm:$0xff]
      %v389 = vld [vmem:[%s3 + $0x70] sm:$0xff]
      %v390 = vld [vmem:[%s3 + $0x78] sm:$0xff]
      %v391 = vld [vmem:[%s3 + $0x80] sm:$0xff]
      %v392 = vld [vmem:[%s3 + $0x88] sm:$0xff]
      %v393 = vld [vmem:[%s3 + $0x90] sm:$0xff]
      %v394 = vld [vmem:[%s3 + $0x98] sm:$0xff]
      %v395 = vld [vmem:[%s3 + $0xa0] sm:$0xff]
      %v396 = vld [vmem:[%s3 + $0xa8] sm:$0xff]
      %v397 = vld [vmem:[%s3 + $0xb0] sm:$0xff]
      %v398 = vld [vmem:[%s3 + $0xb8] sm:$0xff]
      %v399 = vld [vmem:[%s3 + $0xc0] sm:$0xff]
      %v400 = vld [vmem:[%s3 + $0xc8] sm:$0xff]
      %v401 = vld [vmem:[%s3 + $0xd0] sm:$0xff]
      %v402 = vld [vmem:[%s3 + $0xd8] sm:$0xff]
      %v403 = vld [vmem:[%s3 + $0xe0] sm:$0xff]
      %v404 = vld [vmem:[%s3 + $0xe8] sm:$0xff]
      %v405 = vld [vmem:[%s3 + $0xf0] sm:$0xff]
      %v406 = vld [vmem:[%s3 + $0xf8] sm:$0xff]
      %408 = vset.pattern.permute.xlu0 0
      %409 = vperm.xlu0 %408, %v375
      %v410 = vpop.permute.xlu0 %409
      %413 = vset.pattern.permute.xlu0 0
      %414 = vperm.xlu0 %413, %v376
      %v415 = vpop.permute.xlu0 %414
      %418 = vset.pattern.permute.xlu0 0
      %419 = vperm.xlu0 %418, %v377
      %v420 = vpop.permute.xlu0 %419
      %423 = vset.pattern.permute.xlu0 0
      %424 = vperm.xlu0 %423, %v378
      %v425 = vpop.permute.xlu0 %424
      %428 = vset.pattern.permute.xlu0 0
      %429 = vperm.xlu0 %428, %v379
      %v430 = vpop.permute.xlu0 %429
      %433 = vset.pattern.permute.xlu0 0
      %434 = vperm.xlu0 %433, %v380
      %v435 = vpop.permute.xlu0 %434
      %438 = vset.pattern.permute.xlu0 0
      %439 = vperm.xlu0 %438, %v381
      %v440 = vpop.permute.xlu0 %439
      %443 = vset.pattern.permute.xlu0 0
      %444 = vperm.xlu0 %443, %v382
      %v445 = vpop.permute.xlu0 %444
      %448 = vset.pattern.permute.xlu0 0
      %449 = vperm.xlu0 %448, %v383
      %v450 = vpop.permute.xlu0 %449
      %453 = vset.pattern.permute.xlu0 0
      %454 = vperm.xlu0 %453, %v384
      %v455 = vpop.permute.xlu0 %454
      %458 = vset.pattern.permute.xlu0 0
      %459 = vperm.xlu0 %458, %v385
      %v460 = vpop.permute.xlu0 %459
      %463 = vset.pattern.permute.xlu0 0
      %464 = vperm.xlu0 %463, %v386
      %v465 = vpop.permute.xlu0 %464
      %468 = vset.pattern.permute.xlu0 0
      %469 = vperm.xlu0 %468, %v387
      %v470 = vpop.permute.xlu0 %469
      %473 = vset.pattern.permute.xlu0 0
      %474 = vperm.xlu0 %473, %v388
      %v475 = vpop.permute.xlu0 %474
      %478 = vset.pattern.permute.xlu0 0
      %479 = vperm.xlu0 %478, %v389
      %v480 = vpop.permute.xlu0 %479
      %483 = vset.pattern.permute.xlu0 0
      %484 = vperm.xlu0 %483, %v390
      %v485 = vpop.permute.xlu0 %484
      %488 = vset.pattern.permute.xlu0 0
      %489 = vperm.xlu0 %488, %v391
      %v490 = vpop.permute.xlu0 %489
      %493 = vset.pattern.permute.xlu0 0
      %494 = vperm.xlu0 %493, %v392
      %v495 = vpop.permute.xlu0 %494
      %498 = vset.pattern.permute.xlu0 0
      %499 = vperm.xlu0 %498, %v393
      %v500 = vpop.permute.xlu0 %499
      %503 = vset.pattern.permute.xlu0 0
      %504 = vperm.xlu0 %503, %v394
      %v505 = vpop.permute.xlu0 %504
      %508 = vset.pattern.permute.xlu0 0
      %509 = vperm.xlu0 %508, %v395
      %v510 = vpop.permute.xlu0 %509
      %513 = vset.pattern.permute.xlu0 0
      %514 = vperm.xlu0 %513, %v396
      %v515 = vpop.permute.xlu0 %514
      %518 = vset.pattern.permute.xlu0 0
      %519 = vperm.xlu0 %518, %v397
      %v520 = vpop.permute.xlu0 %519
      %523 = vset.pattern.permute.xlu0 0
      %524 = vperm.xlu0 %523, %v398
      %v525 = vpop.permute.xlu0 %524
      %528 = vset.pattern.permute.xlu0 0
      %529 = vperm.xlu0 %528, %v399
      %v530 = vpop.permute.xlu0 %529
      %533 = vset.pattern.permute.xlu0 0
      %534 = vperm.xlu0 %533, %v400
      %v535 = vpop.permute.xlu0 %534
      %538 = vset.pattern.permute.xlu0 0
      %539 = vperm.xlu0 %538, %v401
      %v540 = vpop.permute.xlu0 %539
      %543 = vset.pattern.permute.xlu0 0
      %544 = vperm.xlu0 %543, %v402
      %v545 = vpop.permute.xlu0 %544
      %548 = vset.pattern.permute.xlu0 0
      %549 = vperm.xlu0 %548, %v403
      %v550 = vpop.permute.xlu0 %549
      %553 = vset.pattern.permute.xlu0 0
      %554 = vperm.xlu0 %553, %v404
      %v555 = vpop.permute.xlu0 %554
      %558 = vset.pattern.permute.xlu0 0
      %559 = vperm.xlu0 %558, %v405
      %v560 = vpop.permute.xlu0 %559
      %563 = vset.pattern.permute.xlu0 0
      %564 = vperm.xlu0 %563, %v406
      %v565 = vpop.permute.xlu0 %564
      %vm567 = vcmask 261120
      %v569 = vsel %vm567, %v343, 0
      %v572 = vsel %vm567, %v344, 0
      %v575 = vsel %vm567, %v345, 0
      %v578 = vsel %vm567, %v346, 0
      %v581 = vsel %vm567, %v347, 0
      %v584 = vsel %vm567, %v348, 0
      %v587 = vsel %vm567, %v349, 0
      %v590 = vsel %vm567, %v350, 0
      %v593 = vsel %vm567, %v351, 0
      %v596 = vsel %vm567, %v352, 0
      %v599 = vsel %vm567, %v353, 0
      %v602 = vsel %vm567, %v354, 0
      %v605 = vsel %vm567, %v355, 0
      %v608 = vsel %vm567, %v356, 0
      %v611 = vsel %vm567, %v357, 0
      %v614 = vsel %vm567, %v358, 0
      %v617 = vsel %vm567, %v359, 0
      %v620 = vsel %vm567, %v360, 0
      %v623 = vsel %vm567, %v361, 0
      %v626 = vsel %vm567, %v362, 0
      %v629 = vsel %vm567, %v363, 0
      %v632 = vsel %vm567, %v364, 0
      %v635 = vsel %vm567, %v365, 0
      %v638 = vsel %vm567, %v366, 0
      %v641 = vsel %vm567, %v367, 0
      %v644 = vsel %vm567, %v368, 0
      %v647 = vsel %vm567, %v369, 0
      %v650 = vsel %vm567, %v370, 0
      %v653 = vsel %vm567, %v371, 0
      %v656 = vsel %vm567, %v372, 0
      %v659 = vsel %vm567, %v373, 0
      %v662 = vsel %vm567, %v374, 0
      %664 = vmatprep.subr.mxu0 0.0
      %v665 = vand.u32 %v338, 4294901760
      %666 = vmatpush1.msra.mxu0 %v665
      %667 = vmatprep.subr.mxu0 0.0
      %v668 = vand.u32 %v339, 4294901760
      %669 = vmatpush1.msra.mxu0 %v668
      %670 = vmatprep.subr.mxu0 0.0
      %v671 = vand.u32 %v340, 4294901760
      %672 = vmatpush1.msra.mxu0 %v671
      %673 = vmatprep.subr.mxu0 0.0
      %v674 = vand.u32 %v341, 4294901760
      %675 = vmatpush1.msra.mxu0 %v674
      %676 = vmatprep.subr.mxu0 0.0
      %677 = vmatpush1.msra.mxu0 0.0
      %678 = vmatprep.subr.mxu0 0.0
      %679 = vmatpush1.msra.mxu0 0.0
      %680 = vmatprep.subr.mxu0 0.0
      %681 = vmatpush1.msra.mxu0 0.0
      %682 = vmatprep.subr.mxu0 0.0
      %683 = vmatpush1.msra.mxu0 0.0
      %684 = vmatprep.subr.mxu0 0.0
      %685 = vmatpush1.msra.mxu0 0.0
      %686 = vmatprep.subr.mxu0 0.0
      %687 = vmatpush1.msra.mxu0 0.0
      %688 = vmatprep.subr.mxu0 0.0
      %689 = vmatpush1.msra.mxu0 0.0
      %690 = vmatprep.subr.mxu0 0.0
      %691 = vmatpush1.msra.mxu0 0.0
      %692 = vmatprep.subr.mxu0 0.0
      %693 = vmatpush1.msra.mxu0 0.0
      %694 = vmatprep.subr.mxu0 0.0
      %695 = vmatpush1.msra.mxu0 0.0
      %696 = vmatprep.subr.mxu0 0.0
      %697 = vmatpush1.msra.mxu0 0.0
      %698 = vmatprep.subr.mxu0 0.0
      %699 = vmatpush1.msra.mxu0 0.0
      %700 = vmatprep.subr.mxu0 0.0
      %701 = vmatpush1.msra.mxu0 0.0
      %702 = vmatprep.subr.mxu0 0.0
      %703 = vmatpush1.msra.mxu0 0.0
      %704 = vmatprep.subr.mxu0 0.0
      %705 = vmatpush1.msra.mxu0 0.0
      %706 = vmatprep.subr.mxu0 0.0
      %707 = vmatpush1.msra.mxu0 0.0
      %708 = vmatprep.subr.mxu0 0.0
      %709 = vmatpush1.msra.mxu0 0.0
      %710 = vmatprep.subr.mxu0 0.0
      %711 = vmatpush1.msra.mxu0 0.0
      %712 = vmatprep.subr.mxu0 0.0
      %713 = vmatpush1.msra.mxu0 0.0
      %714 = vmatprep.subr.mxu0 0.0
      %715 = vmatpush1.msra.mxu0 0.0
      %716 = vmatprep.subr.mxu0 0.0
      %717 = vmatpush1.msra.mxu0 0.0
      %718 = vmatprep.subr.mxu0 0.0
      %719 = vmatpush1.msra.mxu0 0.0
      %720 = vmatprep.subr.mxu0 0.0
      %721 = vmatpush1.msra.mxu0 0.0
      %722 = vmatprep.subr.mxu0 0.0
      %723 = vmatpush1.msra.mxu0 0.0
      %724 = vmatprep.subr.mxu0 0.0
      %725 = vmatpush1.msra.mxu0 0.0
      %726 = vmatprep.subr.mxu0 0.0
      %727 = vmatpush1.msra.mxu0 0.0
      %728 = vmatprep.subr.mxu0 0.0
      %729 = vmatpush1.msra.mxu0 0.0
      %730 = vmatprep.subr.mxu0 0.0
      %731 = vmatpush1.msra.mxu0 0.0
      %732 = vmatprep.mubr.f32.mxu0 0.0
      %v733 = vand.u32 %v569, 4294901760
      %v734 = vsub.f32 %v569, %v733
      %v735 = vand.u32 %v734, 4294901760
      %v736 = vsub.f32 %v734, %v735
      %v737 = vand.u32 %v736, 4294901760
      %738 = vmatmul.mubr.f32.gmra.mrb[0].mxu0 %v737
      %v739 = vpop.f32.mrb[0].mxu0
      %v740 = vadd.f32 %v410, %v739
      %v741 = vpop.f32.mrb[0].mxu0
      %742 = vmatprep.mubr.f32.mxu0 0.0
      %v743 = vand.u32 %v572, 4294901760
      %v744 = vsub.f32 %v572, %v743
      %v745 = vand.u32 %v744, 4294901760
      %v746 = vsub.f32 %v744, %v745
      %v747 = vand.u32 %v746, 4294901760
      %748 = vmatmul.mubr.f32.gmra.mrb[0].mxu0 %v747
      %v749 = vpop.f32.mrb[0].mxu0
      %v750 = vadd.f32 %v415, %v749
      %v751 = vpop.f32.mrb[0].mxu0
      %752 = vmatprep.mubr.f32.mxu0 0.0
      %v753 = vand.u32 %v575, 4294901760
      %v754 = vsub.f32 %v575, %v753
      %v755 = vand.u32 %v754, 4294901760
      %v756 = vsub.f32 %v754, %v755
      %v757 = vand.u32 %v756, 4294901760
      %758 = vmatmul.mubr.f32.gmra.mrb[0].mxu0 %v757
      %v759 = vpop.f32.mrb[0].mxu0
      %v760 = vadd.f32 %v420, %v759
      %v761 = vpop.f32.mrb[0].mxu0
      %762 = vmatprep.mubr.f32.mxu0 0.0
      %v763 = vand.u32 %v578, 4294901760
      %v764 = vsub.f32 %v578, %v763
      %v765 = vand.u32 %v764, 4294901760
      %v766 = vsub.f32 %v764, %v765
      %v767 = vand.u32 %v766, 4294901760
      %768 = vmatmul.mubr.f32.gmra.mrb[0].mxu0 %v767
      %v769 = vpop.f32.mrb[0].mxu0
      %v770 = vadd.f32 %v425, %v769
      %v771 = vpop.f32.mrb[0].mxu0
      %772 = vmatprep.mubr.f32.mxu0 0.0
      %v773 = vand.u32 %v581, 4294901760
      %v774 = vsub.f32 %v581, %v773
      %v775 = vand.u32 %v774, 4294901760
      %v776 = vsub.f32 %v774, %v775
      %v777 = vand.u32 %v776, 4294901760
      %778 = vmatmul.mubr.f32.gmra.mrb[0].mxu0 %v777
      %v779 = vpop.f32.mrb[0].mxu0
      %v780 = vadd.f32 %v430, %v779
      %v781 = vpop.f32.mrb[0].mxu0
      %782 = vmatprep.mubr.f32.mxu0 0.0
      %v783 = vand.u32 %v584, 4294901760
      %v784 = vsub.f32 %v584, %v783
      %v785 = vand.u32 %v784, 4294901760
      %v786 = vsub.f32 %v784, %v785
      %v787 = vand.u32 %v786, 4294901760
      %788 = vmatmul.mubr.f32.gmra.mrb[0].mxu0 %v787
      %v789 = vpop.f32.mrb[0].mxu0
      %v790 = vadd.f32 %v435, %v789
      %v791 = vpop.f32.mrb[0].mxu0
      %792 = vmatprep.mubr.f32.mxu0 0.0
      %v793 = vand.u32 %v587, 4294901760
      %v794 = vsub.f32 %v587, %v793
      %v795 = vand.u32 %v794, 4294901760
      %v796 = vsub.f32 %v794, %v795
      %v797 = vand.u32 %v796, 4294901760
      %798 = vmatmul.mubr.f32.gmra.mrb[0].mxu0 %v797
      %v799 = vpop.f32.mrb[0].mxu0
      %v800 = vadd.f32 %v440, %v799
      %v801 = vpop.f32.mrb[0].mxu0
      %802 = vmatprep.mubr.f32.mxu0 0.0
      %v803 = vand.u32 %v590, 4294901760
      %v804 = vsub.f32 %v590, %v803
      %v805 = vand.u32 %v804, 4294901760
      %v806 = vsub.f32 %v804, %v805
      %v807 = vand.u32 %v806, 4294901760
      %808 = vmatmul.mubr.f32.gmra.mrb[0].mxu0 %v807
      %v809 = vpop.f32.mrb[0].mxu0
      %v810 = vadd.f32 %v445, %v809
      %v811 = vpop.f32.mrb[0].mxu0
      %812 = vmatprep.mubr.f32.mxu0 0.0
      %v813 = vand.u32 %v593, 4294901760
      %v814 = vsub.f32 %v593, %v813
      %v815 = vand.u32 %v814, 4294901760
      %v816 = vsub.f32 %v814, %v815
      %v817 = vand.u32 %v816, 4294901760
      %818 = vmatmul.mubr.f32.gmra.mrb[0].mxu0 %v817
      %v819 = vpop.f32.mrb[0].mxu0
      %v820 = vadd.f32 %v450, %v819
      %v821 = vpop.f32.mrb[0].mxu0
      %822 = vmatprep.mubr.f32.mxu0 0.0
      %v823 = vand.u32 %v596, 4294901760
      %v824 = vsub.f32 %v596, %v823
      %v825 = vand.u32 %v824, 4294901760
      %v826 = vsub.f32 %v824, %v825
      %v827 = vand.u32 %v826, 4294901760
      %828 = vmatmul.mubr.f32.gmra.mrb[0].mxu0 %v827
      %v829 = vpop.f32.mrb[0].mxu0
      %v830 = vadd.f32 %v455, %v829
      %v831 = vpop.f32.mrb[0].mxu0
      %832 = vmatprep.mubr.f32.mxu0 0.0
      %v833 = vand.u32 %v599, 4294901760
      %v834 = vsub.f32 %v599, %v833
      %v835 = vand.u32 %v834, 4294901760
      %v836 = vsub.f32 %v834, %v835
      %v837 = vand.u32 %v836, 4294901760
      %838 = vmatmul.mubr.f32.gmra.mrb[0].mxu0 %v837
      %v839 = vpop.f32.mrb[0].mxu0
      %v840 = vadd.f32 %v460, %v839
      %v841 = vpop.f32.mrb[0].mxu0
      %842 = vmatprep.mubr.f32.mxu0 0.0
      %v843 = vand.u32 %v602, 4294901760
      %v844 = vsub.f32 %v602, %v843
      %v845 = vand.u32 %v844, 4294901760
      %v846 = vsub.f32 %v844, %v845
      %v847 = vand.u32 %v846, 4294901760
      %848 = vmatmul.mubr.f32.gmra.mrb[0].mxu0 %v847
      %v849 = vpop.f32.mrb[0].mxu0
      %v850 = vadd.f32 %v465, %v849
      %v851 = vpop.f32.mrb[0].mxu0
      %852 = vmatprep.mubr.f32.mxu0 0.0
      %v853 = vand.u32 %v605, 4294901760
      %v854 = vsub.f32 %v605, %v853
      %v855 = vand.u32 %v854, 4294901760
      %v856 = vsub.f32 %v854, %v855
      %v857 = vand.u32 %v856, 4294901760
      %858 = vmatmul.mubr.f32.gmra.mrb[0].mxu0 %v857
      %v859 = vpop.f32.mrb[0].mxu0
      %v860 = vadd.f32 %v470, %v859
      %v861 = vpop.f32.mrb[0].mxu0
      %862 = vmatprep.mubr.f32.mxu0 0.0
      %v863 = vand.u32 %v608, 4294901760
      %v864 = vsub.f32 %v608, %v863
      %v865 = vand.u32 %v864, 4294901760
      %v866 = vsub.f32 %v864, %v865
      %v867 = vand.u32 %v866, 4294901760
      %868 = vmatmul.mubr.f32.gmra.mrb[0].mxu0 %v867
      %v869 = vpop.f32.mrb[0].mxu0
      %v870 = vadd.f32 %v475, %v869
      %v871 = vpop.f32.mrb[0].mxu0
      %872 = vmatprep.mubr.f32.mxu0 0.0
      %v873 = vand.u32 %v611, 4294901760
      %v874 = vsub.f32 %v611, %v873
      %v875 = vand.u32 %v874, 4294901760
      %v876 = vsub.f32 %v874, %v875
      %v877 = vand.u32 %v876, 4294901760
      %878 = vmatmul.mubr.f32.gmra.mrb[0].mxu0 %v877
      %v879 = vpop.f32.mrb[0].mxu0
      %v880 = vadd.f32 %v480, %v879
      %v881 = vpop.f32.mrb[0].mxu0
      %882 = vmatprep.mubr.f32.mxu0 0.0
      %v883 = vand.u32 %v614, 4294901760
      %v884 = vsub.f32 %v614, %v883
      %v885 = vand.u32 %v884, 4294901760
      %v886 = vsub.f32 %v884, %v885
      %v887 = vand.u32 %v886, 4294901760
      %888 = vmatmul.mubr.f32.gmra.mrb[0].mxu0 %v887
      %v889 = vpop.f32.mrb[0].mxu0
      %v890 = vadd.f32 %v485, %v889
      %v891 = vpop.f32.mrb[0].mxu0
      %892 = vmatprep.mubr.f32.mxu0 0.0
      %v893 = vand.u32 %v617, 4294901760
      %v894 = vsub.f32 %v617, %v893
      %v895 = vand.u32 %v894, 4294901760
      %v896 = vsub.f32 %v894, %v895
      %v897 = vand.u32 %v896, 4294901760
      %898 = vmatmul.mubr.f32.gmra.mrb[0].mxu0 %v897
      %v899 = vpop.f32.mrb[0].mxu0
      %v900 = vadd.f32 %v490, %v899
      %v901 = vpop.f32.mrb[0].mxu0
      %902 = vmatprep.mubr.f32.mxu0 0.0
      %v903 = vand.u32 %v620, 4294901760
      %v904 = vsub.f32 %v620, %v903
      %v905 = vand.u32 %v904, 4294901760
      %v906 = vsub.f32 %v904, %v905
      %v907 = vand.u32 %v906, 4294901760
      %908 = vmatmul.mubr.f32.gmra.mrb[0].mxu0 %v907
      %v909 = vpop.f32.mrb[0].mxu0
      %v910 = vadd.f32 %v495, %v909
      %v911 = vpop.f32.mrb[0].mxu0
      %912 = vmatprep.mubr.f32.mxu0 0.0
      %v913 = vand.u32 %v623, 4294901760
      %v914 = vsub.f32 %v623, %v913
      %v915 = vand.u32 %v914, 4294901760
      %v916 = vsub.f32 %v914, %v915
      %v917 = vand.u32 %v916, 4294901760
      %918 = vmatmul.mubr.f32.gmra.mrb[0].mxu0 %v917
      %v919 = vpop.f32.mrb[0].mxu0
      %v920 = vadd.f32 %v500, %v919
      %v921 = vpop.f32.mrb[0].mxu0
      %922 = vmatprep.mubr.f32.mxu0 0.0
      %v923 = vand.u32 %v626, 4294901760
      %v924 = vsub.f32 %v626, %v923
      %v925 = vand.u32 %v924, 4294901760
      %v926 = vsub.f32 %v924, %v925
      %v927 = vand.u32 %v926, 4294901760
      %928 = vmatmul.mubr.f32.gmra.mrb[0].mxu0 %v927
      %v929 = vpop.f32.mrb[0].mxu0
      %v930 = vadd.f32 %v505, %v929
      %v931 = vpop.f32.mrb[0].mxu0
      %932 = vmatprep.mubr.f32.mxu0 0.0
      %v933 = vand.u32 %v629, 4294901760
      %v934 = vsub.f32 %v629, %v933
      %v935 = vand.u32 %v934, 4294901760
      %v936 = vsub.f32 %v934, %v935
      %v937 = vand.u32 %v936, 4294901760
      %938 = vmatmul.mubr.f32.gmra.mrb[0].mxu0 %v937
      %v939 = vpop.f32.mrb[0].mxu0
      %v940 = vadd.f32 %v510, %v939
      %v941 = vpop.f32.mrb[0].mxu0
      %942 = vmatprep.mubr.f32.mxu0 0.0
      %v943 = vand.u32 %v632, 4294901760
      %v944 = vsub.f32 %v632, %v943
      %v945 = vand.u32 %v944, 4294901760
      %v946 = vsub.f32 %v944, %v945
      %v947 = vand.u32 %v946, 4294901760
      %948 = vmatmul.mubr.f32.gmra.mrb[0].mxu0 %v947
      %v949 = vpop.f32.mrb[0].mxu0
      %v950 = vadd.f32 %v515, %v949
      %v951 = vpop.f32.mrb[0].mxu0
      %952 = vmatprep.mubr.f32.mxu0 0.0
      %v953 = vand.u32 %v635, 4294901760
      %v954 = vsub.f32 %v635, %v953
      %v955 = vand.u32 %v954, 4294901760
      %v956 = vsub.f32 %v954, %v955
      %v957 = vand.u32 %v956, 4294901760
      %958 = vmatmul.mubr.f32.gmra.mrb[0].mxu0 %v957
      %v959 = vpop.f32.mrb[0].mxu0
      %v960 = vadd.f32 %v520, %v959
      %v961 = vpop.f32.mrb[0].mxu0
      %962 = vmatprep.mubr.f32.mxu0 0.0
      %v963 = vand.u32 %v638, 4294901760
      %v964 = vsub.f32 %v638, %v963
      %v965 = vand.u32 %v964, 4294901760
      %v966 = vsub.f32 %v964, %v965
      %v967 = vand.u32 %v966, 4294901760
      %968 = vmatmul.mubr.f32.gmra.mrb[0].mxu0 %v967
      %v969 = vpop.f32.mrb[0].mxu0
      %v970 = vadd.f32 %v525, %v969
      %v971 = vpop.f32.mrb[0].mxu0
      %972 = vmatprep.mubr.f32.mxu0 0.0
      %v973 = vand.u32 %v641, 4294901760
      %v974 = vsub.f32 %v641, %v973
      %v975 = vand.u32 %v974, 4294901760
      %v976 = vsub.f32 %v974, %v975
      %v977 = vand.u32 %v976, 4294901760
      %978 = vmatmul.mubr.f32.gmra.mrb[0].mxu0 %v977
      %v979 = vpop.f32.mrb[0].mxu0
      %v980 = vadd.f32 %v530, %v979
      %v981 = vpop.f32.mrb[0].mxu0
      %982 = vmatprep.mubr.f32.mxu0 0.0
      %v983 = vand.u32 %v644, 4294901760
      %v984 = vsub.f32 %v644, %v983
      %v985 = vand.u32 %v984, 4294901760
      %v986 = vsub.f32 %v984, %v985
      %v987 = vand.u32 %v986, 4294901760
      %988 = vmatmul.mubr.f32.gmra.mrb[0].mxu0 %v987
      %v989 = vpop.f32.mrb[0].mxu0
      %v990 = vadd.f32 %v535, %v989
      %v991 = vpop.f32.mrb[0].mxu0
      %992 = vmatprep.mubr.f32.mxu0 0.0
      %v993 = vand.u32 %v647, 4294901760
      %v994 = vsub.f32 %v647, %v993
      %v995 = vand.u32 %v994, 4294901760
      %v996 = vsub.f32 %v994, %v995
      %v997 = vand.u32 %v996, 4294901760
      %998 = vmatmul.mubr.f32.gmra.mrb[0].mxu0 %v997
      %v999 = vpop.f32.mrb[0].mxu0
      %v1000 = vadd.f32 %v540, %v999
      %v1001 = vpop.f32.mrb[0].mxu0
      %1002 = vmatprep.mubr.f32.mxu0 0.0
      %v1003 = vand.u32 %v650, 4294901760
      %v1004 = vsub.f32 %v650, %v1003
      %v1005 = vand.u32 %v1004, 4294901760
      %v1006 = vsub.f32 %v1004, %v1005
      %v1007 = vand.u32 %v1006, 4294901760
      %1008 = vmatmul.mubr.f32.gmra.mrb[0].mxu0 %v1007
      %v1009 = vpop.f32.mrb[0].mxu0
      %v1010 = vadd.f32 %v545, %v1009
      %v1011 = vpop.f32.mrb[0].mxu0
      %1012 = vmatprep.mubr.f32.mxu0 0.0
      %v1013 = vand.u32 %v653, 4294901760
      %v1014 = vsub.f32 %v653, %v1013
      %v1015 = vand.u32 %v1014, 4294901760
      %v1016 = vsub.f32 %v1014, %v1015
      %v1017 = vand.u32 %v1016, 4294901760
      %1018 = vmatmul.mubr.f32.gmra.mrb[0].mxu0 %v1017
      %v1019 = vpop.f32.mrb[0].mxu0
      %v1020 = vadd.f32 %v550, %v1019
      %v1021 = vpop.f32.mrb[0].mxu0
      %1022 = vmatprep.mubr.f32.mxu0 0.0
      %v1023 = vand.u32 %v656, 4294901760
      %v1024 = vsub.f32 %v656, %v1023
      %v1025 = vand.u32 %v1024, 4294901760
      %v1026 = vsub.f32 %v1024, %v1025
      %v1027 = vand.u32 %v1026, 4294901760
      %1028 = vmatmul.mubr.f32.gmra.mrb[0].mxu0 %v1027
      %v1029 = vpop.f32.mrb[0].mxu0
      %v1030 = vadd.f32 %v555, %v1029
      %v1031 = vpop.f32.mrb[0].mxu0
      %1032 = vmatprep.mubr.f32.mxu0 0.0
      %v1033 = vand.u32 %v659, 4294901760
      %v1034 = vsub.f32 %v659, %v1033
      %v1035 = vand.u32 %v1034, 4294901760
      %v1036 = vsub.f32 %v1034, %v1035
      %v1037 = vand.u32 %v1036, 4294901760
      %1038 = vmatmul.mubr.f32.gmra.mrb[0].mxu0 %v1037
      %v1039 = vpop.f32.mrb[0].mxu0
      %v1040 = vadd.f32 %v560, %v1039
      %v1041 = vpop.f32.mrb[0].mxu0
      %1042 = vmatprep.mubr.f32.mxu0 0.0
      %v1043 = vand.u32 %v662, 4294901760
      %v1044 = vsub.f32 %v662, %v1043
      %v1045 = vand.u32 %v1044, 4294901760
      %v1046 = vsub.f32 %v1044, %v1045
      %v1047 = vand.u32 %v1046, 4294901760
      %1048 = vmatmul.mubr.f32.gmra.mrb[0].mxu0 %v1047
      %v1049 = vpop.f32.mrb[0].mxu0
      %v1050 = vadd.f32 %v565, %v1049
      %v1051 = vpop.f32.mrb[0].mxu0
      %1052 = vdwg.mxu0
      %1053 = vmatprep.subr.mxu0 0.0
      %v1054 = vand.u32 %v338, 4294901760
      %v1055 = vsub.f32 %v338, %v1054
      %v1056 = vand.u32 %v1055, 4294901760
      %v1057 = vsub.f32 %v1055, %v1056
      %v1058 = vand.u32 %v1057, 4294901760
      %1059 = vmatpush1.msra.mxu0 %v1058
      %1060 = vmatprep.subr.mxu0 0.0
      %v1061 = vand.u32 %v339, 4294901760
      %v1062 = vsub.f32 %v339, %v1061
      %v1063 = vand.u32 %v1062, 4294901760
      %v1064 = vsub.f32 %v1062, %v1063
      %v1065 = vand.u32 %v1064, 4294901760
      %1066 = vmatpush1.msra.mxu0 %v1065
      %1067 = vmatprep.subr.mxu0 0.0
      %v1068 = vand.u32 %v340, 4294901760
      %v1069 = vsub.f32 %v340, %v1068
      %v1070 = vand.u32 %v1069, 4294901760
      %v1071 = vsub.f32 %v1069, %v1070
      %v1072 = vand.u32 %v1071, 4294901760
      %1073 = vmatpush1.msra.mxu0 %v1072
      %1074 = vmatprep.subr.mxu0 0.0
      %v1075 = vand.u32 %v341, 4294901760
      %v1076 = vsub.f32 %v341, %v1075
      %v1077 = vand.u32 %v1076, 4294901760
      %v1078 = vsub.f32 %v1076, %v1077
      %v1079 = vand.u32 %v1078, 4294901760
      %1080 = vmatpush1.msra.mxu0 %v1079
      %1081 = vmatprep.subr.mxu0 0.0
      %1082 = vmatpush1.msra.mxu0 0.0
      %1083 = vmatprep.subr.mxu0 0.0
      %1084 = vmatpush1.msra.mxu0 0.0
      %1085 = vmatprep.subr.mxu0 0.0
      %1086 = vmatpush1.msra.mxu0 0.0
      %1087 = vmatprep.subr.mxu0 0.0
      %1088 = vmatpush1.msra.mxu0 0.0
      %1089 = vmatprep.subr.mxu0 0.0
      %1090 = vmatpush1.msra.mxu0 0.0
      %1091 = vmatprep.subr.mxu0 0.0
      %1092 = vmatpush1.msra.mxu0 0.0
      %1093 = vmatprep.subr.mxu0 0.0
      %1094 = vmatpush1.msra.mxu0 0.0
      %1095 = vmatprep.subr.mxu0 0.0
      %1096 = vmatpush1.msra.mxu0 0.0
      %1097 = vmatprep.subr.mxu0 0.0
      %1098 = vmatpush1.msra.mxu0 0.0
      %1099 = vmatprep.subr.mxu0 0.0
      %1100 = vmatpush1.msra.mxu0 0.0
      %1101 = vmatprep.subr.mxu0 0.0
      %1102 = vmatpush1.msra.mxu0 0.0
      %1103 = vmatprep.subr.mxu0 0.0
      %1104 = vmatpush1.msra.mxu0 0.0
      %1105 = vmatprep.subr.mxu0 0.0
      %1106 = vmatpush1.msra.mxu0 0.0
      %1107 = vmatprep.subr.mxu0 0.0
      %1108 = vmatpush1.msra.mxu0 0.0
      %1109 = vmatprep.subr.mxu0 0.0
      %1110 = vmatpush1.msra.mxu0 0.0
      %1111 = vmatprep.subr.mxu0 0.0
      %1112 = vmatpush1.msra.mxu0 0.0
      %1113 = vmatprep.subr.mxu0 0.0
      %1114 = vmatpush1.msra.mxu0 0.0
      %1115 = vmatprep.subr.mxu0 0.0
      %1116 = vmatpush1.msra.mxu0 0.0
      %1117 = vmatprep.subr.mxu0 0.0
      %1118 = vmatpush1.msra.mxu0 0.0
      %1119 = vmatprep.subr.mxu0 0.0
      %1120 = vmatpush1.msra.mxu0 0.0
      %1121 = vmatprep.subr.mxu0 0.0
      %1122 = vmatpush1.msra.mxu0 0.0
      %1123 = vmatprep.subr.mxu0 0.0
      %1124 = vmatpush1.msra.mxu0 0.0
      %1125 = vmatprep.subr.mxu0 0.0
      %1126 = vmatpush1.msra.mxu0 0.0
      %1127 = vmatprep.subr.mxu0 0.0
      %1128 = vmatpush1.msra.mxu0 0.0
      %1129 = vmatprep.subr.mxu0 0.0
      %1130 = vmatpush1.msra.mxu0 0.0
      %1131 = vmatprep.subr.mxu0 0.0
      %1132 = vmatpush1.msra.mxu0 0.0
      %1133 = vmatprep.subr.mxu0 0.0
      %1134 = vmatpush1.msra.mxu0 0.0
      %1135 = vmatprep.subr.mxu0 0.0
      %1136 = vmatpush1.msra.mxu0 0.0
      %1137 = vmatprep.mubr.f32.mxu0 0.0
      %v1138 = vand.u32 %v569, 4294901760
      %1139 = vmatmul.mubr.f32.gmra.mrb[0].mxu0 %v1138
      %v1140 = vpop.f32.mrb[0].mxu0
      %v1141 = vadd.f32 %v740, %v1140
      %v1142 = vpop.f32.mrb[0].mxu0
      %1143 = vmatprep.mubr.f32.mxu0 0.0
      %v1144 = vand.u32 %v572, 4294901760
      %1145 = vmatmul.mubr.f32.gmra.mrb[0].mxu0 %v1144
      %v1146 = vpop.f32.mrb[0].mxu0
      %v1147 = vadd.f32 %v750, %v1146
      %v1148 = vpop.f32.mrb[0].mxu0
      %1149 = vmatprep.mubr.f32.mxu0 0.0
      %v1150 = vand.u32 %v575, 4294901760
      %1151 = vmatmul.mubr.f32.gmra.mrb[0].mxu0 %v1150
      %v1152 = vpop.f32.mrb[0].mxu0
      %v1153 = vadd.f32 %v760, %v1152
      %v1154 = vpop.f32.mrb[0].mxu0
      %1155 = vmatprep.mubr.f32.mxu0 0.0
      %v1156 = vand.u32 %v578, 4294901760
      %1157 = vmatmul.mubr.f32.gmra.mrb[0].mxu0 %v1156
      %v1158 = vpop.f32.mrb[0].mxu0
      %v1159 = vadd.f32 %v770, %v1158
      %v1160 = vpop.f32.mrb[0].mxu0
      %1161 = vmatprep.mubr.f32.mxu0 0.0
      %v1162 = vand.u32 %v581, 4294901760
      %1163 = vmatmul.mubr.f32.gmra.mrb[0].mxu0 %v1162
      %v1164 = vpop.f32.mrb[0].mxu0
      %v1165 = vadd.f32 %v780, %v1164
      %v1166 = vpop.f32.mrb[0].mxu0
      %1167 = vmatprep.mubr.f32.mxu0 0.0
      %v1168 = vand.u32 %v584, 4294901760
      %1169 = vmatmul.mubr.f32.gmra.mrb[0].mxu0 %v1168
      %v1170 = vpop.f32.mrb[0].mxu0
      %v1171 = vadd.f32 %v790, %v1170
      %v1172 = vpop.f32.mrb[0].mxu0
      %1173 = vmatprep.mubr.f32.mxu0 0.0
      %v1174 = vand.u32 %v587, 4294901760
      %1175 = vmatmul.mubr.f32.gmra.mrb[0].mxu0 %v1174
      %v1176 = vpop.f32.mrb[0].mxu0
      %v1177 = vadd.f32 %v800, %v1176
      %v1178 = vpop.f32.mrb[0].mxu0
      %1179 = vmatprep.mubr.f32.mxu0 0.0
      %v1180 = vand.u32 %v590, 4294901760
      %1181 = vmatmul.mubr.f32.gmra.mrb[0].mxu0 %v1180
      %v1182 = vpop.f32.mrb[0].mxu0
      %v1183 = vadd.f32 %v810, %v1182
      %v1184 = vpop.f32.mrb[0].mxu0
      %1185 = vmatprep.mubr.f32.mxu0 0.0
      %v1186 = vand.u32 %v593, 4294901760
      %1187 = vmatmul.mubr.f32.gmra.mrb[0].mxu0 %v1186
      %v1188 = vpop.f32.mrb[0].mxu0
      %v1189 = vadd.f32 %v820, %v1188
      %v1190 = vpop.f32.mrb[0].mxu0
      %1191 = vmatprep.mubr.f32.mxu0 0.0
      %v1192 = vand.u32 %v596, 4294901760
      %1193 = vmatmul.mubr.f32.gmra.mrb[0].mxu0 %v1192
      %v1194 = vpop.f32.mrb[0].mxu0
      %v1195 = vadd.f32 %v830, %v1194
      %v1196 = vpop.f32.mrb[0].mxu0
      %1197 = vmatprep.mubr.f32.mxu0 0.0
      %v1198 = vand.u32 %v599, 4294901760
      %1199 = vmatmul.mubr.f32.gmra.mrb[0].mxu0 %v1198
      %v1200 = vpop.f32.mrb[0].mxu0
      %v1201 = vadd.f32 %v840, %v1200
      %v1202 = vpop.f32.mrb[0].mxu0
      %1203 = vmatprep.mubr.f32.mxu0 0.0
      %v1204 = vand.u32 %v602, 4294901760
      %1205 = vmatmul.mubr.f32.gmra.mrb[0].mxu0 %v1204
      %v1206 = vpop.f32.mrb[0].mxu0
      %v1207 = vadd.f32 %v850, %v1206
      %v1208 = vpop.f32.mrb[0].mxu0
      %1209 = vmatprep.mubr.f32.mxu0 0.0
      %v1210 = vand.u32 %v605, 4294901760
      %1211 = vmatmul.mubr.f32.gmra.mrb[0].mxu0 %v1210
      %v1212 = vpop.f32.mrb[0].mxu0
      %v1213 = vadd.f32 %v860, %v1212
      %v1214 = vpop.f32.mrb[0].mxu0
      %1215 = vmatprep.mubr.f32.mxu0 0.0
      %v1216 = vand.u32 %v608, 4294901760
      %1217 = vmatmul.mubr.f32.gmra.mrb[0].mxu0 %v1216
      %v1218 = vpop.f32.mrb[0].mxu0
      %v1219 = vadd.f32 %v870, %v1218
      %v1220 = vpop.f32.mrb[0].mxu0
      %1221 = vmatprep.mubr.f32.mxu0 0.0
      %v1222 = vand.u32 %v611, 4294901760
      %1223 = vmatmul.mubr.f32.gmra.mrb[0].mxu0 %v1222
      %v1224 = vpop.f32.mrb[0].mxu0
      %v1225 = vadd.f32 %v880, %v1224
      %v1226 = vpop.f32.mrb[0].mxu0
      %1227 = vmatprep.mubr.f32.mxu0 0.0
      %v1228 = vand.u32 %v614, 4294901760
      %1229 = vmatmul.mubr.f32.gmra.mrb[0].mxu0 %v1228
      %v1230 = vpop.f32.mrb[0].mxu0
      %v1231 = vadd.f32 %v890, %v1230
      %v1232 = vpop.f32.mrb[0].mxu0
      %1233 = vmatprep.mubr.f32.mxu0 0.0
      %v1234 = vand.u32 %v617, 4294901760
      %1235 = vmatmul.mubr.f32.gmra.mrb[0].mxu0 %v1234
      %v1236 = vpop.f32.mrb[0].mxu0
      %v1237 = vadd.f32 %v900, %v1236
      %v1238 = vpop.f32.mrb[0].mxu0
      %1239 = vmatprep.mubr.f32.mxu0 0.0
      %v1240 = vand.u32 %v620, 4294901760
      %1241 = vmatmul.mubr.f32.gmra.mrb[0].mxu0 %v1240
      %v1242 = vpop.f32.mrb[0].mxu0
      %v1243 = vadd.f32 %v910, %v1242
      %v1244 = vpop.f32.mrb[0].mxu0
      %1245 = vmatprep.mubr.f32.mxu0 0.0
      %v1246 = vand.u32 %v623, 4294901760
      %1247 = vmatmul.mubr.f32.gmra.mrb[0].mxu0 %v1246
      %v1248 = vpop.f32.mrb[0].mxu0
      %v1249 = vadd.f32 %v920, %v1248
      %v1250 = vpop.f32.mrb[0].mxu0
      %1251 = vmatprep.mubr.f32.mxu0 0.0
      %v1252 = vand.u32 %v626, 4294901760
      %1253 = vmatmul.mubr.f32.gmra.mrb[0].mxu0 %v1252
      %v1254 = vpop.f32.mrb[0].mxu0
      %v1255 = vadd.f32 %v930, %v1254
      %v1256 = vpop.f32.mrb[0].mxu0
      %1257 = vmatprep.mubr.f32.mxu0 0.0
      %v1258 = vand.u32 %v629, 4294901760
      %1259 = vmatmul.mubr.f32.gmra.mrb[0].mxu0 %v1258
      %v1260 = vpop.f32.mrb[0].mxu0
      %v1261 = vadd.f32 %v940, %v1260
      %v1262 = vpop.f32.mrb[0].mxu0
      %1263 = vmatprep.mubr.f32.mxu0 0.0
      %v1264 = vand.u32 %v632, 4294901760
      %1265 = vmatmul.mubr.f32.gmra.mrb[0].mxu0 %v1264
      %v1266 = vpop.f32.mrb[0].mxu0
      %v1267 = vadd.f32 %v950, %v1266
      %v1268 = vpop.f32.mrb[0].mxu0
      %1269 = vmatprep.mubr.f32.mxu0 0.0
      %v1270 = vand.u32 %v635, 4294901760
      %1271 = vmatmul.mubr.f32.gmra.mrb[0].mxu0 %v1270
      %v1272 = vpop.f32.mrb[0].mxu0
      %v1273 = vadd.f32 %v960, %v1272
      %v1274 = vpop.f32.mrb[0].mxu0
      %1275 = vmatprep.mubr.f32.mxu0 0.0
      %v1276 = vand.u32 %v638, 4294901760
      %1277 = vmatmul.mubr.f32.gmra.mrb[0].mxu0 %v1276
      %v1278 = vpop.f32.mrb[0].mxu0
      %v1279 = vadd.f32 %v970, %v1278
      %v1280 = vpop.f32.mrb[0].mxu0
      %1281 = vmatprep.mubr.f32.mxu0 0.0
      %v1282 = vand.u32 %v641, 4294901760
      %1283 = vmatmul.mubr.f32.gmra.mrb[0].mxu0 %v1282
      %v1284 = vpop.f32.mrb[0].mxu0
      %v1285 = vadd.f32 %v980, %v1284
      %v1286 = vpop.f32.mrb[0].mxu0
      %1287 = vmatprep.mubr.f32.mxu0 0.0
      %v1288 = vand.u32 %v644, 4294901760
      %1289 = vmatmul.mubr.f32.gmra.mrb[0].mxu0 %v1288
      %v1290 = vpop.f32.mrb[0].mxu0
      %v1291 = vadd.f32 %v990, %v1290
      %v1292 = vpop.f32.mrb[0].mxu0
      %1293 = vmatprep.mubr.f32.mxu0 0.0
      %v1294 = vand.u32 %v647, 4294901760
      %1295 = vmatmul.mubr.f32.gmra.mrb[0].mxu0 %v1294
      %v1296 = vpop.f32.mrb[0].mxu0
      %v1297 = vadd.f32 %v1000, %v1296
      %v1298 = vpop.f32.mrb[0].mxu0
      %1299 = vmatprep.mubr.f32.mxu0 0.0
      %v1300 = vand.u32 %v650, 4294901760
      %1301 = vmatmul.mubr.f32.gmra.mrb[0].mxu0 %v1300
      %v1302 = vpop.f32.mrb[0].mxu0
      %v1303 = vadd.f32 %v1010, %v1302
      %v1304 = vpop.f32.mrb[0].mxu0
      %1305 = vmatprep.mubr.f32.mxu0 0.0
      %v1306 = vand.u32 %v653, 4294901760
      %1307 = vmatmul.mubr.f32.gmra.mrb[0].mxu0 %v1306
      %v1308 = vpop.f32.mrb[0].mxu0
      %v1309 = vadd.f32 %v1020, %v1308
      %v1310 = vpop.f32.mrb[0].mxu0
      %1311 = vmatprep.mubr.f32.mxu0 0.0
      %v1312 = vand.u32 %v656, 4294901760
      %1313 = vmatmul.mubr.f32.gmra.mrb[0].mxu0 %v1312
      %v1314 = vpop.f32.mrb[0].mxu0
      %v1315 = vadd.f32 %v1030, %v1314
      %v1316 = vpop.f32.mrb[0].mxu0
      %1317 = vmatprep.mubr.f32.mxu0 0.0
      %v1318 = vand.u32 %v659, 4294901760
      %1319 = vmatmul.mubr.f32.gmra.mrb[0].mxu0 %v1318
      %v1320 = vpop.f32.mrb[0].mxu0
      %v1321 = vadd.f32 %v1040, %v1320
      %v1322 = vpop.f32.mrb[0].mxu0
      %1323 = vmatprep.mubr.f32.mxu0 0.0
      %v1324 = vand.u32 %v662, 4294901760
      %1325 = vmatmul.mubr.f32.gmra.mrb[0].mxu0 %v1324
      %v1326 = vpop.f32.mrb[0].mxu0
      %v1327 = vadd.f32 %v1050, %v1326
      %v1328 = vpop.f32.mrb[0].mxu0
      %1329 = vdwg.mxu0
      %1330 = vmatprep.subr.mxu0 0.0
      %v1331 = vand.u32 %v338, 4294901760
      %v1332 = vsub.f32 %v338, %v1331
      %1333 = vmatpush1.msra.mxu0 %v1332
      %1334 = vmatprep.subr.mxu0 0.0
      %v1335 = vand.u32 %v339, 4294901760
      %v1336 = vsub.f32 %v339, %v1335
      %1337 = vmatpush1.msra.mxu0 %v1336
      %1338 = vmatprep.subr.mxu0 0.0
      %v1339 = vand.u32 %v340, 4294901760
      %v1340 = vsub.f32 %v340, %v1339
      %1341 = vmatpush1.msra.mxu0 %v1340
      %1342 = vmatprep.subr.mxu0 0.0
      %v1343 = vand.u32 %v341, 4294901760
      %v1344 = vsub.f32 %v341, %v1343
      %1345 = vmatpush1.msra.mxu0 %v1344
      %1346 = vmatprep.subr.mxu0 0.0
      %1347 = vmatpush1.msra.mxu0 0.0
      %1348 = vmatprep.subr.mxu0 0.0
      %1349 = vmatpush1.msra.mxu0 0.0
      %1350 = vmatprep.subr.mxu0 0.0
      %1351 = vmatpush1.msra.mxu0 0.0
      %1352 = vmatprep.subr.mxu0 0.0
      %1353 = vmatpush1.msra.mxu0 0.0
      %1354 = vmatprep.subr.mxu0 0.0
      %1355 = vmatpush1.msra.mxu0 0.0
      %1356 = vmatprep.subr.mxu0 0.0
      %1357 = vmatpush1.msra.mxu0 0.0
      %1358 = vmatprep.subr.mxu0 0.0
      %1359 = vmatpush1.msra.mxu0 0.0
      %1360 = vmatprep.subr.mxu0 0.0
      %1361 = vmatpush1.msra.mxu0 0.0
      %1362 = vmatprep.subr.mxu0 0.0
      %1363 = vmatpush1.msra.mxu0 0.0
      %1364 = vmatprep.subr.mxu0 0.0
      %1365 = vmatpush1.msra.mxu0 0.0
      %1366 = vmatprep.subr.mxu0 0.0
      %1367 = vmatpush1.msra.mxu0 0.0
      %1368 = vmatprep.subr.mxu0 0.0
      %1369 = vmatpush1.msra.mxu0 0.0
      %1370 = vmatprep.subr.mxu0 0.0
      %1371 = vmatpush1.msra.mxu0 0.0
      %1372 = vmatprep.subr.mxu0 0.0
      %1373 = vmatpush1.msra.mxu0 0.0
      %1374 = vmatprep.subr.mxu0 0.0
      %1375 = vmatpush1.msra.mxu0 0.0
      %1376 = vmatprep.subr.mxu0 0.0
      %1377 = vmatpush1.msra.mxu0 0.0
      %1378 = vmatprep.subr.mxu0 0.0
      %1379 = vmatpush1.msra.mxu0 0.0
      %1380 = vmatprep.subr.mxu0 0.0
      %1381 = vmatpush1.msra.mxu0 0.0
      %1382 = vmatprep.subr.mxu0 0.0
      %1383 = vmatpush1.msra.mxu0 0.0
      %1384 = vmatprep.subr.mxu0 0.0
      %1385 = vmatpush1.msra.mxu0 0.0
      %1386 = vmatprep.subr.mxu0 0.0
      %1387 = vmatpush1.msra.mxu0 0.0
      %1388 = vmatprep.subr.mxu0 0.0
      %1389 = vmatpush1.msra.mxu0 0.0
      %1390 = vmatprep.subr.mxu0 0.0
      %1391 = vmatpush1.msra.mxu0 0.0
      %1392 = vmatprep.subr.mxu0 0.0
      %1393 = vmatpush1.msra.mxu0 0.0
      %1394 = vmatprep.subr.mxu0 0.0
      %1395 = vmatpush1.msra.mxu0 0.0
      %1396 = vmatprep.subr.mxu0 0.0
      %1397 = vmatpush1.msra.mxu0 0.0
      %1398 = vmatprep.subr.mxu0 0.0
      %1399 = vmatpush1.msra.mxu0 0.0
      %1400 = vmatprep.subr.mxu0 0.0
      %1401 = vmatpush1.msra.mxu0 0.0
      %1402 = vmatprep.mubr.f32.mxu0 0.0
      %v1403 = vand.u32 %v569, 4294901760
      %v1404 = vsub.f32 %v569, %v1403
      %1405 = vmatmul.mubr.f32.gmra.mrb[0].mxu0 %v1404
      %v1406 = vpop.f32.mrb[0].mxu0
      %v1407 = vadd.f32 %v1141, %v1406
      %v1408 = vpop.f32.mrb[0].mxu0
      %1409 = vmatprep.mubr.f32.mxu0 0.0
      %v1410 = vand.u32 %v572, 4294901760
      %v1411 = vsub.f32 %v572, %v1410
      %1412 = vmatmul.mubr.f32.gmra.mrb[0].mxu0 %v1411
      %v1413 = vpop.f32.mrb[0].mxu0
      %v1414 = vadd.f32 %v1147, %v1413
      %v1415 = vpop.f32.mrb[0].mxu0
      %1416 = vmatprep.mubr.f32.mxu0 0.0
      %v1417 = vand.u32 %v575, 4294901760
      %v1418 = vsub.f32 %v575, %v1417
      %1419 = vmatmul.mubr.f32.gmra.mrb[0].mxu0 %v1418
      %v1420 = vpop.f32.mrb[0].mxu0
      %v1421 = vadd.f32 %v1153, %v1420
      %v1422 = vpop.f32.mrb[0].mxu0
      %1423 = vmatprep.mubr.f32.mxu0 0.0
      %v1424 = vand.u32 %v578, 4294901760
      %v1425 = vsub.f32 %v578, %v1424
      %1426 = vmatmul.mubr.f32.gmra.mrb[0].mxu0 %v1425
      %v1427 = vpop.f32.mrb[0].mxu0
      %v1428 = vadd.f32 %v1159, %v1427
      %v1429 = vpop.f32.mrb[0].mxu0
      %1430 = vmatprep.mubr.f32.mxu0 0.0
      %v1431 = vand.u32 %v581, 4294901760
      %v1432 = vsub.f32 %v581, %v1431
      %1433 = vmatmul.mubr.f32.gmra.mrb[0].mxu0 %v1432
      %v1434 = vpop.f32.mrb[0].mxu0
      %v1435 = vadd.f32 %v1165, %v1434
      %v1436 = vpop.f32.mrb[0].mxu0
      %1437 = vmatprep.mubr.f32.mxu0 0.0
      %v1438 = vand.u32 %v584, 4294901760
      %v1439 = vsub.f32 %v584, %v1438
      %1440 = vmatmul.mubr.f32.gmra.mrb[0].mxu0 %v1439
      %v1441 = vpop.f32.mrb[0].mxu0
      %v1442 = vadd.f32 %v1171, %v1441
      %v1443 = vpop.f32.mrb[0].mxu0
      %1444 = vmatprep.mubr.f32.mxu0 0.0
      %v1445 = vand.u32 %v587, 4294901760
      %v1446 = vsub.f32 %v587, %v1445
      %1447 = vmatmul.mubr.f32.gmra.mrb[0].mxu0 %v1446
      %v1448 = vpop.f32.mrb[0].mxu0
      %v1449 = vadd.f32 %v1177, %v1448
      %v1450 = vpop.f32.mrb[0].mxu0
      %1451 = vmatprep.mubr.f32.mxu0 0.0
      %v1452 = vand.u32 %v590, 4294901760
      %v1453 = vsub.f32 %v590, %v1452
      %1454 = vmatmul.mubr.f32.gmra.mrb[0].mxu0 %v1453
      %v1455 = vpop.f32.mrb[0].mxu0
      %v1456 = vadd.f32 %v1183, %v1455
      %v1457 = vpop.f32.mrb[0].mxu0
      %1458 = vmatprep.mubr.f32.mxu0 0.0
      %v1459 = vand.u32 %v593, 4294901760
      %v1460 = vsub.f32 %v593, %v1459
      %1461 = vmatmul.mubr.f32.gmra.mrb[0].mxu0 %v1460
      %v1462 = vpop.f32.mrb[0].mxu0
      %v1463 = vadd.f32 %v1189, %v1462
      %v1464 = vpop.f32.mrb[0].mxu0
      %1465 = vmatprep.mubr.f32.mxu0 0.0
      %v1466 = vand.u32 %v596, 4294901760
      %v1467 = vsub.f32 %v596, %v1466
      %1468 = vmatmul.mubr.f32.gmra.mrb[0].mxu0 %v1467
      %v1469 = vpop.f32.mrb[0].mxu0
      %v1470 = vadd.f32 %v1195, %v1469
      %v1471 = vpop.f32.mrb[0].mxu0
      %1472 = vmatprep.mubr.f32.mxu0 0.0
      %v1473 = vand.u32 %v599, 4294901760
      %v1474 = vsub.f32 %v599, %v1473
      %1475 = vmatmul.mubr.f32.gmra.mrb[0].mxu0 %v1474
      %v1476 = vpop.f32.mrb[0].mxu0
      %v1477 = vadd.f32 %v1201, %v1476
      %v1478 = vpop.f32.mrb[0].mxu0
      %1479 = vmatprep.mubr.f32.mxu0 0.0
      %v1480 = vand.u32 %v602, 4294901760
      %v1481 = vsub.f32 %v602, %v1480
      %1482 = vmatmul.mubr.f32.gmra.mrb[0].mxu0 %v1481
      %v1483 = vpop.f32.mrb[0].mxu0
      %v1484 = vadd.f32 %v1207, %v1483
      %v1485 = vpop.f32.mrb[0].mxu0
      %1486 = vmatprep.mubr.f32.mxu0 0.0
      %v1487 = vand.u32 %v605, 4294901760
      %v1488 = vsub.f32 %v605, %v1487
      %1489 = vmatmul.mubr.f32.gmra.mrb[0].mxu0 %v1488
      %v1490 = vpop.f32.mrb[0].mxu0
      %v1491 = vadd.f32 %v1213, %v1490
      %v1492 = vpop.f32.mrb[0].mxu0
      %1493 = vmatprep.mubr.f32.mxu0 0.0
      %v1494 = vand.u32 %v608, 4294901760
      %v1495 = vsub.f32 %v608, %v1494
      %1496 = vmatmul.mubr.f32.gmra.mrb[0].mxu0 %v1495
      %v1497 = vpop.f32.mrb[0].mxu0
      %v1498 = vadd.f32 %v1219, %v1497
      %v1499 = vpop.f32.mrb[0].mxu0
      %1500 = vmatprep.mubr.f32.mxu0 0.0
      %v1501 = vand.u32 %v611, 4294901760
      %v1502 = vsub.f32 %v611, %v1501
      %1503 = vmatmul.mubr.f32.gmra.mrb[0].mxu0 %v1502
      %v1504 = vpop.f32.mrb[0].mxu0
      %v1505 = vadd.f32 %v1225, %v1504
      %v1506 = vpop.f32.mrb[0].mxu0
      %1507 = vmatprep.mubr.f32.mxu0 0.0
      %v1508 = vand.u32 %v614, 4294901760
      %v1509 = vsub.f32 %v614, %v1508
      %1510 = vmatmul.mubr.f32.gmra.mrb[0].mxu0 %v1509
      %v1511 = vpop.f32.mrb[0].mxu0
      %v1512 = vadd.f32 %v1231, %v1511
      %v1513 = vpop.f32.mrb[0].mxu0
      %1514 = vmatprep.mubr.f32.mxu0 0.0
      %v1515 = vand.u32 %v617, 4294901760
      %v1516 = vsub.f32 %v617, %v1515
      %1517 = vmatmul.mubr.f32.gmra.mrb[0].mxu0 %v1516
      %v1518 = vpop.f32.mrb[0].mxu0
      %v1519 = vadd.f32 %v1237, %v1518
      %v1520 = vpop.f32.mrb[0].mxu0
      %1521 = vmatprep.mubr.f32.mxu0 0.0
      %v1522 = vand.u32 %v620, 4294901760
      %v1523 = vsub.f32 %v620, %v1522
      %1524 = vmatmul.mubr.f32.gmra.mrb[0].mxu0 %v1523
      %v1525 = vpop.f32.mrb[0].mxu0
      %v1526 = vadd.f32 %v1243, %v1525
      %v1527 = vpop.f32.mrb[0].mxu0
      %1528 = vmatprep.mubr.f32.mxu0 0.0
      %v1529 = vand.u32 %v623, 4294901760
      %v1530 = vsub.f32 %v623, %v1529
      %1531 = vmatmul.mubr.f32.gmra.mrb[0].mxu0 %v1530
      %v1532 = vpop.f32.mrb[0].mxu0
      %v1533 = vadd.f32 %v1249, %v1532
      %v1534 = vpop.f32.mrb[0].mxu0
      %1535 = vmatprep.mubr.f32.mxu0 0.0
      %v1536 = vand.u32 %v626, 4294901760
      %v1537 = vsub.f32 %v626, %v1536
      %1538 = vmatmul.mubr.f32.gmra.mrb[0].mxu0 %v1537
      %v1539 = vpop.f32.mrb[0].mxu0
      %v1540 = vadd.f32 %v1255, %v1539
      %v1541 = vpop.f32.mrb[0].mxu0
      %1542 = vmatprep.mubr.f32.mxu0 0.0
      %v1543 = vand.u32 %v629, 4294901760
      %v1544 = vsub.f32 %v629, %v1543
      %1545 = vmatmul.mubr.f32.gmra.mrb[0].mxu0 %v1544
      %v1546 = vpop.f32.mrb[0].mxu0
      %v1547 = vadd.f32 %v1261, %v1546
      %v1548 = vpop.f32.mrb[0].mxu0
      %1549 = vmatprep.mubr.f32.mxu0 0.0
      %v1550 = vand.u32 %v632, 4294901760
      %v1551 = vsub.f32 %v632, %v1550
      %1552 = vmatmul.mubr.f32.gmra.mrb[0].mxu0 %v1551
      %v1553 = vpop.f32.mrb[0].mxu0
      %v1554 = vadd.f32 %v1267, %v1553
      %v1555 = vpop.f32.mrb[0].mxu0
      %1556 = vmatprep.mubr.f32.mxu0 0.0
      %v1557 = vand.u32 %v635, 4294901760
      %v1558 = vsub.f32 %v635, %v1557
      %1559 = vmatmul.mubr.f32.gmra.mrb[0].mxu0 %v1558
      %v1560 = vpop.f32.mrb[0].mxu0
      %v1561 = vadd.f32 %v1273, %v1560
      %v1562 = vpop.f32.mrb[0].mxu0
      %1563 = vmatprep.mubr.f32.mxu0 0.0
      %v1564 = vand.u32 %v638, 4294901760
      %v1565 = vsub.f32 %v638, %v1564
      %1566 = vmatmul.mubr.f32.gmra.mrb[0].mxu0 %v1565
      %v1567 = vpop.f32.mrb[0].mxu0
      %v1568 = vadd.f32 %v1279, %v1567
      %v1569 = vpop.f32.mrb[0].mxu0
      %1570 = vmatprep.mubr.f32.mxu0 0.0
      %v1571 = vand.u32 %v641, 4294901760
      %v1572 = vsub.f32 %v641, %v1571
      %1573 = vmatmul.mubr.f32.gmra.mrb[0].mxu0 %v1572
      %v1574 = vpop.f32.mrb[0].mxu0
      %v1575 = vadd.f32 %v1285, %v1574
      %v1576 = vpop.f32.mrb[0].mxu0
      %1577 = vmatprep.mubr.f32.mxu0 0.0
      %v1578 = vand.u32 %v644, 4294901760
      %v1579 = vsub.f32 %v644, %v1578
      %1580 = vmatmul.mubr.f32.gmra.mrb[0].mxu0 %v1579
      %v1581 = vpop.f32.mrb[0].mxu0
      %v1582 = vadd.f32 %v1291, %v1581
      %v1583 = vpop.f32.mrb[0].mxu0
      %1584 = vmatprep.mubr.f32.mxu0 0.0
      %v1585 = vand.u32 %v647, 4294901760
      %v1586 = vsub.f32 %v647, %v1585
      %1587 = vmatmul.mubr.f32.gmra.mrb[0].mxu0 %v1586
      %v1588 = vpop.f32.mrb[0].mxu0
      %v1589 = vadd.f32 %v1297, %v1588
      %v1590 = vpop.f32.mrb[0].mxu0
      %1591 = vmatprep.mubr.f32.mxu0 0.0
      %v1592 = vand.u32 %v650, 4294901760
      %v1593 = vsub.f32 %v650, %v1592
      %1594 = vmatmul.mubr.f32.gmra.mrb[0].mxu0 %v1593
      %v1595 = vpop.f32.mrb[0].mxu0
      %v1596 = vadd.f32 %v1303, %v1595
      %v1597 = vpop.f32.mrb[0].mxu0
      %1598 = vmatprep.mubr.f32.mxu0 0.0
      %v1599 = vand.u32 %v653, 4294901760
      %v1600 = vsub.f32 %v653, %v1599
      %1601 = vmatmul.mubr.f32.gmra.mrb[0].mxu0 %v1600
      %v1602 = vpop.f32.mrb[0].mxu0
      %v1603 = vadd.f32 %v1309, %v1602
      %v1604 = vpop.f32.mrb[0].mxu0
      %1605 = vmatprep.mubr.f32.mxu0 0.0
      %v1606 = vand.u32 %v656, 4294901760
      %v1607 = vsub.f32 %v656, %v1606
      %1608 = vmatmul.mubr.f32.gmra.mrb[0].mxu0 %v1607
      %v1609 = vpop.f32.mrb[0].mxu0
      %v1610 = vadd.f32 %v1315, %v1609
      %v1611 = vpop.f32.mrb[0].mxu0
      %1612 = vmatprep.mubr.f32.mxu0 0.0
      %v1613 = vand.u32 %v659, 4294901760
      %v1614 = vsub.f32 %v659, %v1613
      %1615 = vmatmul.mubr.f32.gmra.mrb[0].mxu0 %v1614
      %v1616 = vpop.f32.mrb[0].mxu0
      %v1617 = vadd.f32 %v1321, %v1616
      %v1618 = vpop.f32.mrb[0].mxu0
      %1619 = vmatprep.mubr.f32.mxu0 0.0
      %v1620 = vand.u32 %v662, 4294901760
      %v1621 = vsub.f32 %v662, %v1620
      %1622 = vmatmul.mubr.f32.gmra.mrb[0].mxu0 %v1621
      %v1623 = vpop.f32.mrb[0].mxu0
      %v1624 = vadd.f32 %v1327, %v1623
      %v1625 = vpop.f32.mrb[0].mxu0
      %1626 = vdwg.mxu0
      %1627 = vmatprep.subr.mxu0 0.0
      %v1628 = vand.u32 %v338, 4294901760
      %1629 = vmatpush1.msra.mxu0 %v1628
      %1630 = vmatprep.subr.mxu0 0.0
      %v1631 = vand.u32 %v339, 4294901760
      %1632 = vmatpush1.msra.mxu0 %v1631
      %1633 = vmatprep.subr.mxu0 0.0
      %v1634 = vand.u32 %v340, 4294901760
      %1635 = vmatpush1.msra.mxu0 %v1634
      %1636 = vmatprep.subr.mxu0 0.0
      %v1637 = vand.u32 %v341, 4294901760
      %1638 = vmatpush1.msra.mxu0 %v1637
      %1639 = vmatprep.subr.mxu0 0.0
      %1640 = vmatpush1.msra.mxu0 0.0
      %1641 = vmatprep.subr.mxu0 0.0
      %1642 = vmatpush1.msra.mxu0 0.0
      %1643 = vmatprep.subr.mxu0 0.0
      %1644 = vmatpush1.msra.mxu0 0.0
      %1645 = vmatprep.subr.mxu0 0.0
      %1646 = vmatpush1.msra.mxu0 0.0
      %1647 = vmatprep.subr.mxu0 0.0
      %1648 = vmatpush1.msra.mxu0 0.0
      %1649 = vmatprep.subr.mxu0 0.0
      %1650 = vmatpush1.msra.mxu0 0.0
      %1651 = vmatprep.subr.mxu0 0.0
      %1652 = vmatpush1.msra.mxu0 0.0
      %1653 = vmatprep.subr.mxu0 0.0
      %1654 = vmatpush1.msra.mxu0 0.0
      %1655 = vmatprep.subr.mxu0 0.0
      %1656 = vmatpush1.msra.mxu0 0.0
      %1657 = vmatprep.subr.mxu0 0.0
      %1658 = vmatpush1.msra.mxu0 0.0
      %1659 = vmatprep.subr.mxu0 0.0
      %1660 = vmatpush1.msra.mxu0 0.0
      %1661 = vmatprep.subr.mxu0 0.0
      %1662 = vmatpush1.msra.mxu0 0.0
      %1663 = vmatprep.subr.mxu0 0.0
      %1664 = vmatpush1.msra.mxu0 0.0
      %1665 = vmatprep.subr.mxu0 0.0
      %1666 = vmatpush1.msra.mxu0 0.0
      %1667 = vmatprep.subr.mxu0 0.0
      %1668 = vmatpush1.msra.mxu0 0.0
      %1669 = vmatprep.subr.mxu0 0.0
      %1670 = vmatpush1.msra.mxu0 0.0
      %1671 = vmatprep.subr.mxu0 0.0
      %1672 = vmatpush1.msra.mxu0 0.0
      %1673 = vmatprep.subr.mxu0 0.0
      %1674 = vmatpush1.msra.mxu0 0.0
      %1675 = vmatprep.subr.mxu0 0.0
      %1676 = vmatpush1.msra.mxu0 0.0
      %1677 = vmatprep.subr.mxu0 0.0
      %1678 = vmatpush1.msra.mxu0 0.0
      %1679 = vmatprep.subr.mxu0 0.0
      %1680 = vmatpush1.msra.mxu0 0.0
      %1681 = vmatprep.subr.mxu0 0.0
      %1682 = vmatpush1.msra.mxu0 0.0
      %1683 = vmatprep.subr.mxu0 0.0
      %1684 = vmatpush1.msra.mxu0 0.0
      %1685 = vmatprep.subr.mxu0 0.0
      %1686 = vmatpush1.msra.mxu0 0.0
      %1687 = vmatprep.subr.mxu0 0.0
      %1688 = vmatpush1.msra.mxu0 0.0
      %1689 = vmatprep.subr.mxu0 0.0
      %1690 = vmatpush1.msra.mxu0 0.0
      %1691 = vmatprep.subr.mxu0 0.0
      %1692 = vmatpush1.msra.mxu0 0.0
      %1693 = vmatprep.subr.mxu0 0.0
      %1694 = vmatpush1.msra.mxu0 0.0
      %1695 = vmatprep.mubr.f32.mxu0 0.0
      %v1696 = vand.u32 %v569, 4294901760
      %v1697 = vsub.f32 %v569, %v1696
      %v1698 = vand.u32 %v1697, 4294901760
      %1699 = vmatmul.mubr.f32.gmra.mrb[0].mxu0 %v1698
      %v1700 = vpop.f32.mrb[0].mxu0
      %v1701 = vadd.f32 %v1407, %v1700
      %v1702 = vpop.f32.mrb[0].mxu0
      %1703 = vmatprep.mubr.f32.mxu0 0.0
      %v1704 = vand.u32 %v572, 4294901760
      %v1705 = vsub.f32 %v572, %v1704
      %v1706 = vand.u32 %v1705, 4294901760
      %1707 = vmatmul.mubr.f32.gmra.mrb[0].mxu0 %v1706
      %v1708 = vpop.f32.mrb[0].mxu0
      %v1709 = vadd.f32 %v1414, %v1708
      %v1710 = vpop.f32.mrb[0].mxu0
      %1711 = vmatprep.mubr.f32.mxu0 0.0
      %v1712 = vand.u32 %v575, 4294901760
      %v1713 = vsub.f32 %v575, %v1712
      %v1714 = vand.u32 %v1713, 4294901760
      %1715 = vmatmul.mubr.f32.gmra.mrb[0].mxu0 %v1714
      %v1716 = vpop.f32.mrb[0].mxu0
      %v1717 = vadd.f32 %v1421, %v1716
      %v1718 = vpop.f32.mrb[0].mxu0
      %1719 = vmatprep.mubr.f32.mxu0 0.0
      %v1720 = vand.u32 %v578, 4294901760
      %v1721 = vsub.f32 %v578, %v1720
      %v1722 = vand.u32 %v1721, 4294901760
      %1723 = vmatmul.mubr.f32.gmra.mrb[0].mxu0 %v1722
      %v1724 = vpop.f32.mrb[0].mxu0
      %v1725 = vadd.f32 %v1428, %v1724
      %v1726 = vpop.f32.mrb[0].mxu0
      %1727 = vmatprep.mubr.f32.mxu0 0.0
      %v1728 = vand.u32 %v581, 4294901760
      %v1729 = vsub.f32 %v581, %v1728
      %v1730 = vand.u32 %v1729, 4294901760
      %1731 = vmatmul.mubr.f32.gmra.mrb[0].mxu0 %v1730
      %v1732 = vpop.f32.mrb[0].mxu0
      %v1733 = vadd.f32 %v1435, %v1732
      %v1734 = vpop.f32.mrb[0].mxu0
      %1735 = vmatprep.mubr.f32.mxu0 0.0
      %v1736 = vand.u32 %v584, 4294901760
      %v1737 = vsub.f32 %v584, %v1736
      %v1738 = vand.u32 %v1737, 4294901760
      %1739 = vmatmul.mubr.f32.gmra.mrb[0].mxu0 %v1738
      %v1740 = vpop.f32.mrb[0].mxu0
      %v1741 = vadd.f32 %v1442, %v1740
      %v1742 = vpop.f32.mrb[0].mxu0
      %1743 = vmatprep.mubr.f32.mxu0 0.0
      %v1744 = vand.u32 %v587, 4294901760
      %v1745 = vsub.f32 %v587, %v1744
      %v1746 = vand.u32 %v1745, 4294901760
      %1747 = vmatmul.mubr.f32.gmra.mrb[0].mxu0 %v1746
      %v1748 = vpop.f32.mrb[0].mxu0
      %v1749 = vadd.f32 %v1449, %v1748
      %v1750 = vpop.f32.mrb[0].mxu0
      %1751 = vmatprep.mubr.f32.mxu0 0.0
      %v1752 = vand.u32 %v590, 4294901760
      %v1753 = vsub.f32 %v590, %v1752
      %v1754 = vand.u32 %v1753, 4294901760
      %1755 = vmatmul.mubr.f32.gmra.mrb[0].mxu0 %v1754
      %v1756 = vpop.f32.mrb[0].mxu0
      %v1757 = vadd.f32 %v1456, %v1756
      %v1758 = vpop.f32.mrb[0].mxu0
      %1759 = vmatprep.mubr.f32.mxu0 0.0
      %v1760 = vand.u32 %v593, 4294901760
      %v1761 = vsub.f32 %v593, %v1760
      %v1762 = vand.u32 %v1761, 4294901760
      %1763 = vmatmul.mubr.f32.gmra.mrb[0].mxu0 %v1762
      %v1764 = vpop.f32.mrb[0].mxu0
      %v1765 = vadd.f32 %v1463, %v1764
      %v1766 = vpop.f32.mrb[0].mxu0
      %1767 = vmatprep.mubr.f32.mxu0 0.0
      %v1768 = vand.u32 %v596, 4294901760
      %v1769 = vsub.f32 %v596, %v1768
      %v1770 = vand.u32 %v1769, 4294901760
      %1771 = vmatmul.mubr.f32.gmra.mrb[0].mxu0 %v1770
      %v1772 = vpop.f32.mrb[0].mxu0
      %v1773 = vadd.f32 %v1470, %v1772
      %v1774 = vpop.f32.mrb[0].mxu0
      %1775 = vmatprep.mubr.f32.mxu0 0.0
      %v1776 = vand.u32 %v599, 4294901760
      %v1777 = vsub.f32 %v599, %v1776
      %v1778 = vand.u32 %v1777, 4294901760
      %1779 = vmatmul.mubr.f32.gmra.mrb[0].mxu0 %v1778
      %v1780 = vpop.f32.mrb[0].mxu0
      %v1781 = vadd.f32 %v1477, %v1780
      %v1782 = vpop.f32.mrb[0].mxu0
      %1783 = vmatprep.mubr.f32.mxu0 0.0
      %v1784 = vand.u32 %v602, 4294901760
      %v1785 = vsub.f32 %v602, %v1784
      %v1786 = vand.u32 %v1785, 4294901760
      %1787 = vmatmul.mubr.f32.gmra.mrb[0].mxu0 %v1786
      %v1788 = vpop.f32.mrb[0].mxu0
      %v1789 = vadd.f32 %v1484, %v1788
      %v1790 = vpop.f32.mrb[0].mxu0
      %1791 = vmatprep.mubr.f32.mxu0 0.0
      %v1792 = vand.u32 %v605, 4294901760
      %v1793 = vsub.f32 %v605, %v1792
      %v1794 = vand.u32 %v1793, 4294901760
      %1795 = vmatmul.mubr.f32.gmra.mrb[0].mxu0 %v1794
      %v1796 = vpop.f32.mrb[0].mxu0
      %v1797 = vadd.f32 %v1491, %v1796
      %v1798 = vpop.f32.mrb[0].mxu0
      %1799 = vmatprep.mubr.f32.mxu0 0.0
      %v1800 = vand.u32 %v608, 4294901760
      %v1801 = vsub.f32 %v608, %v1800
      %v1802 = vand.u32 %v1801, 4294901760
      %1803 = vmatmul.mubr.f32.gmra.mrb[0].mxu0 %v1802
      %v1804 = vpop.f32.mrb[0].mxu0
      %v1805 = vadd.f32 %v1498, %v1804
      %v1806 = vpop.f32.mrb[0].mxu0
      %1807 = vmatprep.mubr.f32.mxu0 0.0
      %v1808 = vand.u32 %v611, 4294901760
      %v1809 = vsub.f32 %v611, %v1808
      %v1810 = vand.u32 %v1809, 4294901760
      %1811 = vmatmul.mubr.f32.gmra.mrb[0].mxu0 %v1810
      %v1812 = vpop.f32.mrb[0].mxu0
      %v1813 = vadd.f32 %v1505, %v1812
      %v1814 = vpop.f32.mrb[0].mxu0
      %1815 = vmatprep.mubr.f32.mxu0 0.0
      %v1816 = vand.u32 %v614, 4294901760
      %v1817 = vsub.f32 %v614, %v1816
      %v1818 = vand.u32 %v1817, 4294901760
      %1819 = vmatmul.mubr.f32.gmra.mrb[0].mxu0 %v1818
      %v1820 = vpop.f32.mrb[0].mxu0
      %v1821 = vadd.f32 %v1512, %v1820
      %v1822 = vpop.f32.mrb[0].mxu0
      %1823 = vmatprep.mubr.f32.mxu0 0.0
      %v1824 = vand.u32 %v617, 4294901760
      %v1825 = vsub.f32 %v617, %v1824
      %v1826 = vand.u32 %v1825, 4294901760
      %1827 = vmatmul.mubr.f32.gmra.mrb[0].mxu0 %v1826
      %v1828 = vpop.f32.mrb[0].mxu0
      %v1829 = vadd.f32 %v1519, %v1828
      %v1830 = vpop.f32.mrb[0].mxu0
      %1831 = vmatprep.mubr.f32.mxu0 0.0
      %v1832 = vand.u32 %v620, 4294901760
      %v1833 = vsub.f32 %v620, %v1832
      %v1834 = vand.u32 %v1833, 4294901760
      %1835 = vmatmul.mubr.f32.gmra.mrb[0].mxu0 %v1834
      %v1836 = vpop.f32.mrb[0].mxu0
      %v1837 = vadd.f32 %v1526, %v1836
      %v1838 = vpop.f32.mrb[0].mxu0
      %1839 = vmatprep.mubr.f32.mxu0 0.0
      %v1840 = vand.u32 %v623, 4294901760
      %v1841 = vsub.f32 %v623, %v1840
      %v1842 = vand.u32 %v1841, 4294901760
      %1843 = vmatmul.mubr.f32.gmra.mrb[0].mxu0 %v1842
      %v1844 = vpop.f32.mrb[0].mxu0
      %v1845 = vadd.f32 %v1533, %v1844
      %v1846 = vpop.f32.mrb[0].mxu0
      %1847 = vmatprep.mubr.f32.mxu0 0.0
      %v1848 = vand.u32 %v626, 4294901760
      %v1849 = vsub.f32 %v626, %v1848
      %v1850 = vand.u32 %v1849, 4294901760
      %1851 = vmatmul.mubr.f32.gmra.mrb[0].mxu0 %v1850
      %v1852 = vpop.f32.mrb[0].mxu0
      %v1853 = vadd.f32 %v1540, %v1852
      %v1854 = vpop.f32.mrb[0].mxu0
      %1855 = vmatprep.mubr.f32.mxu0 0.0
      %v1856 = vand.u32 %v629, 4294901760
      %v1857 = vsub.f32 %v629, %v1856
      %v1858 = vand.u32 %v1857, 4294901760
      %1859 = vmatmul.mubr.f32.gmra.mrb[0].mxu0 %v1858
      %v1860 = vpop.f32.mrb[0].mxu0
      %v1861 = vadd.f32 %v1547, %v1860
      %v1862 = vpop.f32.mrb[0].mxu0
      %1863 = vmatprep.mubr.f32.mxu0 0.0
      %v1864 = vand.u32 %v632, 4294901760
      %v1865 = vsub.f32 %v632, %v1864
      %v1866 = vand.u32 %v1865, 4294901760
      %1867 = vmatmul.mubr.f32.gmra.mrb[0].mxu0 %v1866
      %v1868 = vpop.f32.mrb[0].mxu0
      %v1869 = vadd.f32 %v1554, %v1868
      %v1870 = vpop.f32.mrb[0].mxu0
      %1871 = vmatprep.mubr.f32.mxu0 0.0
      %v1872 = vand.u32 %v635, 4294901760
      %v1873 = vsub.f32 %v635, %v1872
      %v1874 = vand.u32 %v1873, 4294901760
      %1875 = vmatmul.mubr.f32.gmra.mrb[0].mxu0 %v1874
      %v1876 = vpop.f32.mrb[0].mxu0
      %v1877 = vadd.f32 %v1561, %v1876
      %v1878 = vpop.f32.mrb[0].mxu0
      %1879 = vmatprep.mubr.f32.mxu0 0.0
      %v1880 = vand.u32 %v638, 4294901760
      %v1881 = vsub.f32 %v638, %v1880
      %v1882 = vand.u32 %v1881, 4294901760
      %1883 = vmatmul.mubr.f32.gmra.mrb[0].mxu0 %v1882
      %v1884 = vpop.f32.mrb[0].mxu0
      %v1885 = vadd.f32 %v1568, %v1884
      %v1886 = vpop.f32.mrb[0].mxu0
      %1887 = vmatprep.mubr.f32.mxu0 0.0
      %v1888 = vand.u32 %v641, 4294901760
      %v1889 = vsub.f32 %v641, %v1888
      %v1890 = vand.u32 %v1889, 4294901760
      %1891 = vmatmul.mubr.f32.gmra.mrb[0].mxu0 %v1890
      %v1892 = vpop.f32.mrb[0].mxu0
      %v1893 = vadd.f32 %v1575, %v1892
      %v1894 = vpop.f32.mrb[0].mxu0
      %1895 = vmatprep.mubr.f32.mxu0 0.0
      %v1896 = vand.u32 %v644, 4294901760
      %v1897 = vsub.f32 %v644, %v1896
      %v1898 = vand.u32 %v1897, 4294901760
      %1899 = vmatmul.mubr.f32.gmra.mrb[0].mxu0 %v1898
      %v1900 = vpop.f32.mrb[0].mxu0
      %v1901 = vadd.f32 %v1582, %v1900
      %v1902 = vpop.f32.mrb[0].mxu0
      %1903 = vmatprep.mubr.f32.mxu0 0.0
      %v1904 = vand.u32 %v647, 4294901760
      %v1905 = vsub.f32 %v647, %v1904
      %v1906 = vand.u32 %v1905, 4294901760
      %1907 = vmatmul.mubr.f32.gmra.mrb[0].mxu0 %v1906
      %v1908 = vpop.f32.mrb[0].mxu0
      %v1909 = vadd.f32 %v1589, %v1908
      %v1910 = vpop.f32.mrb[0].mxu0
      %1911 = vmatprep.mubr.f32.mxu0 0.0
      %v1912 = vand.u32 %v650, 4294901760
      %v1913 = vsub.f32 %v650, %v1912
      %v1914 = vand.u32 %v1913, 4294901760
      %1915 = vmatmul.mubr.f32.gmra.mrb[0].mxu0 %v1914
      %v1916 = vpop.f32.mrb[0].mxu0
      %v1917 = vadd.f32 %v1596, %v1916
      %v1918 = vpop.f32.mrb[0].mxu0
      %1919 = vmatprep.mubr.f32.mxu0 0.0
      %v1920 = vand.u32 %v653, 4294901760
      %v1921 = vsub.f32 %v653, %v1920
      %v1922 = vand.u32 %v1921, 4294901760
      %1923 = vmatmul.mubr.f32.gmra.mrb[0].mxu0 %v1922
      %v1924 = vpop.f32.mrb[0].mxu0
      %v1925 = vadd.f32 %v1603, %v1924
      %v1926 = vpop.f32.mrb[0].mxu0
      %1927 = vmatprep.mubr.f32.mxu0 0.0
      %v1928 = vand.u32 %v656, 4294901760
      %v1929 = vsub.f32 %v656, %v1928
      %v1930 = vand.u32 %v1929, 4294901760
      %1931 = vmatmul.mubr.f32.gmra.mrb[0].mxu0 %v1930
      %v1932 = vpop.f32.mrb[0].mxu0
      %v1933 = vadd.f32 %v1610, %v1932
      %v1934 = vpop.f32.mrb[0].mxu0
      %1935 = vmatprep.mubr.f32.mxu0 0.0
      %v1936 = vand.u32 %v659, 4294901760
      %v1937 = vsub.f32 %v659, %v1936
      %v1938 = vand.u32 %v1937, 4294901760
      %1939 = vmatmul.mubr.f32.gmra.mrb[0].mxu0 %v1938
      %v1940 = vpop.f32.mrb[0].mxu0
      %v1941 = vadd.f32 %v1617, %v1940
      %v1942 = vpop.f32.mrb[0].mxu0
      %1943 = vmatprep.mubr.f32.mxu0 0.0
      %v1944 = vand.u32 %v662, 4294901760
      %v1945 = vsub.f32 %v662, %v1944
      %v1946 = vand.u32 %v1945, 4294901760
      %1947 = vmatmul.mubr.f32.gmra.mrb[0].mxu0 %v1946
      %v1948 = vpop.f32.mrb[0].mxu0
      %v1949 = vadd.f32 %v1624, %v1948
      %v1950 = vpop.f32.mrb[0].mxu0
      %1951 = vdwg.mxu0
      %1952 = vmatprep.subr.mxu0 0.0
      %v1953 = vand.u32 %v338, 4294901760
      %v1954 = vsub.f32 %v338, %v1953
      %v1955 = vand.u32 %v1954, 4294901760
      %1956 = vmatpush1.msra.mxu0 %v1955
      %1957 = vmatprep.subr.mxu0 0.0
      %v1958 = vand.u32 %v339, 4294901760
      %v1959 = vsub.f32 %v339, %v1958
      %v1960 = vand.u32 %v1959, 4294901760
      %1961 = vmatpush1.msra.mxu0 %v1960
      %1962 = vmatprep.subr.mxu0 0.0
      %v1963 = vand.u32 %v340, 4294901760
      %v1964 = vsub.f32 %v340, %v1963
      %v1965 = vand.u32 %v1964, 4294901760
      %1966 = vmatpush1.msra.mxu0 %v1965
      %1967 = vmatprep.subr.mxu0 0.0
      %v1968 = vand.u32 %v341, 4294901760
      %v1969 = vsub.f32 %v341, %v1968
      %v1970 = vand.u32 %v1969, 4294901760
      %1971 = vmatpush1.msra.mxu0 %v1970
      %1972 = vmatprep.subr.mxu0 0.0
      %1973 = vmatpush1.msra.mxu0 0.0
      %1974 = vmatprep.subr.mxu0 0.0
      %1975 = vmatpush1.msra.mxu0 0.0
      %1976 = vmatprep.subr.mxu0 0.0
      %1977 = vmatpush1.msra.mxu0 0.0
      %1978 = vmatprep.subr.mxu0 0.0
      %1979 = vmatpush1.msra.mxu0 0.0
      %1980 = vmatprep.subr.mxu0 0.0
      %1981 = vmatpush1.msra.mxu0 0.0
      %1982 = vmatprep.subr.mxu0 0.0
      %1983 = vmatpush1.msra.mxu0 0.0
      %1984 = vmatprep.subr.mxu0 0.0
      %1985 = vmatpush1.msra.mxu0 0.0
      %1986 = vmatprep.subr.mxu0 0.0
      %1987 = vmatpush1.msra.mxu0 0.0
      %1988 = vmatprep.subr.mxu0 0.0
      %1989 = vmatpush1.msra.mxu0 0.0
      %1990 = vmatprep.subr.mxu0 0.0
      %1991 = vmatpush1.msra.mxu0 0.0
      %1992 = vmatprep.subr.mxu0 0.0
      %1993 = vmatpush1.msra.mxu0 0.0
      %1994 = vmatprep.subr.mxu0 0.0
      %1995 = vmatpush1.msra.mxu0 0.0
      %1996 = vmatprep.subr.mxu0 0.0
      %1997 = vmatpush1.msra.mxu0 0.0
      %1998 = vmatprep.subr.mxu0 0.0
      %1999 = vmatpush1.msra.mxu0 0.0
      %2000 = vmatprep.subr.mxu0 0.0
      %2001 = vmatpush1.msra.mxu0 0.0
      %2002 = vmatprep.subr.mxu0 0.0
      %2003 = vmatpush1.msra.mxu0 0.0
      %2004 = vmatprep.subr.mxu0 0.0
      %2005 = vmatpush1.msra.mxu0 0.0
      %2006 = vmatprep.subr.mxu0 0.0
      %2007 = vmatpush1.msra.mxu0 0.0
      %2008 = vmatprep.subr.mxu0 0.0
      %2009 = vmatpush1.msra.mxu0 0.0
      %2010 = vmatprep.subr.mxu0 0.0
      %2011 = vmatpush1.msra.mxu0 0.0
      %2012 = vmatprep.subr.mxu0 0.0
      %2013 = vmatpush1.msra.mxu0 0.0
      %2014 = vmatprep.subr.mxu0 0.0
      %2015 = vmatpush1.msra.mxu0 0.0
      %2016 = vmatprep.subr.mxu0 0.0
      %2017 = vmatpush1.msra.mxu0 0.0
      %2018 = vmatprep.subr.mxu0 0.0
      %2019 = vmatpush1.msra.mxu0 0.0
      %2020 = vmatprep.subr.mxu0 0.0
      %2021 = vmatpush1.msra.mxu0 0.0
      %2022 = vmatprep.subr.mxu0 0.0
      %2023 = vmatpush1.msra.mxu0 0.0
      %2024 = vmatprep.subr.mxu0 0.0
      %2025 = vmatpush1.msra.mxu0 0.0
      %2026 = vmatprep.subr.mxu0 0.0
      %2027 = vmatpush1.msra.mxu0 0.0
      %2028 = vmatprep.mubr.f32.mxu0 0.0
      %v2029 = vand.u32 %v569, 4294901760
      %2030 = vmatmul.mubr.f32.gmra.mrb[0].mxu0 %v2029
      %v2031 = vpop.f32.mrb[0].mxu0
      %v2032 = vadd.f32 %v1701, %v2031
      %v2033 = vpop.f32.mrb[0].mxu0
      %2034 = vmatprep.mubr.f32.mxu0 0.0
      %v2035 = vand.u32 %v572, 4294901760
      %2036 = vmatmul.mubr.f32.gmra.mrb[0].mxu0 %v2035
      %v2037 = vpop.f32.mrb[0].mxu0
      %v2038 = vadd.f32 %v1709, %v2037
      %v2039 = vpop.f32.mrb[0].mxu0
      %2040 = vmatprep.mubr.f32.mxu0 0.0
      %v2041 = vand.u32 %v575, 4294901760
      %2042 = vmatmul.mubr.f32.gmra.mrb[0].mxu0 %v2041
      %v2043 = vpop.f32.mrb[0].mxu0
      %v2044 = vadd.f32 %v1717, %v2043
      %v2045 = vpop.f32.mrb[0].mxu0
      %2046 = vmatprep.mubr.f32.mxu0 0.0
      %v2047 = vand.u32 %v578, 4294901760
      %2048 = vmatmul.mubr.f32.gmra.mrb[0].mxu0 %v2047
      %v2049 = vpop.f32.mrb[0].mxu0
      %v2050 = vadd.f32 %v1725, %v2049
      %v2051 = vpop.f32.mrb[0].mxu0
      %2052 = vmatprep.mubr.f32.mxu0 0.0
      %v2053 = vand.u32 %v581, 4294901760
      %2054 = vmatmul.mubr.f32.gmra.mrb[0].mxu0 %v2053
      %v2055 = vpop.f32.mrb[0].mxu0
      %v2056 = vadd.f32 %v1733, %v2055
      %v2057 = vpop.f32.mrb[0].mxu0
      %2058 = vmatprep.mubr.f32.mxu0 0.0
      %v2059 = vand.u32 %v584, 4294901760
      %2060 = vmatmul.mubr.f32.gmra.mrb[0].mxu0 %v2059
      %v2061 = vpop.f32.mrb[0].mxu0
      %v2062 = vadd.f32 %v1741, %v2061
      %v2063 = vpop.f32.mrb[0].mxu0
      %2064 = vmatprep.mubr.f32.mxu0 0.0
      %v2065 = vand.u32 %v587, 4294901760
      %2066 = vmatmul.mubr.f32.gmra.mrb[0].mxu0 %v2065
      %v2067 = vpop.f32.mrb[0].mxu0
      %v2068 = vadd.f32 %v1749, %v2067
      %v2069 = vpop.f32.mrb[0].mxu0
      %2070 = vmatprep.mubr.f32.mxu0 0.0
      %v2071 = vand.u32 %v590, 4294901760
      %2072 = vmatmul.mubr.f32.gmra.mrb[0].mxu0 %v2071
      %v2073 = vpop.f32.mrb[0].mxu0
      %v2074 = vadd.f32 %v1757, %v2073
      %v2075 = vpop.f32.mrb[0].mxu0
      %2076 = vmatprep.mubr.f32.mxu0 0.0
      %v2077 = vand.u32 %v593, 4294901760
      %2078 = vmatmul.mubr.f32.gmra.mrb[0].mxu0 %v2077
      %v2079 = vpop.f32.mrb[0].mxu0
      %v2080 = vadd.f32 %v1765, %v2079
      %v2081 = vpop.f32.mrb[0].mxu0
      %2082 = vmatprep.mubr.f32.mxu0 0.0
      %v2083 = vand.u32 %v596, 4294901760
      %2084 = vmatmul.mubr.f32.gmra.mrb[0].mxu0 %v2083
      %v2085 = vpop.f32.mrb[0].mxu0
      %v2086 = vadd.f32 %v1773, %v2085
      %v2087 = vpop.f32.mrb[0].mxu0
      %2088 = vmatprep.mubr.f32.mxu0 0.0
      %v2089 = vand.u32 %v599, 4294901760
      %2090 = vmatmul.mubr.f32.gmra.mrb[0].mxu0 %v2089
      %v2091 = vpop.f32.mrb[0].mxu0
      %v2092 = vadd.f32 %v1781, %v2091
      %v2093 = vpop.f32.mrb[0].mxu0
      %2094 = vmatprep.mubr.f32.mxu0 0.0
      %v2095 = vand.u32 %v602, 4294901760
      %2096 = vmatmul.mubr.f32.gmra.mrb[0].mxu0 %v2095
      %v2097 = vpop.f32.mrb[0].mxu0
      %v2098 = vadd.f32 %v1789, %v2097
      %v2099 = vpop.f32.mrb[0].mxu0
      %2100 = vmatprep.mubr.f32.mxu0 0.0
      %v2101 = vand.u32 %v605, 4294901760
      %2102 = vmatmul.mubr.f32.gmra.mrb[0].mxu0 %v2101
      %v2103 = vpop.f32.mrb[0].mxu0
      %v2104 = vadd.f32 %v1797, %v2103
      %v2105 = vpop.f32.mrb[0].mxu0
      %2106 = vmatprep.mubr.f32.mxu0 0.0
      %v2107 = vand.u32 %v608, 4294901760
      %2108 = vmatmul.mubr.f32.gmra.mrb[0].mxu0 %v2107
      %v2109 = vpop.f32.mrb[0].mxu0
      %v2110 = vadd.f32 %v1805, %v2109
      %v2111 = vpop.f32.mrb[0].mxu0
      %2112 = vmatprep.mubr.f32.mxu0 0.0
      %v2113 = vand.u32 %v611, 4294901760
      %2114 = vmatmul.mubr.f32.gmra.mrb[0].mxu0 %v2113
      %v2115 = vpop.f32.mrb[0].mxu0
      %v2116 = vadd.f32 %v1813, %v2115
      %v2117 = vpop.f32.mrb[0].mxu0
      %2118 = vmatprep.mubr.f32.mxu0 0.0
      %v2119 = vand.u32 %v614, 4294901760
      %2120 = vmatmul.mubr.f32.gmra.mrb[0].mxu0 %v2119
      %v2121 = vpop.f32.mrb[0].mxu0
      %v2122 = vadd.f32 %v1821, %v2121
      %v2123 = vpop.f32.mrb[0].mxu0
      %2124 = vmatprep.mubr.f32.mxu0 0.0
      %v2125 = vand.u32 %v617, 4294901760
      %2126 = vmatmul.mubr.f32.gmra.mrb[0].mxu0 %v2125
      %v2127 = vpop.f32.mrb[0].mxu0
      %v2128 = vadd.f32 %v1829, %v2127
      %v2129 = vpop.f32.mrb[0].mxu0
      %2130 = vmatprep.mubr.f32.mxu0 0.0
      %v2131 = vand.u32 %v620, 4294901760
      %2132 = vmatmul.mubr.f32.gmra.mrb[0].mxu0 %v2131
      %v2133 = vpop.f32.mrb[0].mxu0
      %v2134 = vadd.f32 %v1837, %v2133
      %v2135 = vpop.f32.mrb[0].mxu0
      %2136 = vmatprep.mubr.f32.mxu0 0.0
      %v2137 = vand.u32 %v623, 4294901760
      %2138 = vmatmul.mubr.f32.gmra.mrb[0].mxu0 %v2137
      %v2139 = vpop.f32.mrb[0].mxu0
      %v2140 = vadd.f32 %v1845, %v2139
      %v2141 = vpop.f32.mrb[0].mxu0
      %2142 = vmatprep.mubr.f32.mxu0 0.0
      %v2143 = vand.u32 %v626, 4294901760
      %2144 = vmatmul.mubr.f32.gmra.mrb[0].mxu0 %v2143
      %v2145 = vpop.f32.mrb[0].mxu0
      %v2146 = vadd.f32 %v1853, %v2145
      %v2147 = vpop.f32.mrb[0].mxu0
      %2148 = vmatprep.mubr.f32.mxu0 0.0
      %v2149 = vand.u32 %v629, 4294901760
      %2150 = vmatmul.mubr.f32.gmra.mrb[0].mxu0 %v2149
      %v2151 = vpop.f32.mrb[0].mxu0
      %v2152 = vadd.f32 %v1861, %v2151
      %v2153 = vpop.f32.mrb[0].mxu0
      %2154 = vmatprep.mubr.f32.mxu0 0.0
      %v2155 = vand.u32 %v632, 4294901760
      %2156 = vmatmul.mubr.f32.gmra.mrb[0].mxu0 %v2155
      %v2157 = vpop.f32.mrb[0].mxu0
      %v2158 = vadd.f32 %v1869, %v2157
      %v2159 = vpop.f32.mrb[0].mxu0
      %2160 = vmatprep.mubr.f32.mxu0 0.0
      %v2161 = vand.u32 %v635, 4294901760
      %2162 = vmatmul.mubr.f32.gmra.mrb[0].mxu0 %v2161
      %v2163 = vpop.f32.mrb[0].mxu0
      %v2164 = vadd.f32 %v1877, %v2163
      %v2165 = vpop.f32.mrb[0].mxu0
      %2166 = vmatprep.mubr.f32.mxu0 0.0
      %v2167 = vand.u32 %v638, 4294901760
      %2168 = vmatmul.mubr.f32.gmra.mrb[0].mxu0 %v2167
      %v2169 = vpop.f32.mrb[0].mxu0
      %v2170 = vadd.f32 %v1885, %v2169
      %v2171 = vpop.f32.mrb[0].mxu0
      %2172 = vmatprep.mubr.f32.mxu0 0.0
      %v2173 = vand.u32 %v641, 4294901760
      %2174 = vmatmul.mubr.f32.gmra.mrb[0].mxu0 %v2173
      %v2175 = vpop.f32.mrb[0].mxu0
      %v2176 = vadd.f32 %v1893, %v2175
      %v2177 = vpop.f32.mrb[0].mxu0
      %2178 = vmatprep.mubr.f32.mxu0 0.0
      %v2179 = vand.u32 %v644, 4294901760
      %2180 = vmatmul.mubr.f32.gmra.mrb[0].mxu0 %v2179
      %v2181 = vpop.f32.mrb[0].mxu0
      %v2182 = vadd.f32 %v1901, %v2181
      %v2183 = vpop.f32.mrb[0].mxu0
      %2184 = vmatprep.mubr.f32.mxu0 0.0
      %v2185 = vand.u32 %v647, 4294901760
      %2186 = vmatmul.mubr.f32.gmra.mrb[0].mxu0 %v2185
      %v2187 = vpop.f32.mrb[0].mxu0
      %v2188 = vadd.f32 %v1909, %v2187
      %v2189 = vpop.f32.mrb[0].mxu0
      %2190 = vmatprep.mubr.f32.mxu0 0.0
      %v2191 = vand.u32 %v650, 4294901760
      %2192 = vmatmul.mubr.f32.gmra.mrb[0].mxu0 %v2191
      %v2193 = vpop.f32.mrb[0].mxu0
      %v2194 = vadd.f32 %v1917, %v2193
      %v2195 = vpop.f32.mrb[0].mxu0
      %2196 = vmatprep.mubr.f32.mxu0 0.0
      %v2197 = vand.u32 %v653, 4294901760
      %2198 = vmatmul.mubr.f32.gmra.mrb[0].mxu0 %v2197
      %v2199 = vpop.f32.mrb[0].mxu0
      %v2200 = vadd.f32 %v1925, %v2199
      %v2201 = vpop.f32.mrb[0].mxu0
      %2202 = vmatprep.mubr.f32.mxu0 0.0
      %v2203 = vand.u32 %v656, 4294901760
      %2204 = vmatmul.mubr.f32.gmra.mrb[0].mxu0 %v2203
      %v2205 = vpop.f32.mrb[0].mxu0
      %v2206 = vadd.f32 %v1933, %v2205
      %v2207 = vpop.f32.mrb[0].mxu0
      %2208 = vmatprep.mubr.f32.mxu0 0.0
      %v2209 = vand.u32 %v659, 4294901760
      %2210 = vmatmul.mubr.f32.gmra.mrb[0].mxu0 %v2209
      %v2211 = vpop.f32.mrb[0].mxu0
      %v2212 = vadd.f32 %v1941, %v2211
      %v2213 = vpop.f32.mrb[0].mxu0
      %2214 = vmatprep.mubr.f32.mxu0 0.0
      %v2215 = vand.u32 %v662, 4294901760
      %2216 = vmatmul.mubr.f32.gmra.mrb[0].mxu0 %v2215
      %v2217 = vpop.f32.mrb[0].mxu0
      %v2218 = vadd.f32 %v1949, %v2217
      %v2219 = vpop.f32.mrb[0].mxu0
      %2220 = vdwg.mxu0
      %2221 = vmatprep.subr.mxu0 0.0
      %v2222 = vand.u32 %v338, 4294901760
      %2223 = vmatpush1.msra.mxu0 %v2222
      %2224 = vmatprep.subr.mxu0 0.0
      %v2225 = vand.u32 %v339, 4294901760
      %2226 = vmatpush1.msra.mxu0 %v2225
      %2227 = vmatprep.subr.mxu0 0.0
      %v2228 = vand.u32 %v340, 4294901760
      %2229 = vmatpush1.msra.mxu0 %v2228
      %2230 = vmatprep.subr.mxu0 0.0
      %v2231 = vand.u32 %v341, 4294901760
      %2232 = vmatpush1.msra.mxu0 %v2231
      %2233 = vmatprep.subr.mxu0 0.0
      %2234 = vmatpush1.msra.mxu0 0.0
      %2235 = vmatprep.subr.mxu0 0.0
      %2236 = vmatpush1.msra.mxu0 0.0
      %2237 = vmatprep.subr.mxu0 0.0
      %2238 = vmatpush1.msra.mxu0 0.0
      %2239 = vmatprep.subr.mxu0 0.0
      %2240 = vmatpush1.msra.mxu0 0.0
      %2241 = vmatprep.subr.mxu0 0.0
      %2242 = vmatpush1.msra.mxu0 0.0
      %2243 = vmatprep.subr.mxu0 0.0
      %2244 = vmatpush1.msra.mxu0 0.0
      %2245 = vmatprep.subr.mxu0 0.0
      %2246 = vmatpush1.msra.mxu0 0.0
      %2247 = vmatprep.subr.mxu0 0.0
      %2248 = vmatpush1.msra.mxu0 0.0
      %2249 = vmatprep.subr.mxu0 0.0
      %2250 = vmatpush1.msra.mxu0 0.0
      %2251 = vmatprep.subr.mxu0 0.0
      %2252 = vmatpush1.msra.mxu0 0.0
      %2253 = vmatprep.subr.mxu0 0.0
      %2254 = vmatpush1.msra.mxu0 0.0
      %2255 = vmatprep.subr.mxu0 0.0
      %2256 = vmatpush1.msra.mxu0 0.0
      %2257 = vmatprep.subr.mxu0 0.0
      %2258 = vmatpush1.msra.mxu0 0.0
      %2259 = vmatprep.subr.mxu0 0.0
      %2260 = vmatpush1.msra.mxu0 0.0
      %2261 = vmatprep.subr.mxu0 0.0
      %2262 = vmatpush1.msra.mxu0 0.0
      %2263 = vmatprep.subr.mxu0 0.0
      %2264 = vmatpush1.msra.mxu0 0.0
      %2265 = vmatprep.subr.mxu0 0.0
      %2266 = vmatpush1.msra.mxu0 0.0
      %2267 = vmatprep.subr.mxu0 0.0
      %2268 = vmatpush1.msra.mxu0 0.0
      %2269 = vmatprep.subr.mxu0 0.0
      %2270 = vmatpush1.msra.mxu0 0.0
      %2271 = vmatprep.subr.mxu0 0.0
      %2272 = vmatpush1.msra.mxu0 0.0
      %2273 = vmatprep.subr.mxu0 0.0
      %2274 = vmatpush1.msra.mxu0 0.0
      %2275 = vmatprep.subr.mxu0 0.0
      %2276 = vmatpush1.msra.mxu0 0.0
      %2277 = vmatprep.subr.mxu0 0.0
      %2278 = vmatpush1.msra.mxu0 0.0
      %2279 = vmatprep.subr.mxu0 0.0
      %2280 = vmatpush1.msra.mxu0 0.0
      %2281 = vmatprep.subr.mxu0 0.0
      %2282 = vmatpush1.msra.mxu0 0.0
      %2283 = vmatprep.subr.mxu0 0.0
      %2284 = vmatpush1.msra.mxu0 0.0
      %2285 = vmatprep.subr.mxu0 0.0
      %2286 = vmatpush1.msra.mxu0 0.0
      %2287 = vmatprep.subr.mxu0 0.0
      %2288 = vmatpush1.msra.mxu0 0.0
      %2289 = vmatprep.mubr.f32.mxu0 0.0
      %v2290 = vand.u32 %v569, 4294901760
      %2291 = vmatmul.mubr.f32.gmra.mrb[0].mxu0 %v2290
      %v2292 = vpop.f32.mrb[0].mxu0
      %v2293 = vadd.f32 %v2032, %v2292
      %v2294 = vpop.f32.mrb[0].mxu0
      %2295 = vmatprep.mubr.f32.mxu0 0.0
      %v2296 = vand.u32 %v572, 4294901760
      %2297 = vmatmul.mubr.f32.gmra.mrb[0].mxu0 %v2296
      %v2298 = vpop.f32.mrb[0].mxu0
      %v2299 = vadd.f32 %v2038, %v2298
      %v2300 = vpop.f32.mrb[0].mxu0
      %2301 = vmatprep.mubr.f32.mxu0 0.0
      %v2302 = vand.u32 %v575, 4294901760
      %2303 = vmatmul.mubr.f32.gmra.mrb[0].mxu0 %v2302
      %v2304 = vpop.f32.mrb[0].mxu0
      %v2305 = vadd.f32 %v2044, %v2304
      %v2306 = vpop.f32.mrb[0].mxu0
      %2307 = vmatprep.mubr.f32.mxu0 0.0
      %v2308 = vand.u32 %v578, 4294901760
      %2309 = vmatmul.mubr.f32.gmra.mrb[0].mxu0 %v2308
      %v2310 = vpop.f32.mrb[0].mxu0
      %v2311 = vadd.f32 %v2050, %v2310
      %v2312 = vpop.f32.mrb[0].mxu0
      %2313 = vmatprep.mubr.f32.mxu0 0.0
      %v2314 = vand.u32 %v581, 4294901760
      %2315 = vmatmul.mubr.f32.gmra.mrb[0].mxu0 %v2314
      %v2316 = vpop.f32.mrb[0].mxu0
      %v2317 = vadd.f32 %v2056, %v2316
      %v2318 = vpop.f32.mrb[0].mxu0
      %2319 = vmatprep.mubr.f32.mxu0 0.0
      %v2320 = vand.u32 %v584, 4294901760
      %2321 = vmatmul.mubr.f32.gmra.mrb[0].mxu0 %v2320
      %v2322 = vpop.f32.mrb[0].mxu0
      %v2323 = vadd.f32 %v2062, %v2322
      %v2324 = vpop.f32.mrb[0].mxu0
      %2325 = vmatprep.mubr.f32.mxu0 0.0
      %v2326 = vand.u32 %v587, 4294901760
      %2327 = vmatmul.mubr.f32.gmra.mrb[0].mxu0 %v2326
      %v2328 = vpop.f32.mrb[0].mxu0
      %v2329 = vadd.f32 %v2068, %v2328
      %v2330 = vpop.f32.mrb[0].mxu0
      %2331 = vmatprep.mubr.f32.mxu0 0.0
      %v2332 = vand.u32 %v590, 4294901760
      %2333 = vmatmul.mubr.f32.gmra.mrb[0].mxu0 %v2332
      %v2334 = vpop.f32.mrb[0].mxu0
      %v2335 = vadd.f32 %v2074, %v2334
      %v2336 = vpop.f32.mrb[0].mxu0
      %2337 = vmatprep.mubr.f32.mxu0 0.0
      %v2338 = vand.u32 %v593, 4294901760
      %2339 = vmatmul.mubr.f32.gmra.mrb[0].mxu0 %v2338
      %v2340 = vpop.f32.mrb[0].mxu0
      %v2341 = vadd.f32 %v2080, %v2340
      %v2342 = vpop.f32.mrb[0].mxu0
      %2343 = vmatprep.mubr.f32.mxu0 0.0
      %v2344 = vand.u32 %v596, 4294901760
      %2345 = vmatmul.mubr.f32.gmra.mrb[0].mxu0 %v2344
      %v2346 = vpop.f32.mrb[0].mxu0
      %v2347 = vadd.f32 %v2086, %v2346
      %v2348 = vpop.f32.mrb[0].mxu0
      %2349 = vmatprep.mubr.f32.mxu0 0.0
      %v2350 = vand.u32 %v599, 4294901760
      %2351 = vmatmul.mubr.f32.gmra.mrb[0].mxu0 %v2350
      %v2352 = vpop.f32.mrb[0].mxu0
      %v2353 = vadd.f32 %v2092, %v2352
      %v2354 = vpop.f32.mrb[0].mxu0
      %2355 = vmatprep.mubr.f32.mxu0 0.0
      %v2356 = vand.u32 %v602, 4294901760
      %2357 = vmatmul.mubr.f32.gmra.mrb[0].mxu0 %v2356
      %v2358 = vpop.f32.mrb[0].mxu0
      %v2359 = vadd.f32 %v2098, %v2358
      %v2360 = vpop.f32.mrb[0].mxu0
      %2361 = vmatprep.mubr.f32.mxu0 0.0
      %v2362 = vand.u32 %v605, 4294901760
      %2363 = vmatmul.mubr.f32.gmra.mrb[0].mxu0 %v2362
      %v2364 = vpop.f32.mrb[0].mxu0
      %v2365 = vadd.f32 %v2104, %v2364
      %v2366 = vpop.f32.mrb[0].mxu0
      %2367 = vmatprep.mubr.f32.mxu0 0.0
      %v2368 = vand.u32 %v608, 4294901760
      %2369 = vmatmul.mubr.f32.gmra.mrb[0].mxu0 %v2368
      %v2370 = vpop.f32.mrb[0].mxu0
      %v2371 = vadd.f32 %v2110, %v2370
      %v2372 = vpop.f32.mrb[0].mxu0
      %2373 = vmatprep.mubr.f32.mxu0 0.0
      %v2374 = vand.u32 %v611, 4294901760
      %2375 = vmatmul.mubr.f32.gmra.mrb[0].mxu0 %v2374
      %v2376 = vpop.f32.mrb[0].mxu0
      %v2377 = vadd.f32 %v2116, %v2376
      %v2378 = vpop.f32.mrb[0].mxu0
      %2379 = vmatprep.mubr.f32.mxu0 0.0
      %v2380 = vand.u32 %v614, 4294901760
      %2381 = vmatmul.mubr.f32.gmra.mrb[0].mxu0 %v2380
      %v2382 = vpop.f32.mrb[0].mxu0
      %v2383 = vadd.f32 %v2122, %v2382
      %v2384 = vpop.f32.mrb[0].mxu0
      %2385 = vmatprep.mubr.f32.mxu0 0.0
      %v2386 = vand.u32 %v617, 4294901760
      %2387 = vmatmul.mubr.f32.gmra.mrb[0].mxu0 %v2386
      %v2388 = vpop.f32.mrb[0].mxu0
      %v2389 = vadd.f32 %v2128, %v2388
      %v2390 = vpop.f32.mrb[0].mxu0
      %2391 = vmatprep.mubr.f32.mxu0 0.0
      %v2392 = vand.u32 %v620, 4294901760
      %2393 = vmatmul.mubr.f32.gmra.mrb[0].mxu0 %v2392
      %v2394 = vpop.f32.mrb[0].mxu0
      %v2395 = vadd.f32 %v2134, %v2394
      %v2396 = vpop.f32.mrb[0].mxu0
      %2397 = vmatprep.mubr.f32.mxu0 0.0
      %v2398 = vand.u32 %v623, 4294901760
      %2399 = vmatmul.mubr.f32.gmra.mrb[0].mxu0 %v2398
      %v2400 = vpop.f32.mrb[0].mxu0
      %v2401 = vadd.f32 %v2140, %v2400
      %v2402 = vpop.f32.mrb[0].mxu0
      %2403 = vmatprep.mubr.f32.mxu0 0.0
      %v2404 = vand.u32 %v626, 4294901760
      %2405 = vmatmul.mubr.f32.gmra.mrb[0].mxu0 %v2404
      %v2406 = vpop.f32.mrb[0].mxu0
      %v2407 = vadd.f32 %v2146, %v2406
      %v2408 = vpop.f32.mrb[0].mxu0
      %2409 = vmatprep.mubr.f32.mxu0 0.0
      %v2410 = vand.u32 %v629, 4294901760
      %2411 = vmatmul.mubr.f32.gmra.mrb[0].mxu0 %v2410
      %v2412 = vpop.f32.mrb[0].mxu0
      %v2413 = vadd.f32 %v2152, %v2412
      %v2414 = vpop.f32.mrb[0].mxu0
      %2415 = vmatprep.mubr.f32.mxu0 0.0
      %v2416 = vand.u32 %v632, 4294901760
      %2417 = vmatmul.mubr.f32.gmra.mrb[0].mxu0 %v2416
      %v2418 = vpop.f32.mrb[0].mxu0
      %v2419 = vadd.f32 %v2158, %v2418
      %v2420 = vpop.f32.mrb[0].mxu0
      %2421 = vmatprep.mubr.f32.mxu0 0.0
      %v2422 = vand.u32 %v635, 4294901760
      %2423 = vmatmul.mubr.f32.gmra.mrb[0].mxu0 %v2422
      %v2424 = vpop.f32.mrb[0].mxu0
      %v2425 = vadd.f32 %v2164, %v2424
      %v2426 = vpop.f32.mrb[0].mxu0
      %2427 = vmatprep.mubr.f32.mxu0 0.0
      %v2428 = vand.u32 %v638, 4294901760
      %2429 = vmatmul.mubr.f32.gmra.mrb[0].mxu0 %v2428
      %v2430 = vpop.f32.mrb[0].mxu0
      %v2431 = vadd.f32 %v2170, %v2430
      %v2432 = vpop.f32.mrb[0].mxu0
      %2433 = vmatprep.mubr.f32.mxu0 0.0
      %v2434 = vand.u32 %v641, 4294901760
      %2435 = vmatmul.mubr.f32.gmra.mrb[0].mxu0 %v2434
      %v2436 = vpop.f32.mrb[0].mxu0
      %v2437 = vadd.f32 %v2176, %v2436
      %v2438 = vpop.f32.mrb[0].mxu0
      %2439 = vmatprep.mubr.f32.mxu0 0.0
      %v2440 = vand.u32 %v644, 4294901760
      %2441 = vmatmul.mubr.f32.gmra.mrb[0].mxu0 %v2440
      %v2442 = vpop.f32.mrb[0].mxu0
      %v2443 = vadd.f32 %v2182, %v2442
      %v2444 = vpop.f32.mrb[0].mxu0
      %2445 = vmatprep.mubr.f32.mxu0 0.0
      %v2446 = vand.u32 %v647, 4294901760
      %2447 = vmatmul.mubr.f32.gmra.mrb[0].mxu0 %v2446
      %v2448 = vpop.f32.mrb[0].mxu0
      %v2449 = vadd.f32 %v2188, %v2448
      %v2450 = vpop.f32.mrb[0].mxu0
      %2451 = vmatprep.mubr.f32.mxu0 0.0
      %v2452 = vand.u32 %v650, 4294901760
      %2453 = vmatmul.mubr.f32.gmra.mrb[0].mxu0 %v2452
      %v2454 = vpop.f32.mrb[0].mxu0
      %v2455 = vadd.f32 %v2194, %v2454
      %v2456 = vpop.f32.mrb[0].mxu0
      %2457 = vmatprep.mubr.f32.mxu0 0.0
      %v2458 = vand.u32 %v653, 4294901760
      %2459 = vmatmul.mubr.f32.gmra.mrb[0].mxu0 %v2458
      %v2460 = vpop.f32.mrb[0].mxu0
      %v2461 = vadd.f32 %v2200, %v2460
      %v2462 = vpop.f32.mrb[0].mxu0
      %2463 = vmatprep.mubr.f32.mxu0 0.0
      %v2464 = vand.u32 %v656, 4294901760
      %2465 = vmatmul.mubr.f32.gmra.mrb[0].mxu0 %v2464
      %v2466 = vpop.f32.mrb[0].mxu0
      %v2467 = vadd.f32 %v2206, %v2466
      %v2468 = vpop.f32.mrb[0].mxu0
      %2469 = vmatprep.mubr.f32.mxu0 0.0
      %v2470 = vand.u32 %v659, 4294901760
      %2471 = vmatmul.mubr.f32.gmra.mrb[0].mxu0 %v2470
      %v2472 = vpop.f32.mrb[0].mxu0
      %v2473 = vadd.f32 %v2212, %v2472
      %v2474 = vpop.f32.mrb[0].mxu0
      %2475 = vmatprep.mubr.f32.mxu0 0.0
      %v2476 = vand.u32 %v662, 4294901760
      %2477 = vmatmul.mubr.f32.gmra.mrb[0].mxu0 %v2476
      %v2478 = vpop.f32.mrb[0].mxu0
      %v2479 = vadd.f32 %v2218, %v2478
      %v2480 = vpop.f32.mrb[0].mxu0
      %2481 = vdwg.mxu0
      %v2482 = vmax.f32 %v2293, 0.0
      %v2483 = vmax.f32 %v2299, 0.0
      %v2484 = vmax.f32 %v2305, 0.0
      %v2485 = vmax.f32 %v2311, 0.0
      %v2486 = vmax.f32 %v2317, 0.0
      %v2487 = vmax.f32 %v2323, 0.0
      %v2488 = vmax.f32 %v2329, 0.0
      %v2489 = vmax.f32 %v2335, 0.0
      %v2490 = vmax.f32 %v2341, 0.0
      %v2491 = vmax.f32 %v2347, 0.0
      %v2492 = vmax.f32 %v2353, 0.0
      %v2493 = vmax.f32 %v2359, 0.0
      %v2494 = vmax.f32 %v2365, 0.0
      %v2495 = vmax.f32 %v2371, 0.0
      %v2496 = vmax.f32 %v2377, 0.0
      %v2497 = vmax.f32 %v2383, 0.0
      %v2498 = vmax.f32 %v2389, 0.0
      %v2499 = vmax.f32 %v2395, 0.0
      %v2500 = vmax.f32 %v2401, 0.0
      %v2501 = vmax.f32 %v2407, 0.0
      %v2502 = vmax.f32 %v2413, 0.0
      %v2503 = vmax.f32 %v2419, 0.0
      %v2504 = vmax.f32 %v2425, 0.0
      %v2505 = vmax.f32 %v2431, 0.0
      %v2506 = vmax.f32 %v2437, 0.0
      %v2507 = vmax.f32 %v2443, 0.0
      %v2508 = vmax.f32 %v2449, 0.0
      %v2509 = vmax.f32 %v2455, 0.0
      %v2510 = vmax.f32 %v2461, 0.0
      %v2511 = vmax.f32 %v2467, 0.0
      %v2512 = vmax.f32 %v2473, 0.0
      %v2513 = vmax.f32 %v2479, 0.0
      %v2514 = vld [vmem:[%s4] sm:$0xff]
      %v2515 = vld [vmem:[%s4 + $0x8] sm:$0xff]
      %v2516 = vld [vmem:[%s4 + $0x10] sm:$0xff]
      %v2517 = vld [vmem:[%s4 + $0x18] sm:$0xff]
      %v2518 = vld [vmem:[%s4 + $0x20] sm:$0xff]
      %v2519 = vld [vmem:[%s4 + $0x28] sm:$0xff]
      %v2520 = vld [vmem:[%s4 + $0x30] sm:$0xff]
      %v2521 = vld [vmem:[%s4 + $0x38] sm:$0xff]
      %v2522 = vld [vmem:[%s4 + $0x40] sm:$0xff]
      %v2523 = vld [vmem:[%s4 + $0x48] sm:$0xff]
      %v2524 = vld [vmem:[%s4 + $0x50] sm:$0xff]
      %v2525 = vld [vmem:[%s4 + $0x58] sm:$0xff]
      %v2526 = vld [vmem:[%s4 + $0x60] sm:$0xff]
      %v2527 = vld [vmem:[%s4 + $0x68] sm:$0xff]
      %v2528 = vld [vmem:[%s4 + $0x70] sm:$0xff]
      %v2529 = vld [vmem:[%s4 + $0x78] sm:$0xff]
      %v2530 = vld [vmem:[%s4 + $0x80] sm:$0xff]
      %v2531 = vld [vmem:[%s4 + $0x88] sm:$0xff]
      %v2532 = vld [vmem:[%s4 + $0x90] sm:$0xff]
      %v2533 = vld [vmem:[%s4 + $0x98] sm:$0xff]
      %v2534 = vld [vmem:[%s4 + $0xa0] sm:$0xff]
      %v2535 = vld [vmem:[%s4 + $0xa8] sm:$0xff]
      %v2536 = vld [vmem:[%s4 + $0xb0] sm:$0xff]
      %v2537 = vld [vmem:[%s4 + $0xb8] sm:$0xff]
      %v2538 = vld [vmem:[%s4 + $0xc0] sm:$0xff]
      %v2539 = vld [vmem:[%s4 + $0xc8] sm:$0xff]
      %v2540 = vld [vmem:[%s4 + $0xd0] sm:$0xff]
      %v2541 = vld [vmem:[%s4 + $0xd8] sm:$0xff]
      %v2542 = vld [vmem:[%s4 + $0xe0] sm:$0xff]
      %v2543 = vld [vmem:[%s4 + $0xe8] sm:$0xff]
      %v2544 = vld [vmem:[%s4 + $0xf0] sm:$0xff]
      %v2545 = vld [vmem:[%s4 + $0xf8] sm:$0xff]
      %v2546 = vld [vmem:[%s4 + $0x100] sm:$0xff]
      %v2547 = vld [vmem:[%s4 + $0x108] sm:$0xff]
      %v2548 = vld [vmem:[%s4 + $0x110] sm:$0xff]
      %v2549 = vld [vmem:[%s4 + $0x118] sm:$0xff]
      %v2550 = vld [vmem:[%s4 + $0x120] sm:$0xff]
      %v2551 = vld [vmem:[%s4 + $0x128] sm:$0xff]
      %v2552 = vld [vmem:[%s4 + $0x130] sm:$0xff]
      %v2553 = vld [vmem:[%s4 + $0x138] sm:$0xff]
      %v2554 = vld [vmem:[%s4 + $0x140] sm:$0xff]
      %v2555 = vld [vmem:[%s4 + $0x148] sm:$0xff]
      %v2556 = vld [vmem:[%s4 + $0x150] sm:$0xff]
      %v2557 = vld [vmem:[%s4 + $0x158] sm:$0xff]
      %v2558 = vld [vmem:[%s4 + $0x160] sm:$0xff]
      %v2559 = vld [vmem:[%s4 + $0x168] sm:$0xff]
      %v2560 = vld [vmem:[%s4 + $0x170] sm:$0xff]
      %v2561 = vld [vmem:[%s4 + $0x178] sm:$0xff]
      %v2562 = vld [vmem:[%s5] sm:$0xff]
      %v2563 = vld [vmem:[%s5 + $0x8] sm:$0xff]
      %v2564 = vld [vmem:[%s5 + $0x10] sm:$0xff]
      %v2565 = vld [vmem:[%s5 + $0x18] sm:$0xff]
      %v2566 = vld [vmem:[%s5 + $0x20] sm:$0xff]
      %v2567 = vld [vmem:[%s5 + $0x28] sm:$0xff]
      %v2568 = vld [vmem:[%s5 + $0x30] sm:$0xff]
      %v2569 = vld [vmem:[%s5 + $0x38] sm:$0xff]
      %v2570 = vld [vmem:[%s5 + $0x40] sm:$0xff]
      %v2571 = vld [vmem:[%s5 + $0x48] sm:$0xff]
      %v2572 = vld [vmem:[%s5 + $0x50] sm:$0xff]
      %v2573 = vld [vmem:[%s5 + $0x58] sm:$0xff]
      %v2574 = vld [vmem:[%s5 + $0x60] sm:$0xff]
      %v2575 = vld [vmem:[%s5 + $0x68] sm:$0xff]
      %v2576 = vld [vmem:[%s5 + $0x70] sm:$0xff]
      %v2577 = vld [vmem:[%s5 + $0x78] sm:$0xff]
      %v2578 = vld [vmem:[%s5 + $0x80] sm:$0xff]
      %v2579 = vld [vmem:[%s5 + $0x88] sm:$0xff]
      %v2580 = vld [vmem:[%s5 + $0x90] sm:$0xff]
      %v2581 = vld [vmem:[%s5 + $0x98] sm:$0xff]
      %v2582 = vld [vmem:[%s5 + $0xa0] sm:$0xff]
      %v2583 = vld [vmem:[%s5 + $0xa8] sm:$0xff]
      %v2584 = vld [vmem:[%s5 + $0xb0] sm:$0xff]
      %v2585 = vld [vmem:[%s5 + $0xb8] sm:$0xff]
      %2587 = vset.pattern.permute.xlu0 0
      %2588 = vperm.xlu0 %2587, %v2562
      %v2589 = vpop.permute.xlu0 %2588
      %2592 = vset.pattern.permute.xlu0 0
      %2593 = vperm.xlu0 %2592, %v2563
      %v2594 = vpop.permute.xlu0 %2593
      %2597 = vset.pattern.permute.xlu0 0
      %2598 = vperm.xlu0 %2597, %v2564
      %v2599 = vpop.permute.xlu0 %2598
      %2602 = vset.pattern.permute.xlu0 0
      %2603 = vperm.xlu0 %2602, %v2565
      %v2604 = vpop.permute.xlu0 %2603
      %2607 = vset.pattern.permute.xlu0 0
      %2608 = vperm.xlu0 %2607, %v2566
      %v2609 = vpop.permute.xlu0 %2608
      %2612 = vset.pattern.permute.xlu0 0
      %2613 = vperm.xlu0 %2612, %v2567
      %v2614 = vpop.permute.xlu0 %2613
      %2617 = vset.pattern.permute.xlu0 0
      %2618 = vperm.xlu0 %2617, %v2568
      %v2619 = vpop.permute.xlu0 %2618
      %2622 = vset.pattern.permute.xlu0 0
      %2623 = vperm.xlu0 %2622, %v2569
      %v2624 = vpop.permute.xlu0 %2623
      %2627 = vset.pattern.permute.xlu0 0
      %2628 = vperm.xlu0 %2627, %v2570
      %v2629 = vpop.permute.xlu0 %2628
      %2632 = vset.pattern.permute.xlu0 0
      %2633 = vperm.xlu0 %2632, %v2571
      %v2634 = vpop.permute.xlu0 %2633
      %2637 = vset.pattern.permute.xlu0 0
      %2638 = vperm.xlu0 %2637, %v2572
      %v2639 = vpop.permute.xlu0 %2638
      %2642 = vset.pattern.permute.xlu0 0
      %2643 = vperm.xlu0 %2642, %v2573
      %v2644 = vpop.permute.xlu0 %2643
      %2647 = vset.pattern.permute.xlu0 0
      %2648 = vperm.xlu0 %2647, %v2574
      %v2649 = vpop.permute.xlu0 %2648
      %2652 = vset.pattern.permute.xlu0 0
      %2653 = vperm.xlu0 %2652, %v2575
      %v2654 = vpop.permute.xlu0 %2653
      %2657 = vset.pattern.permute.xlu0 0
      %2658 = vperm.xlu0 %2657, %v2576
      %v2659 = vpop.permute.xlu0 %2658
      %2662 = vset.pattern.permute.xlu0 0
      %2663 = vperm.xlu0 %2662, %v2577
      %v2664 = vpop.permute.xlu0 %2663
      %2667 = vset.pattern.permute.xlu0 0
      %2668 = vperm.xlu0 %2667, %v2578
      %v2669 = vpop.permute.xlu0 %2668
      %2672 = vset.pattern.permute.xlu0 0
      %2673 = vperm.xlu0 %2672, %v2579
      %v2674 = vpop.permute.xlu0 %2673
      %2677 = vset.pattern.permute.xlu0 0
      %2678 = vperm.xlu0 %2677, %v2580
      %v2679 = vpop.permute.xlu0 %2678
      %2682 = vset.pattern.permute.xlu0 0
      %2683 = vperm.xlu0 %2682, %v2581
      %v2684 = vpop.permute.xlu0 %2683
      %2687 = vset.pattern.permute.xlu0 0
      %2688 = vperm.xlu0 %2687, %v2582
      %v2689 = vpop.permute.xlu0 %2688
      %2692 = vset.pattern.permute.xlu0 0
      %2693 = vperm.xlu0 %2692, %v2583
      %v2694 = vpop.permute.xlu0 %2693
      %2697 = vset.pattern.permute.xlu0 0
      %2698 = vperm.xlu0 %2697, %v2584
      %v2699 = vpop.permute.xlu0 %2698
      %2702 = vset.pattern.permute.xlu0 0
      %2703 = vperm.xlu0 %2702, %v2585
      %v2704 = vpop.permute.xlu0 %2703
      %2706 = vmatprep.subr.mxu0 0.0
      %v2707 = vand.u32 %v2482, 4294901760
      %2708 = vmatpush1.msra.mxu0 %v2707
      %2709 = vmatprep.subr.mxu0 0.0
      %v2710 = vand.u32 %v2483, 4294901760
      %2711 = vmatpush1.msra.mxu0 %v2710
      %2712 = vmatprep.subr.mxu0 0.0
      %v2713 = vand.u32 %v2484, 4294901760
      %2714 = vmatpush1.msra.mxu0 %v2713
      %2715 = vmatprep.subr.mxu0 0.0
      %v2716 = vand.u32 %v2485, 4294901760
      %2717 = vmatpush1.msra.mxu0 %v2716
      %2718 = vmatprep.subr.mxu0 0.0
      %v2719 = vand.u32 %v2486, 4294901760
      %2720 = vmatpush1.msra.mxu0 %v2719
      %2721 = vmatprep.subr.mxu0 0.0
      %v2722 = vand.u32 %v2487, 4294901760
      %2723 = vmatpush1.msra.mxu0 %v2722
      %2724 = vmatprep.subr.mxu0 0.0
      %v2725 = vand.u32 %v2488, 4294901760
      %2726 = vmatpush1.msra.mxu0 %v2725
      %2727 = vmatprep.subr.mxu0 0.0
      %v2728 = vand.u32 %v2489, 4294901760
      %2729 = vmatpush1.msra.mxu0 %v2728
      %2730 = vmatprep.subr.mxu0 0.0
      %v2731 = vand.u32 %v2490, 4294901760
      %2732 = vmatpush1.msra.mxu0 %v2731
      %2733 = vmatprep.subr.mxu0 0.0
      %v2734 = vand.u32 %v2491, 4294901760
      %2735 = vmatpush1.msra.mxu0 %v2734
      %2736 = vmatprep.subr.mxu0 0.0
      %v2737 = vand.u32 %v2492, 4294901760
      %2738 = vmatpush1.msra.mxu0 %v2737
      %2739 = vmatprep.subr.mxu0 0.0
      %v2740 = vand.u32 %v2493, 4294901760
      %2741 = vmatpush1.msra.mxu0 %v2740
      %2742 = vmatprep.subr.mxu0 0.0
      %v2743 = vand.u32 %v2494, 4294901760
      %2744 = vmatpush1.msra.mxu0 %v2743
      %2745 = vmatprep.subr.mxu0 0.0
      %v2746 = vand.u32 %v2495, 4294901760
      %2747 = vmatpush1.msra.mxu0 %v2746
      %2748 = vmatprep.subr.mxu0 0.0
      %v2749 = vand.u32 %v2496, 4294901760
      %2750 = vmatpush1.msra.mxu0 %v2749
      %2751 = vmatprep.subr.mxu0 0.0
      %v2752 = vand.u32 %v2497, 4294901760
      %2753 = vmatpush1.msra.mxu0 %v2752
      %2754 = vmatprep.subr.mxu0 0.0
      %v2755 = vand.u32 %v2498, 4294901760
      %2756 = vmatpush1.msra.mxu0 %v2755
      %2757 = vmatprep.subr.mxu0 0.0
      %v2758 = vand.u32 %v2499, 4294901760
      %2759 = vmatpush1.msra.mxu0 %v2758
      %2760 = vmatprep.subr.mxu0 0.0
      %v2761 = vand.u32 %v2500, 4294901760
      %2762 = vmatpush1.msra.mxu0 %v2761
      %2763 = vmatprep.subr.mxu0 0.0
      %v2764 = vand.u32 %v2501, 4294901760
      %2765 = vmatpush1.msra.mxu0 %v2764
      %2766 = vmatprep.subr.mxu0 0.0
      %v2767 = vand.u32 %v2502, 4294901760
      %2768 = vmatpush1.msra.mxu0 %v2767
      %2769 = vmatprep.subr.mxu0 0.0
      %v2770 = vand.u32 %v2503, 4294901760
      %2771 = vmatpush1.msra.mxu0 %v2770
      %2772 = vmatprep.subr.mxu0 0.0
      %v2773 = vand.u32 %v2504, 4294901760
      %2774 = vmatpush1.msra.mxu0 %v2773
      %2775 = vmatprep.subr.mxu0 0.0
      %v2776 = vand.u32 %v2505, 4294901760
      %2777 = vmatpush1.msra.mxu0 %v2776
      %2778 = vmatprep.subr.mxu0 0.0
      %v2779 = vand.u32 %v2506, 4294901760
      %2780 = vmatpush1.msra.mxu0 %v2779
      %2781 = vmatprep.subr.mxu0 0.0
      %v2782 = vand.u32 %v2507, 4294901760
      %2783 = vmatpush1.msra.mxu0 %v2782
      %2784 = vmatprep.subr.mxu0 0.0
      %v2785 = vand.u32 %v2508, 4294901760
      %2786 = vmatpush1.msra.mxu0 %v2785
      %2787 = vmatprep.subr.mxu0 0.0
      %v2788 = vand.u32 %v2509, 4294901760
      %2789 = vmatpush1.msra.mxu0 %v2788
      %2790 = vmatprep.subr.mxu0 0.0
      %v2791 = vand.u32 %v2510, 4294901760
      %2792 = vmatpush1.msra.mxu0 %v2791
      %2793 = vmatprep.subr.mxu0 0.0
      %v2794 = vand.u32 %v2511, 4294901760
      %2795 = vmatpush1.msra.mxu0 %v2794
      %2796 = vmatprep.subr.mxu0 0.0
      %v2797 = vand.u32 %v2512, 4294901760
      %2798 = vmatpush1.msra.mxu0 %v2797
      %2799 = vmatprep.subr.mxu0 0.0
      %v2800 = vand.u32 %v2513, 4294901760
      %2801 = vmatpush1.msra.mxu0 %v2800
      %v2802 = vand.u32 %v2515, 4294901760
      %v2803 = vsub.f32 %v2515, %v2802
      %v2804 = vand.u32 %v2803, 4294901760
      %v2805 = vsub.f32 %v2803, %v2804
      %v2806 = vand.u32 %v2805, 4294901760
      %2807 = vmatprep.mubr.f32.mxu0 %v2806
      %v2808 = vand.u32 %v2514, 4294901760
      %v2809 = vsub.f32 %v2514, %v2808
      %v2810 = vand.u32 %v2809, 4294901760
      %v2811 = vsub.f32 %v2809, %v2810
      %v2812 = vand.u32 %v2811, 4294901760
      %2813 = vmatmul.mubr.f32.gmra.mrb[0].mxu0 %v2812
      %v2814 = vpop.f32.mrb[0].mxu0
      %v2815 = vadd.f32 %v2589, %v2814
      %v2816 = vpop.f32.mrb[0].mxu0
      %v2817 = vand.u32 %v2517, 4294901760
      %v2818 = vsub.f32 %v2517, %v2817
      %v2819 = vand.u32 %v2818, 4294901760
      %v2820 = vsub.f32 %v2818, %v2819
      %v2821 = vand.u32 %v2820, 4294901760
      %2822 = vmatprep.mubr.f32.mxu0 %v2821
      %v2823 = vand.u32 %v2516, 4294901760
      %v2824 = vsub.f32 %v2516, %v2823
      %v2825 = vand.u32 %v2824, 4294901760
      %v2826 = vsub.f32 %v2824, %v2825
      %v2827 = vand.u32 %v2826, 4294901760
      %2828 = vmatmul.mubr.f32.gmra.mrb[0].mxu0 %v2827
      %v2829 = vpop.f32.mrb[0].mxu0
      %v2830 = vadd.f32 %v2594, %v2829
      %v2831 = vpop.f32.mrb[0].mxu0
      %v2832 = vand.u32 %v2519, 4294901760
      %v2833 = vsub.f32 %v2519, %v2832
      %v2834 = vand.u32 %v2833, 4294901760
      %v2835 = vsub.f32 %v2833, %v2834
      %v2836 = vand.u32 %v2835, 4294901760
      %2837 = vmatprep.mubr.f32.mxu0 %v2836
      %v2838 = vand.u32 %v2518, 4294901760
      %v2839 = vsub.f32 %v2518, %v2838
      %v2840 = vand.u32 %v2839, 4294901760
      %v2841 = vsub.f32 %v2839, %v2840
      %v2842 = vand.u32 %v2841, 4294901760
      %2843 = vmatmul.mubr.f32.gmra.mrb[0].mxu0 %v2842
      %v2844 = vpop.f32.mrb[0].mxu0
      %v2845 = vadd.f32 %v2599, %v2844
      %v2846 = vpop.f32.mrb[0].mxu0
      %v2847 = vand.u32 %v2521, 4294901760
      %v2848 = vsub.f32 %v2521, %v2847
      %v2849 = vand.u32 %v2848, 4294901760
      %v2850 = vsub.f32 %v2848, %v2849
      %v2851 = vand.u32 %v2850, 4294901760
      %2852 = vmatprep.mubr.f32.mxu0 %v2851
      %v2853 = vand.u32 %v2520, 4294901760
      %v2854 = vsub.f32 %v2520, %v2853
      %v2855 = vand.u32 %v2854, 4294901760
      %v2856 = vsub.f32 %v2854, %v2855
      %v2857 = vand.u32 %v2856, 4294901760
      %2858 = vmatmul.mubr.f32.gmra.mrb[0].mxu0 %v2857
      %v2859 = vpop.f32.mrb[0].mxu0
      %v2860 = vadd.f32 %v2604, %v2859
      %v2861 = vpop.f32.mrb[0].mxu0
      %v2862 = vand.u32 %v2523, 4294901760
      %v2863 = vsub.f32 %v2523, %v2862
      %v2864 = vand.u32 %v2863, 4294901760
      %v2865 = vsub.f32 %v2863, %v2864
      %v2866 = vand.u32 %v2865, 4294901760
      %2867 = vmatprep.mubr.f32.mxu0 %v2866
      %v2868 = vand.u32 %v2522, 4294901760
      %v2869 = vsub.f32 %v2522, %v2868
      %v2870 = vand.u32 %v2869, 4294901760
      %v2871 = vsub.f32 %v2869, %v2870
      %v2872 = vand.u32 %v2871, 4294901760
      %2873 = vmatmul.mubr.f32.gmra.mrb[0].mxu0 %v2872
      %v2874 = vpop.f32.mrb[0].mxu0
      %v2875 = vadd.f32 %v2609, %v2874
      %v2876 = vpop.f32.mrb[0].mxu0
      %v2877 = vand.u32 %v2525, 4294901760
      %v2878 = vsub.f32 %v2525, %v2877
      %v2879 = vand.u32 %v2878, 4294901760
      %v2880 = vsub.f32 %v2878, %v2879
      %v2881 = vand.u32 %v2880, 4294901760
      %2882 = vmatprep.mubr.f32.mxu0 %v2881
      %v2883 = vand.u32 %v2524, 4294901760
      %v2884 = vsub.f32 %v2524, %v2883
      %v2885 = vand.u32 %v2884, 4294901760
      %v2886 = vsub.f32 %v2884, %v2885
      %v2887 = vand.u32 %v2886, 4294901760
      %2888 = vmatmul.mubr.f32.gmra.mrb[0].mxu0 %v2887
      %v2889 = vpop.f32.mrb[0].mxu0
      %v2890 = vadd.f32 %v2614, %v2889
      %v2891 = vpop.f32.mrb[0].mxu0
      %v2892 = vand.u32 %v2527, 4294901760
      %v2893 = vsub.f32 %v2527, %v2892
      %v2894 = vand.u32 %v2893, 4294901760
      %v2895 = vsub.f32 %v2893, %v2894
      %v2896 = vand.u32 %v2895, 4294901760
      %2897 = vmatprep.mubr.f32.mxu0 %v2896
      %v2898 = vand.u32 %v2526, 4294901760
      %v2899 = vsub.f32 %v2526, %v2898
      %v2900 = vand.u32 %v2899, 4294901760
      %v2901 = vsub.f32 %v2899, %v2900
      %v2902 = vand.u32 %v2901, 4294901760
      %2903 = vmatmul.mubr.f32.gmra.mrb[0].mxu0 %v2902
      %v2904 = vpop.f32.mrb[0].mxu0
      %v2905 = vadd.f32 %v2619, %v2904
      %v2906 = vpop.f32.mrb[0].mxu0
      %v2907 = vand.u32 %v2529, 4294901760
      %v2908 = vsub.f32 %v2529, %v2907
      %v2909 = vand.u32 %v2908, 4294901760
      %v2910 = vsub.f32 %v2908, %v2909
      %v2911 = vand.u32 %v2910, 4294901760
      %2912 = vmatprep.mubr.f32.mxu0 %v2911
      %v2913 = vand.u32 %v2528, 4294901760
      %v2914 = vsub.f32 %v2528, %v2913
      %v2915 = vand.u32 %v2914, 4294901760
      %v2916 = vsub.f32 %v2914, %v2915
      %v2917 = vand.u32 %v2916, 4294901760
      %2918 = vmatmul.mubr.f32.gmra.mrb[0].mxu0 %v2917
      %v2919 = vpop.f32.mrb[0].mxu0
      %v2920 = vadd.f32 %v2624, %v2919
      %v2921 = vpop.f32.mrb[0].mxu0
      %v2922 = vand.u32 %v2531, 4294901760
      %v2923 = vsub.f32 %v2531, %v2922
      %v2924 = vand.u32 %v2923, 4294901760
      %v2925 = vsub.f32 %v2923, %v2924
      %v2926 = vand.u32 %v2925, 4294901760
      %2927 = vmatprep.mubr.f32.mxu0 %v2926
      %v2928 = vand.u32 %v2530, 4294901760
      %v2929 = vsub.f32 %v2530, %v2928
      %v2930 = vand.u32 %v2929, 4294901760
      %v2931 = vsub.f32 %v2929, %v2930
      %v2932 = vand.u32 %v2931, 4294901760
      %2933 = vmatmul.mubr.f32.gmra.mrb[0].mxu0 %v2932
      %v2934 = vpop.f32.mrb[0].mxu0
      %v2935 = vadd.f32 %v2629, %v2934
      %v2936 = vpop.f32.mrb[0].mxu0
      %v2937 = vand.u32 %v2533, 4294901760
      %v2938 = vsub.f32 %v2533, %v2937
      %v2939 = vand.u32 %v2938, 4294901760
      %v2940 = vsub.f32 %v2938, %v2939
      %v2941 = vand.u32 %v2940, 4294901760
      %2942 = vmatprep.mubr.f32.mxu0 %v2941
      %v2943 = vand.u32 %v2532, 4294901760
      %v2944 = vsub.f32 %v2532, %v2943
      %v2945 = vand.u32 %v2944, 4294901760
      %v2946 = vsub.f32 %v2944, %v2945
      %v2947 = vand.u32 %v2946, 4294901760
      %2948 = vmatmul.mubr.f32.gmra.mrb[0].mxu0 %v2947
      %v2949 = vpop.f32.mrb[0].mxu0
      %v2950 = vadd.f32 %v2634, %v2949
      %v2951 = vpop.f32.mrb[0].mxu0
      %v2952 = vand.u32 %v2535, 4294901760
      %v2953 = vsub.f32 %v2535, %v2952
      %v2954 = vand.u32 %v2953, 4294901760
      %v2955 = vsub.f32 %v2953, %v2954
      %v2956 = vand.u32 %v2955, 4294901760
      %2957 = vmatprep.mubr.f32.mxu0 %v2956
      %v2958 = vand.u32 %v2534, 4294901760
      %v2959 = vsub.f32 %v2534, %v2958
      %v2960 = vand.u32 %v2959, 4294901760
      %v2961 = vsub.f32 %v2959, %v2960
      %v2962 = vand.u32 %v2961, 4294901760
      %2963 = vmatmul.mubr.f32.gmra.mrb[0].mxu0 %v2962
      %v2964 = vpop.f32.mrb[0].mxu0
      %v2965 = vadd.f32 %v2639, %v2964
      %v2966 = vpop.f32.mrb[0].mxu0
      %v2967 = vand.u32 %v2537, 4294901760
      %v2968 = vsub.f32 %v2537, %v2967
      %v2969 = vand.u32 %v2968, 4294901760
      %v2970 = vsub.f32 %v2968, %v2969
      %v2971 = vand.u32 %v2970, 4294901760
      %2972 = vmatprep.mubr.f32.mxu0 %v2971
      %v2973 = vand.u32 %v2536, 4294901760
      %v2974 = vsub.f32 %v2536, %v2973
      %v2975 = vand.u32 %v2974, 4294901760
      %v2976 = vsub.f32 %v2974, %v2975
      %v2977 = vand.u32 %v2976, 4294901760
      %2978 = vmatmul.mubr.f32.gmra.mrb[0].mxu0 %v2977
      %v2979 = vpop.f32.mrb[0].mxu0
      %v2980 = vadd.f32 %v2644, %v2979
      %v2981 = vpop.f32.mrb[0].mxu0
      %v2982 = vand.u32 %v2539, 4294901760
      %v2983 = vsub.f32 %v2539, %v2982
      %v2984 = vand.u32 %v2983, 4294901760
      %v2985 = vsub.f32 %v2983, %v2984
      %v2986 = vand.u32 %v2985, 4294901760
      %2987 = vmatprep.mubr.f32.mxu0 %v2986
      %v2988 = vand.u32 %v2538, 4294901760
      %v2989 = vsub.f32 %v2538, %v2988
      %v2990 = vand.u32 %v2989, 4294901760
      %v2991 = vsub.f32 %v2989, %v2990
      %v2992 = vand.u32 %v2991, 4294901760
      %2993 = vmatmul.mubr.f32.gmra.mrb[0].mxu0 %v2992
      %v2994 = vpop.f32.mrb[0].mxu0
      %v2995 = vadd.f32 %v2649, %v2994
      %v2996 = vpop.f32.mrb[0].mxu0
      %v2997 = vand.u32 %v2541, 4294901760
      %v2998 = vsub.f32 %v2541, %v2997
      %v2999 = vand.u32 %v2998, 4294901760
      %v3000 = vsub.f32 %v2998, %v2999
      %v3001 = vand.u32 %v3000, 4294901760
      %3002 = vmatprep.mubr.f32.mxu0 %v3001
      %v3003 = vand.u32 %v2540, 4294901760
      %v3004 = vsub.f32 %v2540, %v3003
      %v3005 = vand.u32 %v3004, 4294901760
      %v3006 = vsub.f32 %v3004, %v3005
      %v3007 = vand.u32 %v3006, 4294901760
      %3008 = vmatmul.mubr.f32.gmra.mrb[0].mxu0 %v3007
      %v3009 = vpop.f32.mrb[0].mxu0
      %v3010 = vadd.f32 %v2654, %v3009
      %v3011 = vpop.f32.mrb[0].mxu0
      %v3012 = vand.u32 %v2543, 4294901760
      %v3013 = vsub.f32 %v2543, %v3012
      %v3014 = vand.u32 %v3013, 4294901760
      %v3015 = vsub.f32 %v3013, %v3014
      %v3016 = vand.u32 %v3015, 4294901760
      %3017 = vmatprep.mubr.f32.mxu0 %v3016
      %v3018 = vand.u32 %v2542, 4294901760
      %v3019 = vsub.f32 %v2542, %v3018
      %v3020 = vand.u32 %v3019, 4294901760
      %v3021 = vsub.f32 %v3019, %v3020
      %v3022 = vand.u32 %v3021, 4294901760
      %3023 = vmatmul.mubr.f32.gmra.mrb[0].mxu0 %v3022
      %v3024 = vpop.f32.mrb[0].mxu0
      %v3025 = vadd.f32 %v2659, %v3024
      %v3026 = vpop.f32.mrb[0].mxu0
      %v3027 = vand.u32 %v2545, 4294901760
      %v3028 = vsub.f32 %v2545, %v3027
      %v3029 = vand.u32 %v3028, 4294901760
      %v3030 = vsub.f32 %v3028, %v3029
      %v3031 = vand.u32 %v3030, 4294901760
      %3032 = vmatprep.mubr.f32.mxu0 %v3031
      %v3033 = vand.u32 %v2544, 4294901760
      %v3034 = vsub.f32 %v2544, %v3033
      %v3035 = vand.u32 %v3034, 4294901760
      %v3036 = vsub.f32 %v3034, %v3035
      %v3037 = vand.u32 %v3036, 4294901760
      %3038 = vmatmul.mubr.f32.gmra.mrb[0].mxu0 %v3037
      %v3039 = vpop.f32.mrb[0].mxu0
      %v3040 = vadd.f32 %v2664, %v3039
      %v3041 = vpop.f32.mrb[0].mxu0
      %v3042 = vand.u32 %v2547, 4294901760
      %v3043 = vsub.f32 %v2547, %v3042
      %v3044 = vand.u32 %v3043, 4294901760
      %v3045 = vsub.f32 %v3043, %v3044
      %v3046 = vand.u32 %v3045, 4294901760
      %3047 = vmatprep.mubr.f32.mxu0 %v3046
      %v3048 = vand.u32 %v2546, 4294901760
      %v3049 = vsub.f32 %v2546, %v3048
      %v3050 = vand.u32 %v3049, 4294901760
      %v3051 = vsub.f32 %v3049, %v3050
      %v3052 = vand.u32 %v3051, 4294901760
      %3053 = vmatmul.mubr.f32.gmra.mrb[0].mxu0 %v3052
      %v3054 = vpop.f32.mrb[0].mxu0
      %v3055 = vadd.f32 %v2669, %v3054
      %v3056 = vpop.f32.mrb[0].mxu0
      %v3057 = vand.u32 %v2549, 4294901760
      %v3058 = vsub.f32 %v2549, %v3057
      %v3059 = vand.u32 %v3058, 4294901760
      %v3060 = vsub.f32 %v3058, %v3059
      %v3061 = vand.u32 %v3060, 4294901760
      %3062 = vmatprep.mubr.f32.mxu0 %v3061
      %v3063 = vand.u32 %v2548, 4294901760
      %v3064 = vsub.f32 %v2548, %v3063
      %v3065 = vand.u32 %v3064, 4294901760
      %v3066 = vsub.f32 %v3064, %v3065
      %v3067 = vand.u32 %v3066, 4294901760
      %3068 = vmatmul.mubr.f32.gmra.mrb[0].mxu0 %v3067
      %v3069 = vpop.f32.mrb[0].mxu0
      %v3070 = vadd.f32 %v2674, %v3069
      %v3071 = vpop.f32.mrb[0].mxu0
      %v3072 = vand.u32 %v2551, 4294901760
      %v3073 = vsub.f32 %v2551, %v3072
      %v3074 = vand.u32 %v3073, 4294901760
      %v3075 = vsub.f32 %v3073, %v3074
      %v3076 = vand.u32 %v3075, 4294901760
      %3077 = vmatprep.mubr.f32.mxu0 %v3076
      %v3078 = vand.u32 %v2550, 4294901760
      %v3079 = vsub.f32 %v2550, %v3078
      %v3080 = vand.u32 %v3079, 4294901760
      %v3081 = vsub.f32 %v3079, %v3080
      %v3082 = vand.u32 %v3081, 4294901760
      %3083 = vmatmul.mubr.f32.gmra.mrb[0].mxu0 %v3082
      %v3084 = vpop.f32.mrb[0].mxu0
      %v3085 = vadd.f32 %v2679, %v3084
      %v3086 = vpop.f32.mrb[0].mxu0
      %v3087 = vand.u32 %v2553, 4294901760
      %v3088 = vsub.f32 %v2553, %v3087
      %v3089 = vand.u32 %v3088, 4294901760
      %v3090 = vsub.f32 %v3088, %v3089
      %v3091 = vand.u32 %v3090, 4294901760
      %3092 = vmatprep.mubr.f32.mxu0 %v3091
      %v3093 = vand.u32 %v2552, 4294901760
      %v3094 = vsub.f32 %v2552, %v3093
      %v3095 = vand.u32 %v3094, 4294901760
      %v3096 = vsub.f32 %v3094, %v3095
      %v3097 = vand.u32 %v3096, 4294901760
      %3098 = vmatmul.mubr.f32.gmra.mrb[0].mxu0 %v3097
      %v3099 = vpop.f32.mrb[0].mxu0
      %v3100 = vadd.f32 %v2684, %v3099
      %v3101 = vpop.f32.mrb[0].mxu0
      %v3102 = vand.u32 %v2555, 4294901760
      %v3103 = vsub.f32 %v2555, %v3102
      %v3104 = vand.u32 %v3103, 4294901760
      %v3105 = vsub.f32 %v3103, %v3104
      %v3106 = vand.u32 %v3105, 4294901760
      %3107 = vmatprep.mubr.f32.mxu0 %v3106
      %v3108 = vand.u32 %v2554, 4294901760
      %v3109 = vsub.f32 %v2554, %v3108
      %v3110 = vand.u32 %v3109, 4294901760
      %v3111 = vsub.f32 %v3109, %v3110
      %v3112 = vand.u32 %v3111, 4294901760
      %3113 = vmatmul.mubr.f32.gmra.mrb[0].mxu0 %v3112
      %v3114 = vpop.f32.mrb[0].mxu0
      %v3115 = vadd.f32 %v2689, %v3114
      %v3116 = vpop.f32.mrb[0].mxu0
      %v3117 = vand.u32 %v2557, 4294901760
      %v3118 = vsub.f32 %v2557, %v3117
      %v3119 = vand.u32 %v3118, 4294901760
      %v3120 = vsub.f32 %v3118, %v3119
      %v3121 = vand.u32 %v3120, 4294901760
      %3122 = vmatprep.mubr.f32.mxu0 %v3121
      %v3123 = vand.u32 %v2556, 4294901760
      %v3124 = vsub.f32 %v2556, %v3123
      %v3125 = vand.u32 %v3124, 4294901760
      %v3126 = vsub.f32 %v3124, %v3125
      %v3127 = vand.u32 %v3126, 4294901760
      %3128 = vmatmul.mubr.f32.gmra.mrb[0].mxu0 %v3127
      %v3129 = vpop.f32.mrb[0].mxu0
      %v3130 = vadd.f32 %v2694, %v3129
      %v3131 = vpop.f32.mrb[0].mxu0
      %v3132 = vand.u32 %v2559, 4294901760
      %v3133 = vsub.f32 %v2559, %v3132
      %v3134 = vand.u32 %v3133, 4294901760
      %v3135 = vsub.f32 %v3133, %v3134
      %v3136 = vand.u32 %v3135, 4294901760
      %3137 = vmatprep.mubr.f32.mxu0 %v3136
      %v3138 = vand.u32 %v2558, 4294901760
      %v3139 = vsub.f32 %v2558, %v3138
      %v3140 = vand.u32 %v3139, 4294901760
      %v3141 = vsub.f32 %v3139, %v3140
      %v3142 = vand.u32 %v3141, 4294901760
      %3143 = vmatmul.mubr.f32.gmra.mrb[0].mxu0 %v3142
      %v3144 = vpop.f32.mrb[0].mxu0
      %v3145 = vadd.f32 %v2699, %v3144
      %v3146 = vpop.f32.mrb[0].mxu0
      %v3147 = vand.u32 %v2561, 4294901760
      %v3148 = vsub.f32 %v2561, %v3147
      %v3149 = vand.u32 %v3148, 4294901760
      %v3150 = vsub.f32 %v3148, %v3149
      %v3151 = vand.u32 %v3150, 4294901760
      %3152 = vmatprep.mubr.f32.mxu0 %v3151
      %v3153 = vand.u32 %v2560, 4294901760
      %v3154 = vsub.f32 %v2560, %v3153
      %v3155 = vand.u32 %v3154, 4294901760
      %v3156 = vsub.f32 %v3154, %v3155
      %v3157 = vand.u32 %v3156, 4294901760
      %3158 = vmatmul.mubr.f32.gmra.mrb[0].mxu0 %v3157
      %v3159 = vpop.f32.mrb[0].mxu0
      %v3160 = vadd.f32 %v2704, %v3159
      %v3161 = vpop.f32.mrb[0].mxu0
      %3162 = vdwg.mxu0
      %3163 = vmatprep.subr.mxu0 0.0
      %v3164 = vand.u32 %v2482, 4294901760
      %v3165 = vsub.f32 %v2482, %v3164
      %v3166 = vand.u32 %v3165, 4294901760
      %v3167 = vsub.f32 %v3165, %v3166
      %v3168 = vand.u32 %v3167, 4294901760
      %3169 = vmatpush1.msra.mxu0 %v3168
      %3170 = vmatprep.subr.mxu0 0.0
      %v3171 = vand.u32 %v2483, 4294901760
      %v3172 = vsub.f32 %v2483, %v3171
      %v3173 = vand.u32 %v3172, 4294901760
      %v3174 = vsub.f32 %v3172, %v3173
      %v3175 = vand.u32 %v3174, 4294901760
      %3176 = vmatpush1.msra.mxu0 %v3175
      %3177 = vmatprep.subr.mxu0 0.0
      %v3178 = vand.u32 %v2484, 4294901760
      %v3179 = vsub.f32 %v2484, %v3178
      %v3180 = vand.u32 %v3179, 4294901760
      %v3181 = vsub.f32 %v3179, %v3180
      %v3182 = vand.u32 %v3181, 4294901760
      %3183 = vmatpush1.msra.mxu0 %v3182
      %3184 = vmatprep.subr.mxu0 0.0
      %v3185 = vand.u32 %v2485, 4294901760
      %v3186 = vsub.f32 %v2485, %v3185
      %v3187 = vand.u32 %v3186, 4294901760
      %v3188 = vsub.f32 %v3186, %v3187
      %v3189 = vand.u32 %v3188, 4294901760
      %3190 = vmatpush1.msra.mxu0 %v3189
      %3191 = vmatprep.subr.mxu0 0.0
      %v3192 = vand.u32 %v2486, 4294901760
      %v3193 = vsub.f32 %v2486, %v3192
      %v3194 = vand.u32 %v3193, 4294901760
      %v3195 = vsub.f32 %v3193, %v3194
      %v3196 = vand.u32 %v3195, 4294901760
      %3197 = vmatpush1.msra.mxu0 %v3196
      %3198 = vmatprep.subr.mxu0 0.0
      %v3199 = vand.u32 %v2487, 4294901760
      %v3200 = vsub.f32 %v2487, %v3199
      %v3201 = vand.u32 %v3200, 4294901760
      %v3202 = vsub.f32 %v3200, %v3201
      %v3203 = vand.u32 %v3202, 4294901760
      %3204 = vmatpush1.msra.mxu0 %v3203
      %3205 = vmatprep.subr.mxu0 0.0
      %v3206 = vand.u32 %v2488, 4294901760
      %v3207 = vsub.f32 %v2488, %v3206
      %v3208 = vand.u32 %v3207, 4294901760
      %v3209 = vsub.f32 %v3207, %v3208
      %v3210 = vand.u32 %v3209, 4294901760
      %3211 = vmatpush1.msra.mxu0 %v3210
      %3212 = vmatprep.subr.mxu0 0.0
      %v3213 = vand.u32 %v2489, 4294901760
      %v3214 = vsub.f32 %v2489, %v3213
      %v3215 = vand.u32 %v3214, 4294901760
      %v3216 = vsub.f32 %v3214, %v3215
      %v3217 = vand.u32 %v3216, 4294901760
      %3218 = vmatpush1.msra.mxu0 %v3217
      %3219 = vmatprep.subr.mxu0 0.0
      %v3220 = vand.u32 %v2490, 4294901760
      %v3221 = vsub.f32 %v2490, %v3220
      %v3222 = vand.u32 %v3221, 4294901760
      %v3223 = vsub.f32 %v3221, %v3222
      %v3224 = vand.u32 %v3223, 4294901760
      %3225 = vmatpush1.msra.mxu0 %v3224
      %3226 = vmatprep.subr.mxu0 0.0
      %v3227 = vand.u32 %v2491, 4294901760
      %v3228 = vsub.f32 %v2491, %v3227
      %v3229 = vand.u32 %v3228, 4294901760
      %v3230 = vsub.f32 %v3228, %v3229
      %v3231 = vand.u32 %v3230, 4294901760
      %3232 = vmatpush1.msra.mxu0 %v3231
      %3233 = vmatprep.subr.mxu0 0.0
      %v3234 = vand.u32 %v2492, 4294901760
      %v3235 = vsub.f32 %v2492, %v3234
      %v3236 = vand.u32 %v3235, 4294901760
      %v3237 = vsub.f32 %v3235, %v3236
      %v3238 = vand.u32 %v3237, 4294901760
      %3239 = vmatpush1.msra.mxu0 %v3238
      %3240 = vmatprep.subr.mxu0 0.0
      %v3241 = vand.u32 %v2493, 4294901760
      %v3242 = vsub.f32 %v2493, %v3241
      %v3243 = vand.u32 %v3242, 4294901760
      %v3244 = vsub.f32 %v3242, %v3243
      %v3245 = vand.u32 %v3244, 4294901760
      %3246 = vmatpush1.msra.mxu0 %v3245
      %3247 = vmatprep.subr.mxu0 0.0
      %v3248 = vand.u32 %v2494, 4294901760
      %v3249 = vsub.f32 %v2494, %v3248
      %v3250 = vand.u32 %v3249, 4294901760
      %v3251 = vsub.f32 %v3249, %v3250
      %v3252 = vand.u32 %v3251, 4294901760
      %3253 = vmatpush1.msra.mxu0 %v3252
      %3254 = vmatprep.subr.mxu0 0.0
      %v3255 = vand.u32 %v2495, 4294901760
      %v3256 = vsub.f32 %v2495, %v3255
      %v3257 = vand.u32 %v3256, 4294901760
      %v3258 = vsub.f32 %v3256, %v3257
      %v3259 = vand.u32 %v3258, 4294901760
      %3260 = vmatpush1.msra.mxu0 %v3259
      %3261 = vmatprep.subr.mxu0 0.0
      %v3262 = vand.u32 %v2496, 4294901760
      %v3263 = vsub.f32 %v2496, %v3262
      %v3264 = vand.u32 %v3263, 4294901760
      %v3265 = vsub.f32 %v3263, %v3264
      %v3266 = vand.u32 %v3265, 4294901760
      %3267 = vmatpush1.msra.mxu0 %v3266
      %3268 = vmatprep.subr.mxu0 0.0
      %v3269 = vand.u32 %v2497, 4294901760
      %v3270 = vsub.f32 %v2497, %v3269
      %v3271 = vand.u32 %v3270, 4294901760
      %v3272 = vsub.f32 %v3270, %v3271
      %v3273 = vand.u32 %v3272, 4294901760
      %3274 = vmatpush1.msra.mxu0 %v3273
      %3275 = vmatprep.subr.mxu0 0.0
      %v3276 = vand.u32 %v2498, 4294901760
      %v3277 = vsub.f32 %v2498, %v3276
      %v3278 = vand.u32 %v3277, 4294901760
      %v3279 = vsub.f32 %v3277, %v3278
      %v3280 = vand.u32 %v3279, 4294901760
      %3281 = vmatpush1.msra.mxu0 %v3280
      %3282 = vmatprep.subr.mxu0 0.0
      %v3283 = vand.u32 %v2499, 4294901760
      %v3284 = vsub.f32 %v2499, %v3283
      %v3285 = vand.u32 %v3284, 4294901760
      %v3286 = vsub.f32 %v3284, %v3285
      %v3287 = vand.u32 %v3286, 4294901760
      %3288 = vmatpush1.msra.mxu0 %v3287
      %3289 = vmatprep.subr.mxu0 0.0
      %v3290 = vand.u32 %v2500, 4294901760
      %v3291 = vsub.f32 %v2500, %v3290
      %v3292 = vand.u32 %v3291, 4294901760
      %v3293 = vsub.f32 %v3291, %v3292
      %v3294 = vand.u32 %v3293, 4294901760
      %3295 = vmatpush1.msra.mxu0 %v3294
      %3296 = vmatprep.subr.mxu0 0.0
      %v3297 = vand.u32 %v2501, 4294901760
      %v3298 = vsub.f32 %v2501, %v3297
      %v3299 = vand.u32 %v3298, 4294901760
      %v3300 = vsub.f32 %v3298, %v3299
      %v3301 = vand.u32 %v3300, 4294901760
      %3302 = vmatpush1.msra.mxu0 %v3301
      %3303 = vmatprep.subr.mxu0 0.0
      %v3304 = vand.u32 %v2502, 4294901760
      %v3305 = vsub.f32 %v2502, %v3304
      %v3306 = vand.u32 %v3305, 4294901760
      %v3307 = vsub.f32 %v3305, %v3306
      %v3308 = vand.u32 %v3307, 4294901760
      %3309 = vmatpush1.msra.mxu0 %v3308
      %3310 = vmatprep.subr.mxu0 0.0
      %v3311 = vand.u32 %v2503, 4294901760
      %v3312 = vsub.f32 %v2503, %v3311
      %v3313 = vand.u32 %v3312, 4294901760
      %v3314 = vsub.f32 %v3312, %v3313
      %v3315 = vand.u32 %v3314, 4294901760
      %3316 = vmatpush1.msra.mxu0 %v3315
      %3317 = vmatprep.subr.mxu0 0.0
      %v3318 = vand.u32 %v2504, 4294901760
      %v3319 = vsub.f32 %v2504, %v3318
      %v3320 = vand.u32 %v3319, 4294901760
      %v3321 = vsub.f32 %v3319, %v3320
      %v3322 = vand.u32 %v3321, 4294901760
      %3323 = vmatpush1.msra.mxu0 %v3322
      %3324 = vmatprep.subr.mxu0 0.0
      %v3325 = vand.u32 %v2505, 4294901760
      %v3326 = vsub.f32 %v2505, %v3325
      %v3327 = vand.u32 %v3326, 4294901760
      %v3328 = vsub.f32 %v3326, %v3327
      %v3329 = vand.u32 %v3328, 4294901760
      %3330 = vmatpush1.msra.mxu0 %v3329
      %3331 = vmatprep.subr.mxu0 0.0
      %v3332 = vand.u32 %v2506, 4294901760
      %v3333 = vsub.f32 %v2506, %v3332
      %v3334 = vand.u32 %v3333, 4294901760
      %v3335 = vsub.f32 %v3333, %v3334
      %v3336 = vand.u32 %v3335, 4294901760
      %3337 = vmatpush1.msra.mxu0 %v3336
      %3338 = vmatprep.subr.mxu0 0.0
      %v3339 = vand.u32 %v2507, 4294901760
      %v3340 = vsub.f32 %v2507, %v3339
      %v3341 = vand.u32 %v3340, 4294901760
      %v3342 = vsub.f32 %v3340, %v3341
      %v3343 = vand.u32 %v3342, 4294901760
      %3344 = vmatpush1.msra.mxu0 %v3343
      %3345 = vmatprep.subr.mxu0 0.0
      %v3346 = vand.u32 %v2508, 4294901760
      %v3347 = vsub.f32 %v2508, %v3346
      %v3348 = vand.u32 %v3347, 4294901760
      %v3349 = vsub.f32 %v3347, %v3348
      %v3350 = vand.u32 %v3349, 4294901760
      %3351 = vmatpush1.msra.mxu0 %v3350
      %3352 = vmatprep.subr.mxu0 0.0
      %v3353 = vand.u32 %v2509, 4294901760
      %v3354 = vsub.f32 %v2509, %v3353
      %v3355 = vand.u32 %v3354, 4294901760
      %v3356 = vsub.f32 %v3354, %v3355
      %v3357 = vand.u32 %v3356, 4294901760
      %3358 = vmatpush1.msra.mxu0 %v3357
      %3359 = vmatprep.subr.mxu0 0.0
      %v3360 = vand.u32 %v2510, 4294901760
      %v3361 = vsub.f32 %v2510, %v3360
      %v3362 = vand.u32 %v3361, 4294901760
      %v3363 = vsub.f32 %v3361, %v3362
      %v3364 = vand.u32 %v3363, 4294901760
      %3365 = vmatpush1.msra.mxu0 %v3364
      %3366 = vmatprep.subr.mxu0 0.0
      %v3367 = vand.u32 %v2511, 4294901760
      %v3368 = vsub.f32 %v2511, %v3367
      %v3369 = vand.u32 %v3368, 4294901760
      %v3370 = vsub.f32 %v3368, %v3369
      %v3371 = vand.u32 %v3370, 4294901760
      %3372 = vmatpush1.msra.mxu0 %v3371
      %3373 = vmatprep.subr.mxu0 0.0
      %v3374 = vand.u32 %v2512, 4294901760
      %v3375 = vsub.f32 %v2512, %v3374
      %v3376 = vand.u32 %v3375, 4294901760
      %v3377 = vsub.f32 %v3375, %v3376
      %v3378 = vand.u32 %v3377, 4294901760
      %3379 = vmatpush1.msra.mxu0 %v3378
      %3380 = vmatprep.subr.mxu0 0.0
      %v3381 = vand.u32 %v2513, 4294901760
      %v3382 = vsub.f32 %v2513, %v3381
      %v3383 = vand.u32 %v3382, 4294901760
      %v3384 = vsub.f32 %v3382, %v3383
      %v3385 = vand.u32 %v3384, 4294901760
      %3386 = vmatpush1.msra.mxu0 %v3385
      %v3387 = vand.u32 %v2515, 4294901760
      %3388 = vmatprep.mubr.f32.mxu0 %v3387
      %v3389 = vand.u32 %v2514, 4294901760
      %3390 = vmatmul.mubr.f32.gmra.mrb[0].mxu0 %v3389
      %v3391 = vpop.f32.mrb[0].mxu0
      %v3392 = vadd.f32 %v2815, %v3391
      %v3393 = vpop.f32.mrb[0].mxu0
      %v3394 = vand.u32 %v2517, 4294901760
      %3395 = vmatprep.mubr.f32.mxu0 %v3394
      %v3396 = vand.u32 %v2516, 4294901760
      %3397 = vmatmul.mubr.f32.gmra.mrb[0].mxu0 %v3396
      %v3398 = vpop.f32.mrb[0].mxu0
      %v3399 = vadd.f32 %v2830, %v3398
      %v3400 = vpop.f32.mrb[0].mxu0
      %v3401 = vand.u32 %v2519, 4294901760
      %3402 = vmatprep.mubr.f32.mxu0 %v3401
      %v3403 = vand.u32 %v2518, 4294901760
      %3404 = vmatmul.mubr.f32.gmra.mrb[0].mxu0 %v3403
      %v3405 = vpop.f32.mrb[0].mxu0
      %v3406 = vadd.f32 %v2845, %v3405
      %v3407 = vpop.f32.mrb[0].mxu0
      %v3408 = vand.u32 %v2521, 4294901760
      %3409 = vmatprep.mubr.f32.mxu0 %v3408
      %v3410 = vand.u32 %v2520, 4294901760
      %3411 = vmatmul.mubr.f32.gmra.mrb[0].mxu0 %v3410
      %v3412 = vpop.f32.mrb[0].mxu0
      %v3413 = vadd.f32 %v2860, %v3412
      %v3414 = vpop.f32.mrb[0].mxu0
      %v3415 = vand.u32 %v2523, 4294901760
      %3416 = vmatprep.mubr.f32.mxu0 %v3415
      %v3417 = vand.u32 %v2522, 4294901760
      %3418 = vmatmul.mubr.f32.gmra.mrb[0].mxu0 %v3417
      %v3419 = vpop.f32.mrb[0].mxu0
      %v3420 = vadd.f32 %v2875, %v3419
      %v3421 = vpop.f32.mrb[0].mxu0
      %v3422 = vand.u32 %v2525, 4294901760
      %3423 = vmatprep.mubr.f32.mxu0 %v3422
      %v3424 = vand.u32 %v2524, 4294901760
      %3425 = vmatmul.mubr.f32.gmra.mrb[0].mxu0 %v3424
      %v3426 = vpop.f32.mrb[0].mxu0
      %v3427 = vadd.f32 %v2890, %v3426
      %v3428 = vpop.f32.mrb[0].mxu0
      %v3429 = vand.u32 %v2527, 4294901760
      %3430 = vmatprep.mubr.f32.mxu0 %v3429
      %v3431 = vand.u32 %v2526, 4294901760
      %3432 = vmatmul.mubr.f32.gmra.mrb[0].mxu0 %v3431
      %v3433 = vpop.f32.mrb[0].mxu0
      %v3434 = vadd.f32 %v2905, %v3433
      %v3435 = vpop.f32.mrb[0].mxu0
      %v3436 = vand.u32 %v2529, 4294901760
      %3437 = vmatprep.mubr.f32.mxu0 %v3436
      %v3438 = vand.u32 %v2528, 4294901760
      %3439 = vmatmul.mubr.f32.gmra.mrb[0].mxu0 %v3438
      %v3440 = vpop.f32.mrb[0].mxu0
      %v3441 = vadd.f32 %v2920, %v3440
      %v3442 = vpop.f32.mrb[0].mxu0
      %v3443 = vand.u32 %v2531, 4294901760
      %3444 = vmatprep.mubr.f32.mxu0 %v3443
      %v3445 = vand.u32 %v2530, 4294901760
      %3446 = vmatmul.mubr.f32.gmra.mrb[0].mxu0 %v3445
      %v3447 = vpop.f32.mrb[0].mxu0
      %v3448 = vadd.f32 %v2935, %v3447
      %v3449 = vpop.f32.mrb[0].mxu0
      %v3450 = vand.u32 %v2533, 4294901760
      %3451 = vmatprep.mubr.f32.mxu0 %v3450
      %v3452 = vand.u32 %v2532, 4294901760
      %3453 = vmatmul.mubr.f32.gmra.mrb[0].mxu0 %v3452
      %v3454 = vpop.f32.mrb[0].mxu0
      %v3455 = vadd.f32 %v2950, %v3454
      %v3456 = vpop.f32.mrb[0].mxu0
      %v3457 = vand.u32 %v2535, 4294901760
      %3458 = vmatprep.mubr.f32.mxu0 %v3457
      %v3459 = vand.u32 %v2534, 4294901760
      %3460 = vmatmul.mubr.f32.gmra.mrb[0].mxu0 %v3459
      %v3461 = vpop.f32.mrb[0].mxu0
      %v3462 = vadd.f32 %v2965, %v3461
      %v3463 = vpop.f32.mrb[0].mxu0
      %v3464 = vand.u32 %v2537, 4294901760
      %3465 = vmatprep.mubr.f32.mxu0 %v3464
      %v3466 = vand.u32 %v2536, 4294901760
      %3467 = vmatmul.mubr.f32.gmra.mrb[0].mxu0 %v3466
      %v3468 = vpop.f32.mrb[0].mxu0
      %v3469 = vadd.f32 %v2980, %v3468
      %v3470 = vpop.f32.mrb[0].mxu0
      %v3471 = vand.u32 %v2539, 4294901760
      %3472 = vmatprep.mubr.f32.mxu0 %v3471
      %v3473 = vand.u32 %v2538, 4294901760
      %3474 = vmatmul.mubr.f32.gmra.mrb[0].mxu0 %v3473
      %v3475 = vpop.f32.mrb[0].mxu0
      %v3476 = vadd.f32 %v2995, %v3475
      %v3477 = vpop.f32.mrb[0].mxu0
      %v3478 = vand.u32 %v2541, 4294901760
      %3479 = vmatprep.mubr.f32.mxu0 %v3478
      %v3480 = vand.u32 %v2540, 4294901760
      %3481 = vmatmul.mubr.f32.gmra.mrb[0].mxu0 %v3480
      %v3482 = vpop.f32.mrb[0].mxu0
      %v3483 = vadd.f32 %v3010, %v3482
      %v3484 = vpop.f32.mrb[0].mxu0
      %v3485 = vand.u32 %v2543, 4294901760
      %3486 = vmatprep.mubr.f32.mxu0 %v3485
      %v3487 = vand.u32 %v2542, 4294901760
      %3488 = vmatmul.mubr.f32.gmra.mrb[0].mxu0 %v3487
      %v3489 = vpop.f32.mrb[0].mxu0
      %v3490 = vadd.f32 %v3025, %v3489
      %v3491 = vpop.f32.mrb[0].mxu0
      %v3492 = vand.u32 %v2545, 4294901760
      %3493 = vmatprep.mubr.f32.mxu0 %v3492
      %v3494 = vand.u32 %v2544, 4294901760
      %3495 = vmatmul.mubr.f32.gmra.mrb[0].mxu0 %v3494
      %v3496 = vpop.f32.mrb[0].mxu0
      %v3497 = vadd.f32 %v3040, %v3496
      %v3498 = vpop.f32.mrb[0].mxu0
      %v3499 = vand.u32 %v2547, 4294901760
      %3500 = vmatprep.mubr.f32.mxu0 %v3499
      %v3501 = vand.u32 %v2546, 4294901760
      %3502 = vmatmul.mubr.f32.gmra.mrb[0].mxu0 %v3501
      %v3503 = vpop.f32.mrb[0].mxu0
      %v3504 = vadd.f32 %v3055, %v3503
      %v3505 = vpop.f32.mrb[0].mxu0
      %v3506 = vand.u32 %v2549, 4294901760
      %3507 = vmatprep.mubr.f32.mxu0 %v3506
      %v3508 = vand.u32 %v2548, 4294901760
      %3509 = vmatmul.mubr.f32.gmra.mrb[0].mxu0 %v3508
      %v3510 = vpop.f32.mrb[0].mxu0
      %v3511 = vadd.f32 %v3070, %v3510
      %v3512 = vpop.f32.mrb[0].mxu0
      %v3513 = vand.u32 %v2551, 4294901760
      %3514 = vmatprep.mubr.f32.mxu0 %v3513
      %v3515 = vand.u32 %v2550, 4294901760
      %3516 = vmatmul.mubr.f32.gmra.mrb[0].mxu0 %v3515
      %v3517 = vpop.f32.mrb[0].mxu0
      %v3518 = vadd.f32 %v3085, %v3517
      %v3519 = vpop.f32.mrb[0].mxu0
      %v3520 = vand.u32 %v2553, 4294901760
      %3521 = vmatprep.mubr.f32.mxu0 %v3520
      %v3522 = vand.u32 %v2552, 4294901760
      %3523 = vmatmul.mubr.f32.gmra.mrb[0].mxu0 %v3522
      %v3524 = vpop.f32.mrb[0].mxu0
      %v3525 = vadd.f32 %v3100, %v3524
      %v3526 = vpop.f32.mrb[0].mxu0
      %v3527 = vand.u32 %v2555, 4294901760
      %3528 = vmatprep.mubr.f32.mxu0 %v3527
      %v3529 = vand.u32 %v2554, 4294901760
      %3530 = vmatmul.mubr.f32.gmra.mrb[0].mxu0 %v3529
      %v3531 = vpop.f32.mrb[0].mxu0
      %v3532 = vadd.f32 %v3115, %v3531
      %v3533 = vpop.f32.mrb[0].mxu0
      %v3534 = vand.u32 %v2557, 4294901760
      %3535 = vmatprep.mubr.f32.mxu0 %v3534
      %v3536 = vand.u32 %v2556, 4294901760
      %3537 = vmatmul.mubr.f32.gmra.mrb[0].mxu0 %v3536
      %v3538 = vpop.f32.mrb[0].mxu0
      %v3539 = vadd.f32 %v3130, %v3538
      %v3540 = vpop.f32.mrb[0].mxu0
      %v3541 = vand.u32 %v2559, 4294901760
      %3542 = vmatprep.mubr.f32.mxu0 %v3541
      %v3543 = vand.u32 %v2558, 4294901760
      %3544 = vmatmul.mubr.f32.gmra.mrb[0].mxu0 %v3543
      %v3545 = vpop.f32.mrb[0].mxu0
      %v3546 = vadd.f32 %v3145, %v3545
      %v3547 = vpop.f32.mrb[0].mxu0
      %v3548 = vand.u32 %v2561, 4294901760
      %3549 = vmatprep.mubr.f32.mxu0 %v3548
      %v3550 = vand.u32 %v2560, 4294901760
      %3551 = vmatmul.mubr.f32.gmra.mrb[0].mxu0 %v3550
      %v3552 = vpop.f32.mrb[0].mxu0
      %v3553 = vadd.f32 %v3160, %v3552
      %v3554 = vpop.f32.mrb[0].mxu0
      %3555 = vdwg.mxu0
      %3556 = vmatprep.subr.mxu0 0.0
      %v3557 = vand.u32 %v2482, 4294901760
      %v3558 = vsub.f32 %v2482, %v3557
      %3559 = vmatpush1.msra.mxu0 %v3558
      %3560 = vmatprep.subr.mxu0 0.0
      %v3561 = vand.u32 %v2483, 4294901760
      %v3562 = vsub.f32 %v2483, %v3561
      %3563 = vmatpush1.msra.mxu0 %v3562
      %3564 = vmatprep.subr.mxu0 0.0
      %v3565 = vand.u32 %v2484, 4294901760
      %v3566 = vsub.f32 %v2484, %v3565
      %3567 = vmatpush1.msra.mxu0 %v3566
      %3568 = vmatprep.subr.mxu0 0.0
      %v3569 = vand.u32 %v2485, 4294901760
      %v3570 = vsub.f32 %v2485, %v3569
      %3571 = vmatpush1.msra.mxu0 %v3570
      %3572 = vmatprep.subr.mxu0 0.0
      %v3573 = vand.u32 %v2486, 4294901760
      %v3574 = vsub.f32 %v2486, %v3573
      %3575 = vmatpush1.msra.mxu0 %v3574
      %3576 = vmatprep.subr.mxu0 0.0
      %v3577 = vand.u32 %v2487, 4294901760
      %v3578 = vsub.f32 %v2487, %v3577
      %3579 = vmatpush1.msra.mxu0 %v3578
      %3580 = vmatprep.subr.mxu0 0.0
      %v3581 = vand.u32 %v2488, 4294901760
      %v3582 = vsub.f32 %v2488, %v3581
      %3583 = vmatpush1.msra.mxu0 %v3582
      %3584 = vmatprep.subr.mxu0 0.0
      %v3585 = vand.u32 %v2489, 4294901760
      %v3586 = vsub.f32 %v2489, %v3585
      %3587 = vmatpush1.msra.mxu0 %v3586
      %3588 = vmatprep.subr.mxu0 0.0
      %v3589 = vand.u32 %v2490, 4294901760
      %v3590 = vsub.f32 %v2490, %v3589
      %3591 = vmatpush1.msra.mxu0 %v3590
      %3592 = vmatprep.subr.mxu0 0.0
      %v3593 = vand.u32 %v2491, 4294901760
      %v3594 = vsub.f32 %v2491, %v3593
      %3595 = vmatpush1.msra.mxu0 %v3594
      %3596 = vmatprep.subr.mxu0 0.0
      %v3597 = vand.u32 %v2492, 4294901760
      %v3598 = vsub.f32 %v2492, %v3597
      %3599 = vmatpush1.msra.mxu0 %v3598
      %3600 = vmatprep.subr.mxu0 0.0
      %v3601 = vand.u32 %v2493, 4294901760
      %v3602 = vsub.f32 %v2493, %v3601
      %3603 = vmatpush1.msra.mxu0 %v3602
      %3604 = vmatprep.subr.mxu0 0.0
      %v3605 = vand.u32 %v2494, 4294901760
      %v3606 = vsub.f32 %v2494, %v3605
      %3607 = vmatpush1.msra.mxu0 %v3606
      %3608 = vmatprep.subr.mxu0 0.0
      %v3609 = vand.u32 %v2495, 4294901760
      %v3610 = vsub.f32 %v2495, %v3609
      %3611 = vmatpush1.msra.mxu0 %v3610
      %3612 = vmatprep.subr.mxu0 0.0
      %v3613 = vand.u32 %v2496, 4294901760
      %v3614 = vsub.f32 %v2496, %v3613
      %3615 = vmatpush1.msra.mxu0 %v3614
      %3616 = vmatprep.subr.mxu0 0.0
      %v3617 = vand.u32 %v2497, 4294901760
      %v3618 = vsub.f32 %v2497, %v3617
      %3619 = vmatpush1.msra.mxu0 %v3618
      %3620 = vmatprep.subr.mxu0 0.0
      %v3621 = vand.u32 %v2498, 4294901760
      %v3622 = vsub.f32 %v2498, %v3621
      %3623 = vmatpush1.msra.mxu0 %v3622
      %3624 = vmatprep.subr.mxu0 0.0
      %v3625 = vand.u32 %v2499, 4294901760
      %v3626 = vsub.f32 %v2499, %v3625
      %3627 = vmatpush1.msra.mxu0 %v3626
      %3628 = vmatprep.subr.mxu0 0.0
      %v3629 = vand.u32 %v2500, 4294901760
      %v3630 = vsub.f32 %v2500, %v3629
      %3631 = vmatpush1.msra.mxu0 %v3630
      %3632 = vmatprep.subr.mxu0 0.0
      %v3633 = vand.u32 %v2501, 4294901760
      %v3634 = vsub.f32 %v2501, %v3633
      %3635 = vmatpush1.msra.mxu0 %v3634
      %3636 = vmatprep.subr.mxu0 0.0
      %v3637 = vand.u32 %v2502, 4294901760
      %v3638 = vsub.f32 %v2502, %v3637
      %3639 = vmatpush1.msra.mxu0 %v3638
      %3640 = vmatprep.subr.mxu0 0.0
      %v3641 = vand.u32 %v2503, 4294901760
      %v3642 = vsub.f32 %v2503, %v3641
      %3643 = vmatpush1.msra.mxu0 %v3642
      %3644 = vmatprep.subr.mxu0 0.0
      %v3645 = vand.u32 %v2504, 4294901760
      %v3646 = vsub.f32 %v2504, %v3645
      %3647 = vmatpush1.msra.mxu0 %v3646
      %3648 = vmatprep.subr.mxu0 0.0
      %v3649 = vand.u32 %v2505, 4294901760
      %v3650 = vsub.f32 %v2505, %v3649
      %3651 = vmatpush1.msra.mxu0 %v3650
      %3652 = vmatprep.subr.mxu0 0.0
      %v3653 = vand.u32 %v2506, 4294901760
      %v3654 = vsub.f32 %v2506, %v3653
      %3655 = vmatpush1.msra.mxu0 %v3654
      %3656 = vmatprep.subr.mxu0 0.0
      %v3657 = vand.u32 %v2507, 4294901760
      %v3658 = vsub.f32 %v2507, %v3657
      %3659 = vmatpush1.msra.mxu0 %v3658
      %3660 = vmatprep.subr.mxu0 0.0
      %v3661 = vand.u32 %v2508, 4294901760
      %v3662 = vsub.f32 %v2508, %v3661
      %3663 = vmatpush1.msra.mxu0 %v3662
      %3664 = vmatprep.subr.mxu0 0.0
      %v3665 = vand.u32 %v2509, 4294901760
      %v3666 = vsub.f32 %v2509, %v3665
      %3667 = vmatpush1.msra.mxu0 %v3666
      %3668 = vmatprep.subr.mxu0 0.0
      %v3669 = vand.u32 %v2510, 4294901760
      %v3670 = vsub.f32 %v2510, %v3669
      %3671 = vmatpush1.msra.mxu0 %v3670
      %3672 = vmatprep.subr.mxu0 0.0
      %v3673 = vand.u32 %v2511, 4294901760
      %v3674 = vsub.f32 %v2511, %v3673
      %3675 = vmatpush1.msra.mxu0 %v3674
      %3676 = vmatprep.subr.mxu0 0.0
      %v3677 = vand.u32 %v2512, 4294901760
      %v3678 = vsub.f32 %v2512, %v3677
      %3679 = vmatpush1.msra.mxu0 %v3678
      %3680 = vmatprep.subr.mxu0 0.0
      %v3681 = vand.u32 %v2513, 4294901760
      %v3682 = vsub.f32 %v2513, %v3681
      %3683 = vmatpush1.msra.mxu0 %v3682
      %v3684 = vand.u32 %v2515, 4294901760
      %v3685 = vsub.f32 %v2515, %v3684
      %3686 = vmatprep.mubr.f32.mxu0 %v3685
      %v3687 = vand.u32 %v2514, 4294901760
      %v3688 = vsub.f32 %v2514, %v3687
      %3689 = vmatmul.mubr.f32.gmra.mrb[0].mxu0 %v3688
      %v3690 = vpop.f32.mrb[0].mxu0
      %v3691 = vadd.f32 %v3392, %v3690
      %v3692 = vpop.f32.mrb[0].mxu0
      %v3693 = vand.u32 %v2517, 4294901760
      %v3694 = vsub.f32 %v2517, %v3693
      %3695 = vmatprep.mubr.f32.mxu0 %v3694
      %v3696 = vand.u32 %v2516, 4294901760
      %v3697 = vsub.f32 %v2516, %v3696
      %3698 = vmatmul.mubr.f32.gmra.mrb[0].mxu0 %v3697
      %v3699 = vpop.f32.mrb[0].mxu0
      %v3700 = vadd.f32 %v3399, %v3699
      %v3701 = vpop.f32.mrb[0].mxu0
      %v3702 = vand.u32 %v2519, 4294901760
      %v3703 = vsub.f32 %v2519, %v3702
      %3704 = vmatprep.mubr.f32.mxu0 %v3703
      %v3705 = vand.u32 %v2518, 4294901760
      %v3706 = vsub.f32 %v2518, %v3705
      %3707 = vmatmul.mubr.f32.gmra.mrb[0].mxu0 %v3706
      %v3708 = vpop.f32.mrb[0].mxu0
      %v3709 = vadd.f32 %v3406, %v3708
      %v3710 = vpop.f32.mrb[0].mxu0
      %v3711 = vand.u32 %v2521, 4294901760
      %v3712 = vsub.f32 %v2521, %v3711
      %3713 = vmatprep.mubr.f32.mxu0 %v3712
      %v3714 = vand.u32 %v2520, 4294901760
      %v3715 = vsub.f32 %v2520, %v3714
      %3716 = vmatmul.mubr.f32.gmra.mrb[0].mxu0 %v3715
      %v3717 = vpop.f32.mrb[0].mxu0
      %v3718 = vadd.f32 %v3413, %v3717
      %v3719 = vpop.f32.mrb[0].mxu0
      %v3720 = vand.u32 %v2523, 4294901760
      %v3721 = vsub.f32 %v2523, %v3720
      %3722 = vmatprep.mubr.f32.mxu0 %v3721
      %v3723 = vand.u32 %v2522, 4294901760
      %v3724 = vsub.f32 %v2522, %v3723
      %3725 = vmatmul.mubr.f32.gmra.mrb[0].mxu0 %v3724
      %v3726 = vpop.f32.mrb[0].mxu0
      %v3727 = vadd.f32 %v3420, %v3726
      %v3728 = vpop.f32.mrb[0].mxu0
      %v3729 = vand.u32 %v2525, 4294901760
      %v3730 = vsub.f32 %v2525, %v3729
      %3731 = vmatprep.mubr.f32.mxu0 %v3730
      %v3732 = vand.u32 %v2524, 4294901760
      %v3733 = vsub.f32 %v2524, %v3732
      %3734 = vmatmul.mubr.f32.gmra.mrb[0].mxu0 %v3733
      %v3735 = vpop.f32.mrb[0].mxu0
      %v3736 = vadd.f32 %v3427, %v3735
      %v3737 = vpop.f32.mrb[0].mxu0
      %v3738 = vand.u32 %v2527, 4294901760
      %v3739 = vsub.f32 %v2527, %v3738
      %3740 = vmatprep.mubr.f32.mxu0 %v3739
      %v3741 = vand.u32 %v2526, 4294901760
      %v3742 = vsub.f32 %v2526, %v3741
      %3743 = vmatmul.mubr.f32.gmra.mrb[0].mxu0 %v3742
      %v3744 = vpop.f32.mrb[0].mxu0
      %v3745 = vadd.f32 %v3434, %v3744
      %v3746 = vpop.f32.mrb[0].mxu0
      %v3747 = vand.u32 %v2529, 4294901760
      %v3748 = vsub.f32 %v2529, %v3747
      %3749 = vmatprep.mubr.f32.mxu0 %v3748
      %v3750 = vand.u32 %v2528, 4294901760
      %v3751 = vsub.f32 %v2528, %v3750
      %3752 = vmatmul.mubr.f32.gmra.mrb[0].mxu0 %v3751
      %v3753 = vpop.f32.mrb[0].mxu0
      %v3754 = vadd.f32 %v3441, %v3753
      %v3755 = vpop.f32.mrb[0].mxu0
      %v3756 = vand.u32 %v2531, 4294901760
      %v3757 = vsub.f32 %v2531, %v3756
      %3758 = vmatprep.mubr.f32.mxu0 %v3757
      %v3759 = vand.u32 %v2530, 4294901760
      %v3760 = vsub.f32 %v2530, %v3759
      %3761 = vmatmul.mubr.f32.gmra.mrb[0].mxu0 %v3760
      %v3762 = vpop.f32.mrb[0].mxu0
      %v3763 = vadd.f32 %v3448, %v3762
      %v3764 = vpop.f32.mrb[0].mxu0
      %v3765 = vand.u32 %v2533, 4294901760
      %v3766 = vsub.f32 %v2533, %v3765
      %3767 = vmatprep.mubr.f32.mxu0 %v3766
      %v3768 = vand.u32 %v2532, 4294901760
      %v3769 = vsub.f32 %v2532, %v3768
      %3770 = vmatmul.mubr.f32.gmra.mrb[0].mxu0 %v3769
      %v3771 = vpop.f32.mrb[0].mxu0
      %v3772 = vadd.f32 %v3455, %v3771
      %v3773 = vpop.f32.mrb[0].mxu0
      %v3774 = vand.u32 %v2535, 4294901760
      %v3775 = vsub.f32 %v2535, %v3774
      %3776 = vmatprep.mubr.f32.mxu0 %v3775
      %v3777 = vand.u32 %v2534, 4294901760
      %v3778 = vsub.f32 %v2534, %v3777
      %3779 = vmatmul.mubr.f32.gmra.mrb[0].mxu0 %v3778
      %v3780 = vpop.f32.mrb[0].mxu0
      %v3781 = vadd.f32 %v3462, %v3780
      %v3782 = vpop.f32.mrb[0].mxu0
      %v3783 = vand.u32 %v2537, 4294901760
      %v3784 = vsub.f32 %v2537, %v3783
      %3785 = vmatprep.mubr.f32.mxu0 %v3784
      %v3786 = vand.u32 %v2536, 4294901760
      %v3787 = vsub.f32 %v2536, %v3786
      %3788 = vmatmul.mubr.f32.gmra.mrb[0].mxu0 %v3787
      %v3789 = vpop.f32.mrb[0].mxu0
      %v3790 = vadd.f32 %v3469, %v3789
      %v3791 = vpop.f32.mrb[0].mxu0
      %v3792 = vand.u32 %v2539, 4294901760
      %v3793 = vsub.f32 %v2539, %v3792
      %3794 = vmatprep.mubr.f32.mxu0 %v3793
      %v3795 = vand.u32 %v2538, 4294901760
      %v3796 = vsub.f32 %v2538, %v3795
      %3797 = vmatmul.mubr.f32.gmra.mrb[0].mxu0 %v3796
      %v3798 = vpop.f32.mrb[0].mxu0
      %v3799 = vadd.f32 %v3476, %v3798
      %v3800 = vpop.f32.mrb[0].mxu0
      %v3801 = vand.u32 %v2541, 4294901760
      %v3802 = vsub.f32 %v2541, %v3801
      %3803 = vmatprep.mubr.f32.mxu0 %v3802
      %v3804 = vand.u32 %v2540, 4294901760
      %v3805 = vsub.f32 %v2540, %v3804
      %3806 = vmatmul.mubr.f32.gmra.mrb[0].mxu0 %v3805
      %v3807 = vpop.f32.mrb[0].mxu0
      %v3808 = vadd.f32 %v3483, %v3807
      %v3809 = vpop.f32.mrb[0].mxu0
      %v3810 = vand.u32 %v2543, 4294901760
      %v3811 = vsub.f32 %v2543, %v3810
      %3812 = vmatprep.mubr.f32.mxu0 %v3811
      %v3813 = vand.u32 %v2542, 4294901760
      %v3814 = vsub.f32 %v2542, %v3813
      %3815 = vmatmul.mubr.f32.gmra.mrb[0].mxu0 %v3814
      %v3816 = vpop.f32.mrb[0].mxu0
      %v3817 = vadd.f32 %v3490, %v3816
      %v3818 = vpop.f32.mrb[0].mxu0
      %v3819 = vand.u32 %v2545, 4294901760
      %v3820 = vsub.f32 %v2545, %v3819
      %3821 = vmatprep.mubr.f32.mxu0 %v3820
      %v3822 = vand.u32 %v2544, 4294901760
      %v3823 = vsub.f32 %v2544, %v3822
      %3824 = vmatmul.mubr.f32.gmra.mrb[0].mxu0 %v3823
      %v3825 = vpop.f32.mrb[0].mxu0
      %v3826 = vadd.f32 %v3497, %v3825
      %v3827 = vpop.f32.mrb[0].mxu0
      %v3828 = vand.u32 %v2547, 4294901760
      %v3829 = vsub.f32 %v2547, %v3828
      %3830 = vmatprep.mubr.f32.mxu0 %v3829
      %v3831 = vand.u32 %v2546, 4294901760
      %v3832 = vsub.f32 %v2546, %v3831
      %3833 = vmatmul.mubr.f32.gmra.mrb[0].mxu0 %v3832
      %v3834 = vpop.f32.mrb[0].mxu0
      %v3835 = vadd.f32 %v3504, %v3834
      %v3836 = vpop.f32.mrb[0].mxu0
      %v3837 = vand.u32 %v2549, 4294901760
      %v3838 = vsub.f32 %v2549, %v3837
      %3839 = vmatprep.mubr.f32.mxu0 %v3838
      %v3840 = vand.u32 %v2548, 4294901760
      %v3841 = vsub.f32 %v2548, %v3840
      %3842 = vmatmul.mubr.f32.gmra.mrb[0].mxu0 %v3841
      %v3843 = vpop.f32.mrb[0].mxu0
      %v3844 = vadd.f32 %v3511, %v3843
      %v3845 = vpop.f32.mrb[0].mxu0
      %v3846 = vand.u32 %v2551, 4294901760
      %v3847 = vsub.f32 %v2551, %v3846
      %3848 = vmatprep.mubr.f32.mxu0 %v3847
      %v3849 = vand.u32 %v2550, 4294901760
      %v3850 = vsub.f32 %v2550, %v3849
      %3851 = vmatmul.mubr.f32.gmra.mrb[0].mxu0 %v3850
      %v3852 = vpop.f32.mrb[0].mxu0
      %v3853 = vadd.f32 %v3518, %v3852
      %v3854 = vpop.f32.mrb[0].mxu0
      %v3855 = vand.u32 %v2553, 4294901760
      %v3856 = vsub.f32 %v2553, %v3855
      %3857 = vmatprep.mubr.f32.mxu0 %v3856
      %v3858 = vand.u32 %v2552, 4294901760
      %v3859 = vsub.f32 %v2552, %v3858
      %3860 = vmatmul.mubr.f32.gmra.mrb[0].mxu0 %v3859
      %v3861 = vpop.f32.mrb[0].mxu0
      %v3862 = vadd.f32 %v3525, %v3861
      %v3863 = vpop.f32.mrb[0].mxu0
      %v3864 = vand.u32 %v2555, 4294901760
      %v3865 = vsub.f32 %v2555, %v3864
      %3866 = vmatprep.mubr.f32.mxu0 %v3865
      %v3867 = vand.u32 %v2554, 4294901760
      %v3868 = vsub.f32 %v2554, %v3867
      %3869 = vmatmul.mubr.f32.gmra.mrb[0].mxu0 %v3868
      %v3870 = vpop.f32.mrb[0].mxu0
      %v3871 = vadd.f32 %v3532, %v3870
      %v3872 = vpop.f32.mrb[0].mxu0
      %v3873 = vand.u32 %v2557, 4294901760
      %v3874 = vsub.f32 %v2557, %v3873
      %3875 = vmatprep.mubr.f32.mxu0 %v3874
      %v3876 = vand.u32 %v2556, 4294901760
      %v3877 = vsub.f32 %v2556, %v3876
      %3878 = vmatmul.mubr.f32.gmra.mrb[0].mxu0 %v3877
      %v3879 = vpop.f32.mrb[0].mxu0
      %v3880 = vadd.f32 %v3539, %v3879
      %v3881 = vpop.f32.mrb[0].mxu0
      %v3882 = vand.u32 %v2559, 4294901760
      %v3883 = vsub.f32 %v2559, %v3882
      %3884 = vmatprep.mubr.f32.mxu0 %v3883
      %v3885 = vand.u32 %v2558, 4294901760
      %v3886 = vsub.f32 %v2558, %v3885
      %3887 = vmatmul.mubr.f32.gmra.mrb[0].mxu0 %v3886
      %v3888 = vpop.f32.mrb[0].mxu0
      %v3889 = vadd.f32 %v3546, %v3888
      %v3890 = vpop.f32.mrb[0].mxu0
      %v3891 = vand.u32 %v2561, 4294901760
      %v3892 = vsub.f32 %v2561, %v3891
      %3893 = vmatprep.mubr.f32.mxu0 %v3892
      %v3894 = vand.u32 %v2560, 4294901760
      %v3895 = vsub.f32 %v2560, %v3894
      %3896 = vmatmul.mubr.f32.gmra.mrb[0].mxu0 %v3895
      %v3897 = vpop.f32.mrb[0].mxu0
      %v3898 = vadd.f32 %v3553, %v3897
      %v3899 = vpop.f32.mrb[0].mxu0
      %3900 = vdwg.mxu0
      %3901 = vmatprep.subr.mxu0 0.0
      %v3902 = vand.u32 %v2482, 4294901760
      %3903 = vmatpush1.msra.mxu0 %v3902
      %3904 = vmatprep.subr.mxu0 0.0
      %v3905 = vand.u32 %v2483, 4294901760
      %3906 = vmatpush1.msra.mxu0 %v3905
      %3907 = vmatprep.subr.mxu0 0.0
      %v3908 = vand.u32 %v2484, 4294901760
      %3909 = vmatpush1.msra.mxu0 %v3908
      %3910 = vmatprep.subr.mxu0 0.0
      %v3911 = vand.u32 %v2485, 4294901760
      %3912 = vmatpush1.msra.mxu0 %v3911
      %3913 = vmatprep.subr.mxu0 0.0
      %v3914 = vand.u32 %v2486, 4294901760
      %3915 = vmatpush1.msra.mxu0 %v3914
      %3916 = vmatprep.subr.mxu0 0.0
      %v3917 = vand.u32 %v2487, 4294901760
      %3918 = vmatpush1.msra.mxu0 %v3917
      %3919 = vmatprep.subr.mxu0 0.0
      %v3920 = vand.u32 %v2488, 4294901760
      %3921 = vmatpush1.msra.mxu0 %v3920
      %3922 = vmatprep.subr.mxu0 0.0
      %v3923 = vand.u32 %v2489, 4294901760
      %3924 = vmatpush1.msra.mxu0 %v3923
      %3925 = vmatprep.subr.mxu0 0.0
      %v3926 = vand.u32 %v2490, 4294901760
      %3927 = vmatpush1.msra.mxu0 %v3926
      %3928 = vmatprep.subr.mxu0 0.0
      %v3929 = vand.u32 %v2491, 4294901760
      %3930 = vmatpush1.msra.mxu0 %v3929
      %3931 = vmatprep.subr.mxu0 0.0
      %v3932 = vand.u32 %v2492, 4294901760
      %3933 = vmatpush1.msra.mxu0 %v3932
      %3934 = vmatprep.subr.mxu0 0.0
      %v3935 = vand.u32 %v2493, 4294901760
      %3936 = vmatpush1.msra.mxu0 %v3935
      %3937 = vmatprep.subr.mxu0 0.0
      %v3938 = vand.u32 %v2494, 4294901760
      %3939 = vmatpush1.msra.mxu0 %v3938
      %3940 = vmatprep.subr.mxu0 0.0
      %v3941 = vand.u32 %v2495, 4294901760
      %3942 = vmatpush1.msra.mxu0 %v3941
      %3943 = vmatprep.subr.mxu0 0.0
      %v3944 = vand.u32 %v2496, 4294901760
      %3945 = vmatpush1.msra.mxu0 %v3944
      %3946 = vmatprep.subr.mxu0 0.0
      %v3947 = vand.u32 %v2497, 4294901760
      %3948 = vmatpush1.msra.mxu0 %v3947
      %3949 = vmatprep.subr.mxu0 0.0
      %v3950 = vand.u32 %v2498, 4294901760
      %3951 = vmatpush1.msra.mxu0 %v3950
      %3952 = vmatprep.subr.mxu0 0.0
      %v3953 = vand.u32 %v2499, 4294901760
      %3954 = vmatpush1.msra.mxu0 %v3953
      %3955 = vmatprep.subr.mxu0 0.0
      %v3956 = vand.u32 %v2500, 4294901760
      %3957 = vmatpush1.msra.mxu0 %v3956
      %3958 = vmatprep.subr.mxu0 0.0
      %v3959 = vand.u32 %v2501, 4294901760
      %3960 = vmatpush1.msra.mxu0 %v3959
      %3961 = vmatprep.subr.mxu0 0.0
      %v3962 = vand.u32 %v2502, 4294901760
      %3963 = vmatpush1.msra.mxu0 %v3962
      %3964 = vmatprep.subr.mxu0 0.0
      %v3965 = vand.u32 %v2503, 4294901760
      %3966 = vmatpush1.msra.mxu0 %v3965
      %3967 = vmatprep.subr.mxu0 0.0
      %v3968 = vand.u32 %v2504, 4294901760
      %3969 = vmatpush1.msra.mxu0 %v3968
      %3970 = vmatprep.subr.mxu0 0.0
      %v3971 = vand.u32 %v2505, 4294901760
      %3972 = vmatpush1.msra.mxu0 %v3971
      %3973 = vmatprep.subr.mxu0 0.0
      %v3974 = vand.u32 %v2506, 4294901760
      %3975 = vmatpush1.msra.mxu0 %v3974
      %3976 = vmatprep.subr.mxu0 0.0
      %v3977 = vand.u32 %v2507, 4294901760
      %3978 = vmatpush1.msra.mxu0 %v3977
      %3979 = vmatprep.subr.mxu0 0.0
      %v3980 = vand.u32 %v2508, 4294901760
      %3981 = vmatpush1.msra.mxu0 %v3980
      %3982 = vmatprep.subr.mxu0 0.0
      %v3983 = vand.u32 %v2509, 4294901760
      %3984 = vmatpush1.msra.mxu0 %v3983
      %3985 = vmatprep.subr.mxu0 0.0
      %v3986 = vand.u32 %v2510, 4294901760
      %3987 = vmatpush1.msra.mxu0 %v3986
      %3988 = vmatprep.subr.mxu0 0.0
      %v3989 = vand.u32 %v2511, 4294901760
      %3990 = vmatpush1.msra.mxu0 %v3989
      %3991 = vmatprep.subr.mxu0 0.0
      %v3992 = vand.u32 %v2512, 4294901760
      %3993 = vmatpush1.msra.mxu0 %v3992
      %3994 = vmatprep.subr.mxu0 0.0
      %v3995 = vand.u32 %v2513, 4294901760
      %3996 = vmatpush1.msra.mxu0 %v3995
      %v3997 = vand.u32 %v2515, 4294901760
      %v3998 = vsub.f32 %v2515, %v3997
      %v3999 = vand.u32 %v3998, 4294901760
      %4000 = vmatprep.mubr.f32.mxu0 %v3999
      %v4001 = vand.u32 %v2514, 4294901760
      %v4002 = vsub.f32 %v2514, %v4001
      %v4003 = vand.u32 %v4002, 4294901760
      %4004 = vmatmul.mubr.f32.gmra.mrb[0].mxu0 %v4003
      %v4005 = vpop.f32.mrb[0].mxu0
      %v4006 = vadd.f32 %v3691, %v4005
      %v4007 = vpop.f32.mrb[0].mxu0
      %v4008 = vand.u32 %v2517, 4294901760
      %v4009 = vsub.f32 %v2517, %v4008
      %v4010 = vand.u32 %v4009, 4294901760
      %4011 = vmatprep.mubr.f32.mxu0 %v4010
      %v4012 = vand.u32 %v2516, 4294901760
      %v4013 = vsub.f32 %v2516, %v4012
      %v4014 = vand.u32 %v4013, 4294901760
      %4015 = vmatmul.mubr.f32.gmra.mrb[0].mxu0 %v4014
      %v4016 = vpop.f32.mrb[0].mxu0
      %v4017 = vadd.f32 %v3700, %v4016
      %v4018 = vpop.f32.mrb[0].mxu0
      %v4019 = vand.u32 %v2519, 4294901760
      %v4020 = vsub.f32 %v2519, %v4019
      %v4021 = vand.u32 %v4020, 4294901760
      %4022 = vmatprep.mubr.f32.mxu0 %v4021
      %v4023 = vand.u32 %v2518, 4294901760
      %v4024 = vsub.f32 %v2518, %v4023
      %v4025 = vand.u32 %v4024, 4294901760
      %4026 = vmatmul.mubr.f32.gmra.mrb[0].mxu0 %v4025
      %v4027 = vpop.f32.mrb[0].mxu0
      %v4028 = vadd.f32 %v3709, %v4027
      %v4029 = vpop.f32.mrb[0].mxu0
      %v4030 = vand.u32 %v2521, 4294901760
      %v4031 = vsub.f32 %v2521, %v4030
      %v4032 = vand.u32 %v4031, 4294901760
      %4033 = vmatprep.mubr.f32.mxu0 %v4032
      %v4034 = vand.u32 %v2520, 4294901760
      %v4035 = vsub.f32 %v2520, %v4034
      %v4036 = vand.u32 %v4035, 4294901760
      %4037 = vmatmul.mubr.f32.gmra.mrb[0].mxu0 %v4036
      %v4038 = vpop.f32.mrb[0].mxu0
      %v4039 = vadd.f32 %v3718, %v4038
      %v4040 = vpop.f32.mrb[0].mxu0
      %v4041 = vand.u32 %v2523, 4294901760
      %v4042 = vsub.f32 %v2523, %v4041
      %v4043 = vand.u32 %v4042, 4294901760
      %4044 = vmatprep.mubr.f32.mxu0 %v4043
      %v4045 = vand.u32 %v2522, 4294901760
      %v4046 = vsub.f32 %v2522, %v4045
      %v4047 = vand.u32 %v4046, 4294901760
      %4048 = vmatmul.mubr.f32.gmra.mrb[0].mxu0 %v4047
      %v4049 = vpop.f32.mrb[0].mxu0
      %v4050 = vadd.f32 %v3727, %v4049
      %v4051 = vpop.f32.mrb[0].mxu0
      %v4052 = vand.u32 %v2525, 4294901760
      %v4053 = vsub.f32 %v2525, %v4052
      %v4054 = vand.u32 %v4053, 4294901760
      %4055 = vmatprep.mubr.f32.mxu0 %v4054
      %v4056 = vand.u32 %v2524, 4294901760
      %v4057 = vsub.f32 %v2524, %v4056
      %v4058 = vand.u32 %v4057, 4294901760
      %4059 = vmatmul.mubr.f32.gmra.mrb[0].mxu0 %v4058
      %v4060 = vpop.f32.mrb[0].mxu0
      %v4061 = vadd.f32 %v3736, %v4060
      %v4062 = vpop.f32.mrb[0].mxu0
      %v4063 = vand.u32 %v2527, 4294901760
      %v4064 = vsub.f32 %v2527, %v4063
      %v4065 = vand.u32 %v4064, 4294901760
      %4066 = vmatprep.mubr.f32.mxu0 %v4065
      %v4067 = vand.u32 %v2526, 4294901760
      %v4068 = vsub.f32 %v2526, %v4067
      %v4069 = vand.u32 %v4068, 4294901760
      %4070 = vmatmul.mubr.f32.gmra.mrb[0].mxu0 %v4069
      %v4071 = vpop.f32.mrb[0].mxu0
      %v4072 = vadd.f32 %v3745, %v4071
      %v4073 = vpop.f32.mrb[0].mxu0
      %v4074 = vand.u32 %v2529, 4294901760
      %v4075 = vsub.f32 %v2529, %v4074
      %v4076 = vand.u32 %v4075, 4294901760
      %4077 = vmatprep.mubr.f32.mxu0 %v4076
      %v4078 = vand.u32 %v2528, 4294901760
      %v4079 = vsub.f32 %v2528, %v4078
      %v4080 = vand.u32 %v4079, 4294901760
      %4081 = vmatmul.mubr.f32.gmra.mrb[0].mxu0 %v4080
      %v4082 = vpop.f32.mrb[0].mxu0
      %v4083 = vadd.f32 %v3754, %v4082
      %v4084 = vpop.f32.mrb[0].mxu0
      %v4085 = vand.u32 %v2531, 4294901760
      %v4086 = vsub.f32 %v2531, %v4085
      %v4087 = vand.u32 %v4086, 4294901760
      %4088 = vmatprep.mubr.f32.mxu0 %v4087
      %v4089 = vand.u32 %v2530, 4294901760
      %v4090 = vsub.f32 %v2530, %v4089
      %v4091 = vand.u32 %v4090, 4294901760
      %4092 = vmatmul.mubr.f32.gmra.mrb[0].mxu0 %v4091
      %v4093 = vpop.f32.mrb[0].mxu0
      %v4094 = vadd.f32 %v3763, %v4093
      %v4095 = vpop.f32.mrb[0].mxu0
      %v4096 = vand.u32 %v2533, 4294901760
      %v4097 = vsub.f32 %v2533, %v4096
      %v4098 = vand.u32 %v4097, 4294901760
      %4099 = vmatprep.mubr.f32.mxu0 %v4098
      %v4100 = vand.u32 %v2532, 4294901760
      %v4101 = vsub.f32 %v2532, %v4100
      %v4102 = vand.u32 %v4101, 4294901760
      %4103 = vmatmul.mubr.f32.gmra.mrb[0].mxu0 %v4102
      %v4104 = vpop.f32.mrb[0].mxu0
      %v4105 = vadd.f32 %v3772, %v4104
      %v4106 = vpop.f32.mrb[0].mxu0
      %v4107 = vand.u32 %v2535, 4294901760
      %v4108 = vsub.f32 %v2535, %v4107
      %v4109 = vand.u32 %v4108, 4294901760
      %4110 = vmatprep.mubr.f32.mxu0 %v4109
      %v4111 = vand.u32 %v2534, 4294901760
      %v4112 = vsub.f32 %v2534, %v4111
      %v4113 = vand.u32 %v4112, 4294901760
      %4114 = vmatmul.mubr.f32.gmra.mrb[0].mxu0 %v4113
      %v4115 = vpop.f32.mrb[0].mxu0
      %v4116 = vadd.f32 %v3781, %v4115
      %v4117 = vpop.f32.mrb[0].mxu0
      %v4118 = vand.u32 %v2537, 4294901760
      %v4119 = vsub.f32 %v2537, %v4118
      %v4120 = vand.u32 %v4119, 4294901760
      %4121 = vmatprep.mubr.f32.mxu0 %v4120
      %v4122 = vand.u32 %v2536, 4294901760
      %v4123 = vsub.f32 %v2536, %v4122
      %v4124 = vand.u32 %v4123, 4294901760
      %4125 = vmatmul.mubr.f32.gmra.mrb[0].mxu0 %v4124
      %v4126 = vpop.f32.mrb[0].mxu0
      %v4127 = vadd.f32 %v3790, %v4126
      %v4128 = vpop.f32.mrb[0].mxu0
      %v4129 = vand.u32 %v2539, 4294901760
      %v4130 = vsub.f32 %v2539, %v4129
      %v4131 = vand.u32 %v4130, 4294901760
      %4132 = vmatprep.mubr.f32.mxu0 %v4131
      %v4133 = vand.u32 %v2538, 4294901760
      %v4134 = vsub.f32 %v2538, %v4133
      %v4135 = vand.u32 %v4134, 4294901760
      %4136 = vmatmul.mubr.f32.gmra.mrb[0].mxu0 %v4135
      %v4137 = vpop.f32.mrb[0].mxu0
      %v4138 = vadd.f32 %v3799, %v4137
      %v4139 = vpop.f32.mrb[0].mxu0
      %v4140 = vand.u32 %v2541, 4294901760
      %v4141 = vsub.f32 %v2541, %v4140
      %v4142 = vand.u32 %v4141, 4294901760
      %4143 = vmatprep.mubr.f32.mxu0 %v4142
      %v4144 = vand.u32 %v2540, 4294901760
      %v4145 = vsub.f32 %v2540, %v4144
      %v4146 = vand.u32 %v4145, 4294901760
      %4147 = vmatmul.mubr.f32.gmra.mrb[0].mxu0 %v4146
      %v4148 = vpop.f32.mrb[0].mxu0
      %v4149 = vadd.f32 %v3808, %v4148
      %v4150 = vpop.f32.mrb[0].mxu0
      %v4151 = vand.u32 %v2543, 4294901760
      %v4152 = vsub.f32 %v2543, %v4151
      %v4153 = vand.u32 %v4152, 4294901760
      %4154 = vmatprep.mubr.f32.mxu0 %v4153
      %v4155 = vand.u32 %v2542, 4294901760
      %v4156 = vsub.f32 %v2542, %v4155
      %v4157 = vand.u32 %v4156, 4294901760
      %4158 = vmatmul.mubr.f32.gmra.mrb[0].mxu0 %v4157
      %v4159 = vpop.f32.mrb[0].mxu0
      %v4160 = vadd.f32 %v3817, %v4159
      %v4161 = vpop.f32.mrb[0].mxu0
      %v4162 = vand.u32 %v2545, 4294901760
      %v4163 = vsub.f32 %v2545, %v4162
      %v4164 = vand.u32 %v4163, 4294901760
      %4165 = vmatprep.mubr.f32.mxu0 %v4164
      %v4166 = vand.u32 %v2544, 4294901760
      %v4167 = vsub.f32 %v2544, %v4166
      %v4168 = vand.u32 %v4167, 4294901760
      %4169 = vmatmul.mubr.f32.gmra.mrb[0].mxu0 %v4168
      %v4170 = vpop.f32.mrb[0].mxu0
      %v4171 = vadd.f32 %v3826, %v4170
      %v4172 = vpop.f32.mrb[0].mxu0
      %v4173 = vand.u32 %v2547, 4294901760
      %v4174 = vsub.f32 %v2547, %v4173
      %v4175 = vand.u32 %v4174, 4294901760
      %4176 = vmatprep.mubr.f32.mxu0 %v4175
      %v4177 = vand.u32 %v2546, 4294901760
      %v4178 = vsub.f32 %v2546, %v4177
      %v4179 = vand.u32 %v4178, 4294901760
      %4180 = vmatmul.mubr.f32.gmra.mrb[0].mxu0 %v4179
      %v4181 = vpop.f32.mrb[0].mxu0
      %v4182 = vadd.f32 %v3835, %v4181
      %v4183 = vpop.f32.mrb[0].mxu0
      %v4184 = vand.u32 %v2549, 4294901760
      %v4185 = vsub.f32 %v2549, %v4184
      %v4186 = vand.u32 %v4185, 4294901760
      %4187 = vmatprep.mubr.f32.mxu0 %v4186
      %v4188 = vand.u32 %v2548, 4294901760
      %v4189 = vsub.f32 %v2548, %v4188
      %v4190 = vand.u32 %v4189, 4294901760
      %4191 = vmatmul.mubr.f32.gmra.mrb[0].mxu0 %v4190
      %v4192 = vpop.f32.mrb[0].mxu0
      %v4193 = vadd.f32 %v3844, %v4192
      %v4194 = vpop.f32.mrb[0].mxu0
      %v4195 = vand.u32 %v2551, 4294901760
      %v4196 = vsub.f32 %v2551, %v4195
      %v4197 = vand.u32 %v4196, 4294901760
      %4198 = vmatprep.mubr.f32.mxu0 %v4197
      %v4199 = vand.u32 %v2550, 4294901760
      %v4200 = vsub.f32 %v2550, %v4199
      %v4201 = vand.u32 %v4200, 4294901760
      %4202 = vmatmul.mubr.f32.gmra.mrb[0].mxu0 %v4201
      %v4203 = vpop.f32.mrb[0].mxu0
      %v4204 = vadd.f32 %v3853, %v4203
      %v4205 = vpop.f32.mrb[0].mxu0
      %v4206 = vand.u32 %v2553, 4294901760
      %v4207 = vsub.f32 %v2553, %v4206
      %v4208 = vand.u32 %v4207, 4294901760
      %4209 = vmatprep.mubr.f32.mxu0 %v4208
      %v4210 = vand.u32 %v2552, 4294901760
      %v4211 = vsub.f32 %v2552, %v4210
      %v4212 = vand.u32 %v4211, 4294901760
      %4213 = vmatmul.mubr.f32.gmra.mrb[0].mxu0 %v4212
      %v4214 = vpop.f32.mrb[0].mxu0
      %v4215 = vadd.f32 %v3862, %v4214
      %v4216 = vpop.f32.mrb[0].mxu0
      %v4217 = vand.u32 %v2555, 4294901760
      %v4218 = vsub.f32 %v2555, %v4217
      %v4219 = vand.u32 %v4218, 4294901760
      %4220 = vmatprep.mubr.f32.mxu0 %v4219
      %v4221 = vand.u32 %v2554, 4294901760
      %v4222 = vsub.f32 %v2554, %v4221
      %v4223 = vand.u32 %v4222, 4294901760
      %4224 = vmatmul.mubr.f32.gmra.mrb[0].mxu0 %v4223
      %v4225 = vpop.f32.mrb[0].mxu0
      %v4226 = vadd.f32 %v3871, %v4225
      %v4227 = vpop.f32.mrb[0].mxu0
      %v4228 = vand.u32 %v2557, 4294901760
      %v4229 = vsub.f32 %v2557, %v4228
      %v4230 = vand.u32 %v4229, 4294901760
      %4231 = vmatprep.mubr.f32.mxu0 %v4230
      %v4232 = vand.u32 %v2556, 4294901760
      %v4233 = vsub.f32 %v2556, %v4232
      %v4234 = vand.u32 %v4233, 4294901760
      %4235 = vmatmul.mubr.f32.gmra.mrb[0].mxu0 %v4234
      %v4236 = vpop.f32.mrb[0].mxu0
      %v4237 = vadd.f32 %v3880, %v4236
      %v4238 = vpop.f32.mrb[0].mxu0
      %v4239 = vand.u32 %v2559, 4294901760
      %v4240 = vsub.f32 %v2559, %v4239
      %v4241 = vand.u32 %v4240, 4294901760
      %4242 = vmatprep.mubr.f32.mxu0 %v4241
      %v4243 = vand.u32 %v2558, 4294901760
      %v4244 = vsub.f32 %v2558, %v4243
      %v4245 = vand.u32 %v4244, 4294901760
      %4246 = vmatmul.mubr.f32.gmra.mrb[0].mxu0 %v4245
      %v4247 = vpop.f32.mrb[0].mxu0
      %v4248 = vadd.f32 %v3889, %v4247
      %v4249 = vpop.f32.mrb[0].mxu0
      %v4250 = vand.u32 %v2561, 4294901760
      %v4251 = vsub.f32 %v2561, %v4250
      %v4252 = vand.u32 %v4251, 4294901760
      %4253 = vmatprep.mubr.f32.mxu0 %v4252
      %v4254 = vand.u32 %v2560, 4294901760
      %v4255 = vsub.f32 %v2560, %v4254
      %v4256 = vand.u32 %v4255, 4294901760
      %4257 = vmatmul.mubr.f32.gmra.mrb[0].mxu0 %v4256
      %v4258 = vpop.f32.mrb[0].mxu0
      %v4259 = vadd.f32 %v3898, %v4258
      %v4260 = vpop.f32.mrb[0].mxu0
      %4261 = vdwg.mxu0
      %4262 = vmatprep.subr.mxu0 0.0
      %v4263 = vand.u32 %v2482, 4294901760
      %v4264 = vsub.f32 %v2482, %v4263
      %v4265 = vand.u32 %v4264, 4294901760
      %4266 = vmatpush1.msra.mxu0 %v4265
      %4267 = vmatprep.subr.mxu0 0.0
      %v4268 = vand.u32 %v2483, 4294901760
      %v4269 = vsub.f32 %v2483, %v4268
      %v4270 = vand.u32 %v4269, 4294901760
      %4271 = vmatpush1.msra.mxu0 %v4270
      %4272 = vmatprep.subr.mxu0 0.0
      %v4273 = vand.u32 %v2484, 4294901760
      %v4274 = vsub.f32 %v2484, %v4273
      %v4275 = vand.u32 %v4274, 4294901760
      %4276 = vmatpush1.msra.mxu0 %v4275
      %4277 = vmatprep.subr.mxu0 0.0
      %v4278 = vand.u32 %v2485, 4294901760
      %v4279 = vsub.f32 %v2485, %v4278
      %v4280 = vand.u32 %v4279, 4294901760
      %4281 = vmatpush1.msra.mxu0 %v4280
      %4282 = vmatprep.subr.mxu0 0.0
      %v4283 = vand.u32 %v2486, 4294901760
      %v4284 = vsub.f32 %v2486, %v4283
      %v4285 = vand.u32 %v4284, 4294901760
      %4286 = vmatpush1.msra.mxu0 %v4285
      %4287 = vmatprep.subr.mxu0 0.0
      %v4288 = vand.u32 %v2487, 4294901760
      %v4289 = vsub.f32 %v2487, %v4288
      %v4290 = vand.u32 %v4289, 4294901760
      %4291 = vmatpush1.msra.mxu0 %v4290
      %4292 = vmatprep.subr.mxu0 0.0
      %v4293 = vand.u32 %v2488, 4294901760
      %v4294 = vsub.f32 %v2488, %v4293
      %v4295 = vand.u32 %v4294, 4294901760
      %4296 = vmatpush1.msra.mxu0 %v4295
      %4297 = vmatprep.subr.mxu0 0.0
      %v4298 = vand.u32 %v2489, 4294901760
      %v4299 = vsub.f32 %v2489, %v4298
      %v4300 = vand.u32 %v4299, 4294901760
      %4301 = vmatpush1.msra.mxu0 %v4300
      %4302 = vmatprep.subr.mxu0 0.0
      %v4303 = vand.u32 %v2490, 4294901760
      %v4304 = vsub.f32 %v2490, %v4303
      %v4305 = vand.u32 %v4304, 4294901760
      %4306 = vmatpush1.msra.mxu0 %v4305
      %4307 = vmatprep.subr.mxu0 0.0
      %v4308 = vand.u32 %v2491, 4294901760
      %v4309 = vsub.f32 %v2491, %v4308
      %v4310 = vand.u32 %v4309, 4294901760
      %4311 = vmatpush1.msra.mxu0 %v4310
      %4312 = vmatprep.subr.mxu0 0.0
      %v4313 = vand.u32 %v2492, 4294901760
      %v4314 = vsub.f32 %v2492, %v4313
      %v4315 = vand.u32 %v4314, 4294901760
      %4316 = vmatpush1.msra.mxu0 %v4315
      %4317 = vmatprep.subr.mxu0 0.0
      %v4318 = vand.u32 %v2493, 4294901760
      %v4319 = vsub.f32 %v2493, %v4318
      %v4320 = vand.u32 %v4319, 4294901760
      %4321 = vmatpush1.msra.mxu0 %v4320
      %4322 = vmatprep.subr.mxu0 0.0
      %v4323 = vand.u32 %v2494, 4294901760
      %v4324 = vsub.f32 %v2494, %v4323
      %v4325 = vand.u32 %v4324, 4294901760
      %4326 = vmatpush1.msra.mxu0 %v4325
      %4327 = vmatprep.subr.mxu0 0.0
      %v4328 = vand.u32 %v2495, 4294901760
      %v4329 = vsub.f32 %v2495, %v4328
      %v4330 = vand.u32 %v4329, 4294901760
      %4331 = vmatpush1.msra.mxu0 %v4330
      %4332 = vmatprep.subr.mxu0 0.0
      %v4333 = vand.u32 %v2496, 4294901760
      %v4334 = vsub.f32 %v2496, %v4333
      %v4335 = vand.u32 %v4334, 4294901760
      %4336 = vmatpush1.msra.mxu0 %v4335
      %4337 = vmatprep.subr.mxu0 0.0
      %v4338 = vand.u32 %v2497, 4294901760
      %v4339 = vsub.f32 %v2497, %v4338
      %v4340 = vand.u32 %v4339, 4294901760
      %4341 = vmatpush1.msra.mxu0 %v4340
      %4342 = vmatprep.subr.mxu0 0.0
      %v4343 = vand.u32 %v2498, 4294901760
      %v4344 = vsub.f32 %v2498, %v4343
      %v4345 = vand.u32 %v4344, 4294901760
      %4346 = vmatpush1.msra.mxu0 %v4345
      %4347 = vmatprep.subr.mxu0 0.0
      %v4348 = vand.u32 %v2499, 4294901760
      %v4349 = vsub.f32 %v2499, %v4348
      %v4350 = vand.u32 %v4349, 4294901760
      %4351 = vmatpush1.msra.mxu0 %v4350
      %4352 = vmatprep.subr.mxu0 0.0
      %v4353 = vand.u32 %v2500, 4294901760
      %v4354 = vsub.f32 %v2500, %v4353
      %v4355 = vand.u32 %v4354, 4294901760
      %4356 = vmatpush1.msra.mxu0 %v4355
      %4357 = vmatprep.subr.mxu0 0.0
      %v4358 = vand.u32 %v2501, 4294901760
      %v4359 = vsub.f32 %v2501, %v4358
      %v4360 = vand.u32 %v4359, 4294901760
      %4361 = vmatpush1.msra.mxu0 %v4360
      %4362 = vmatprep.subr.mxu0 0.0
      %v4363 = vand.u32 %v2502, 4294901760
      %v4364 = vsub.f32 %v2502, %v4363
      %v4365 = vand.u32 %v4364, 4294901760
      %4366 = vmatpush1.msra.mxu0 %v4365
      %4367 = vmatprep.subr.mxu0 0.0
      %v4368 = vand.u32 %v2503, 4294901760
      %v4369 = vsub.f32 %v2503, %v4368
      %v4370 = vand.u32 %v4369, 4294901760
      %4371 = vmatpush1.msra.mxu0 %v4370
      %4372 = vmatprep.subr.mxu0 0.0
      %v4373 = vand.u32 %v2504, 4294901760
      %v4374 = vsub.f32 %v2504, %v4373
      %v4375 = vand.u32 %v4374, 4294901760
      %4376 = vmatpush1.msra.mxu0 %v4375
      %4377 = vmatprep.subr.mxu0 0.0
      %v4378 = vand.u32 %v2505, 4294901760
      %v4379 = vsub.f32 %v2505, %v4378
      %v4380 = vand.u32 %v4379, 4294901760
      %4381 = vmatpush1.msra.mxu0 %v4380
      %4382 = vmatprep.subr.mxu0 0.0
      %v4383 = vand.u32 %v2506, 4294901760
      %v4384 = vsub.f32 %v2506, %v4383
      %v4385 = vand.u32 %v4384, 4294901760
      %4386 = vmatpush1.msra.mxu0 %v4385
      %4387 = vmatprep.subr.mxu0 0.0
      %v4388 = vand.u32 %v2507, 4294901760
      %v4389 = vsub.f32 %v2507, %v4388
      %v4390 = vand.u32 %v4389, 4294901760
      %4391 = vmatpush1.msra.mxu0 %v4390
      %4392 = vmatprep.subr.mxu0 0.0
      %v4393 = vand.u32 %v2508, 4294901760
      %v4394 = vsub.f32 %v2508, %v4393
      %v4395 = vand.u32 %v4394, 4294901760
      %4396 = vmatpush1.msra.mxu0 %v4395
      %4397 = vmatprep.subr.mxu0 0.0
      %v4398 = vand.u32 %v2509, 4294901760
      %v4399 = vsub.f32 %v2509, %v4398
      %v4400 = vand.u32 %v4399, 4294901760
      %4401 = vmatpush1.msra.mxu0 %v4400
      %4402 = vmatprep.subr.mxu0 0.0
      %v4403 = vand.u32 %v2510, 4294901760
      %v4404 = vsub.f32 %v2510, %v4403
      %v4405 = vand.u32 %v4404, 4294901760
      %4406 = vmatpush1.msra.mxu0 %v4405
      %4407 = vmatprep.subr.mxu0 0.0
      %v4408 = vand.u32 %v2511, 4294901760
      %v4409 = vsub.f32 %v2511, %v4408
      %v4410 = vand.u32 %v4409, 4294901760
      %4411 = vmatpush1.msra.mxu0 %v4410
      %4412 = vmatprep.subr.mxu0 0.0
      %v4413 = vand.u32 %v2512, 4294901760
      %v4414 = vsub.f32 %v2512, %v4413
      %v4415 = vand.u32 %v4414, 4294901760
      %4416 = vmatpush1.msra.mxu0 %v4415
      %4417 = vmatprep.subr.mxu0 0.0
      %v4418 = vand.u32 %v2513, 4294901760
      %v4419 = vsub.f32 %v2513, %v4418
      %v4420 = vand.u32 %v4419, 4294901760
      %4421 = vmatpush1.msra.mxu0 %v4420
      %v4422 = vand.u32 %v2515, 4294901760
      %4423 = vmatprep.mubr.f32.mxu0 %v4422
      %v4424 = vand.u32 %v2514, 4294901760
      %4425 = vmatmul.mubr.f32.gmra.mrb[0].mxu0 %v4424
      %v4426 = vpop.f32.mrb[0].mxu0
      %v4427 = vadd.f32 %v4006, %v4426
      %v4428 = vpop.f32.mrb[0].mxu0
      %v4429 = vand.u32 %v2517, 4294901760
      %4430 = vmatprep.mubr.f32.mxu0 %v4429
      %v4431 = vand.u32 %v2516, 4294901760
      %4432 = vmatmul.mubr.f32.gmra.mrb[0].mxu0 %v4431
      %v4433 = vpop.f32.mrb[0].mxu0
      %v4434 = vadd.f32 %v4017, %v4433
      %v4435 = vpop.f32.mrb[0].mxu0
      %v4436 = vand.u32 %v2519, 4294901760
      %4437 = vmatprep.mubr.f32.mxu0 %v4436
      %v4438 = vand.u32 %v2518, 4294901760
      %4439 = vmatmul.mubr.f32.gmra.mrb[0].mxu0 %v4438
      %v4440 = vpop.f32.mrb[0].mxu0
      %v4441 = vadd.f32 %v4028, %v4440
      %v4442 = vpop.f32.mrb[0].mxu0
      %v4443 = vand.u32 %v2521, 4294901760
      %4444 = vmatprep.mubr.f32.mxu0 %v4443
      %v4445 = vand.u32 %v2520, 4294901760
      %4446 = vmatmul.mubr.f32.gmra.mrb[0].mxu0 %v4445
      %v4447 = vpop.f32.mrb[0].mxu0
      %v4448 = vadd.f32 %v4039, %v4447
      %v4449 = vpop.f32.mrb[0].mxu0
      %v4450 = vand.u32 %v2523, 4294901760
      %4451 = vmatprep.mubr.f32.mxu0 %v4450
      %v4452 = vand.u32 %v2522, 4294901760
      %4453 = vmatmul.mubr.f32.gmra.mrb[0].mxu0 %v4452
      %v4454 = vpop.f32.mrb[0].mxu0
      %v4455 = vadd.f32 %v4050, %v4454
      %v4456 = vpop.f32.mrb[0].mxu0
      %v4457 = vand.u32 %v2525, 4294901760
      %4458 = vmatprep.mubr.f32.mxu0 %v4457
      %v4459 = vand.u32 %v2524, 4294901760
      %4460 = vmatmul.mubr.f32.gmra.mrb[0].mxu0 %v4459
      %v4461 = vpop.f32.mrb[0].mxu0
      %v4462 = vadd.f32 %v4061, %v4461
      %v4463 = vpop.f32.mrb[0].mxu0
      %v4464 = vand.u32 %v2527, 4294901760
      %4465 = vmatprep.mubr.f32.mxu0 %v4464
      %v4466 = vand.u32 %v2526, 4294901760
      %4467 = vmatmul.mubr.f32.gmra.mrb[0].mxu0 %v4466
      %v4468 = vpop.f32.mrb[0].mxu0
      %v4469 = vadd.f32 %v4072, %v4468
      %v4470 = vpop.f32.mrb[0].mxu0
      %v4471 = vand.u32 %v2529, 4294901760
      %4472 = vmatprep.mubr.f32.mxu0 %v4471
      %v4473 = vand.u32 %v2528, 4294901760
      %4474 = vmatmul.mubr.f32.gmra.mrb[0].mxu0 %v4473
      %v4475 = vpop.f32.mrb[0].mxu0
      %v4476 = vadd.f32 %v4083, %v4475
      %v4477 = vpop.f32.mrb[0].mxu0
      %v4478 = vand.u32 %v2531, 4294901760
      %4479 = vmatprep.mubr.f32.mxu0 %v4478
      %v4480 = vand.u32 %v2530, 4294901760
      %4481 = vmatmul.mubr.f32.gmra.mrb[0].mxu0 %v4480
      %v4482 = vpop.f32.mrb[0].mxu0
      %v4483 = vadd.f32 %v4094, %v4482
      %v4484 = vpop.f32.mrb[0].mxu0
      %v4485 = vand.u32 %v2533, 4294901760
      %4486 = vmatprep.mubr.f32.mxu0 %v4485
      %v4487 = vand.u32 %v2532, 4294901760
      %4488 = vmatmul.mubr.f32.gmra.mrb[0].mxu0 %v4487
      %v4489 = vpop.f32.mrb[0].mxu0
      %v4490 = vadd.f32 %v4105, %v4489
      %v4491 = vpop.f32.mrb[0].mxu0
      %v4492 = vand.u32 %v2535, 4294901760
      %4493 = vmatprep.mubr.f32.mxu0 %v4492
      %v4494 = vand.u32 %v2534, 4294901760
      %4495 = vmatmul.mubr.f32.gmra.mrb[0].mxu0 %v4494
      %v4496 = vpop.f32.mrb[0].mxu0
      %v4497 = vadd.f32 %v4116, %v4496
      %v4498 = vpop.f32.mrb[0].mxu0
      %v4499 = vand.u32 %v2537, 4294901760
      %4500 = vmatprep.mubr.f32.mxu0 %v4499
      %v4501 = vand.u32 %v2536, 4294901760
      %4502 = vmatmul.mubr.f32.gmra.mrb[0].mxu0 %v4501
      %v4503 = vpop.f32.mrb[0].mxu0
      %v4504 = vadd.f32 %v4127, %v4503
      %v4505 = vpop.f32.mrb[0].mxu0
      %v4506 = vand.u32 %v2539, 4294901760
      %4507 = vmatprep.mubr.f32.mxu0 %v4506
      %v4508 = vand.u32 %v2538, 4294901760
      %4509 = vmatmul.mubr.f32.gmra.mrb[0].mxu0 %v4508
      %v4510 = vpop.f32.mrb[0].mxu0
      %v4511 = vadd.f32 %v4138, %v4510
      %v4512 = vpop.f32.mrb[0].mxu0
      %v4513 = vand.u32 %v2541, 4294901760
      %4514 = vmatprep.mubr.f32.mxu0 %v4513
      %v4515 = vand.u32 %v2540, 4294901760
      %4516 = vmatmul.mubr.f32.gmra.mrb[0].mxu0 %v4515
      %v4517 = vpop.f32.mrb[0].mxu0
      %v4518 = vadd.f32 %v4149, %v4517
      %v4519 = vpop.f32.mrb[0].mxu0
      %v4520 = vand.u32 %v2543, 4294901760
      %4521 = vmatprep.mubr.f32.mxu0 %v4520
      %v4522 = vand.u32 %v2542, 4294901760
      %4523 = vmatmul.mubr.f32.gmra.mrb[0].mxu0 %v4522
      %v4524 = vpop.f32.mrb[0].mxu0
      %v4525 = vadd.f32 %v4160, %v4524
      %v4526 = vpop.f32.mrb[0].mxu0
      %v4527 = vand.u32 %v2545, 4294901760
      %4528 = vmatprep.mubr.f32.mxu0 %v4527
      %v4529 = vand.u32 %v2544, 4294901760
      %4530 = vmatmul.mubr.f32.gmra.mrb[0].mxu0 %v4529
      %v4531 = vpop.f32.mrb[0].mxu0
      %v4532 = vadd.f32 %v4171, %v4531
      %v4533 = vpop.f32.mrb[0].mxu0
      %v4534 = vand.u32 %v2547, 4294901760
      %4535 = vmatprep.mubr.f32.mxu0 %v4534
      %v4536 = vand.u32 %v2546, 4294901760
      %4537 = vmatmul.mubr.f32.gmra.mrb[0].mxu0 %v4536
      %v4538 = vpop.f32.mrb[0].mxu0
      %v4539 = vadd.f32 %v4182, %v4538
      %v4540 = vpop.f32.mrb[0].mxu0
      %v4541 = vand.u32 %v2549, 4294901760
      %4542 = vmatprep.mubr.f32.mxu0 %v4541
      %v4543 = vand.u32 %v2548, 4294901760
      %4544 = vmatmul.mubr.f32.gmra.mrb[0].mxu0 %v4543
      %v4545 = vpop.f32.mrb[0].mxu0
      %v4546 = vadd.f32 %v4193, %v4545
      %v4547 = vpop.f32.mrb[0].mxu0
      %v4548 = vand.u32 %v2551, 4294901760
      %4549 = vmatprep.mubr.f32.mxu0 %v4548
      %v4550 = vand.u32 %v2550, 4294901760
      %4551 = vmatmul.mubr.f32.gmra.mrb[0].mxu0 %v4550
      %v4552 = vpop.f32.mrb[0].mxu0
      %v4553 = vadd.f32 %v4204, %v4552
      %v4554 = vpop.f32.mrb[0].mxu0
      %v4555 = vand.u32 %v2553, 4294901760
      %4556 = vmatprep.mubr.f32.mxu0 %v4555
      %v4557 = vand.u32 %v2552, 4294901760
      %4558 = vmatmul.mubr.f32.gmra.mrb[0].mxu0 %v4557
      %v4559 = vpop.f32.mrb[0].mxu0
      %v4560 = vadd.f32 %v4215, %v4559
      %v4561 = vpop.f32.mrb[0].mxu0
      %v4562 = vand.u32 %v2555, 4294901760
      %4563 = vmatprep.mubr.f32.mxu0 %v4562
      %v4564 = vand.u32 %v2554, 4294901760
      %4565 = vmatmul.mubr.f32.gmra.mrb[0].mxu0 %v4564
      %v4566 = vpop.f32.mrb[0].mxu0
      %v4567 = vadd.f32 %v4226, %v4566
      %v4568 = vpop.f32.mrb[0].mxu0
      %v4569 = vand.u32 %v2557, 4294901760
      %4570 = vmatprep.mubr.f32.mxu0 %v4569
      %v4571 = vand.u32 %v2556, 4294901760
      %4572 = vmatmul.mubr.f32.gmra.mrb[0].mxu0 %v4571
      %v4573 = vpop.f32.mrb[0].mxu0
      %v4574 = vadd.f32 %v4237, %v4573
      %v4575 = vpop.f32.mrb[0].mxu0
      %v4576 = vand.u32 %v2559, 4294901760
      %4577 = vmatprep.mubr.f32.mxu0 %v4576
      %v4578 = vand.u32 %v2558, 4294901760
      %4579 = vmatmul.mubr.f32.gmra.mrb[0].mxu0 %v4578
      %v4580 = vpop.f32.mrb[0].mxu0
      %v4581 = vadd.f32 %v4248, %v4580
      %v4582 = vpop.f32.mrb[0].mxu0
      %v4583 = vand.u32 %v2561, 4294901760
      %4584 = vmatprep.mubr.f32.mxu0 %v4583
      %v4585 = vand.u32 %v2560, 4294901760
      %4586 = vmatmul.mubr.f32.gmra.mrb[0].mxu0 %v4585
      %v4587 = vpop.f32.mrb[0].mxu0
      %v4588 = vadd.f32 %v4259, %v4587
      %v4589 = vpop.f32.mrb[0].mxu0
      %4590 = vdwg.mxu0
      %4591 = vmatprep.subr.mxu0 0.0
      %v4592 = vand.u32 %v2482, 4294901760
      %4593 = vmatpush1.msra.mxu0 %v4592
      %4594 = vmatprep.subr.mxu0 0.0
      %v4595 = vand.u32 %v2483, 4294901760
      %4596 = vmatpush1.msra.mxu0 %v4595
      %4597 = vmatprep.subr.mxu0 0.0
      %v4598 = vand.u32 %v2484, 4294901760
      %4599 = vmatpush1.msra.mxu0 %v4598
      %4600 = vmatprep.subr.mxu0 0.0
      %v4601 = vand.u32 %v2485, 4294901760
      %4602 = vmatpush1.msra.mxu0 %v4601
      %4603 = vmatprep.subr.mxu0 0.0
      %v4604 = vand.u32 %v2486, 4294901760
      %4605 = vmatpush1.msra.mxu0 %v4604
      %4606 = vmatprep.subr.mxu0 0.0
      %v4607 = vand.u32 %v2487, 4294901760
      %4608 = vmatpush1.msra.mxu0 %v4607
      %4609 = vmatprep.subr.mxu0 0.0
      %v4610 = vand.u32 %v2488, 4294901760
      %4611 = vmatpush1.msra.mxu0 %v4610
      %4612 = vmatprep.subr.mxu0 0.0
      %v4613 = vand.u32 %v2489, 4294901760
      %4614 = vmatpush1.msra.mxu0 %v4613
      %4615 = vmatprep.subr.mxu0 0.0
      %v4616 = vand.u32 %v2490, 4294901760
      %4617 = vmatpush1.msra.mxu0 %v4616
      %4618 = vmatprep.subr.mxu0 0.0
      %v4619 = vand.u32 %v2491, 4294901760
      %4620 = vmatpush1.msra.mxu0 %v4619
      %4621 = vmatprep.subr.mxu0 0.0
      %v4622 = vand.u32 %v2492, 4294901760
      %4623 = vmatpush1.msra.mxu0 %v4622
      %4624 = vmatprep.subr.mxu0 0.0
      %v4625 = vand.u32 %v2493, 4294901760
      %4626 = vmatpush1.msra.mxu0 %v4625
      %4627 = vmatprep.subr.mxu0 0.0
      %v4628 = vand.u32 %v2494, 4294901760
      %4629 = vmatpush1.msra.mxu0 %v4628
      %4630 = vmatprep.subr.mxu0 0.0
      %v4631 = vand.u32 %v2495, 4294901760
      %4632 = vmatpush1.msra.mxu0 %v4631
      %4633 = vmatprep.subr.mxu0 0.0
      %v4634 = vand.u32 %v2496, 4294901760
      %4635 = vmatpush1.msra.mxu0 %v4634
      %4636 = vmatprep.subr.mxu0 0.0
      %v4637 = vand.u32 %v2497, 4294901760
      %4638 = vmatpush1.msra.mxu0 %v4637
      %4639 = vmatprep.subr.mxu0 0.0
      %v4640 = vand.u32 %v2498, 4294901760
      %4641 = vmatpush1.msra.mxu0 %v4640
      %4642 = vmatprep.subr.mxu0 0.0
      %v4643 = vand.u32 %v2499, 4294901760
      %4644 = vmatpush1.msra.mxu0 %v4643
      %4645 = vmatprep.subr.mxu0 0.0
      %v4646 = vand.u32 %v2500, 4294901760
      %4647 = vmatpush1.msra.mxu0 %v4646
      %4648 = vmatprep.subr.mxu0 0.0
      %v4649 = vand.u32 %v2501, 4294901760
      %4650 = vmatpush1.msra.mxu0 %v4649
      %4651 = vmatprep.subr.mxu0 0.0
      %v4652 = vand.u32 %v2502, 4294901760
      %4653 = vmatpush1.msra.mxu0 %v4652
      %4654 = vmatprep.subr.mxu0 0.0
      %v4655 = vand.u32 %v2503, 4294901760
      %4656 = vmatpush1.msra.mxu0 %v4655
      %4657 = vmatprep.subr.mxu0 0.0
      %v4658 = vand.u32 %v2504, 4294901760
      %4659 = vmatpush1.msra.mxu0 %v4658
      %4660 = vmatprep.subr.mxu0 0.0
      %v4661 = vand.u32 %v2505, 4294901760
      %4662 = vmatpush1.msra.mxu0 %v4661
      %4663 = vmatprep.subr.mxu0 0.0
      %v4664 = vand.u32 %v2506, 4294901760
      %4665 = vmatpush1.msra.mxu0 %v4664
      %4666 = vmatprep.subr.mxu0 0.0
      %v4667 = vand.u32 %v2507, 4294901760
      %4668 = vmatpush1.msra.mxu0 %v4667
      %4669 = vmatprep.subr.mxu0 0.0
      %v4670 = vand.u32 %v2508, 4294901760
      %4671 = vmatpush1.msra.mxu0 %v4670
      %4672 = vmatprep.subr.mxu0 0.0
      %v4673 = vand.u32 %v2509, 4294901760
      %4674 = vmatpush1.msra.mxu0 %v4673
      %4675 = vmatprep.subr.mxu0 0.0
      %v4676 = vand.u32 %v2510, 4294901760
      %4677 = vmatpush1.msra.mxu0 %v4676
      %4678 = vmatprep.subr.mxu0 0.0
      %v4679 = vand.u32 %v2511, 4294901760
      %4680 = vmatpush1.msra.mxu0 %v4679
      %4681 = vmatprep.subr.mxu0 0.0
      %v4682 = vand.u32 %v2512, 4294901760
      %4683 = vmatpush1.msra.mxu0 %v4682
      %4684 = vmatprep.subr.mxu0 0.0
      %v4685 = vand.u32 %v2513, 4294901760
      %4686 = vmatpush1.msra.mxu0 %v4685
      %v4687 = vand.u32 %v2515, 4294901760
      %4688 = vmatprep.mubr.f32.mxu0 %v4687
      %v4689 = vand.u32 %v2514, 4294901760
      %4690 = vmatmul.mubr.f32.gmra.mrb[0].mxu0 %v4689
      %v4691 = vpop.f32.mrb[0].mxu0
      %v4692 = vadd.f32 %v4427, %v4691
      %v4693 = vpop.f32.mrb[0].mxu0
      %v4694 = vand.u32 %v2517, 4294901760
      %4695 = vmatprep.mubr.f32.mxu0 %v4694
      %v4696 = vand.u32 %v2516, 4294901760
      %4697 = vmatmul.mubr.f32.gmra.mrb[0].mxu0 %v4696
      %v4698 = vpop.f32.mrb[0].mxu0
      %v4699 = vadd.f32 %v4434, %v4698
      %v4700 = vpop.f32.mrb[0].mxu0
      %v4701 = vand.u32 %v2519, 4294901760
      %4702 = vmatprep.mubr.f32.mxu0 %v4701
      %v4703 = vand.u32 %v2518, 4294901760
      %4704 = vmatmul.mubr.f32.gmra.mrb[0].mxu0 %v4703
      %v4705 = vpop.f32.mrb[0].mxu0
      %v4706 = vadd.f32 %v4441, %v4705
      %v4707 = vpop.f32.mrb[0].mxu0
      %v4708 = vand.u32 %v2521, 4294901760
      %4709 = vmatprep.mubr.f32.mxu0 %v4708
      %v4710 = vand.u32 %v2520, 4294901760
      %4711 = vmatmul.mubr.f32.gmra.mrb[0].mxu0 %v4710
      %v4712 = vpop.f32.mrb[0].mxu0
      %v4713 = vadd.f32 %v4448, %v4712
      %v4714 = vpop.f32.mrb[0].mxu0
      %v4715 = vand.u32 %v2523, 4294901760
      %4716 = vmatprep.mubr.f32.mxu0 %v4715
      %v4717 = vand.u32 %v2522, 4294901760
      %4718 = vmatmul.mubr.f32.gmra.mrb[0].mxu0 %v4717
      %v4719 = vpop.f32.mrb[0].mxu0
      %v4720 = vadd.f32 %v4455, %v4719
      %v4721 = vpop.f32.mrb[0].mxu0
      %v4722 = vand.u32 %v2525, 4294901760
      %4723 = vmatprep.mubr.f32.mxu0 %v4722
      %v4724 = vand.u32 %v2524, 4294901760
      %4725 = vmatmul.mubr.f32.gmra.mrb[0].mxu0 %v4724
      %v4726 = vpop.f32.mrb[0].mxu0
      %v4727 = vadd.f32 %v4462, %v4726
      %v4728 = vpop.f32.mrb[0].mxu0
      %v4729 = vand.u32 %v2527, 4294901760
      %4730 = vmatprep.mubr.f32.mxu0 %v4729
      %v4731 = vand.u32 %v2526, 4294901760
      %4732 = vmatmul.mubr.f32.gmra.mrb[0].mxu0 %v4731
      %v4733 = vpop.f32.mrb[0].mxu0
      %v4734 = vadd.f32 %v4469, %v4733
      %v4735 = vpop.f32.mrb[0].mxu0
      %v4736 = vand.u32 %v2529, 4294901760
      %4737 = vmatprep.mubr.f32.mxu0 %v4736
      %v4738 = vand.u32 %v2528, 4294901760
      %4739 = vmatmul.mubr.f32.gmra.mrb[0].mxu0 %v4738
      %v4740 = vpop.f32.mrb[0].mxu0
      %v4741 = vadd.f32 %v4476, %v4740
      %v4742 = vpop.f32.mrb[0].mxu0
      %v4743 = vand.u32 %v2531, 4294901760
      %4744 = vmatprep.mubr.f32.mxu0 %v4743
      %v4745 = vand.u32 %v2530, 4294901760
      %4746 = vmatmul.mubr.f32.gmra.mrb[0].mxu0 %v4745
      %v4747 = vpop.f32.mrb[0].mxu0
      %v4748 = vadd.f32 %v4483, %v4747
      %v4749 = vpop.f32.mrb[0].mxu0
      %v4750 = vand.u32 %v2533, 4294901760
      %4751 = vmatprep.mubr.f32.mxu0 %v4750
      %v4752 = vand.u32 %v2532, 4294901760
      %4753 = vmatmul.mubr.f32.gmra.mrb[0].mxu0 %v4752
      %v4754 = vpop.f32.mrb[0].mxu0
      %v4755 = vadd.f32 %v4490, %v4754
      %v4756 = vpop.f32.mrb[0].mxu0
      %v4757 = vand.u32 %v2535, 4294901760
      %4758 = vmatprep.mubr.f32.mxu0 %v4757
      %v4759 = vand.u32 %v2534, 4294901760
      %4760 = vmatmul.mubr.f32.gmra.mrb[0].mxu0 %v4759
      %v4761 = vpop.f32.mrb[0].mxu0
      %v4762 = vadd.f32 %v4497, %v4761
      %v4763 = vpop.f32.mrb[0].mxu0
      %v4764 = vand.u32 %v2537, 4294901760
      %4765 = vmatprep.mubr.f32.mxu0 %v4764
      %v4766 = vand.u32 %v2536, 4294901760
      %4767 = vmatmul.mubr.f32.gmra.mrb[0].mxu0 %v4766
      %v4768 = vpop.f32.mrb[0].mxu0
      %v4769 = vadd.f32 %v4504, %v4768
      %v4770 = vpop.f32.mrb[0].mxu0
      %v4771 = vand.u32 %v2539, 4294901760
      %4772 = vmatprep.mubr.f32.mxu0 %v4771
      %v4773 = vand.u32 %v2538, 4294901760
      %4774 = vmatmul.mubr.f32.gmra.mrb[0].mxu0 %v4773
      %v4775 = vpop.f32.mrb[0].mxu0
      %v4776 = vadd.f32 %v4511, %v4775
      %v4777 = vpop.f32.mrb[0].mxu0
      %v4778 = vand.u32 %v2541, 4294901760
      %4779 = vmatprep.mubr.f32.mxu0 %v4778
      %v4780 = vand.u32 %v2540, 4294901760
      %4781 = vmatmul.mubr.f32.gmra.mrb[0].mxu0 %v4780
      %v4782 = vpop.f32.mrb[0].mxu0
      %v4783 = vadd.f32 %v4518, %v4782
      %v4784 = vpop.f32.mrb[0].mxu0
      %v4785 = vand.u32 %v2543, 4294901760
      %4786 = vmatprep.mubr.f32.mxu0 %v4785
      %v4787 = vand.u32 %v2542, 4294901760
      %4788 = vmatmul.mubr.f32.gmra.mrb[0].mxu0 %v4787
      %v4789 = vpop.f32.mrb[0].mxu0
      %v4790 = vadd.f32 %v4525, %v4789
      %v4791 = vpop.f32.mrb[0].mxu0
      %v4792 = vand.u32 %v2545, 4294901760
      %4793 = vmatprep.mubr.f32.mxu0 %v4792
      %v4794 = vand.u32 %v2544, 4294901760
      %4795 = vmatmul.mubr.f32.gmra.mrb[0].mxu0 %v4794
      %v4796 = vpop.f32.mrb[0].mxu0
      %v4797 = vadd.f32 %v4532, %v4796
      %v4798 = vpop.f32.mrb[0].mxu0
      %v4799 = vand.u32 %v2547, 4294901760
      %4800 = vmatprep.mubr.f32.mxu0 %v4799
      %v4801 = vand.u32 %v2546, 4294901760
      %4802 = vmatmul.mubr.f32.gmra.mrb[0].mxu0 %v4801
      %v4803 = vpop.f32.mrb[0].mxu0
      %v4804 = vadd.f32 %v4539, %v4803
      %v4805 = vpop.f32.mrb[0].mxu0
      %v4806 = vand.u32 %v2549, 4294901760
      %4807 = vmatprep.mubr.f32.mxu0 %v4806
      %v4808 = vand.u32 %v2548, 4294901760
      %4809 = vmatmul.mubr.f32.gmra.mrb[0].mxu0 %v4808
      %v4810 = vpop.f32.mrb[0].mxu0
      %v4811 = vadd.f32 %v4546, %v4810
      %v4812 = vpop.f32.mrb[0].mxu0
      %v4813 = vand.u32 %v2551, 4294901760
      %4814 = vmatprep.mubr.f32.mxu0 %v4813
      %v4815 = vand.u32 %v2550, 4294901760
      %4816 = vmatmul.mubr.f32.gmra.mrb[0].mxu0 %v4815
      %v4817 = vpop.f32.mrb[0].mxu0
      %v4818 = vadd.f32 %v4553, %v4817
      %v4819 = vpop.f32.mrb[0].mxu0
      %v4820 = vand.u32 %v2553, 4294901760
      %4821 = vmatprep.mubr.f32.mxu0 %v4820
      %v4822 = vand.u32 %v2552, 4294901760
      %4823 = vmatmul.mubr.f32.gmra.mrb[0].mxu0 %v4822
      %v4824 = vpop.f32.mrb[0].mxu0
      %v4825 = vadd.f32 %v4560, %v4824
      %v4826 = vpop.f32.mrb[0].mxu0
      %v4827 = vand.u32 %v2555, 4294901760
      %4828 = vmatprep.mubr.f32.mxu0 %v4827
      %v4829 = vand.u32 %v2554, 4294901760
      %4830 = vmatmul.mubr.f32.gmra.mrb[0].mxu0 %v4829
      %v4831 = vpop.f32.mrb[0].mxu0
      %v4832 = vadd.f32 %v4567, %v4831
      %v4833 = vpop.f32.mrb[0].mxu0
      %v4834 = vand.u32 %v2557, 4294901760
      %4835 = vmatprep.mubr.f32.mxu0 %v4834
      %v4836 = vand.u32 %v2556, 4294901760
      %4837 = vmatmul.mubr.f32.gmra.mrb[0].mxu0 %v4836
      %v4838 = vpop.f32.mrb[0].mxu0
      %v4839 = vadd.f32 %v4574, %v4838
      %v4840 = vpop.f32.mrb[0].mxu0
      %v4841 = vand.u32 %v2559, 4294901760
      %4842 = vmatprep.mubr.f32.mxu0 %v4841
      %v4843 = vand.u32 %v2558, 4294901760
      %4844 = vmatmul.mubr.f32.gmra.mrb[0].mxu0 %v4843
      %v4845 = vpop.f32.mrb[0].mxu0
      %v4846 = vadd.f32 %v4581, %v4845
      %v4847 = vpop.f32.mrb[0].mxu0
      %v4848 = vand.u32 %v2561, 4294901760
      %4849 = vmatprep.mubr.f32.mxu0 %v4848
      %v4850 = vand.u32 %v2560, 4294901760
      %4851 = vmatmul.mubr.f32.gmra.mrb[0].mxu0 %v4850
      %v4852 = vpop.f32.mrb[0].mxu0
      %v4853 = vadd.f32 %v4588, %v4852
      %v4854 = vpop.f32.mrb[0].mxu0
      %4855 = vdwg.mxu0
      %vm4856 = vcmask 130048
      %v4857 = vsel %vm4856, %v4692, -inf
      %v4858 = vsel %vm4856, %v4699, -inf
      %v4859 = vsel %vm4856, %v4706, -inf
      %v4860 = vsel %vm4856, %v4713, -inf
      %v4861 = vsel %vm4856, %v4720, -inf
      %v4862 = vmax.f32 %v4857, %v4861
      %vm4863 = vcmask 124928
      %v4864 = vsel %vm4863, %v4727, -inf
      %v4865 = vmax.f32 %v4858, %v4864
      %v4866 = vmax.f32 %v4862, %v4865
      %v4867 = vmax.f32 %v4859, %v4860
      %v4868 = vmax.f32 %v4866, %v4867
      %v4869 = vrot.slane %v4868, 4
      %v4870 = vmax.f32 %v4868, %v4869
      %v4871 = vrot.slane %v4870, 2
      %v4872 = vmax.f32 %v4870, %v4871
      %v4873 = vrot.slane %v4872, 1
      %v4874 = vmax.f32 %v4872, %v4873
      %v4875 = vsub.f32 %v4692, %v4874
      %v4876 = vsub.f32 %v4699, %v4874
      %v4877 = vsub.f32 %v4706, %v4874
      %v4878 = vsub.f32 %v4713, %v4874
      %v4879 = vsub.f32 %v4720, %v4874
      %v4880 = vsub.f32 %v4727, %v4874
      %v4881 = vmul.f32 %v4875, 1.442695
      %v4882 = vpow.pop %v4881
      %v4883 = vmul.f32 %v4876, 1.442695
      %v4884 = vpow.pop %v4883
      %v4885 = vmul.f32 %v4877, 1.442695
      %v4886 = vpow.pop %v4885
      %v4887 = vmul.f32 %v4878, 1.442695
      %v4888 = vpow.pop %v4887
      %v4889 = vmul.f32 %v4879, 1.442695
      %v4890 = vpow.pop %v4889
      %v4891 = vmul.f32 %v4880, 1.442695
      %v4892 = vpow.pop %v4891
      %v4893 = vsel %vm4856, %v4882, 0.0
      %v4894 = vsel %vm4856, %v4884, 0.0
      %v4895 = vadd.f32 %v4893, %v4894
      %v4896 = vsel %vm4856, %v4886, 0.0
      %v4897 = vadd.f32 %v4895, %v4896
      %v4898 = vsel %vm4856, %v4888, 0.0
      %v4899 = vadd.f32 %v4897, %v4898
      %v4900 = vsel %vm4856, %v4890, 0.0
      %v4901 = vadd.f32 %v4899, %v4900
      %v4902 = vsel %vm4863, %v4892, 0.0
      %v4903 = vadd.f32 %v4901, %v4902
      %v4904 = vrot.slane %v4903, 4
      %v4905 = vadd.f32 %v4903, %v4904
      %v4906 = vrot.slane %v4905, 2
      %v4907 = vadd.f32 %v4905, %v4906
      %v4908 = vrot.slane %v4907, 1
      %v4909 = vadd.f32 %v4907, %v4908
      %v4910 = vrcp.pop %v4909
      %v4911 = vmul.f32 1.0, %v4910
      %v4912 = vmul.f32 %v4882, %v4911
      %v4913 = vmul.f32 %v4884, %v4911
      %v4914 = vmul.f32 %v4886, %v4911
      %v4915 = vmul.f32 %v4888, %v4911
      %v4916 = vmul.f32 %v4890, %v4911
      %v4917 = vmul.f32 %v4892, %v4911
      %v4918 = vld [vmem:[%s6] sm:$0x7]
      %vm4919 = vcmask 351232
      %v4921 = vsel %vm4919, %v4918, 0
      %vm4923 = vcmask 1042432
      %v4925 = vsel %vm4923, %v4917, 0
      %4927 = vmatprep.subr.mxu0 0.0
      %v4928 = vand.u32 %v4912, 4294901760
      %4929 = vmatpush1.msra.mxu0 %v4928
      %4930 = vmatprep.subr.mxu0 0.0
      %v4931 = vand.u32 %v4913, 4294901760
      %4932 = vmatpush1.msra.mxu0 %v4931
      %4933 = vmatprep.subr.mxu0 0.0
      %v4934 = vand.u32 %v4914, 4294901760
      %4935 = vmatpush1.msra.mxu0 %v4934
      %4936 = vmatprep.subr.mxu0 0.0
      %v4937 = vand.u32 %v4915, 4294901760
      %4938 = vmatpush1.msra.mxu0 %v4937
      %4939 = vmatprep.subr.mxu0 0.0
      %v4940 = vand.u32 %v4916, 4294901760
      %4941 = vmatpush1.msra.mxu0 %v4940
      %4942 = vmatprep.subr.mxu0 0.0
      %v4943 = vand.u32 %v4925, 4294901760
      %4944 = vmatpush1.msra.mxu0 %v4943
      %4945 = vmatprep.subr.mxu0 0.0
      %4946 = vmatpush1.msra.mxu0 0.0
      %4947 = vmatprep.subr.mxu0 0.0
      %4948 = vmatpush1.msra.mxu0 0.0
      %4949 = vmatprep.subr.mxu0 0.0
      %4950 = vmatpush1.msra.mxu0 0.0
      %4951 = vmatprep.subr.mxu0 0.0
      %4952 = vmatpush1.msra.mxu0 0.0
      %4953 = vmatprep.subr.mxu0 0.0
      %4954 = vmatpush1.msra.mxu0 0.0
      %4955 = vmatprep.subr.mxu0 0.0
      %4956 = vmatpush1.msra.mxu0 0.0
      %4957 = vmatprep.subr.mxu0 0.0
      %4958 = vmatpush1.msra.mxu0 0.0
      %4959 = vmatprep.subr.mxu0 0.0
      %4960 = vmatpush1.msra.mxu0 0.0
      %4961 = vmatprep.subr.mxu0 0.0
      %4962 = vmatpush1.msra.mxu0 0.0
      %4963 = vmatprep.subr.mxu0 0.0
      %4964 = vmatpush1.msra.mxu0 0.0
      %4965 = vmatprep.subr.mxu0 0.0
      %4966 = vmatpush1.msra.mxu0 0.0
      %4967 = vmatprep.subr.mxu0 0.0
      %4968 = vmatpush1.msra.mxu0 0.0
      %4969 = vmatprep.subr.mxu0 0.0
      %4970 = vmatpush1.msra.mxu0 0.0
      %4971 = vmatprep.subr.mxu0 0.0
      %4972 = vmatpush1.msra.mxu0 0.0
      %4973 = vmatprep.subr.mxu0 0.0
      %4974 = vmatpush1.msra.mxu0 0.0
      %4975 = vmatprep.subr.mxu0 0.0
      %4976 = vmatpush1.msra.mxu0 0.0
      %4977 = vmatprep.subr.mxu0 0.0
      %4978 = vmatpush1.msra.mxu0 0.0
      %4979 = vmatprep.subr.mxu0 0.0
      %4980 = vmatpush1.msra.mxu0 0.0
      %4981 = vmatprep.subr.mxu0 0.0
      %4982 = vmatpush1.msra.mxu0 0.0
      %4983 = vmatprep.subr.mxu0 0.0
      %4984 = vmatpush1.msra.mxu0 0.0
      %4985 = vmatprep.subr.mxu0 0.0
      %4986 = vmatpush1.msra.mxu0 0.0
      %4987 = vmatprep.subr.mxu0 0.0
      %4988 = vmatpush1.msra.mxu0 0.0
      %4989 = vmatprep.subr.mxu0 0.0
      %4990 = vmatpush1.msra.mxu0 0.0
      %4991 = vmatprep.subr.mxu0 0.0
      %4992 = vmatpush1.msra.mxu0 0.0
      %4993 = vmatprep.subr.mxu0 0.0
      %4994 = vmatpush1.msra.mxu0 0.0
      %4995 = vmatprep.subr.mxu0 0.0
      %4996 = vmatpush1.msra.mxu0 0.0
      %4997 = vmatprep.mubr.f32.mxu0 0.0
      %v4998 = vand.u32 %v4921, 4294901760
      %v4999 = vsub.f32 %v4921, %v4998
      %v5000 = vand.u32 %v4999, 4294901760
      %v5001 = vsub.f32 %v4999, %v5000
      %v5002 = vand.u32 %v5001, 4294901760
      %5003 = vmatmul.mubr.f32.gmra.mrb[0].mxu0 %v5002
      %v5004 = vpop.f32.mrb[0].mxu0
      %v5005 = vadd.f32 0.0, %v5004
      %v5006 = vpop.f32.mrb[0].mxu0
      %5007 = vdwg.mxu0
      %5008 = vmatprep.subr.mxu0 0.0
      %v5009 = vand.u32 %v4912, 4294901760
      %v5010 = vsub.f32 %v4912, %v5009
      %v5011 = vand.u32 %v5010, 4294901760
      %v5012 = vsub.f32 %v5010, %v5011
      %v5013 = vand.u32 %v5012, 4294901760
      %5014 = vmatpush1.msra.mxu0 %v5013
      %5015 = vmatprep.subr.mxu0 0.0
      %v5016 = vand.u32 %v4913, 4294901760
      %v5017 = vsub.f32 %v4913, %v5016
      %v5018 = vand.u32 %v5017, 4294901760
      %v5019 = vsub.f32 %v5017, %v5018
      %v5020 = vand.u32 %v5019, 4294901760
      %5021 = vmatpush1.msra.mxu0 %v5020
      %5022 = vmatprep.subr.mxu0 0.0
      %v5023 = vand.u32 %v4914, 4294901760
      %v5024 = vsub.f32 %v4914, %v5023
      %v5025 = vand.u32 %v5024, 4294901760
      %v5026 = vsub.f32 %v5024, %v5025
      %v5027 = vand.u32 %v5026, 4294901760
      %5028 = vmatpush1.msra.mxu0 %v5027
      %5029 = vmatprep.subr.mxu0 0.0
      %v5030 = vand.u32 %v4915, 4294901760
      %v5031 = vsub.f32 %v4915, %v5030
      %v5032 = vand.u32 %v5031, 4294901760
      %v5033 = vsub.f32 %v5031, %v5032
      %v5034 = vand.u32 %v5033, 4294901760
      %5035 = vmatpush1.msra.mxu0 %v5034
      %5036 = vmatprep.subr.mxu0 0.0
      %v5037 = vand.u32 %v4916, 4294901760
      %v5038 = vsub.f32 %v4916, %v5037
      %v5039 = vand.u32 %v5038, 4294901760
      %v5040 = vsub.f32 %v5038, %v5039
      %v5041 = vand.u32 %v5040, 4294901760
      %5042 = vmatpush1.msra.mxu0 %v5041
      %5043 = vmatprep.subr.mxu0 0.0
      %v5044 = vand.u32 %v4925, 4294901760
      %v5045 = vsub.f32 %v4925, %v5044
      %v5046 = vand.u32 %v5045, 4294901760
      %v5047 = vsub.f32 %v5045, %v5046
      %v5048 = vand.u32 %v5047, 4294901760
      %5049 = vmatpush1.msra.mxu0 %v5048
      %5050 = vmatprep.subr.mxu0 0.0
      %5051 = vmatpush1.msra.mxu0 0.0
      %5052 = vmatprep.subr.mxu0 0.0
      %5053 = vmatpush1.msra.mxu0 0.0
      %5054 = vmatprep.subr.mxu0 0.0
      %5055 = vmatpush1.msra.mxu0 0.0
      %5056 = vmatprep.subr.mxu0 0.0
      %5057 = vmatpush1.msra.mxu0 0.0
      %5058 = vmatprep.subr.mxu0 0.0
      %5059 = vmatpush1.msra.mxu0 0.0
      %5060 = vmatprep.subr.mxu0 0.0
      %5061 = vmatpush1.msra.mxu0 0.0
      %5062 = vmatprep.subr.mxu0 0.0
      %5063 = vmatpush1.msra.mxu0 0.0
      %5064 = vmatprep.subr.mxu0 0.0
      %5065 = vmatpush1.msra.mxu0 0.0
      %5066 = vmatprep.subr.mxu0 0.0
      %5067 = vmatpush1.msra.mxu0 0.0
      %5068 = vmatprep.subr.mxu0 0.0
      %5069 = vmatpush1.msra.mxu0 0.0
      %5070 = vmatprep.subr.mxu0 0.0
      %5071 = vmatpush1.msra.mxu0 0.0
      %5072 = vmatprep.subr.mxu0 0.0
      %5073 = vmatpush1.msra.mxu0 0.0
      %5074 = vmatprep.subr.mxu0 0.0
      %5075 = vmatpush1.msra.mxu0 0.0
      %5076 = vmatprep.subr.mxu0 0.0
      %5077 = vmatpush1.msra.mxu0 0.0
      %5078 = vmatprep.subr.mxu0 0.0
      %5079 = vmatpush1.msra.mxu0 0.0
      %5080 = vmatprep.subr.mxu0 0.0
      %5081 = vmatpush1.msra.mxu0 0.0
      %5082 = vmatprep.subr.mxu0 0.0
      %5083 = vmatpush1.msra.mxu0 0.0
      %5084 = vmatprep.subr.mxu0 0.0
      %5085 = vmatpush1.msra.mxu0 0.0
      %5086 = vmatprep.subr.mxu0 0.0
      %5087 = vmatpush1.msra.mxu0 0.0
      %5088 = vmatprep.subr.mxu0 0.0
      %5089 = vmatpush1.msra.mxu0 0.0
      %5090 = vmatprep.subr.mxu0 0.0
      %5091 = vmatpush1.msra.mxu0 0.0
      %5092 = vmatprep.subr.mxu0 0.0
      %5093 = vmatpush1.msra.mxu0 0.0
      %5094 = vmatprep.subr.mxu0 0.0
      %5095 = vmatpush1.msra.mxu0 0.0
      %5096 = vmatprep.subr.mxu0 0.0
      %5097 = vmatpush1.msra.mxu0 0.0
      %5098 = vmatprep.subr.mxu0 0.0
      %5099 = vmatpush1.msra.mxu0 0.0
      %5100 = vmatprep.subr.mxu0 0.0
      %5101 = vmatpush1.msra.mxu0 0.0
      %5102 = vmatprep.mubr.f32.mxu0 0.0
      %v5103 = vand.u32 %v4921, 4294901760
      %5104 = vmatmul.mubr.f32.gmra.mrb[0].mxu0 %v5103
      %v5105 = vpop.f32.mrb[0].mxu0
      %v5106 = vadd.f32 %v5005, %v5105
      %v5107 = vpop.f32.mrb[0].mxu0
      %5108 = vdwg.mxu0
      %5109 = vmatprep.subr.mxu0 0.0
      %v5110 = vand.u32 %v4912, 4294901760
      %v5111 = vsub.f32 %v4912, %v5110
      %5112 = vmatpush1.msra.mxu0 %v5111
      %5113 = vmatprep.subr.mxu0 0.0
      %v5114 = vand.u32 %v4913, 4294901760
      %v5115 = vsub.f32 %v4913, %v5114
      %5116 = vmatpush1.msra.mxu0 %v5115
      %5117 = vmatprep.subr.mxu0 0.0
      %v5118 = vand.u32 %v4914, 4294901760
      %v5119 = vsub.f32 %v4914, %v5118
      %5120 = vmatpush1.msra.mxu0 %v5119
      %5121 = vmatprep.subr.mxu0 0.0
      %v5122 = vand.u32 %v4915, 4294901760
      %v5123 = vsub.f32 %v4915, %v5122
      %5124 = vmatpush1.msra.mxu0 %v5123
      %5125 = vmatprep.subr.mxu0 0.0
      %v5126 = vand.u32 %v4916, 4294901760
      %v5127 = vsub.f32 %v4916, %v5126
      %5128 = vmatpush1.msra.mxu0 %v5127
      %5129 = vmatprep.subr.mxu0 0.0
      %v5130 = vand.u32 %v4925, 4294901760
      %v5131 = vsub.f32 %v4925, %v5130
      %5132 = vmatpush1.msra.mxu0 %v5131
      %5133 = vmatprep.subr.mxu0 0.0
      %5134 = vmatpush1.msra.mxu0 0.0
      %5135 = vmatprep.subr.mxu0 0.0
      %5136 = vmatpush1.msra.mxu0 0.0
      %5137 = vmatprep.subr.mxu0 0.0
      %5138 = vmatpush1.msra.mxu0 0.0
      %5139 = vmatprep.subr.mxu0 0.0
      %5140 = vmatpush1.msra.mxu0 0.0
      %5141 = vmatprep.subr.mxu0 0.0
      %5142 = vmatpush1.msra.mxu0 0.0
      %5143 = vmatprep.subr.mxu0 0.0
      %5144 = vmatpush1.msra.mxu0 0.0
      %5145 = vmatprep.subr.mxu0 0.0
      %5146 = vmatpush1.msra.mxu0 0.0
      %5147 = vmatprep.subr.mxu0 0.0
      %5148 = vmatpush1.msra.mxu0 0.0
      %5149 = vmatprep.subr.mxu0 0.0
      %5150 = vmatpush1.msra.mxu0 0.0
      %5151 = vmatprep.subr.mxu0 0.0
      %5152 = vmatpush1.msra.mxu0 0.0
      %5153 = vmatprep.subr.mxu0 0.0
      %5154 = vmatpush1.msra.mxu0 0.0
      %5155 = vmatprep.subr.mxu0 0.0
      %5156 = vmatpush1.msra.mxu0 0.0
      %5157 = vmatprep.subr.mxu0 0.0
      %5158 = vmatpush1.msra.mxu0 0.0
      %5159 = vmatprep.subr.mxu0 0.0
      %5160 = vmatpush1.msra.mxu0 0.0
      %5161 = vmatprep.subr.mxu0 0.0
      %5162 = vmatpush1.msra.mxu0 0.0
      %5163 = vmatprep.subr.mxu0 0.0
      %5164 = vmatpush1.msra.mxu0 0.0
      %5165 = vmatprep.subr.mxu0 0.0
      %5166 = vmatpush1.msra.mxu0 0.0
      %5167 = vmatprep.subr.mxu0 0.0
      %5168 = vmatpush1.msra.mxu0 0.0
      %5169 = vmatprep.subr.mxu0 0.0
      %5170 = vmatpush1.msra.mxu0 0.0
      %5171 = vmatprep.subr.mxu0 0.0
      %5172 = vmatpush1.msra.mxu0 0.0
      %5173 = vmatprep.subr.mxu0 0.0
      %5174 = vmatpush1.msra.mxu0 0.0
      %5175 = vmatprep.subr.mxu0 0.0
      %5176 = vmatpush1.msra.mxu0 0.0
      %5177 = vmatprep.subr.mxu0 0.0
      %5178 = vmatpush1.msra.mxu0 0.0
      %5179 = vmatprep.subr.mxu0 0.0
      %5180 = vmatpush1.msra.mxu0 0.0
      %5181 = vmatprep.subr.mxu0 0.0
      %5182 = vmatpush1.msra.mxu0 0.0
      %5183 = vmatprep.subr.mxu0 0.0
      %5184 = vmatpush1.msra.mxu0 0.0
      %5185 = vmatprep.mubr.f32.mxu0 0.0
      %v5186 = vand.u32 %v4921, 4294901760
      %v5187 = vsub.f32 %v4921, %v5186
      %5188 = vmatmul.mubr.f32.gmra.mrb[0].mxu0 %v5187
      %v5189 = vpop.f32.mrb[0].mxu0
      %v5190 = vadd.f32 %v5106, %v5189
      %v5191 = vpop.f32.mrb[0].mxu0
      %5192 = vdwg.mxu0
      %5193 = vmatprep.subr.mxu0 0.0
      %v5194 = vand.u32 %v4912, 4294901760
      %5195 = vmatpush1.msra.mxu0 %v5194
      %5196 = vmatprep.subr.mxu0 0.0
      %v5197 = vand.u32 %v4913, 4294901760
      %5198 = vmatpush1.msra.mxu0 %v5197
      %5199 = vmatprep.subr.mxu0 0.0
      %v5200 = vand.u32 %v4914, 4294901760
      %5201 = vmatpush1.msra.mxu0 %v5200
      %5202 = vmatprep.subr.mxu0 0.0
      %v5203 = vand.u32 %v4915, 4294901760
      %5204 = vmatpush1.msra.mxu0 %v5203
      %5205 = vmatprep.subr.mxu0 0.0
      %v5206 = vand.u32 %v4916, 4294901760
      %5207 = vmatpush1.msra.mxu0 %v5206
      %5208 = vmatprep.subr.mxu0 0.0
      %v5209 = vand.u32 %v4925, 4294901760
      %5210 = vmatpush1.msra.mxu0 %v5209
      %5211 = vmatprep.subr.mxu0 0.0
      %5212 = vmatpush1.msra.mxu0 0.0
      %5213 = vmatprep.subr.mxu0 0.0
      %5214 = vmatpush1.msra.mxu0 0.0
      %5215 = vmatprep.subr.mxu0 0.0
      %5216 = vmatpush1.msra.mxu0 0.0
      %5217 = vmatprep.subr.mxu0 0.0
      %5218 = vmatpush1.msra.mxu0 0.0
      %5219 = vmatprep.subr.mxu0 0.0
      %5220 = vmatpush1.msra.mxu0 0.0
      %5221 = vmatprep.subr.mxu0 0.0
      %5222 = vmatpush1.msra.mxu0 0.0
      %5223 = vmatprep.subr.mxu0 0.0
      %5224 = vmatpush1.msra.mxu0 0.0
      %5225 = vmatprep.subr.mxu0 0.0
      %5226 = vmatpush1.msra.mxu0 0.0
      %5227 = vmatprep.subr.mxu0 0.0
      %5228 = vmatpush1.msra.mxu0 0.0
      %5229 = vmatprep.subr.mxu0 0.0
      %5230 = vmatpush1.msra.mxu0 0.0
      %5231 = vmatprep.subr.mxu0 0.0
      %5232 = vmatpush1.msra.mxu0 0.0
      %5233 = vmatprep.subr.mxu0 0.0
      %5234 = vmatpush1.msra.mxu0 0.0
      %5235 = vmatprep.subr.mxu0 0.0
      %5236 = vmatpush1.msra.mxu0 0.0
      %5237 = vmatprep.subr.mxu0 0.0
      %5238 = vmatpush1.msra.mxu0 0.0
      %5239 = vmatprep.subr.mxu0 0.0
      %5240 = vmatpush1.msra.mxu0 0.0
      %5241 = vmatprep.subr.mxu0 0.0
      %5242 = vmatpush1.msra.mxu0 0.0
      %5243 = vmatprep.subr.mxu0 0.0
      %5244 = vmatpush1.msra.mxu0 0.0
      %5245 = vmatprep.subr.mxu0 0.0
      %5246 = vmatpush1.msra.mxu0 0.0
      %5247 = vmatprep.subr.mxu0 0.0
      %5248 = vmatpush1.msra.mxu0 0.0
      %5249 = vmatprep.subr.mxu0 0.0
      %5250 = vmatpush1.msra.mxu0 0.0
      %5251 = vmatprep.subr.mxu0 0.0
      %5252 = vmatpush1.msra.mxu0 0.0
      %5253 = vmatprep.subr.mxu0 0.0
      %5254 = vmatpush1.msra.mxu0 0.0
      %5255 = vmatprep.subr.mxu0 0.0
      %5256 = vmatpush1.msra.mxu0 0.0
      %5257 = vmatprep.subr.mxu0 0.0
      %5258 = vmatpush1.msra.mxu0 0.0
      %5259 = vmatprep.subr.mxu0 0.0
      %5260 = vmatpush1.msra.mxu0 0.0
      %5261 = vmatprep.subr.mxu0 0.0
      %5262 = vmatpush1.msra.mxu0 0.0
      %5263 = vmatprep.mubr.f32.mxu0 0.0
      %v5264 = vand.u32 %v4921, 4294901760
      %v5265 = vsub.f32 %v4921, %v5264
      %v5266 = vand.u32 %v5265, 4294901760
      %5267 = vmatmul.mubr.f32.gmra.mrb[0].mxu0 %v5266
      %v5268 = vpop.f32.mrb[0].mxu0
      %v5269 = vadd.f32 %v5190, %v5268
      %v5270 = vpop.f32.mrb[0].mxu0
      %5271 = vdwg.mxu0
      %5272 = vmatprep.subr.mxu0 0.0
      %v5273 = vand.u32 %v4912, 4294901760
      %v5274 = vsub.f32 %v4912, %v5273
      %v5275 = vand.u32 %v5274, 4294901760
      %5276 = vmatpush1.msra.mxu0 %v5275
      %5277 = vmatprep.subr.mxu0 0.0
      %v5278 = vand.u32 %v4913, 4294901760
      %v5279 = vsub.f32 %v4913, %v5278
      %v5280 = vand.u32 %v5279, 4294901760
      %5281 = vmatpush1.msra.mxu0 %v5280
      %5282 = vmatprep.subr.mxu0 0.0
      %v5283 = vand.u32 %v4914, 4294901760
      %v5284 = vsub.f32 %v4914, %v5283
      %v5285 = vand.u32 %v5284, 4294901760
      %5286 = vmatpush1.msra.mxu0 %v5285
      %5287 = vmatprep.subr.mxu0 0.0
      %v5288 = vand.u32 %v4915, 4294901760
      %v5289 = vsub.f32 %v4915, %v5288
      %v5290 = vand.u32 %v5289, 4294901760
      %5291 = vmatpush1.msra.mxu0 %v5290
      %5292 = vmatprep.subr.mxu0 0.0
      %v5293 = vand.u32 %v4916, 4294901760
      %v5294 = vsub.f32 %v4916, %v5293
      %v5295 = vand.u32 %v5294, 4294901760
      %5296 = vmatpush1.msra.mxu0 %v5295
      %5297 = vmatprep.subr.mxu0 0.0
      %v5298 = vand.u32 %v4925, 4294901760
      %v5299 = vsub.f32 %v4925, %v5298
      %v5300 = vand.u32 %v5299, 4294901760
      %5301 = vmatpush1.msra.mxu0 %v5300
      %5302 = vmatprep.subr.mxu0 0.0
      %5303 = vmatpush1.msra.mxu0 0.0
      %5304 = vmatprep.subr.mxu0 0.0
      %5305 = vmatpush1.msra.mxu0 0.0
      %5306 = vmatprep.subr.mxu0 0.0
      %5307 = vmatpush1.msra.mxu0 0.0
      %5308 = vmatprep.subr.mxu0 0.0
      %5309 = vmatpush1.msra.mxu0 0.0
      %5310 = vmatprep.subr.mxu0 0.0
      %5311 = vmatpush1.msra.mxu0 0.0
      %5312 = vmatprep.subr.mxu0 0.0
      %5313 = vmatpush1.msra.mxu0 0.0
      %5314 = vmatprep.subr.mxu0 0.0
      %5315 = vmatpush1.msra.mxu0 0.0
      %5316 = vmatprep.subr.mxu0 0.0
      %5317 = vmatpush1.msra.mxu0 0.0
      %5318 = vmatprep.subr.mxu0 0.0
      %5319 = vmatpush1.msra.mxu0 0.0
      %5320 = vmatprep.subr.mxu0 0.0
      %5321 = vmatpush1.msra.mxu0 0.0
      %5322 = vmatprep.subr.mxu0 0.0
      %5323 = vmatpush1.msra.mxu0 0.0
      %5324 = vmatprep.subr.mxu0 0.0
      %5325 = vmatpush1.msra.mxu0 0.0
      %5326 = vmatprep.subr.mxu0 0.0
      %5327 = vmatpush1.msra.mxu0 0.0
      %5328 = vmatprep.subr.mxu0 0.0
      %5329 = vmatpush1.msra.mxu0 0.0
      %5330 = vmatprep.subr.mxu0 0.0
      %5331 = vmatpush1.msra.mxu0 0.0
      %5332 = vmatprep.subr.mxu0 0.0
      %5333 = vmatpush1.msra.mxu0 0.0
      %5334 = vmatprep.subr.mxu0 0.0
      %5335 = vmatpush1.msra.mxu0 0.0
      %5336 = vmatprep.subr.mxu0 0.0
      %5337 = vmatpush1.msra.mxu0 0.0
      %5338 = vmatprep.subr.mxu0 0.0
      %5339 = vmatpush1.msra.mxu0 0.0
      %5340 = vmatprep.subr.mxu0 0.0
      %5341 = vmatpush1.msra.mxu0 0.0
      %5342 = vmatprep.subr.mxu0 0.0
      %5343 = vmatpush1.msra.mxu0 0.0
      %5344 = vmatprep.subr.mxu0 0.0
      %5345 = vmatpush1.msra.mxu0 0.0
      %5346 = vmatprep.subr.mxu0 0.0
      %5347 = vmatpush1.msra.mxu0 0.0
      %5348 = vmatprep.subr.mxu0 0.0
      %5349 = vmatpush1.msra.mxu0 0.0
      %5350 = vmatprep.subr.mxu0 0.0
      %5351 = vmatpush1.msra.mxu0 0.0
      %5352 = vmatprep.subr.mxu0 0.0
      %5353 = vmatpush1.msra.mxu0 0.0
      %5354 = vmatprep.mubr.f32.mxu0 0.0
      %v5355 = vand.u32 %v4921, 4294901760
      %5356 = vmatmul.mubr.f32.gmra.mrb[0].mxu0 %v5355
      %v5357 = vpop.f32.mrb[0].mxu0
      %v5358 = vadd.f32 %v5269, %v5357
      %v5359 = vpop.f32.mrb[0].mxu0
      %5360 = vdwg.mxu0
      %5361 = vmatprep.subr.mxu0 0.0
      %v5362 = vand.u32 %v4912, 4294901760
      %5363 = vmatpush1.msra.mxu0 %v5362
      %5364 = vmatprep.subr.mxu0 0.0
      %v5365 = vand.u32 %v4913, 4294901760
      %5366 = vmatpush1.msra.mxu0 %v5365
      %5367 = vmatprep.subr.mxu0 0.0
      %v5368 = vand.u32 %v4914, 4294901760
      %5369 = vmatpush1.msra.mxu0 %v5368
      %5370 = vmatprep.subr.mxu0 0.0
      %v5371 = vand.u32 %v4915, 4294901760
      %5372 = vmatpush1.msra.mxu0 %v5371
      %5373 = vmatprep.subr.mxu0 0.0
      %v5374 = vand.u32 %v4916, 4294901760
      %5375 = vmatpush1.msra.mxu0 %v5374
      %5376 = vmatprep.subr.mxu0 0.0
      %v5377 = vand.u32 %v4925, 4294901760
      %5378 = vmatpush1.msra.mxu0 %v5377
      %5379 = vmatprep.subr.mxu0 0.0
      %5380 = vmatpush1.msra.mxu0 0.0
      %5381 = vmatprep.subr.mxu0 0.0
      %5382 = vmatpush1.msra.mxu0 0.0
      %5383 = vmatprep.subr.mxu0 0.0
      %5384 = vmatpush1.msra.mxu0 0.0
      %5385 = vmatprep.subr.mxu0 0.0
      %5386 = vmatpush1.msra.mxu0 0.0
      %5387 = vmatprep.subr.mxu0 0.0
      %5388 = vmatpush1.msra.mxu0 0.0
      %5389 = vmatprep.subr.mxu0 0.0
      %5390 = vmatpush1.msra.mxu0 0.0
      %5391 = vmatprep.subr.mxu0 0.0
      %5392 = vmatpush1.msra.mxu0 0.0
      %5393 = vmatprep.subr.mxu0 0.0
      %5394 = vmatpush1.msra.mxu0 0.0
      %5395 = vmatprep.subr.mxu0 0.0
      %5396 = vmatpush1.msra.mxu0 0.0
      %5397 = vmatprep.subr.mxu0 0.0
      %5398 = vmatpush1.msra.mxu0 0.0
      %5399 = vmatprep.subr.mxu0 0.0
      %5400 = vmatpush1.msra.mxu0 0.0
      %5401 = vmatprep.subr.mxu0 0.0
      %5402 = vmatpush1.msra.mxu0 0.0
      %5403 = vmatprep.subr.mxu0 0.0
      %5404 = vmatpush1.msra.mxu0 0.0
      %5405 = vmatprep.subr.mxu0 0.0
      %5406 = vmatpush1.msra.mxu0 0.0
      %5407 = vmatprep.subr.mxu0 0.0
      %5408 = vmatpush1.msra.mxu0 0.0
      %5409 = vmatprep.subr.mxu0 0.0
      %5410 = vmatpush1.msra.mxu0 0.0
      %5411 = vmatprep.subr.mxu0 0.0
      %5412 = vmatpush1.msra.mxu0 0.0
      %5413 = vmatprep.subr.mxu0 0.0
      %5414 = vmatpush1.msra.mxu0 0.0
      %5415 = vmatprep.subr.mxu0 0.0
      %5416 = vmatpush1.msra.mxu0 0.0
      %5417 = vmatprep.subr.mxu0 0.0
      %5418 = vmatpush1.msra.mxu0 0.0
      %5419 = vmatprep.subr.mxu0 0.0
      %5420 = vmatpush1.msra.mxu0 0.0
      %5421 = vmatprep.subr.mxu0 0.0
      %5422 = vmatpush1.msra.mxu0 0.0
      %5423 = vmatprep.subr.mxu0 0.0
      %5424 = vmatpush1.msra.mxu0 0.0
      %5425 = vmatprep.subr.mxu0 0.0
      %5426 = vmatpush1.msra.mxu0 0.0
      %5427 = vmatprep.subr.mxu0 0.0
      %5428 = vmatpush1.msra.mxu0 0.0
      %5429 = vmatprep.subr.mxu0 0.0
      %5430 = vmatpush1.msra.mxu0 0.0
      %5431 = vmatprep.mubr.f32.mxu0 0.0
      %v5432 = vand.u32 %v4921, 4294901760
      %5433 = vmatmul.mubr.f32.gmra.mrb[0].mxu0 %v5432
      %v5434 = vpop.f32.mrb[0].mxu0
      %v5435 = vadd.f32 %v5358, %v5434
      %v5436 = vpop.f32.mrb[0].mxu0
      %5437 = vdwg.mxu0
      %v5438 = vmul.f32 %v5435, %v5435
      %v5439 = vsel %vm4863, %v5438, 0.0
      %v5440 = vrot.slane %v5439, 4
      %v5441 = vadd.f32 %v5439, %v5440
      %v5442 = vrot.slane %v5441, 2
      %v5443 = vadd.f32 %v5441, %v5442
      %v5444 = vrot.slane %v5443, 1
      %v5445 = vadd.f32 %v5443, %v5444
      %v5446 = vmax.f32 %v5445, 1e-24
      %v5447 = vrsqrt.pop %v5446
      %v5448 = vmul.f32 %v5447, %v4727
      %v5449 = vlaneseq
      %v5450 = vshrl.u32 %v5449, 7
      %v5451 = vsub.s32 3, %v5450
      %v5452 = vrot.slane %v5448, %v5451
      %v5453 = vmul.f32 %v5435, %v5452
      %v5454 = vadd.f32 %v342, %v5453
      %5455 = vst.msk [vmem:[%s337] sm:$0x7] %vm4863, %v5454
      %v5456 = vsel %vm4856, %v4734, -inf
      %v5457 = vsel %vm4856, %v4741, -inf
      %v5458 = vsel %vm4856, %v4748, -inf
      %v5459 = vsel %vm4856, %v4755, -inf
      %v5460 = vsel %vm4856, %v4762, -inf
      %v5461 = vmax.f32 %v5456, %v5460
      %v5462 = vsel %vm4863, %v4769, -inf
      %v5463 = vmax.f32 %v5457, %v5462
      %v5464 = vmax.f32 %v5461, %v5463
      %v5465 = vmax.f32 %v5458, %v5459
      %v5466 = vmax.f32 %v5464, %v5465
      %v5467 = vrot.slane %v5466, 4
      %v5468 = vmax.f32 %v5466, %v5467
      %v5469 = vrot.slane %v5468, 2
      %v5470 = vmax.f32 %v5468, %v5469
      %v5471 = vrot.slane %v5470, 1
      %v5472 = vmax.f32 %v5470, %v5471
      %v5473 = vsub.f32 %v4734, %v5472
      %v5474 = vsub.f32 %v4741, %v5472
      %v5475 = vsub.f32 %v4748, %v5472
      %v5476 = vsub.f32 %v4755, %v5472
      %v5477 = vsub.f32 %v4762, %v5472
      %v5478 = vsub.f32 %v4769, %v5472
      %v5479 = vmul.f32 %v5473, 1.442695
      %v5480 = vpow.pop %v5479
      %v5481 = vmul.f32 %v5474, 1.442695
      %v5482 = vpow.pop %v5481
      %v5483 = vmul.f32 %v5475, 1.442695
      %v5484 = vpow.pop %v5483
      %v5485 = vmul.f32 %v5476, 1.442695
      %v5486 = vpow.pop %v5485
      %v5487 = vmul.f32 %v5477, 1.442695
      %v5488 = vpow.pop %v5487
      %v5489 = vmul.f32 %v5478, 1.442695
      %v5490 = vpow.pop %v5489
      %v5491 = vsel %vm4856, %v5480, 0.0
      %v5492 = vsel %vm4856, %v5482, 0.0
      %v5493 = vadd.f32 %v5491, %v5492
      %v5494 = vsel %vm4856, %v5484, 0.0
      %v5495 = vadd.f32 %v5493, %v5494
      %v5496 = vsel %vm4856, %v5486, 0.0
      %v5497 = vadd.f32 %v5495, %v5496
      %v5498 = vsel %vm4856, %v5488, 0.0
      %v5499 = vadd.f32 %v5497, %v5498
      %v5500 = vsel %vm4863, %v5490, 0.0
      %v5501 = vadd.f32 %v5499, %v5500
      %v5502 = vrot.slane %v5501, 4
      %v5503 = vadd.f32 %v5501, %v5502
      %v5504 = vrot.slane %v5503, 2
      %v5505 = vadd.f32 %v5503, %v5504
      %v5506 = vrot.slane %v5505, 1
      %v5507 = vadd.f32 %v5505, %v5506
      %v5508 = vrcp.pop %v5507
      %v5509 = vmul.f32 1.0, %v5508
      %v5510 = vmul.f32 %v5480, %v5509
      %v5511 = vmul.f32 %v5482, %v5509
      %v5512 = vmul.f32 %v5484, %v5509
      %v5513 = vmul.f32 %v5486, %v5509
      %v5514 = vmul.f32 %v5488, %v5509
      %v5515 = vmul.f32 %v5490, %v5509
      %v5516 = vld [vmem:[%s6] sm:$0x7]
      %v5518 = vsel %vm4919, %v5516, 0
      %v5521 = vsel %vm4923, %v5515, 0
      %5523 = vmatprep.subr.mxu0 0.0
      %v5524 = vand.u32 %v5510, 4294901760
      %5525 = vmatpush1.msra.mxu0 %v5524
      %5526 = vmatprep.subr.mxu0 0.0
      %v5527 = vand.u32 %v5511, 4294901760
      %5528 = vmatpush1.msra.mxu0 %v5527
      %5529 = vmatprep.subr.mxu0 0.0
      %v5530 = vand.u32 %v5512, 4294901760
      %5531 = vmatpush1.msra.mxu0 %v5530
      %5532 = vmatprep.subr.mxu0 0.0
      %v5533 = vand.u32 %v5513, 4294901760
      %5534 = vmatpush1.msra.mxu0 %v5533
      %5535 = vmatprep.subr.mxu0 0.0
      %v5536 = vand.u32 %v5514, 4294901760
      %5537 = vmatpush1.msra.mxu0 %v5536
      %5538 = vmatprep.subr.mxu0 0.0
      %v5539 = vand.u32 %v5521, 4294901760
      %5540 = vmatpush1.msra.mxu0 %v5539
      %5541 = vmatprep.subr.mxu0 0.0
      %5542 = vmatpush1.msra.mxu0 0.0
      %5543 = vmatprep.subr.mxu0 0.0
      %5544 = vmatpush1.msra.mxu0 0.0
      %5545 = vmatprep.subr.mxu0 0.0
      %5546 = vmatpush1.msra.mxu0 0.0
      %5547 = vmatprep.subr.mxu0 0.0
      %5548 = vmatpush1.msra.mxu0 0.0
      %5549 = vmatprep.subr.mxu0 0.0
      %5550 = vmatpush1.msra.mxu0 0.0
      %5551 = vmatprep.subr.mxu0 0.0
      %5552 = vmatpush1.msra.mxu0 0.0
      %5553 = vmatprep.subr.mxu0 0.0
      %5554 = vmatpush1.msra.mxu0 0.0
      %5555 = vmatprep.subr.mxu0 0.0
      %5556 = vmatpush1.msra.mxu0 0.0
      %5557 = vmatprep.subr.mxu0 0.0
      %5558 = vmatpush1.msra.mxu0 0.0
      %5559 = vmatprep.subr.mxu0 0.0
      %5560 = vmatpush1.msra.mxu0 0.0
      %5561 = vmatprep.subr.mxu0 0.0
      %5562 = vmatpush1.msra.mxu0 0.0
      %5563 = vmatprep.subr.mxu0 0.0
      %5564 = vmatpush1.msra.mxu0 0.0
      %5565 = vmatprep.subr.mxu0 0.0
      %5566 = vmatpush1.msra.mxu0 0.0
      %5567 = vmatprep.subr.mxu0 0.0
      %5568 = vmatpush1.msra.mxu0 0.0
      %5569 = vmatprep.subr.mxu0 0.0
      %5570 = vmatpush1.msra.mxu0 0.0
      %5571 = vmatprep.subr.mxu0 0.0
      %5572 = vmatpush1.msra.mxu0 0.0
      %5573 = vmatprep.subr.mxu0 0.0
      %5574 = vmatpush1.msra.mxu0 0.0
      %5575 = vmatprep.subr.mxu0 0.0
      %5576 = vmatpush1.msra.mxu0 0.0
      %5577 = vmatprep.subr.mxu0 0.0
      %5578 = vmatpush1.msra.mxu0 0.0
      %5579 = vmatprep.subr.mxu0 0.0
      %5580 = vmatpush1.msra.mxu0 0.0
      %5581 = vmatprep.subr.mxu0 0.0
      %5582 = vmatpush1.msra.mxu0 0.0
      %5583 = vmatprep.subr.mxu0 0.0
      %5584 = vmatpush1.msra.mxu0 0.0
      %5585 = vmatprep.subr.mxu0 0.0
      %5586 = vmatpush1.msra.mxu0 0.0
      %5587 = vmatprep.subr.mxu0 0.0
      %5588 = vmatpush1.msra.mxu0 0.0
      %5589 = vmatprep.subr.mxu0 0.0
      %5590 = vmatpush1.msra.mxu0 0.0
      %5591 = vmatprep.subr.mxu0 0.0
      %5592 = vmatpush1.msra.mxu0 0.0
      %5593 = vmatprep.mubr.f32.mxu0 0.0
      %v5594 = vand.u32 %v5518, 4294901760
      %v5595 = vsub.f32 %v5518, %v5594
      %v5596 = vand.u32 %v5595, 4294901760
      %v5597 = vsub.f32 %v5595, %v5596
      %v5598 = vand.u32 %v5597, 4294901760
      %5599 = vmatmul.mubr.f32.gmra.mrb[0].mxu0 %v5598
      %v5600 = vpop.f32.mrb[0].mxu0
      %v5601 = vadd.f32 0.0, %v5600
      %v5602 = vpop.f32.mrb[0].mxu0
      %5603 = vdwg.mxu0
      %5604 = vmatprep.subr.mxu0 0.0
      %v5605 = vand.u32 %v5510, 4294901760
      %v5606 = vsub.f32 %v5510, %v5605
      %v5607 = vand.u32 %v5606, 4294901760
      %v5608 = vsub.f32 %v5606, %v5607
      %v5609 = vand.u32 %v5608, 4294901760
      %5610 = vmatpush1.msra.mxu0 %v5609
      %5611 = vmatprep.subr.mxu0 0.0
      %v5612 = vand.u32 %v5511, 4294901760
      %v5613 = vsub.f32 %v5511, %v5612
      %v5614 = vand.u32 %v5613, 4294901760
      %v5615 = vsub.f32 %v5613, %v5614
      %v5616 = vand.u32 %v5615, 4294901760
      %5617 = vmatpush1.msra.mxu0 %v5616
      %5618 = vmatprep.subr.mxu0 0.0
      %v5619 = vand.u32 %v5512, 4294901760
      %v5620 = vsub.f32 %v5512, %v5619
      %v5621 = vand.u32 %v5620, 4294901760
      %v5622 = vsub.f32 %v5620, %v5621
      %v5623 = vand.u32 %v5622, 4294901760
      %5624 = vmatpush1.msra.mxu0 %v5623
      %5625 = vmatprep.subr.mxu0 0.0
      %v5626 = vand.u32 %v5513, 4294901760
      %v5627 = vsub.f32 %v5513, %v5626
      %v5628 = vand.u32 %v5627, 4294901760
      %v5629 = vsub.f32 %v5627, %v5628
      %v5630 = vand.u32 %v5629, 4294901760
      %5631 = vmatpush1.msra.mxu0 %v5630
      %5632 = vmatprep.subr.mxu0 0.0
      %v5633 = vand.u32 %v5514, 4294901760
      %v5634 = vsub.f32 %v5514, %v5633
      %v5635 = vand.u32 %v5634, 4294901760
      %v5636 = vsub.f32 %v5634, %v5635
      %v5637 = vand.u32 %v5636, 4294901760
      %5638 = vmatpush1.msra.mxu0 %v5637
      %5639 = vmatprep.subr.mxu0 0.0
      %v5640 = vand.u32 %v5521, 4294901760
      %v5641 = vsub.f32 %v5521, %v5640
      %v5642 = vand.u32 %v5641, 4294901760
      %v5643 = vsub.f32 %v5641, %v5642
      %v5644 = vand.u32 %v5643, 4294901760
      %5645 = vmatpush1.msra.mxu0 %v5644
      %5646 = vmatprep.subr.mxu0 0.0
      %5647 = vmatpush1.msra.mxu0 0.0
      %5648 = vmatprep.subr.mxu0 0.0
      %5649 = vmatpush1.msra.mxu0 0.0
      %5650 = vmatprep.subr.mxu0 0.0
      %5651 = vmatpush1.msra.mxu0 0.0
      %5652 = vmatprep.subr.mxu0 0.0
      %5653 = vmatpush1.msra.mxu0 0.0
      %5654 = vmatprep.subr.mxu0 0.0
      %5655 = vmatpush1.msra.mxu0 0.0
      %5656 = vmatprep.subr.mxu0 0.0
      %5657 = vmatpush1.msra.mxu0 0.0
      %5658 = vmatprep.subr.mxu0 0.0
      %5659 = vmatpush1.msra.mxu0 0.0
      %5660 = vmatprep.subr.mxu0 0.0
      %5661 = vmatpush1.msra.mxu0 0.0
      %5662 = vmatprep.subr.mxu0 0.0
      %5663 = vmatpush1.msra.mxu0 0.0
      %5664 = vmatprep.subr.mxu0 0.0
      %5665 = vmatpush1.msra.mxu0 0.0
      %5666 = vmatprep.subr.mxu0 0.0
      %5667 = vmatpush1.msra.mxu0 0.0
      %5668 = vmatprep.subr.mxu0 0.0
      %5669 = vmatpush1.msra.mxu0 0.0
      %5670 = vmatprep.subr.mxu0 0.0
      %5671 = vmatpush1.msra.mxu0 0.0
      %5672 = vmatprep.subr.mxu0 0.0
      %5673 = vmatpush1.msra.mxu0 0.0
      %5674 = vmatprep.subr.mxu0 0.0
      %5675 = vmatpush1.msra.mxu0 0.0
      %5676 = vmatprep.subr.mxu0 0.0
      %5677 = vmatpush1.msra.mxu0 0.0
      %5678 = vmatprep.subr.mxu0 0.0
      %5679 = vmatpush1.msra.mxu0 0.0
      %5680 = vmatprep.subr.mxu0 0.0
      %5681 = vmatpush1.msra.mxu0 0.0
      %5682 = vmatprep.subr.mxu0 0.0
      %5683 = vmatpush1.msra.mxu0 0.0
      %5684 = vmatprep.subr.mxu0 0.0
      %5685 = vmatpush1.msra.mxu0 0.0
      %5686 = vmatprep.subr.mxu0 0.0
      %5687 = vmatpush1.msra.mxu0 0.0
      %5688 = vmatprep.subr.mxu0 0.0
      %5689 = vmatpush1.msra.mxu0 0.0
      %5690 = vmatprep.subr.mxu0 0.0
      %5691 = vmatpush1.msra.mxu0 0.0
      %5692 = vmatprep.subr.mxu0 0.0
      %5693 = vmatpush1.msra.mxu0 0.0
      %5694 = vmatprep.subr.mxu0 0.0
      %5695 = vmatpush1.msra.mxu0 0.0
      %5696 = vmatprep.subr.mxu0 0.0
      %5697 = vmatpush1.msra.mxu0 0.0
      %5698 = vmatprep.mubr.f32.mxu0 0.0
      %v5699 = vand.u32 %v5518, 4294901760
      %5700 = vmatmul.mubr.f32.gmra.mrb[0].mxu0 %v5699
      %v5701 = vpop.f32.mrb[0].mxu0
      %v5702 = vadd.f32 %v5601, %v5701
      %v5703 = vpop.f32.mrb[0].mxu0
      %5704 = vdwg.mxu0
      %5705 = vmatprep.subr.mxu0 0.0
      %v5706 = vand.u32 %v5510, 4294901760
      %v5707 = vsub.f32 %v5510, %v5706
      %5708 = vmatpush1.msra.mxu0 %v5707
      %5709 = vmatprep.subr.mxu0 0.0
      %v5710 = vand.u32 %v5511, 4294901760
      %v5711 = vsub.f32 %v5511, %v5710
      %5712 = vmatpush1.msra.mxu0 %v5711
      %5713 = vmatprep.subr.mxu0 0.0
      %v5714 = vand.u32 %v5512, 4294901760
      %v5715 = vsub.f32 %v5512, %v5714
      %5716 = vmatpush1.msra.mxu0 %v5715
      %5717 = vmatprep.subr.mxu0 0.0
      %v5718 = vand.u32 %v5513, 4294901760
      %v5719 = vsub.f32 %v5513, %v5718
      %5720 = vmatpush1.msra.mxu0 %v5719
      %5721 = vmatprep.subr.mxu0 0.0
      %v5722 = vand.u32 %v5514, 4294901760
      %v5723 = vsub.f32 %v5514, %v5722
      %5724 = vmatpush1.msra.mxu0 %v5723
      %5725 = vmatprep.subr.mxu0 0.0
      %v5726 = vand.u32 %v5521, 4294901760
      %v5727 = vsub.f32 %v5521, %v5726
      %5728 = vmatpush1.msra.mxu0 %v5727
      %5729 = vmatprep.subr.mxu0 0.0
      %5730 = vmatpush1.msra.mxu0 0.0
      %5731 = vmatprep.subr.mxu0 0.0
      %5732 = vmatpush1.msra.mxu0 0.0
      %5733 = vmatprep.subr.mxu0 0.0
      %5734 = vmatpush1.msra.mxu0 0.0
      %5735 = vmatprep.subr.mxu0 0.0
      %5736 = vmatpush1.msra.mxu0 0.0
      %5737 = vmatprep.subr.mxu0 0.0
      %5738 = vmatpush1.msra.mxu0 0.0
      %5739 = vmatprep.subr.mxu0 0.0
      %5740 = vmatpush1.msra.mxu0 0.0
      %5741 = vmatprep.subr.mxu0 0.0
      %5742 = vmatpush1.msra.mxu0 0.0
      %5743 = vmatprep.subr.mxu0 0.0
      %5744 = vmatpush1.msra.mxu0 0.0
      %5745 = vmatprep.subr.mxu0 0.0
      %5746 = vmatpush1.msra.mxu0 0.0
      %5747 = vmatprep.subr.mxu0 0.0
      %5748 = vmatpush1.msra.mxu0 0.0
      %5749 = vmatprep.subr.mxu0 0.0
      %5750 = vmatpush1.msra.mxu0 0.0
      %5751 = vmatprep.subr.mxu0 0.0
      %5752 = vmatpush1.msra.mxu0 0.0
      %5753 = vmatprep.subr.mxu0 0.0
      %5754 = vmatpush1.msra.mxu0 0.0
      %5755 = vmatprep.subr.mxu0 0.0
      %5756 = vmatpush1.msra.mxu0 0.0
      %5757 = vmatprep.subr.mxu0 0.0
      %5758 = vmatpush1.msra.mxu0 0.0
      %5759 = vmatprep.subr.mxu0 0.0
      %5760 = vmatpush1.msra.mxu0 0.0
      %5761 = vmatprep.subr.mxu0 0.0
      %5762 = vmatpush1.msra.mxu0 0.0
      %5763 = vmatprep.subr.mxu0 0.0
      %5764 = vmatpush1.msra.mxu0 0.0
      %5765 = vmatprep.subr.mxu0 0.0
      %5766 = vmatpush1.msra.mxu0 0.0
      %5767 = vmatprep.subr.mxu0 0.0
      %5768 = vmatpush1.msra.mxu0 0.0
      %5769 = vmatprep.subr.mxu0 0.0
      %5770 = vmatpush1.msra.mxu0 0.0
      %5771 = vmatprep.subr.mxu0 0.0
      %5772 = vmatpush1.msra.mxu0 0.0
      %5773 = vmatprep.subr.mxu0 0.0
      %5774 = vmatpush1.msra.mxu0 0.0
      %5775 = vmatprep.subr.mxu0 0.0
      %5776 = vmatpush1.msra.mxu0 0.0
      %5777 = vmatprep.subr.mxu0 0.0
      %5778 = vmatpush1.msra.mxu0 0.0
      %5779 = vmatprep.subr.mxu0 0.0
      %5780 = vmatpush1.msra.mxu0 0.0
      %5781 = vmatprep.mubr.f32.mxu0 0.0
      %v5782 = vand.u32 %v5518, 4294901760
      %v5783 = vsub.f32 %v5518, %v5782
      %5784 = vmatmul.mubr.f32.gmra.mrb[0].mxu0 %v5783
      %v5785 = vpop.f32.mrb[0].mxu0
      %v5786 = vadd.f32 %v5702, %v5785
      %v5787 = vpop.f32.mrb[0].mxu0
      %5788 = vdwg.mxu0
      %5789 = vmatprep.subr.mxu0 0.0
      %v5790 = vand.u32 %v5510, 4294901760
      %5791 = vmatpush1.msra.mxu0 %v5790
      %5792 = vmatprep.subr.mxu0 0.0
      %v5793 = vand.u32 %v5511, 4294901760
      %5794 = vmatpush1.msra.mxu0 %v5793
      %5795 = vmatprep.subr.mxu0 0.0
      %v5796 = vand.u32 %v5512, 4294901760
      %5797 = vmatpush1.msra.mxu0 %v5796
      %5798 = vmatprep.subr.mxu0 0.0
      %v5799 = vand.u32 %v5513, 4294901760
      %5800 = vmatpush1.msra.mxu0 %v5799
      %5801 = vmatprep.subr.mxu0 0.0
      %v5802 = vand.u32 %v5514, 4294901760
      %5803 = vmatpush1.msra.mxu0 %v5802
      %5804 = vmatprep.subr.mxu0 0.0
      %v5805 = vand.u32 %v5521, 4294901760
      %5806 = vmatpush1.msra.mxu0 %v5805
      %5807 = vmatprep.subr.mxu0 0.0
      %5808 = vmatpush1.msra.mxu0 0.0
      %5809 = vmatprep.subr.mxu0 0.0
      %5810 = vmatpush1.msra.mxu0 0.0
      %5811 = vmatprep.subr.mxu0 0.0
      %5812 = vmatpush1.msra.mxu0 0.0
      %5813 = vmatprep.subr.mxu0 0.0
      %5814 = vmatpush1.msra.mxu0 0.0
      %5815 = vmatprep.subr.mxu0 0.0
      %5816 = vmatpush1.msra.mxu0 0.0
      %5817 = vmatprep.subr.mxu0 0.0
      %5818 = vmatpush1.msra.mxu0 0.0
      %5819 = vmatprep.subr.mxu0 0.0
      %5820 = vmatpush1.msra.mxu0 0.0
      %5821 = vmatprep.subr.mxu0 0.0
      %5822 = vmatpush1.msra.mxu0 0.0
      %5823 = vmatprep.subr.mxu0 0.0
      %5824 = vmatpush1.msra.mxu0 0.0
      %5825 = vmatprep.subr.mxu0 0.0
      %5826 = vmatpush1.msra.mxu0 0.0
      %5827 = vmatprep.subr.mxu0 0.0
      %5828 = vmatpush1.msra.mxu0 0.0
      %5829 = vmatprep.subr.mxu0 0.0
      %5830 = vmatpush1.msra.mxu0 0.0
      %5831 = vmatprep.subr.mxu0 0.0
      %5832 = vmatpush1.msra.mxu0 0.0
      %5833 = vmatprep.subr.mxu0 0.0
      %5834 = vmatpush1.msra.mxu0 0.0
      %5835 = vmatprep.subr.mxu0 0.0
      %5836 = vmatpush1.msra.mxu0 0.0
      %5837 = vmatprep.subr.mxu0 0.0
      %5838 = vmatpush1.msra.mxu0 0.0
      %5839 = vmatprep.subr.mxu0 0.0
      %5840 = vmatpush1.msra.mxu0 0.0
      %5841 = vmatprep.subr.mxu0 0.0
      %5842 = vmatpush1.msra.mxu0 0.0
      %5843 = vmatprep.subr.mxu0 0.0
      %5844 = vmatpush1.msra.mxu0 0.0
      %5845 = vmatprep.subr.mxu0 0.0
      %5846 = vmatpush1.msra.mxu0 0.0
      %5847 = vmatprep.subr.mxu0 0.0
      %5848 = vmatpush1.msra.mxu0 0.0
      %5849 = vmatprep.subr.mxu0 0.0
      %5850 = vmatpush1.msra.mxu0 0.0
      %5851 = vmatprep.subr.mxu0 0.0
      %5852 = vmatpush1.msra.mxu0 0.0
      %5853 = vmatprep.subr.mxu0 0.0
      %5854 = vmatpush1.msra.mxu0 0.0
      %5855 = vmatprep.subr.mxu0 0.0
      %5856 = vmatpush1.msra.mxu0 0.0
      %5857 = vmatprep.subr.mxu0 0.0
      %5858 = vmatpush1.msra.mxu0 0.0
      %5859 = vmatprep.mubr.f32.mxu0 0.0
      %v5860 = vand.u32 %v5518, 4294901760
      %v5861 = vsub.f32 %v5518, %v5860
      %v5862 = vand.u32 %v5861, 4294901760
      %5863 = vmatmul.mubr.f32.gmra.mrb[0].mxu0 %v5862
      %v5864 = vpop.f32.mrb[0].mxu0
      %v5865 = vadd.f32 %v5786, %v5864
      %v5866 = vpop.f32.mrb[0].mxu0
      %5867 = vdwg.mxu0
      %5868 = vmatprep.subr.mxu0 0.0
      %v5869 = vand.u32 %v5510, 4294901760
      %v5870 = vsub.f32 %v5510, %v5869
      %v5871 = vand.u32 %v5870, 4294901760
      %5872 = vmatpush1.msra.mxu0 %v5871
      %5873 = vmatprep.subr.mxu0 0.0
      %v5874 = vand.u32 %v5511, 4294901760
      %v5875 = vsub.f32 %v5511, %v5874
      %v5876 = vand.u32 %v5875, 4294901760
      %5877 = vmatpush1.msra.mxu0 %v5876
      %5878 = vmatprep.subr.mxu0 0.0
      %v5879 = vand.u32 %v5512, 4294901760
      %v5880 = vsub.f32 %v5512, %v5879
      %v5881 = vand.u32 %v5880, 4294901760
      %5882 = vmatpush1.msra.mxu0 %v5881
      %5883 = vmatprep.subr.mxu0 0.0
      %v5884 = vand.u32 %v5513, 4294901760
      %v5885 = vsub.f32 %v5513, %v5884
      %v5886 = vand.u32 %v5885, 4294901760
      %5887 = vmatpush1.msra.mxu0 %v5886
      %5888 = vmatprep.subr.mxu0 0.0
      %v5889 = vand.u32 %v5514, 4294901760
      %v5890 = vsub.f32 %v5514, %v5889
      %v5891 = vand.u32 %v5890, 4294901760
      %5892 = vmatpush1.msra.mxu0 %v5891
      %5893 = vmatprep.subr.mxu0 0.0
      %v5894 = vand.u32 %v5521, 4294901760
      %v5895 = vsub.f32 %v5521, %v5894
      %v5896 = vand.u32 %v5895, 4294901760
      %5897 = vmatpush1.msra.mxu0 %v5896
      %5898 = vmatprep.subr.mxu0 0.0
      %5899 = vmatpush1.msra.mxu0 0.0
      %5900 = vmatprep.subr.mxu0 0.0
      %5901 = vmatpush1.msra.mxu0 0.0
      %5902 = vmatprep.subr.mxu0 0.0
      %5903 = vmatpush1.msra.mxu0 0.0
      %5904 = vmatprep.subr.mxu0 0.0
      %5905 = vmatpush1.msra.mxu0 0.0
      %5906 = vmatprep.subr.mxu0 0.0
      %5907 = vmatpush1.msra.mxu0 0.0
      %5908 = vmatprep.subr.mxu0 0.0
      %5909 = vmatpush1.msra.mxu0 0.0
      %5910 = vmatprep.subr.mxu0 0.0
      %5911 = vmatpush1.msra.mxu0 0.0
      %5912 = vmatprep.subr.mxu0 0.0
      %5913 = vmatpush1.msra.mxu0 0.0
      %5914 = vmatprep.subr.mxu0 0.0
      %5915 = vmatpush1.msra.mxu0 0.0
      %5916 = vmatprep.subr.mxu0 0.0
      %5917 = vmatpush1.msra.mxu0 0.0
      %5918 = vmatprep.subr.mxu0 0.0
      %5919 = vmatpush1.msra.mxu0 0.0
      %5920 = vmatprep.subr.mxu0 0.0
      %5921 = vmatpush1.msra.mxu0 0.0
      %5922 = vmatprep.subr.mxu0 0.0
      %5923 = vmatpush1.msra.mxu0 0.0
      %5924 = vmatprep.subr.mxu0 0.0
      %5925 = vmatpush1.msra.mxu0 0.0
      %5926 = vmatprep.subr.mxu0 0.0
      %5927 = vmatpush1.msra.mxu0 0.0
      %5928 = vmatprep.subr.mxu0 0.0
      %5929 = vmatpush1.msra.mxu0 0.0
      %5930 = vmatprep.subr.mxu0 0.0
      %5931 = vmatpush1.msra.mxu0 0.0
      %5932 = vmatprep.subr.mxu0 0.0
      %5933 = vmatpush1.msra.mxu0 0.0
      %5934 = vmatprep.subr.mxu0 0.0
      %5935 = vmatpush1.msra.mxu0 0.0
      %5936 = vmatprep.subr.mxu0 0.0
      %5937 = vmatpush1.msra.mxu0 0.0
      %5938 = vmatprep.subr.mxu0 0.0
      %5939 = vmatpush1.msra.mxu0 0.0
      %5940 = vmatprep.subr.mxu0 0.0
      %5941 = vmatpush1.msra.mxu0 0.0
      %5942 = vmatprep.subr.mxu0 0.0
      %5943 = vmatpush1.msra.mxu0 0.0
      %5944 = vmatprep.subr.mxu0 0.0
      %5945 = vmatpush1.msra.mxu0 0.0
      %5946 = vmatprep.subr.mxu0 0.0
      %5947 = vmatpush1.msra.mxu0 0.0
      %5948 = vmatprep.subr.mxu0 0.0
      %5949 = vmatpush1.msra.mxu0 0.0
      %5950 = vmatprep.mubr.f32.mxu0 0.0
      %v5951 = vand.u32 %v5518, 4294901760
      %5952 = vmatmul.mubr.f32.gmra.mrb[0].mxu0 %v5951
      %v5953 = vpop.f32.mrb[0].mxu0
      %v5954 = vadd.f32 %v5865, %v5953
      %v5955 = vpop.f32.mrb[0].mxu0
      %5956 = vdwg.mxu0
      %5957 = vmatprep.subr.mxu0 0.0
      %v5958 = vand.u32 %v5510, 4294901760
      %5959 = vmatpush1.msra.mxu0 %v5958
      %5960 = vmatprep.subr.mxu0 0.0
      %v5961 = vand.u32 %v5511, 4294901760
      %5962 = vmatpush1.msra.mxu0 %v5961
      %5963 = vmatprep.subr.mxu0 0.0
      %v5964 = vand.u32 %v5512, 4294901760
      %5965 = vmatpush1.msra.mxu0 %v5964
      %5966 = vmatprep.subr.mxu0 0.0
      %v5967 = vand.u32 %v5513, 4294901760
      %5968 = vmatpush1.msra.mxu0 %v5967
      %5969 = vmatprep.subr.mxu0 0.0
      %v5970 = vand.u32 %v5514, 4294901760
      %5971 = vmatpush1.msra.mxu0 %v5970
      %5972 = vmatprep.subr.mxu0 0.0
      %v5973 = vand.u32 %v5521, 4294901760
      %5974 = vmatpush1.msra.mxu0 %v5973
      %5975 = vmatprep.subr.mxu0 0.0
      %5976 = vmatpush1.msra.mxu0 0.0
      %5977 = vmatprep.subr.mxu0 0.0
      %5978 = vmatpush1.msra.mxu0 0.0
      %5979 = vmatprep.subr.mxu0 0.0
      %5980 = vmatpush1.msra.mxu0 0.0
      %5981 = vmatprep.subr.mxu0 0.0
      %5982 = vmatpush1.msra.mxu0 0.0
      %5983 = vmatprep.subr.mxu0 0.0
      %5984 = vmatpush1.msra.mxu0 0.0
      %5985 = vmatprep.subr.mxu0 0.0
      %5986 = vmatpush1.msra.mxu0 0.0
      %5987 = vmatprep.subr.mxu0 0.0
      %5988 = vmatpush1.msra.mxu0 0.0
      %5989 = vmatprep.subr.mxu0 0.0
      %5990 = vmatpush1.msra.mxu0 0.0
      %5991 = vmatprep.subr.mxu0 0.0
      %5992 = vmatpush1.msra.mxu0 0.0
      %5993 = vmatprep.subr.mxu0 0.0
      %5994 = vmatpush1.msra.mxu0 0.0
      %5995 = vmatprep.subr.mxu0 0.0
      %5996 = vmatpush1.msra.mxu0 0.0
      %5997 = vmatprep.subr.mxu0 0.0
      %5998 = vmatpush1.msra.mxu0 0.0
      %5999 = vmatprep.subr.mxu0 0.0
      %6000 = vmatpush1.msra.mxu0 0.0
      %6001 = vmatprep.subr.mxu0 0.0
      %6002 = vmatpush1.msra.mxu0 0.0
      %6003 = vmatprep.subr.mxu0 0.0
      %6004 = vmatpush1.msra.mxu0 0.0
      %6005 = vmatprep.subr.mxu0 0.0
      %6006 = vmatpush1.msra.mxu0 0.0
      %6007 = vmatprep.subr.mxu0 0.0
      %6008 = vmatpush1.msra.mxu0 0.0
      %6009 = vmatprep.subr.mxu0 0.0
      %6010 = vmatpush1.msra.mxu0 0.0
      %6011 = vmatprep.subr.mxu0 0.0
      %6012 = vmatpush1.msra.mxu0 0.0
      %6013 = vmatprep.subr.mxu0 0.0
      %6014 = vmatpush1.msra.mxu0 0.0
      %6015 = vmatprep.subr.mxu0 0.0
      %6016 = vmatpush1.msra.mxu0 0.0
      %6017 = vmatprep.subr.mxu0 0.0
      %6018 = vmatpush1.msra.mxu0 0.0
      %6019 = vmatprep.subr.mxu0 0.0
      %6020 = vmatpush1.msra.mxu0 0.0
      %6021 = vmatprep.subr.mxu0 0.0
      %6022 = vmatpush1.msra.mxu0 0.0
      %6023 = vmatprep.subr.mxu0 0.0
      %6024 = vmatpush1.msra.mxu0 0.0
      %6025 = vmatprep.subr.mxu0 0.0
      %6026 = vmatpush1.msra.mxu0 0.0
      %6027 = vmatprep.mubr.f32.mxu0 0.0
      %v6028 = vand.u32 %v5518, 4294901760
      %6029 = vmatmul.mubr.f32.gmra.mrb[0].mxu0 %v6028
      %v6030 = vpop.f32.mrb[0].mxu0
      %v6031 = vadd.f32 %v5954, %v6030
      %v6032 = vpop.f32.mrb[0].mxu0
      %6033 = vdwg.mxu0
      %v6034 = vmul.f32 %v6031, %v6031
      %v6035 = vsel %vm4863, %v6034, 0.0
      %v6036 = vrot.slane %v6035, 4
      %v6037 = vadd.f32 %v6035, %v6036
      %v6038 = vrot.slane %v6037, 2
      %v6039 = vadd.f32 %v6037, %v6038
      %v6040 = vrot.slane %v6039, 1
      %v6041 = vadd.f32 %v6039, %v6040
      %v6042 = vmax.f32 %v6041, 1e-24
      %v6043 = vrsqrt.pop %v6042
      %v6044 = vmul.f32 %v6043, %v4769
      %v6045 = vlaneseq
      %v6046 = vshrl.u32 %v6045, 7
      %v6047 = vsub.s32 3, %v6046
      %v6048 = vrot.slane %v6044, %v6047
      %v6049 = vmul.f32 %v6031, %v6048
      %v6050 = vadd.f32 %v342, %v6049
      %s6051 = scalar_lea.vmem %s337, 4
      %6052 = vst.msk [vmem:[%s6051] sm:$0x7] %vm4863, %v6050
      %v6053 = vsel %vm4856, %v4776, -inf
      %v6054 = vsel %vm4856, %v4783, -inf
      %v6055 = vsel %vm4856, %v4790, -inf
      %v6056 = vsel %vm4856, %v4797, -inf
      %v6057 = vsel %vm4856, %v4804, -inf
      %v6058 = vmax.f32 %v6053, %v6057
      %v6059 = vsel %vm4863, %v4811, -inf
      %v6060 = vmax.f32 %v6054, %v6059
      %v6061 = vmax.f32 %v6058, %v6060
      %v6062 = vmax.f32 %v6055, %v6056
      %v6063 = vmax.f32 %v6061, %v6062
      %v6064 = vrot.slane %v6063, 4
      %v6065 = vmax.f32 %v6063, %v6064
      %v6066 = vrot.slane %v6065, 2
      %v6067 = vmax.f32 %v6065, %v6066
      %v6068 = vrot.slane %v6067, 1
      %v6069 = vmax.f32 %v6067, %v6068
      %v6070 = vsub.f32 %v4776, %v6069
      %v6071 = vsub.f32 %v4783, %v6069
      %v6072 = vsub.f32 %v4790, %v6069
      %v6073 = vsub.f32 %v4797, %v6069
      %v6074 = vsub.f32 %v4804, %v6069
      %v6075 = vsub.f32 %v4811, %v6069
      %v6076 = vmul.f32 %v6070, 1.442695
      %v6077 = vpow.pop %v6076
      %v6078 = vmul.f32 %v6071, 1.442695
      %v6079 = vpow.pop %v6078
      %v6080 = vmul.f32 %v6072, 1.442695
      %v6081 = vpow.pop %v6080
      %v6082 = vmul.f32 %v6073, 1.442695
      %v6083 = vpow.pop %v6082
      %v6084 = vmul.f32 %v6074, 1.442695
      %v6085 = vpow.pop %v6084
      %v6086 = vmul.f32 %v6075, 1.442695
      %v6087 = vpow.pop %v6086
      %v6088 = vsel %vm4856, %v6077, 0.0
      %v6089 = vsel %vm4856, %v6079, 0.0
      %v6090 = vadd.f32 %v6088, %v6089
      %v6091 = vsel %vm4856, %v6081, 0.0
      %v6092 = vadd.f32 %v6090, %v6091
      %v6093 = vsel %vm4856, %v6083, 0.0
      %v6094 = vadd.f32 %v6092, %v6093
      %v6095 = vsel %vm4856, %v6085, 0.0
      %v6096 = vadd.f32 %v6094, %v6095
      %v6097 = vsel %vm4863, %v6087, 0.0
      %v6098 = vadd.f32 %v6096, %v6097
      %v6099 = vrot.slane %v6098, 4
      %v6100 = vadd.f32 %v6098, %v6099
      %v6101 = vrot.slane %v6100, 2
      %v6102 = vadd.f32 %v6100, %v6101
      %v6103 = vrot.slane %v6102, 1
      %v6104 = vadd.f32 %v6102, %v6103
      %v6105 = vrcp.pop %v6104
      %v6106 = vmul.f32 1.0, %v6105
      %v6107 = vmul.f32 %v6077, %v6106
      %v6108 = vmul.f32 %v6079, %v6106
      %v6109 = vmul.f32 %v6081, %v6106
      %v6110 = vmul.f32 %v6083, %v6106
      %v6111 = vmul.f32 %v6085, %v6106
      %v6112 = vmul.f32 %v6087, %v6106
      %v6113 = vld [vmem:[%s6] sm:$0x7]
      %v6115 = vsel %vm4919, %v6113, 0
      %v6118 = vsel %vm4923, %v6112, 0
      %6120 = vmatprep.subr.mxu0 0.0
      %v6121 = vand.u32 %v6107, 4294901760
      %6122 = vmatpush1.msra.mxu0 %v6121
      %6123 = vmatprep.subr.mxu0 0.0
      %v6124 = vand.u32 %v6108, 4294901760
      %6125 = vmatpush1.msra.mxu0 %v6124
      %6126 = vmatprep.subr.mxu0 0.0
      %v6127 = vand.u32 %v6109, 4294901760
      %6128 = vmatpush1.msra.mxu0 %v6127
      %6129 = vmatprep.subr.mxu0 0.0
      %v6130 = vand.u32 %v6110, 4294901760
      %6131 = vmatpush1.msra.mxu0 %v6130
      %6132 = vmatprep.subr.mxu0 0.0
      %v6133 = vand.u32 %v6111, 4294901760
      %6134 = vmatpush1.msra.mxu0 %v6133
      %6135 = vmatprep.subr.mxu0 0.0
      %v6136 = vand.u32 %v6118, 4294901760
      %6137 = vmatpush1.msra.mxu0 %v6136
      %6138 = vmatprep.subr.mxu0 0.0
      %6139 = vmatpush1.msra.mxu0 0.0
      %6140 = vmatprep.subr.mxu0 0.0
      %6141 = vmatpush1.msra.mxu0 0.0
      %6142 = vmatprep.subr.mxu0 0.0
      %6143 = vmatpush1.msra.mxu0 0.0
      %6144 = vmatprep.subr.mxu0 0.0
      %6145 = vmatpush1.msra.mxu0 0.0
      %6146 = vmatprep.subr.mxu0 0.0
      %6147 = vmatpush1.msra.mxu0 0.0
      %6148 = vmatprep.subr.mxu0 0.0
      %6149 = vmatpush1.msra.mxu0 0.0
      %6150 = vmatprep.subr.mxu0 0.0
      %6151 = vmatpush1.msra.mxu0 0.0
      %6152 = vmatprep.subr.mxu0 0.0
      %6153 = vmatpush1.msra.mxu0 0.0
      %6154 = vmatprep.subr.mxu0 0.0
      %6155 = vmatpush1.msra.mxu0 0.0
      %6156 = vmatprep.subr.mxu0 0.0
      %6157 = vmatpush1.msra.mxu0 0.0
      %6158 = vmatprep.subr.mxu0 0.0
      %6159 = vmatpush1.msra.mxu0 0.0
      %6160 = vmatprep.subr.mxu0 0.0
      %6161 = vmatpush1.msra.mxu0 0.0
      %6162 = vmatprep.subr.mxu0 0.0
      %6163 = vmatpush1.msra.mxu0 0.0
      %6164 = vmatprep.subr.mxu0 0.0
      %6165 = vmatpush1.msra.mxu0 0.0
      %6166 = vmatprep.subr.mxu0 0.0
      %6167 = vmatpush1.msra.mxu0 0.0
      %6168 = vmatprep.subr.mxu0 0.0
      %6169 = vmatpush1.msra.mxu0 0.0
      %6170 = vmatprep.subr.mxu0 0.0
      %6171 = vmatpush1.msra.mxu0 0.0
      %6172 = vmatprep.subr.mxu0 0.0
      %6173 = vmatpush1.msra.mxu0 0.0
      %6174 = vmatprep.subr.mxu0 0.0
      %6175 = vmatpush1.msra.mxu0 0.0
      %6176 = vmatprep.subr.mxu0 0.0
      %6177 = vmatpush1.msra.mxu0 0.0
      %6178 = vmatprep.subr.mxu0 0.0
      %6179 = vmatpush1.msra.mxu0 0.0
      %6180 = vmatprep.subr.mxu0 0.0
      %6181 = vmatpush1.msra.mxu0 0.0
      %6182 = vmatprep.subr.mxu0 0.0
      %6183 = vmatpush1.msra.mxu0 0.0
      %6184 = vmatprep.subr.mxu0 0.0
      %6185 = vmatpush1.msra.mxu0 0.0
      %6186 = vmatprep.subr.mxu0 0.0
      %6187 = vmatpush1.msra.mxu0 0.0
      %6188 = vmatprep.subr.mxu0 0.0
      %6189 = vmatpush1.msra.mxu0 0.0
      %6190 = vmatprep.mubr.f32.mxu0 0.0
      %v6191 = vand.u32 %v6115, 4294901760
      %v6192 = vsub.f32 %v6115, %v6191
      %v6193 = vand.u32 %v6192, 4294901760
      %v6194 = vsub.f32 %v6192, %v6193
      %v6195 = vand.u32 %v6194, 4294901760
      %6196 = vmatmul.mubr.f32.gmra.mrb[0].mxu0 %v6195
      %v6197 = vpop.f32.mrb[0].mxu0
      %v6198 = vadd.f32 0.0, %v6197
      %v6199 = vpop.f32.mrb[0].mxu0
      %6200 = vdwg.mxu0
      %6201 = vmatprep.subr.mxu0 0.0
      %v6202 = vand.u32 %v6107, 4294901760
      %v6203 = vsub.f32 %v6107, %v6202
      %v6204 = vand.u32 %v6203, 4294901760
      %v6205 = vsub.f32 %v6203, %v6204
      %v6206 = vand.u32 %v6205, 4294901760
      %6207 = vmatpush1.msra.mxu0 %v6206
      %6208 = vmatprep.subr.mxu0 0.0
      %v6209 = vand.u32 %v6108, 4294901760
      %v6210 = vsub.f32 %v6108, %v6209
      %v6211 = vand.u32 %v6210, 4294901760
      %v6212 = vsub.f32 %v6210, %v6211
      %v6213 = vand.u32 %v6212, 4294901760
      %6214 = vmatpush1.msra.mxu0 %v6213
      %6215 = vmatprep.subr.mxu0 0.0
      %v6216 = vand.u32 %v6109, 4294901760
      %v6217 = vsub.f32 %v6109, %v6216
      %v6218 = vand.u32 %v6217, 4294901760
      %v6219 = vsub.f32 %v6217, %v6218
      %v6220 = vand.u32 %v6219, 4294901760
      %6221 = vmatpush1.msra.mxu0 %v6220
      %6222 = vmatprep.subr.mxu0 0.0
      %v6223 = vand.u32 %v6110, 4294901760
      %v6224 = vsub.f32 %v6110, %v6223
      %v6225 = vand.u32 %v6224, 4294901760
      %v6226 = vsub.f32 %v6224, %v6225
      %v6227 = vand.u32 %v6226, 4294901760
      %6228 = vmatpush1.msra.mxu0 %v6227
      %6229 = vmatprep.subr.mxu0 0.0
      %v6230 = vand.u32 %v6111, 4294901760
      %v6231 = vsub.f32 %v6111, %v6230
      %v6232 = vand.u32 %v6231, 4294901760
      %v6233 = vsub.f32 %v6231, %v6232
      %v6234 = vand.u32 %v6233, 4294901760
      %6235 = vmatpush1.msra.mxu0 %v6234
      %6236 = vmatprep.subr.mxu0 0.0
      %v6237 = vand.u32 %v6118, 4294901760
      %v6238 = vsub.f32 %v6118, %v6237
      %v6239 = vand.u32 %v6238, 4294901760
      %v6240 = vsub.f32 %v6238, %v6239
      %v6241 = vand.u32 %v6240, 4294901760
      %6242 = vmatpush1.msra.mxu0 %v6241
      %6243 = vmatprep.subr.mxu0 0.0
      %6244 = vmatpush1.msra.mxu0 0.0
      %6245 = vmatprep.subr.mxu0 0.0
      %6246 = vmatpush1.msra.mxu0 0.0
      %6247 = vmatprep.subr.mxu0 0.0
      %6248 = vmatpush1.msra.mxu0 0.0
      %6249 = vmatprep.subr.mxu0 0.0
      %6250 = vmatpush1.msra.mxu0 0.0
      %6251 = vmatprep.subr.mxu0 0.0
      %6252 = vmatpush1.msra.mxu0 0.0
      %6253 = vmatprep.subr.mxu0 0.0
      %6254 = vmatpush1.msra.mxu0 0.0
      %6255 = vmatprep.subr.mxu0 0.0
      %6256 = vmatpush1.msra.mxu0 0.0
      %6257 = vmatprep.subr.mxu0 0.0
      %6258 = vmatpush1.msra.mxu0 0.0
      %6259 = vmatprep.subr.mxu0 0.0
      %6260 = vmatpush1.msra.mxu0 0.0
      %6261 = vmatprep.subr.mxu0 0.0
      %6262 = vmatpush1.msra.mxu0 0.0
      %6263 = vmatprep.subr.mxu0 0.0
      %6264 = vmatpush1.msra.mxu0 0.0
      %6265 = vmatprep.subr.mxu0 0.0
      %6266 = vmatpush1.msra.mxu0 0.0
      %6267 = vmatprep.subr.mxu0 0.0
      %6268 = vmatpush1.msra.mxu0 0.0
      %6269 = vmatprep.subr.mxu0 0.0
      %6270 = vmatpush1.msra.mxu0 0.0
      %6271 = vmatprep.subr.mxu0 0.0
      %6272 = vmatpush1.msra.mxu0 0.0
      %6273 = vmatprep.subr.mxu0 0.0
      %6274 = vmatpush1.msra.mxu0 0.0
      %6275 = vmatprep.subr.mxu0 0.0
      %6276 = vmatpush1.msra.mxu0 0.0
      %6277 = vmatprep.subr.mxu0 0.0
      %6278 = vmatpush1.msra.mxu0 0.0
      %6279 = vmatprep.subr.mxu0 0.0
      %6280 = vmatpush1.msra.mxu0 0.0
      %6281 = vmatprep.subr.mxu0 0.0
      %6282 = vmatpush1.msra.mxu0 0.0
      %6283 = vmatprep.subr.mxu0 0.0
      %6284 = vmatpush1.msra.mxu0 0.0
      %6285 = vmatprep.subr.mxu0 0.0
      %6286 = vmatpush1.msra.mxu0 0.0
      %6287 = vmatprep.subr.mxu0 0.0
      %6288 = vmatpush1.msra.mxu0 0.0
      %6289 = vmatprep.subr.mxu0 0.0
      %6290 = vmatpush1.msra.mxu0 0.0
      %6291 = vmatprep.subr.mxu0 0.0
      %6292 = vmatpush1.msra.mxu0 0.0
      %6293 = vmatprep.subr.mxu0 0.0
      %6294 = vmatpush1.msra.mxu0 0.0
      %6295 = vmatprep.mubr.f32.mxu0 0.0
      %v6296 = vand.u32 %v6115, 4294901760
      %6297 = vmatmul.mubr.f32.gmra.mrb[0].mxu0 %v6296
      %v6298 = vpop.f32.mrb[0].mxu0
      %v6299 = vadd.f32 %v6198, %v6298
      %v6300 = vpop.f32.mrb[0].mxu0
      %6301 = vdwg.mxu0
      %6302 = vmatprep.subr.mxu0 0.0
      %v6303 = vand.u32 %v6107, 4294901760
      %v6304 = vsub.f32 %v6107, %v6303
      %6305 = vmatpush1.msra.mxu0 %v6304
      %6306 = vmatprep.subr.mxu0 0.0
      %v6307 = vand.u32 %v6108, 4294901760
      %v6308 = vsub.f32 %v6108, %v6307
      %6309 = vmatpush1.msra.mxu0 %v6308
      %6310 = vmatprep.subr.mxu0 0.0
      %v6311 = vand.u32 %v6109, 4294901760
      %v6312 = vsub.f32 %v6109, %v6311
      %6313 = vmatpush1.msra.mxu0 %v6312
      %6314 = vmatprep.subr.mxu0 0.0
      %v6315 = vand.u32 %v6110, 4294901760
      %v6316 = vsub.f32 %v6110, %v6315
      %6317 = vmatpush1.msra.mxu0 %v6316
      %6318 = vmatprep.subr.mxu0 0.0
      %v6319 = vand.u32 %v6111, 4294901760
      %v6320 = vsub.f32 %v6111, %v6319
      %6321 = vmatpush1.msra.mxu0 %v6320
      %6322 = vmatprep.subr.mxu0 0.0
      %v6323 = vand.u32 %v6118, 4294901760
      %v6324 = vsub.f32 %v6118, %v6323
      %6325 = vmatpush1.msra.mxu0 %v6324
      %6326 = vmatprep.subr.mxu0 0.0
      %6327 = vmatpush1.msra.mxu0 0.0
      %6328 = vmatprep.subr.mxu0 0.0
      %6329 = vmatpush1.msra.mxu0 0.0
      %6330 = vmatprep.subr.mxu0 0.0
      %6331 = vmatpush1.msra.mxu0 0.0
      %6332 = vmatprep.subr.mxu0 0.0
      %6333 = vmatpush1.msra.mxu0 0.0
      %6334 = vmatprep.subr.mxu0 0.0
      %6335 = vmatpush1.msra.mxu0 0.0
      %6336 = vmatprep.subr.mxu0 0.0
      %6337 = vmatpush1.msra.mxu0 0.0
      %6338 = vmatprep.subr.mxu0 0.0
      %6339 = vmatpush1.msra.mxu0 0.0
      %6340 = vmatprep.subr.mxu0 0.0
      %6341 = vmatpush1.msra.mxu0 0.0
      %6342 = vmatprep.subr.mxu0 0.0
      %6343 = vmatpush1.msra.mxu0 0.0
      %6344 = vmatprep.subr.mxu0 0.0
      %6345 = vmatpush1.msra.mxu0 0.0
      %6346 = vmatprep.subr.mxu0 0.0
      %6347 = vmatpush1.msra.mxu0 0.0
      %6348 = vmatprep.subr.mxu0 0.0
      %6349 = vmatpush1.msra.mxu0 0.0
      %6350 = vmatprep.subr.mxu0 0.0
      %6351 = vmatpush1.msra.mxu0 0.0
      %6352 = vmatprep.subr.mxu0 0.0
      %6353 = vmatpush1.msra.mxu0 0.0
      %6354 = vmatprep.subr.mxu0 0.0
      %6355 = vmatpush1.msra.mxu0 0.0
      %6356 = vmatprep.subr.mxu0 0.0
      %6357 = vmatpush1.msra.mxu0 0.0
      %6358 = vmatprep.subr.mxu0 0.0
      %6359 = vmatpush1.msra.mxu0 0.0
      %6360 = vmatprep.subr.mxu0 0.0
      %6361 = vmatpush1.msra.mxu0 0.0
      %6362 = vmatprep.subr.mxu0 0.0
      %6363 = vmatpush1.msra.mxu0 0.0
      %6364 = vmatprep.subr.mxu0 0.0
      %6365 = vmatpush1.msra.mxu0 0.0
      %6366 = vmatprep.subr.mxu0 0.0
      %6367 = vmatpush1.msra.mxu0 0.0
      %6368 = vmatprep.subr.mxu0 0.0
      %6369 = vmatpush1.msra.mxu0 0.0
      %6370 = vmatprep.subr.mxu0 0.0
      %6371 = vmatpush1.msra.mxu0 0.0
      %6372 = vmatprep.subr.mxu0 0.0
      %6373 = vmatpush1.msra.mxu0 0.0
      %6374 = vmatprep.subr.mxu0 0.0
      %6375 = vmatpush1.msra.mxu0 0.0
      %6376 = vmatprep.subr.mxu0 0.0
      %6377 = vmatpush1.msra.mxu0 0.0
      %6378 = vmatprep.mubr.f32.mxu0 0.0
      %v6379 = vand.u32 %v6115, 4294901760
      %v6380 = vsub.f32 %v6115, %v6379
      %6381 = vmatmul.mubr.f32.gmra.mrb[0].mxu0 %v6380
      %v6382 = vpop.f32.mrb[0].mxu0
      %v6383 = vadd.f32 %v6299, %v6382
      %v6384 = vpop.f32.mrb[0].mxu0
      %6385 = vdwg.mxu0
      %6386 = vmatprep.subr.mxu0 0.0
      %v6387 = vand.u32 %v6107, 4294901760
      %6388 = vmatpush1.msra.mxu0 %v6387
      %6389 = vmatprep.subr.mxu0 0.0
      %v6390 = vand.u32 %v6108, 4294901760
      %6391 = vmatpush1.msra.mxu0 %v6390
      %6392 = vmatprep.subr.mxu0 0.0
      %v6393 = vand.u32 %v6109, 4294901760
      %6394 = vmatpush1.msra.mxu0 %v6393
      %6395 = vmatprep.subr.mxu0 0.0
      %v6396 = vand.u32 %v6110, 4294901760
      %6397 = vmatpush1.msra.mxu0 %v6396
      %6398 = vmatprep.subr.mxu0 0.0
      %v6399 = vand.u32 %v6111, 4294901760
      %6400 = vmatpush1.msra.mxu0 %v6399
      %6401 = vmatprep.subr.mxu0 0.0
      %v6402 = vand.u32 %v6118, 4294901760
      %6403 = vmatpush1.msra.mxu0 %v6402
      %6404 = vmatprep.subr.mxu0 0.0
      %6405 = vmatpush1.msra.mxu0 0.0
      %6406 = vmatprep.subr.mxu0 0.0
      %6407 = vmatpush1.msra.mxu0 0.0
      %6408 = vmatprep.subr.mxu0 0.0
      %6409 = vmatpush1.msra.mxu0 0.0
      %6410 = vmatprep.subr.mxu0 0.0
      %6411 = vmatpush1.msra.mxu0 0.0
      %6412 = vmatprep.subr.mxu0 0.0
      %6413 = vmatpush1.msra.mxu0 0.0
      %6414 = vmatprep.subr.mxu0 0.0
      %6415 = vmatpush1.msra.mxu0 0.0
      %6416 = vmatprep.subr.mxu0 0.0
      %6417 = vmatpush1.msra.mxu0 0.0
      %6418 = vmatprep.subr.mxu0 0.0
      %6419 = vmatpush1.msra.mxu0 0.0
      %6420 = vmatprep.subr.mxu0 0.0
      %6421 = vmatpush1.msra.mxu0 0.0
      %6422 = vmatprep.subr.mxu0 0.0
      %6423 = vmatpush1.msra.mxu0 0.0
      %6424 = vmatprep.subr.mxu0 0.0
      %6425 = vmatpush1.msra.mxu0 0.0
      %6426 = vmatprep.subr.mxu0 0.0
      %6427 = vmatpush1.msra.mxu0 0.0
      %6428 = vmatprep.subr.mxu0 0.0
      %6429 = vmatpush1.msra.mxu0 0.0
      %6430 = vmatprep.subr.mxu0 0.0
      %6431 = vmatpush1.msra.mxu0 0.0
      %6432 = vmatprep.subr.mxu0 0.0
      %6433 = vmatpush1.msra.mxu0 0.0
      %6434 = vmatprep.subr.mxu0 0.0
      %6435 = vmatpush1.msra.mxu0 0.0
      %6436 = vmatprep.subr.mxu0 0.0
      %6437 = vmatpush1.msra.mxu0 0.0
      %6438 = vmatprep.subr.mxu0 0.0
      %6439 = vmatpush1.msra.mxu0 0.0
      %6440 = vmatprep.subr.mxu0 0.0
      %6441 = vmatpush1.msra.mxu0 0.0
      %6442 = vmatprep.subr.mxu0 0.0
      %6443 = vmatpush1.msra.mxu0 0.0
      %6444 = vmatprep.subr.mxu0 0.0
      %6445 = vmatpush1.msra.mxu0 0.0
      %6446 = vmatprep.subr.mxu0 0.0
      %6447 = vmatpush1.msra.mxu0 0.0
      %6448 = vmatprep.subr.mxu0 0.0
      %6449 = vmatpush1.msra.mxu0 0.0
      %6450 = vmatprep.subr.mxu0 0.0
      %6451 = vmatpush1.msra.mxu0 0.0
      %6452 = vmatprep.subr.mxu0 0.0
      %6453 = vmatpush1.msra.mxu0 0.0
      %6454 = vmatprep.subr.mxu0 0.0
      %6455 = vmatpush1.msra.mxu0 0.0
      %6456 = vmatprep.mubr.f32.mxu0 0.0
      %v6457 = vand.u32 %v6115, 4294901760
      %v6458 = vsub.f32 %v6115, %v6457
      %v6459 = vand.u32 %v6458, 4294901760
      %6460 = vmatmul.mubr.f32.gmra.mrb[0].mxu0 %v6459
      %v6461 = vpop.f32.mrb[0].mxu0
      %v6462 = vadd.f32 %v6383, %v6461
      %v6463 = vpop.f32.mrb[0].mxu0
      %6464 = vdwg.mxu0
      %6465 = vmatprep.subr.mxu0 0.0
      %v6466 = vand.u32 %v6107, 4294901760
      %v6467 = vsub.f32 %v6107, %v6466
      %v6468 = vand.u32 %v6467, 4294901760
      %6469 = vmatpush1.msra.mxu0 %v6468
      %6470 = vmatprep.subr.mxu0 0.0
      %v6471 = vand.u32 %v6108, 4294901760
      %v6472 = vsub.f32 %v6108, %v6471
      %v6473 = vand.u32 %v6472, 4294901760
      %6474 = vmatpush1.msra.mxu0 %v6473
      %6475 = vmatprep.subr.mxu0 0.0
      %v6476 = vand.u32 %v6109, 4294901760
      %v6477 = vsub.f32 %v6109, %v6476
      %v6478 = vand.u32 %v6477, 4294901760
      %6479 = vmatpush1.msra.mxu0 %v6478
      %6480 = vmatprep.subr.mxu0 0.0
      %v6481 = vand.u32 %v6110, 4294901760
      %v6482 = vsub.f32 %v6110, %v6481
      %v6483 = vand.u32 %v6482, 4294901760
      %6484 = vmatpush1.msra.mxu0 %v6483
      %6485 = vmatprep.subr.mxu0 0.0
      %v6486 = vand.u32 %v6111, 4294901760
      %v6487 = vsub.f32 %v6111, %v6486
      %v6488 = vand.u32 %v6487, 4294901760
      %6489 = vmatpush1.msra.mxu0 %v6488
      %6490 = vmatprep.subr.mxu0 0.0
      %v6491 = vand.u32 %v6118, 4294901760
      %v6492 = vsub.f32 %v6118, %v6491
      %v6493 = vand.u32 %v6492, 4294901760
      %6494 = vmatpush1.msra.mxu0 %v6493
      %6495 = vmatprep.subr.mxu0 0.0
      %6496 = vmatpush1.msra.mxu0 0.0
      %6497 = vmatprep.subr.mxu0 0.0
      %6498 = vmatpush1.msra.mxu0 0.0
      %6499 = vmatprep.subr.mxu0 0.0
      %6500 = vmatpush1.msra.mxu0 0.0
      %6501 = vmatprep.subr.mxu0 0.0
      %6502 = vmatpush1.msra.mxu0 0.0
      %6503 = vmatprep.subr.mxu0 0.0
      %6504 = vmatpush1.msra.mxu0 0.0
      %6505 = vmatprep.subr.mxu0 0.0
      %6506 = vmatpush1.msra.mxu0 0.0
      %6507 = vmatprep.subr.mxu0 0.0
      %6508 = vmatpush1.msra.mxu0 0.0
      %6509 = vmatprep.subr.mxu0 0.0
      %6510 = vmatpush1.msra.mxu0 0.0
      %6511 = vmatprep.subr.mxu0 0.0
      %6512 = vmatpush1.msra.mxu0 0.0
      %6513 = vmatprep.subr.mxu0 0.0
      %6514 = vmatpush1.msra.mxu0 0.0
      %6515 = vmatprep.subr.mxu0 0.0
      %6516 = vmatpush1.msra.mxu0 0.0
      %6517 = vmatprep.subr.mxu0 0.0
      %6518 = vmatpush1.msra.mxu0 0.0
      %6519 = vmatprep.subr.mxu0 0.0
      %6520 = vmatpush1.msra.mxu0 0.0
      %6521 = vmatprep.subr.mxu0 0.0
      %6522 = vmatpush1.msra.mxu0 0.0
      %6523 = vmatprep.subr.mxu0 0.0
      %6524 = vmatpush1.msra.mxu0 0.0
      %6525 = vmatprep.subr.mxu0 0.0
      %6526 = vmatpush1.msra.mxu0 0.0
      %6527 = vmatprep.subr.mxu0 0.0
      %6528 = vmatpush1.msra.mxu0 0.0
      %6529 = vmatprep.subr.mxu0 0.0
      %6530 = vmatpush1.msra.mxu0 0.0
      %6531 = vmatprep.subr.mxu0 0.0
      %6532 = vmatpush1.msra.mxu0 0.0
      %6533 = vmatprep.subr.mxu0 0.0
      %6534 = vmatpush1.msra.mxu0 0.0
      %6535 = vmatprep.subr.mxu0 0.0
      %6536 = vmatpush1.msra.mxu0 0.0
      %6537 = vmatprep.subr.mxu0 0.0
      %6538 = vmatpush1.msra.mxu0 0.0
      %6539 = vmatprep.subr.mxu0 0.0
      %6540 = vmatpush1.msra.mxu0 0.0
      %6541 = vmatprep.subr.mxu0 0.0
      %6542 = vmatpush1.msra.mxu0 0.0
      %6543 = vmatprep.subr.mxu0 0.0
      %6544 = vmatpush1.msra.mxu0 0.0
      %6545 = vmatprep.subr.mxu0 0.0
      %6546 = vmatpush1.msra.mxu0 0.0
      %6547 = vmatprep.mubr.f32.mxu0 0.0
      %v6548 = vand.u32 %v6115, 4294901760
      %6549 = vmatmul.mubr.f32.gmra.mrb[0].mxu0 %v6548
      %v6550 = vpop.f32.mrb[0].mxu0
      %v6551 = vadd.f32 %v6462, %v6550
      %v6552 = vpop.f32.mrb[0].mxu0
      %6553 = vdwg.mxu0
      %6554 = vmatprep.subr.mxu0 0.0
      %v6555 = vand.u32 %v6107, 4294901760
      %6556 = vmatpush1.msra.mxu0 %v6555
      %6557 = vmatprep.subr.mxu0 0.0
      %v6558 = vand.u32 %v6108, 4294901760
      %6559 = vmatpush1.msra.mxu0 %v6558
      %6560 = vmatprep.subr.mxu0 0.0
      %v6561 = vand.u32 %v6109, 4294901760
      %6562 = vmatpush1.msra.mxu0 %v6561
      %6563 = vmatprep.subr.mxu0 0.0
      %v6564 = vand.u32 %v6110, 4294901760
      %6565 = vmatpush1.msra.mxu0 %v6564
      %6566 = vmatprep.subr.mxu0 0.0
      %v6567 = vand.u32 %v6111, 4294901760
      %6568 = vmatpush1.msra.mxu0 %v6567
      %6569 = vmatprep.subr.mxu0 0.0
      %v6570 = vand.u32 %v6118, 4294901760
      %6571 = vmatpush1.msra.mxu0 %v6570
      %6572 = vmatprep.subr.mxu0 0.0
      %6573 = vmatpush1.msra.mxu0 0.0
      %6574 = vmatprep.subr.mxu0 0.0
      %6575 = vmatpush1.msra.mxu0 0.0
      %6576 = vmatprep.subr.mxu0 0.0
      %6577 = vmatpush1.msra.mxu0 0.0
      %6578 = vmatprep.subr.mxu0 0.0
      %6579 = vmatpush1.msra.mxu0 0.0
      %6580 = vmatprep.subr.mxu0 0.0
      %6581 = vmatpush1.msra.mxu0 0.0
      %6582 = vmatprep.subr.mxu0 0.0
      %6583 = vmatpush1.msra.mxu0 0.0
      %6584 = vmatprep.subr.mxu0 0.0
      %6585 = vmatpush1.msra.mxu0 0.0
      %6586 = vmatprep.subr.mxu0 0.0
      %6587 = vmatpush1.msra.mxu0 0.0
      %6588 = vmatprep.subr.mxu0 0.0
      %6589 = vmatpush1.msra.mxu0 0.0
      %6590 = vmatprep.subr.mxu0 0.0
      %6591 = vmatpush1.msra.mxu0 0.0
      %6592 = vmatprep.subr.mxu0 0.0
      %6593 = vmatpush1.msra.mxu0 0.0
      %6594 = vmatprep.subr.mxu0 0.0
      %6595 = vmatpush1.msra.mxu0 0.0
      %6596 = vmatprep.subr.mxu0 0.0
      %6597 = vmatpush1.msra.mxu0 0.0
      %6598 = vmatprep.subr.mxu0 0.0
      %6599 = vmatpush1.msra.mxu0 0.0
      %6600 = vmatprep.subr.mxu0 0.0
      %6601 = vmatpush1.msra.mxu0 0.0
      %6602 = vmatprep.subr.mxu0 0.0
      %6603 = vmatpush1.msra.mxu0 0.0
      %6604 = vmatprep.subr.mxu0 0.0
      %6605 = vmatpush1.msra.mxu0 0.0
      %6606 = vmatprep.subr.mxu0 0.0
      %6607 = vmatpush1.msra.mxu0 0.0
      %6608 = vmatprep.subr.mxu0 0.0
      %6609 = vmatpush1.msra.mxu0 0.0
      %6610 = vmatprep.subr.mxu0 0.0
      %6611 = vmatpush1.msra.mxu0 0.0
      %6612 = vmatprep.subr.mxu0 0.0
      %6613 = vmatpush1.msra.mxu0 0.0
      %6614 = vmatprep.subr.mxu0 0.0
      %6615 = vmatpush1.msra.mxu0 0.0
      %6616 = vmatprep.subr.mxu0 0.0
      %6617 = vmatpush1.msra.mxu0 0.0
      %6618 = vmatprep.subr.mxu0 0.0
      %6619 = vmatpush1.msra.mxu0 0.0
      %6620 = vmatprep.subr.mxu0 0.0
      %6621 = vmatpush1.msra.mxu0 0.0
      %6622 = vmatprep.subr.mxu0 0.0
      %6623 = vmatpush1.msra.mxu0 0.0
      %6624 = vmatprep.mubr.f32.mxu0 0.0
      %v6625 = vand.u32 %v6115, 4294901760
      %6626 = vmatmul.mubr.f32.gmra.mrb[0].mxu0 %v6625
      %v6627 = vpop.f32.mrb[0].mxu0
      %v6628 = vadd.f32 %v6551, %v6627
      %v6629 = vpop.f32.mrb[0].mxu0
      %6630 = vdwg.mxu0
      %v6631 = vmul.f32 %v6628, %v6628
      %v6632 = vsel %vm4863, %v6631, 0.0
      %v6633 = vrot.slane %v6632, 4
      %v6634 = vadd.f32 %v6632, %v6633
      %v6635 = vrot.slane %v6634, 2
      %v6636 = vadd.f32 %v6634, %v6635
      %v6637 = vrot.slane %v6636, 1
      %v6638 = vadd.f32 %v6636, %v6637
      %v6639 = vmax.f32 %v6638, 1e-24
      %v6640 = vrsqrt.pop %v6639
      %v6641 = vmul.f32 %v6640, %v4811
      %v6642 = vlaneseq
      %v6643 = vshrl.u32 %v6642, 7
      %v6644 = vsub.s32 3, %v6643
      %v6645 = vrot.slane %v6641, %v6644
      %v6646 = vmul.f32 %v6628, %v6645
      %v6647 = vadd.f32 %v342, %v6646
      %s6648 = scalar_lea.vmem %s337, 8
      %6649 = vst.msk [vmem:[%s6648] sm:$0x7] %vm4863, %v6647
      %v6650 = vsel %vm4856, %v4818, -inf
      %v6651 = vsel %vm4856, %v4825, -inf
      %v6652 = vsel %vm4856, %v4832, -inf
      %v6653 = vsel %vm4856, %v4839, -inf
      %v6654 = vsel %vm4856, %v4846, -inf
      %v6655 = vmax.f32 %v6650, %v6654
      %v6656 = vsel %vm4863, %v4853, -inf
      %v6657 = vmax.f32 %v6651, %v6656
      %v6658 = vmax.f32 %v6655, %v6657
      %v6659 = vmax.f32 %v6652, %v6653
      %v6660 = vmax.f32 %v6658, %v6659
      %v6661 = vrot.slane %v6660, 4
      %v6662 = vmax.f32 %v6660, %v6661
      %v6663 = vrot.slane %v6662, 2
      %v6664 = vmax.f32 %v6662, %v6663
      %v6665 = vrot.slane %v6664, 1
      %v6666 = vmax.f32 %v6664, %v6665
      %v6667 = vsub.f32 %v4818, %v6666
      %v6668 = vsub.f32 %v4825, %v6666
      %v6669 = vsub.f32 %v4832, %v6666
      %v6670 = vsub.f32 %v4839, %v6666
      %v6671 = vsub.f32 %v4846, %v6666
      %v6672 = vsub.f32 %v4853, %v6666
      %v6673 = vmul.f32 %v6667, 1.442695
      %v6674 = vpow.pop %v6673
      %v6675 = vmul.f32 %v6668, 1.442695
      %v6676 = vpow.pop %v6675
      %v6677 = vmul.f32 %v6669, 1.442695
      %v6678 = vpow.pop %v6677
      %v6679 = vmul.f32 %v6670, 1.442695
      %v6680 = vpow.pop %v6679
      %v6681 = vmul.f32 %v6671, 1.442695
      %v6682 = vpow.pop %v6681
      %v6683 = vmul.f32 %v6672, 1.442695
      %v6684 = vpow.pop %v6683
      %v6685 = vsel %vm4856, %v6674, 0.0
      %v6686 = vsel %vm4856, %v6676, 0.0
      %v6687 = vadd.f32 %v6685, %v6686
      %v6688 = vsel %vm4856, %v6678, 0.0
      %v6689 = vadd.f32 %v6687, %v6688
      %v6690 = vsel %vm4856, %v6680, 0.0
      %v6691 = vadd.f32 %v6689, %v6690
      %v6692 = vsel %vm4856, %v6682, 0.0
      %v6693 = vadd.f32 %v6691, %v6692
      %v6694 = vsel %vm4863, %v6684, 0.0
      %v6695 = vadd.f32 %v6693, %v6694
      %v6696 = vrot.slane %v6695, 4
      %v6697 = vadd.f32 %v6695, %v6696
      %v6698 = vrot.slane %v6697, 2
      %v6699 = vadd.f32 %v6697, %v6698
      %v6700 = vrot.slane %v6699, 1
      %v6701 = vadd.f32 %v6699, %v6700
      %v6702 = vrcp.pop %v6701
      %v6703 = vmul.f32 1.0, %v6702
      %v6704 = vmul.f32 %v6674, %v6703
      %v6705 = vmul.f32 %v6676, %v6703
      %v6706 = vmul.f32 %v6678, %v6703
      %v6707 = vmul.f32 %v6680, %v6703
      %v6708 = vmul.f32 %v6682, %v6703
      %v6709 = vmul.f32 %v6684, %v6703
      %v6710 = vld [vmem:[%s6] sm:$0x7]
      %v6712 = vsel %vm4919, %v6710, 0
      %v6715 = vsel %vm4923, %v6709, 0
      %6717 = vmatprep.subr.mxu0 0.0
      %v6718 = vand.u32 %v6704, 4294901760
      %6719 = vmatpush1.msra.mxu0 %v6718
      %6720 = vmatprep.subr.mxu0 0.0
      %v6721 = vand.u32 %v6705, 4294901760
      %6722 = vmatpush1.msra.mxu0 %v6721
      %6723 = vmatprep.subr.mxu0 0.0
      %v6724 = vand.u32 %v6706, 4294901760
      %6725 = vmatpush1.msra.mxu0 %v6724
      %6726 = vmatprep.subr.mxu0 0.0
      %v6727 = vand.u32 %v6707, 4294901760
      %6728 = vmatpush1.msra.mxu0 %v6727
      %6729 = vmatprep.subr.mxu0 0.0
      %v6730 = vand.u32 %v6708, 4294901760
      %6731 = vmatpush1.msra.mxu0 %v6730
      %6732 = vmatprep.subr.mxu0 0.0
      %v6733 = vand.u32 %v6715, 4294901760
      %6734 = vmatpush1.msra.mxu0 %v6733
      %6735 = vmatprep.subr.mxu0 0.0
      %6736 = vmatpush1.msra.mxu0 0.0
      %6737 = vmatprep.subr.mxu0 0.0
      %6738 = vmatpush1.msra.mxu0 0.0
      %6739 = vmatprep.subr.mxu0 0.0
      %6740 = vmatpush1.msra.mxu0 0.0
      %6741 = vmatprep.subr.mxu0 0.0
      %6742 = vmatpush1.msra.mxu0 0.0
      %6743 = vmatprep.subr.mxu0 0.0
      %6744 = vmatpush1.msra.mxu0 0.0
      %6745 = vmatprep.subr.mxu0 0.0
      %6746 = vmatpush1.msra.mxu0 0.0
      %6747 = vmatprep.subr.mxu0 0.0
      %6748 = vmatpush1.msra.mxu0 0.0
      %6749 = vmatprep.subr.mxu0 0.0
      %6750 = vmatpush1.msra.mxu0 0.0
      %6751 = vmatprep.subr.mxu0 0.0
      %6752 = vmatpush1.msra.mxu0 0.0
      %6753 = vmatprep.subr.mxu0 0.0
      %6754 = vmatpush1.msra.mxu0 0.0
      %6755 = vmatprep.subr.mxu0 0.0
      %6756 = vmatpush1.msra.mxu0 0.0
      %6757 = vmatprep.subr.mxu0 0.0
      %6758 = vmatpush1.msra.mxu0 0.0
      %6759 = vmatprep.subr.mxu0 0.0
      %6760 = vmatpush1.msra.mxu0 0.0
      %6761 = vmatprep.subr.mxu0 0.0
      %6762 = vmatpush1.msra.mxu0 0.0
      %6763 = vmatprep.subr.mxu0 0.0
      %6764 = vmatpush1.msra.mxu0 0.0
      %6765 = vmatprep.subr.mxu0 0.0
      %6766 = vmatpush1.msra.mxu0 0.0
      %6767 = vmatprep.subr.mxu0 0.0
      %6768 = vmatpush1.msra.mxu0 0.0
      %6769 = vmatprep.subr.mxu0 0.0
      %6770 = vmatpush1.msra.mxu0 0.0
      %6771 = vmatprep.subr.mxu0 0.0
      %6772 = vmatpush1.msra.mxu0 0.0
      %6773 = vmatprep.subr.mxu0 0.0
      %6774 = vmatpush1.msra.mxu0 0.0
      %6775 = vmatprep.subr.mxu0 0.0
      %6776 = vmatpush1.msra.mxu0 0.0
      %6777 = vmatprep.subr.mxu0 0.0
      %6778 = vmatpush1.msra.mxu0 0.0
      %6779 = vmatprep.subr.mxu0 0.0
      %6780 = vmatpush1.msra.mxu0 0.0
      %6781 = vmatprep.subr.mxu0 0.0
      %6782 = vmatpush1.msra.mxu0 0.0
      %6783 = vmatprep.subr.mxu0 0.0
      %6784 = vmatpush1.msra.mxu0 0.0
      %6785 = vmatprep.subr.mxu0 0.0
      %6786 = vmatpush1.msra.mxu0 0.0
      %6787 = vmatprep.mubr.f32.mxu0 0.0
      %v6788 = vand.u32 %v6712, 4294901760
      %v6789 = vsub.f32 %v6712, %v6788
      %v6790 = vand.u32 %v6789, 4294901760
      %v6791 = vsub.f32 %v6789, %v6790
      %v6792 = vand.u32 %v6791, 4294901760
      %6793 = vmatmul.mubr.f32.gmra.mrb[0].mxu0 %v6792
      %v6794 = vpop.f32.mrb[0].mxu0
      %v6795 = vadd.f32 0.0, %v6794
      %v6796 = vpop.f32.mrb[0].mxu0
      %6797 = vdwg.mxu0
      %6798 = vmatprep.subr.mxu0 0.0
      %v6799 = vand.u32 %v6704, 4294901760
      %v6800 = vsub.f32 %v6704, %v6799
      %v6801 = vand.u32 %v6800, 4294901760
      %v6802 = vsub.f32 %v6800, %v6801
      %v6803 = vand.u32 %v6802, 4294901760
      %6804 = vmatpush1.msra.mxu0 %v6803
      %6805 = vmatprep.subr.mxu0 0.0
      %v6806 = vand.u32 %v6705, 4294901760
      %v6807 = vsub.f32 %v6705, %v6806
      %v6808 = vand.u32 %v6807, 4294901760
      %v6809 = vsub.f32 %v6807, %v6808
      %v6810 = vand.u32 %v6809, 4294901760
      %6811 = vmatpush1.msra.mxu0 %v6810
      %6812 = vmatprep.subr.mxu0 0.0
      %v6813 = vand.u32 %v6706, 4294901760
      %v6814 = vsub.f32 %v6706, %v6813
      %v6815 = vand.u32 %v6814, 4294901760
      %v6816 = vsub.f32 %v6814, %v6815
      %v6817 = vand.u32 %v6816, 4294901760
      %6818 = vmatpush1.msra.mxu0 %v6817
      %6819 = vmatprep.subr.mxu0 0.0
      %v6820 = vand.u32 %v6707, 4294901760
      %v6821 = vsub.f32 %v6707, %v6820
      %v6822 = vand.u32 %v6821, 4294901760
      %v6823 = vsub.f32 %v6821, %v6822
      %v6824 = vand.u32 %v6823, 4294901760
      %6825 = vmatpush1.msra.mxu0 %v6824
      %6826 = vmatprep.subr.mxu0 0.0
      %v6827 = vand.u32 %v6708, 4294901760
      %v6828 = vsub.f32 %v6708, %v6827
      %v6829 = vand.u32 %v6828, 4294901760
      %v6830 = vsub.f32 %v6828, %v6829
      %v6831 = vand.u32 %v6830, 4294901760
      %6832 = vmatpush1.msra.mxu0 %v6831
      %6833 = vmatprep.subr.mxu0 0.0
      %v6834 = vand.u32 %v6715, 4294901760
      %v6835 = vsub.f32 %v6715, %v6834
      %v6836 = vand.u32 %v6835, 4294901760
      %v6837 = vsub.f32 %v6835, %v6836
      %v6838 = vand.u32 %v6837, 4294901760
      %6839 = vmatpush1.msra.mxu0 %v6838
      %6840 = vmatprep.subr.mxu0 0.0
      %6841 = vmatpush1.msra.mxu0 0.0
      %6842 = vmatprep.subr.mxu0 0.0
      %6843 = vmatpush1.msra.mxu0 0.0
      %6844 = vmatprep.subr.mxu0 0.0
      %6845 = vmatpush1.msra.mxu0 0.0
      %6846 = vmatprep.subr.mxu0 0.0
      %6847 = vmatpush1.msra.mxu0 0.0
      %6848 = vmatprep.subr.mxu0 0.0
      %6849 = vmatpush1.msra.mxu0 0.0
      %6850 = vmatprep.subr.mxu0 0.0
      %6851 = vmatpush1.msra.mxu0 0.0
      %6852 = vmatprep.subr.mxu0 0.0
      %6853 = vmatpush1.msra.mxu0 0.0
      %6854 = vmatprep.subr.mxu0 0.0
      %6855 = vmatpush1.msra.mxu0 0.0
      %6856 = vmatprep.subr.mxu0 0.0
      %6857 = vmatpush1.msra.mxu0 0.0
      %6858 = vmatprep.subr.mxu0 0.0
      %6859 = vmatpush1.msra.mxu0 0.0
      %6860 = vmatprep.subr.mxu0 0.0
      %6861 = vmatpush1.msra.mxu0 0.0
      %6862 = vmatprep.subr.mxu0 0.0
      %6863 = vmatpush1.msra.mxu0 0.0
      %6864 = vmatprep.subr.mxu0 0.0
      %6865 = vmatpush1.msra.mxu0 0.0
      %6866 = vmatprep.subr.mxu0 0.0
      %6867 = vmatpush1.msra.mxu0 0.0
      %6868 = vmatprep.subr.mxu0 0.0
      %6869 = vmatpush1.msra.mxu0 0.0
      %6870 = vmatprep.subr.mxu0 0.0
      %6871 = vmatpush1.msra.mxu0 0.0
      %6872 = vmatprep.subr.mxu0 0.0
      %6873 = vmatpush1.msra.mxu0 0.0
      %6874 = vmatprep.subr.mxu0 0.0
      %6875 = vmatpush1.msra.mxu0 0.0
      %6876 = vmatprep.subr.mxu0 0.0
      %6877 = vmatpush1.msra.mxu0 0.0
      %6878 = vmatprep.subr.mxu0 0.0
      %6879 = vmatpush1.msra.mxu0 0.0
      %6880 = vmatprep.subr.mxu0 0.0
      %6881 = vmatpush1.msra.mxu0 0.0
      %6882 = vmatprep.subr.mxu0 0.0
      %6883 = vmatpush1.msra.mxu0 0.0
      %6884 = vmatprep.subr.mxu0 0.0
      %6885 = vmatpush1.msra.mxu0 0.0
      %6886 = vmatprep.subr.mxu0 0.0
      %6887 = vmatpush1.msra.mxu0 0.0
      %6888 = vmatprep.subr.mxu0 0.0
      %6889 = vmatpush1.msra.mxu0 0.0
      %6890 = vmatprep.subr.mxu0 0.0
      %6891 = vmatpush1.msra.mxu0 0.0
      %6892 = vmatprep.mubr.f32.mxu0 0.0
      %v6893 = vand.u32 %v6712, 4294901760
      %6894 = vmatmul.mubr.f32.gmra.mrb[0].mxu0 %v6893
      %v6895 = vpop.f32.mrb[0].mxu0
      %v6896 = vadd.f32 %v6795, %v6895
      %v6897 = vpop.f32.mrb[0].mxu0
      %6898 = vdwg.mxu0
      %6899 = vmatprep.subr.mxu0 0.0
      %v6900 = vand.u32 %v6704, 4294901760
      %v6901 = vsub.f32 %v6704, %v6900
      %6902 = vmatpush1.msra.mxu0 %v6901
      %6903 = vmatprep.subr.mxu0 0.0
      %v6904 = vand.u32 %v6705, 4294901760
      %v6905 = vsub.f32 %v6705, %v6904
      %6906 = vmatpush1.msra.mxu0 %v6905
      %6907 = vmatprep.subr.mxu0 0.0
      %v6908 = vand.u32 %v6706, 4294901760
      %v6909 = vsub.f32 %v6706, %v6908
      %6910 = vmatpush1.msra.mxu0 %v6909
      %6911 = vmatprep.subr.mxu0 0.0
      %v6912 = vand.u32 %v6707, 4294901760
      %v6913 = vsub.f32 %v6707, %v6912
      %6914 = vmatpush1.msra.mxu0 %v6913
      %6915 = vmatprep.subr.mxu0 0.0
      %v6916 = vand.u32 %v6708, 4294901760
      %v6917 = vsub.f32 %v6708, %v6916
      %6918 = vmatpush1.msra.mxu0 %v6917
      %6919 = vmatprep.subr.mxu0 0.0
      %v6920 = vand.u32 %v6715, 4294901760
      %v6921 = vsub.f32 %v6715, %v6920
      %6922 = vmatpush1.msra.mxu0 %v6921
      %6923 = vmatprep.subr.mxu0 0.0
      %6924 = vmatpush1.msra.mxu0 0.0
      %6925 = vmatprep.subr.mxu0 0.0
      %6926 = vmatpush1.msra.mxu0 0.0
      %6927 = vmatprep.subr.mxu0 0.0
      %6928 = vmatpush1.msra.mxu0 0.0
      %6929 = vmatprep.subr.mxu0 0.0
      %6930 = vmatpush1.msra.mxu0 0.0
      %6931 = vmatprep.subr.mxu0 0.0
      %6932 = vmatpush1.msra.mxu0 0.0
      %6933 = vmatprep.subr.mxu0 0.0
      %6934 = vmatpush1.msra.mxu0 0.0
      %6935 = vmatprep.subr.mxu0 0.0
      %6936 = vmatpush1.msra.mxu0 0.0
      %6937 = vmatprep.subr.mxu0 0.0
      %6938 = vmatpush1.msra.mxu0 0.0
      %6939 = vmatprep.subr.mxu0 0.0
      %6940 = vmatpush1.msra.mxu0 0.0
      %6941 = vmatprep.subr.mxu0 0.0
      %6942 = vmatpush1.msra.mxu0 0.0
      %6943 = vmatprep.subr.mxu0 0.0
      %6944 = vmatpush1.msra.mxu0 0.0
      %6945 = vmatprep.subr.mxu0 0.0
      %6946 = vmatpush1.msra.mxu0 0.0
      %6947 = vmatprep.subr.mxu0 0.0
      %6948 = vmatpush1.msra.mxu0 0.0
      %6949 = vmatprep.subr.mxu0 0.0
      %6950 = vmatpush1.msra.mxu0 0.0
      %6951 = vmatprep.subr.mxu0 0.0
      %6952 = vmatpush1.msra.mxu0 0.0
      %6953 = vmatprep.subr.mxu0 0.0
      %6954 = vmatpush1.msra.mxu0 0.0
      %6955 = vmatprep.subr.mxu0 0.0
      %6956 = vmatpush1.msra.mxu0 0.0
      %6957 = vmatprep.subr.mxu0 0.0
      %6958 = vmatpush1.msra.mxu0 0.0
      %6959 = vmatprep.subr.mxu0 0.0
      %6960 = vmatpush1.msra.mxu0 0.0
      %6961 = vmatprep.subr.mxu0 0.0
      %6962 = vmatpush1.msra.mxu0 0.0
      %6963 = vmatprep.subr.mxu0 0.0
      %6964 = vmatpush1.msra.mxu0 0.0
      %6965 = vmatprep.subr.mxu0 0.0
      %6966 = vmatpush1.msra.mxu0 0.0
      %6967 = vmatprep.subr.mxu0 0.0
      %6968 = vmatpush1.msra.mxu0 0.0
      %6969 = vmatprep.subr.mxu0 0.0
      %6970 = vmatpush1.msra.mxu0 0.0
      %6971 = vmatprep.subr.mxu0 0.0
      %6972 = vmatpush1.msra.mxu0 0.0
      %6973 = vmatprep.subr.mxu0 0.0
      %6974 = vmatpush1.msra.mxu0 0.0
      %6975 = vmatprep.mubr.f32.mxu0 0.0
      %v6976 = vand.u32 %v6712, 4294901760
      %v6977 = vsub.f32 %v6712, %v6976
      %6978 = vmatmul.mubr.f32.gmra.mrb[0].mxu0 %v6977
      %v6979 = vpop.f32.mrb[0].mxu0
      %v6980 = vadd.f32 %v6896, %v6979
      %v6981 = vpop.f32.mrb[0].mxu0
      %6982 = vdwg.mxu0
      %6983 = vmatprep.subr.mxu0 0.0
      %v6984 = vand.u32 %v6704, 4294901760
      %6985 = vmatpush1.msra.mxu0 %v6984
      %6986 = vmatprep.subr.mxu0 0.0
      %v6987 = vand.u32 %v6705, 4294901760
      %6988 = vmatpush1.msra.mxu0 %v6987
      %6989 = vmatprep.subr.mxu0 0.0
      %v6990 = vand.u32 %v6706, 4294901760
      %6991 = vmatpush1.msra.mxu0 %v6990
      %6992 = vmatprep.subr.mxu0 0.0
      %v6993 = vand.u32 %v6707, 4294901760
      %6994 = vmatpush1.msra.mxu0 %v6993
      %6995 = vmatprep.subr.mxu0 0.0
      %v6996 = vand.u32 %v6708, 4294901760
      %6997 = vmatpush1.msra.mxu0 %v6996
      %6998 = vmatprep.subr.mxu0 0.0
      %v6999 = vand.u32 %v6715, 4294901760
      %7000 = vmatpush1.msra.mxu0 %v6999
      %7001 = vmatprep.subr.mxu0 0.0
      %7002 = vmatpush1.msra.mxu0 0.0
      %7003 = vmatprep.subr.mxu0 0.0
      %7004 = vmatpush1.msra.mxu0 0.0
      %7005 = vmatprep.subr.mxu0 0.0
      %7006 = vmatpush1.msra.mxu0 0.0
      %7007 = vmatprep.subr.mxu0 0.0
      %7008 = vmatpush1.msra.mxu0 0.0
      %7009 = vmatprep.subr.mxu0 0.0
      %7010 = vmatpush1.msra.mxu0 0.0
      %7011 = vmatprep.subr.mxu0 0.0
      %7012 = vmatpush1.msra.mxu0 0.0
      %7013 = vmatprep.subr.mxu0 0.0
      %7014 = vmatpush1.msra.mxu0 0.0
      %7015 = vmatprep.subr.mxu0 0.0
      %7016 = vmatpush1.msra.mxu0 0.0
      %7017 = vmatprep.subr.mxu0 0.0
      %7018 = vmatpush1.msra.mxu0 0.0
      %7019 = vmatprep.subr.mxu0 0.0
      %7020 = vmatpush1.msra.mxu0 0.0
      %7021 = vmatprep.subr.mxu0 0.0
      %7022 = vmatpush1.msra.mxu0 0.0
      %7023 = vmatprep.subr.mxu0 0.0
      %7024 = vmatpush1.msra.mxu0 0.0
      %7025 = vmatprep.subr.mxu0 0.0
      %7026 = vmatpush1.msra.mxu0 0.0
      %7027 = vmatprep.subr.mxu0 0.0
      %7028 = vmatpush1.msra.mxu0 0.0
      %7029 = vmatprep.subr.mxu0 0.0
      %7030 = vmatpush1.msra.mxu0 0.0
      %7031 = vmatprep.subr.mxu0 0.0
      %7032 = vmatpush1.msra.mxu0 0.0
      %7033 = vmatprep.subr.mxu0 0.0
      %7034 = vmatpush1.msra.mxu0 0.0
      %7035 = vmatprep.subr.mxu0 0.0
      %7036 = vmatpush1.msra.mxu0 0.0
      %7037 = vmatprep.subr.mxu0 0.0
      %7038 = vmatpush1.msra.mxu0 0.0
      %7039 = vmatprep.subr.mxu0 0.0
      %7040 = vmatpush1.msra.mxu0 0.0
      %7041 = vmatprep.subr.mxu0 0.0
      %7042 = vmatpush1.msra.mxu0 0.0
      %7043 = vmatprep.subr.mxu0 0.0
      %7044 = vmatpush1.msra.mxu0 0.0
      %7045 = vmatprep.subr.mxu0 0.0
      %7046 = vmatpush1.msra.mxu0 0.0
      %7047 = vmatprep.subr.mxu0 0.0
      %7048 = vmatpush1.msra.mxu0 0.0
      %7049 = vmatprep.subr.mxu0 0.0
      %7050 = vmatpush1.msra.mxu0 0.0
      %7051 = vmatprep.subr.mxu0 0.0
      %7052 = vmatpush1.msra.mxu0 0.0
      %7053 = vmatprep.mubr.f32.mxu0 0.0
      %v7054 = vand.u32 %v6712, 4294901760
      %v7055 = vsub.f32 %v6712, %v7054
      %v7056 = vand.u32 %v7055, 4294901760
      %7057 = vmatmul.mubr.f32.gmra.mrb[0].mxu0 %v7056
      %v7058 = vpop.f32.mrb[0].mxu0
      %v7059 = vadd.f32 %v6980, %v7058
      %v7060 = vpop.f32.mrb[0].mxu0
      %7061 = vdwg.mxu0
      %7062 = vmatprep.subr.mxu0 0.0
      %v7063 = vand.u32 %v6704, 4294901760
      %v7064 = vsub.f32 %v6704, %v7063
      %v7065 = vand.u32 %v7064, 4294901760
      %7066 = vmatpush1.msra.mxu0 %v7065
      %7067 = vmatprep.subr.mxu0 0.0
      %v7068 = vand.u32 %v6705, 4294901760
      %v7069 = vsub.f32 %v6705, %v7068
      %v7070 = vand.u32 %v7069, 4294901760
      %7071 = vmatpush1.msra.mxu0 %v7070
      %7072 = vmatprep.subr.mxu0 0.0
      %v7073 = vand.u32 %v6706, 4294901760
      %v7074 = vsub.f32 %v6706, %v7073
      %v7075 = vand.u32 %v7074, 4294901760
      %7076 = vmatpush1.msra.mxu0 %v7075
      %7077 = vmatprep.subr.mxu0 0.0
      %v7078 = vand.u32 %v6707, 4294901760
      %v7079 = vsub.f32 %v6707, %v7078
      %v7080 = vand.u32 %v7079, 4294901760
      %7081 = vmatpush1.msra.mxu0 %v7080
      %7082 = vmatprep.subr.mxu0 0.0
      %v7083 = vand.u32 %v6708, 4294901760
      %v7084 = vsub.f32 %v6708, %v7083
      %v7085 = vand.u32 %v7084, 4294901760
      %7086 = vmatpush1.msra.mxu0 %v7085
      %7087 = vmatprep.subr.mxu0 0.0
      %v7088 = vand.u32 %v6715, 4294901760
      %v7089 = vsub.f32 %v6715, %v7088
      %v7090 = vand.u32 %v7089, 4294901760
      %7091 = vmatpush1.msra.mxu0 %v7090
      %7092 = vmatprep.subr.mxu0 0.0
      %7093 = vmatpush1.msra.mxu0 0.0
      %7094 = vmatprep.subr.mxu0 0.0
      %7095 = vmatpush1.msra.mxu0 0.0
      %7096 = vmatprep.subr.mxu0 0.0
      %7097 = vmatpush1.msra.mxu0 0.0
      %7098 = vmatprep.subr.mxu0 0.0
      %7099 = vmatpush1.msra.mxu0 0.0
      %7100 = vmatprep.subr.mxu0 0.0
      %7101 = vmatpush1.msra.mxu0 0.0
      %7102 = vmatprep.subr.mxu0 0.0
      %7103 = vmatpush1.msra.mxu0 0.0
      %7104 = vmatprep.subr.mxu0 0.0
      %7105 = vmatpush1.msra.mxu0 0.0
      %7106 = vmatprep.subr.mxu0 0.0
      %7107 = vmatpush1.msra.mxu0 0.0
      %7108 = vmatprep.subr.mxu0 0.0
      %7109 = vmatpush1.msra.mxu0 0.0
      %7110 = vmatprep.subr.mxu0 0.0
      %7111 = vmatpush1.msra.mxu0 0.0
      %7112 = vmatprep.subr.mxu0 0.0
      %7113 = vmatpush1.msra.mxu0 0.0
      %7114 = vmatprep.subr.mxu0 0.0
      %7115 = vmatpush1.msra.mxu0 0.0
      %7116 = vmatprep.subr.mxu0 0.0
      %7117 = vmatpush1.msra.mxu0 0.0
      %7118 = vmatprep.subr.mxu0 0.0
      %7119 = vmatpush1.msra.mxu0 0.0
      %7120 = vmatprep.subr.mxu0 0.0
      %7121 = vmatpush1.msra.mxu0 0.0
      %7122 = vmatprep.subr.mxu0 0.0
      %7123 = vmatpush1.msra.mxu0 0.0
      %7124 = vmatprep.subr.mxu0 0.0
      %7125 = vmatpush1.msra.mxu0 0.0
      %7126 = vmatprep.subr.mxu0 0.0
      %7127 = vmatpush1.msra.mxu0 0.0
      %7128 = vmatprep.subr.mxu0 0.0
      %7129 = vmatpush1.msra.mxu0 0.0
      %7130 = vmatprep.subr.mxu0 0.0
      %7131 = vmatpush1.msra.mxu0 0.0
      %7132 = vmatprep.subr.mxu0 0.0
      %7133 = vmatpush1.msra.mxu0 0.0
      %7134 = vmatprep.subr.mxu0 0.0
      %7135 = vmatpush1.msra.mxu0 0.0
      %7136 = vmatprep.subr.mxu0 0.0
      %7137 = vmatpush1.msra.mxu0 0.0
      %7138 = vmatprep.subr.mxu0 0.0
      %7139 = vmatpush1.msra.mxu0 0.0
      %7140 = vmatprep.subr.mxu0 0.0
      %7141 = vmatpush1.msra.mxu0 0.0
      %7142 = vmatprep.subr.mxu0 0.0
      %7143 = vmatpush1.msra.mxu0 0.0
      %7144 = vmatprep.mubr.f32.mxu0 0.0
      %v7145 = vand.u32 %v6712, 4294901760
      %7146 = vmatmul.mubr.f32.gmra.mrb[0].mxu0 %v7145
      %v7147 = vpop.f32.mrb[0].mxu0
      %v7148 = vadd.f32 %v7059, %v7147
      %v7149 = vpop.f32.mrb[0].mxu0
      %7150 = vdwg.mxu0
      %7151 = vmatprep.subr.mxu0 0.0
      %v7152 = vand.u32 %v6704, 4294901760
      %7153 = vmatpush1.msra.mxu0 %v7152
      %7154 = vmatprep.subr.mxu0 0.0
      %v7155 = vand.u32 %v6705, 4294901760
      %7156 = vmatpush1.msra.mxu0 %v7155
      %7157 = vmatprep.subr.mxu0 0.0
      %v7158 = vand.u32 %v6706, 4294901760
      %7159 = vmatpush1.msra.mxu0 %v7158
      %7160 = vmatprep.subr.mxu0 0.0
      %v7161 = vand.u32 %v6707, 4294901760
      %7162 = vmatpush1.msra.mxu0 %v7161
      %7163 = vmatprep.subr.mxu0 0.0
      %v7164 = vand.u32 %v6708, 4294901760
      %7165 = vmatpush1.msra.mxu0 %v7164
      %7166 = vmatprep.subr.mxu0 0.0
      %v7167 = vand.u32 %v6715, 4294901760
      %7168 = vmatpush1.msra.mxu0 %v7167
      %7169 = vmatprep.subr.mxu0 0.0
      %7170 = vmatpush1.msra.mxu0 0.0
      %7171 = vmatprep.subr.mxu0 0.0
      %7172 = vmatpush1.msra.mxu0 0.0
      %7173 = vmatprep.subr.mxu0 0.0
      %7174 = vmatpush1.msra.mxu0 0.0
      %7175 = vmatprep.subr.mxu0 0.0
      %7176 = vmatpush1.msra.mxu0 0.0
      %7177 = vmatprep.subr.mxu0 0.0
      %7178 = vmatpush1.msra.mxu0 0.0
      %7179 = vmatprep.subr.mxu0 0.0
      %7180 = vmatpush1.msra.mxu0 0.0
      %7181 = vmatprep.subr.mxu0 0.0
      %7182 = vmatpush1.msra.mxu0 0.0
      %7183 = vmatprep.subr.mxu0 0.0
      %7184 = vmatpush1.msra.mxu0 0.0
      %7185 = vmatprep.subr.mxu0 0.0
      %7186 = vmatpush1.msra.mxu0 0.0
      %7187 = vmatprep.subr.mxu0 0.0
      %7188 = vmatpush1.msra.mxu0 0.0
      %7189 = vmatprep.subr.mxu0 0.0
      %7190 = vmatpush1.msra.mxu0 0.0
      %7191 = vmatprep.subr.mxu0 0.0
      %7192 = vmatpush1.msra.mxu0 0.0
      %7193 = vmatprep.subr.mxu0 0.0
      %7194 = vmatpush1.msra.mxu0 0.0
      %7195 = vmatprep.subr.mxu0 0.0
      %7196 = vmatpush1.msra.mxu0 0.0
      %7197 = vmatprep.subr.mxu0 0.0
      %7198 = vmatpush1.msra.mxu0 0.0
      %7199 = vmatprep.subr.mxu0 0.0
      %7200 = vmatpush1.msra.mxu0 0.0
      %7201 = vmatprep.subr.mxu0 0.0
      %7202 = vmatpush1.msra.mxu0 0.0
      %7203 = vmatprep.subr.mxu0 0.0
      %7204 = vmatpush1.msra.mxu0 0.0
      %7205 = vmatprep.subr.mxu0 0.0
      %7206 = vmatpush1.msra.mxu0 0.0
      %7207 = vmatprep.subr.mxu0 0.0
      %7208 = vmatpush1.msra.mxu0 0.0
      %7209 = vmatprep.subr.mxu0 0.0
      %7210 = vmatpush1.msra.mxu0 0.0
      %7211 = vmatprep.subr.mxu0 0.0
      %7212 = vmatpush1.msra.mxu0 0.0
      %7213 = vmatprep.subr.mxu0 0.0
      %7214 = vmatpush1.msra.mxu0 0.0
      %7215 = vmatprep.subr.mxu0 0.0
      %7216 = vmatpush1.msra.mxu0 0.0
      %7217 = vmatprep.subr.mxu0 0.0
      %7218 = vmatpush1.msra.mxu0 0.0
      %7219 = vmatprep.subr.mxu0 0.0
      %7220 = vmatpush1.msra.mxu0 0.0
      %7221 = vmatprep.mubr.f32.mxu0 0.0
      %v7222 = vand.u32 %v6712, 4294901760
      %7223 = vmatmul.mubr.f32.gmra.mrb[0].mxu0 %v7222
      %v7224 = vpop.f32.mrb[0].mxu0
      %v7225 = vadd.f32 %v7148, %v7224
      %v7226 = vpop.f32.mrb[0].mxu0
      %7227 = vdwg.mxu0
      %v7228 = vmul.f32 %v7225, %v7225
      %v7229 = vsel %vm4863, %v7228, 0.0
      %v7230 = vrot.slane %v7229, 4
      %v7231 = vadd.f32 %v7229, %v7230
      %v7232 = vrot.slane %v7231, 2
      %v7233 = vadd.f32 %v7231, %v7232
      %v7234 = vrot.slane %v7233, 1
      %v7235 = vadd.f32 %v7233, %v7234
      %v7236 = vmax.f32 %v7235, 1e-24
      %v7237 = vrsqrt.pop %v7236
      %v7238 = vmul.f32 %v7237, %v4853
      %v7239 = vlaneseq
      %v7240 = vshrl.u32 %v7239, 7
      %v7241 = vsub.s32 3, %v7240
      %v7242 = vrot.slane %v7238, %v7241
      %v7243 = vmul.f32 %v7225, %v7242
      %v7244 = vadd.f32 %v342, %v7243
      %s7245 = scalar_lea.vmem %s337, 12
      %7246 = vst.msk [vmem:[%s7245] sm:$0x7] %vm4863, %v7244
      %p7247 = scmp.lt.s32.totalorder %s22, 1
      %s7248 = scalar_select %p7247, %s22, 1
      %p7249 = scmp.lt.s32.totalorder %s23, 0
      %s7250 = scalar_select %p7249, %s23, 0
      %s7251 = smul.addr %s7248, 4
      %s7252 = sadd.s32 %s7250, %s7251
      %s7253 = smul.addr %s7252, 4
      %s7254 = scalar_lea.vmem %s7, %s7253
      // Predicated region
      $region49: #{tpu_custom_call.1} parent=47 // pred_check
        %p7255 = pneg %p211
      $region50: #{tpu_custom_call.1} parent=47 // pred_check_branch
        %7257 = sbr.rel (%p7255) target = $region52
      $region51: #{tpu_custom_call.1} parent=47 // pred_region
        _
      $region52: #{tpu_custom_call.1} parent=47 // pred_fallthru
        _
    $region48: #{tpu_custom_call.1} parent=5 // pred_fallthru
      _
    %p7258 = scmp.le.s32.totalorder 2, %s13
    // Predicated region
    $region53: #{tpu_custom_call.1} parent=5 // pred_check
      %p7259 = pneg %p7258
    $region54: #{tpu_custom_call.1} parent=5 // pred_check_branch
      %7261 = sbr.rel (%p7259) target = $region56
    $region55: #{tpu_custom_call.1} parent=5 // pred_region
      %s7262 = ssub.s32 %s13, 2
      // Predicated region
      $region57: #{tpu_custom_call.1} parent=55 // pred_check
        %p7263 = pneg %p217
      $region58: #{tpu_custom_call.1} parent=55 // pred_check_branch
        %7265 = sbr.rel (%p7263) target = $region60
      $region59: #{tpu_custom_call.1} parent=55 // pred_region
        %p7266 = scmp.lt.s32.totalorder %s24, 1
        %s7267 = scalar_select %p7266, %s24, 1
        %p7268 = scmp.lt.s32.totalorder %s25, 0
        %s7269 = scalar_select %p7268, %s25, 0
        %s7270 = smul.addr %s7267, 4
        %s7271 = sadd.s32 %s7269, %s7270
        %s7272 = smul.addr %s7271, 4
        %s7273 = scalar_lea.vmem %s7, %s7272
      $region60: #{tpu_custom_call.1} parent=55 // pred_fallthru
        _
    $region56: #{tpu_custom_call.1} parent=5 // pred_fallthru
      _
  $region6: #{tpu_custom_call.1} parent=0 // loop_footer
    %s17 = sadd.s32 1, %s13
  $region7: #{tpu_custom_call.1} parent=0 // loop_footer_branch
    %12 = sbr.rel target = $region3
  $region8: #{tpu_custom_call.1} parent=0 // loop_exit
    _

</llo_original>
